<compile_context>
chip_gen: v7x
topology: tpu7x:2x2x1
jax: 0.10.0
libtpu: 0.0.40
codegen_flags: <defaults>
</compile_context>

<pallas_src>
import functools

import jax
import jax.numpy as jnp
from jax.experimental import pallas as pl
from jax.experimental.pallas import tpu as pltpu

EPS = 1e-5
CPAD = 128          # conv output channels zero-padded 64 -> 128 (lane-dense BN/pool)

NOTE_NET_CFG = {  # 'cqt_pad_4'
    'conv1': (25, 3), 'pool1': (3, 2),
    'conv2': (9, 3), 'pool2': (3, 1),
    'fc1': 1536, 'fc2': 1024, 'fc3': 512,
}

_VMEM = pl.BlockSpec(memory_space=pltpu.MemorySpace.VMEM)


# ----------------------------- Pallas kernels ------------------------------ #

def _conv_bn_pool_relu_kernel(x_ref, w_ref, gamma_ref, beta_ref, o_ref, *,
                              pool_size, pooled_rows, out_channels):
    """conv (im2col GEMM) + training-mode BatchNorm + MaxPool + ReLU, fused.

    x_ref : (pool_size * pooled_rows, K) bf16 patches, row order
            (pool_dy, pool_dx, n, out_h, out_w) -- pool-window offset LEADING.
    w_ref : (K, CPAD) bf16 weight, cout zero-padded to 128 lanes.
    o_ref : (pooled_rows, out_channels) bf16.
    """
    # im2col GEMM on the MXU (bf16 operands, f32 accumulation).
    y = jnp.dot(x_ref[...], w_ref[...], preferred_element_type=jnp.float32)

    # Training-mode BatchNorm2d: per-channel batch stats over all (N,H,W) rows.
    # Two-pass (mean-subtracted) variance -- numerically safe; the tile already
    # lives in VMEM so the second pass is pure VPU work.  The conv bias shifts
    # y and its batch mean identically, so it cancels exactly and is never
    # applied.
    inv_r = 1.0 / y.shape[0]
    mu = jnp.sum(y, axis=0, keepdims=True) * inv_r
    d = y - mu
    var = jnp.sum(d * d, axis=0, keepdims=True) * inv_r
    scale = gamma_ref[...] * jax.lax.rsqrt(var + EPS)
    ybn = y * scale + (beta_ref[...] - mu * scale)

    # MaxPool: elementwise max over the pool_size leading row-slabs.
    # pooled_rows % 8 == 0, so every slab slice is (8,128)-tile aligned.
    acc = ybn[0:pooled_rows]
    for p in range(1, pool_size):
        acc = jnp.maximum(acc, ybn[p * pooled_rows:(p + 1) * pooled_rows])
    # ReLU commutes with max -> apply after pooling (pool_size x fewer rows).
    acc = jnp.maximum(acc, 0.0)
    # Padded lanes are exact zeros (gamma/beta zero-padded => scale=shift=0);
    # slice back to the real channel count for the store.
    o_ref[...] = acc[:, :out_channels].astype(o_ref.dtype)


def _fc_fused_kernel(x_ref, w1_ref, b1_ref, w2_ref, b2_ref, w3_ref, b3_ref,
                     mask_ref, o_ref):
    """fc1 -> ReLU -> fc2 -> ReLU -> dropout(p=0.5) -> fc3 -> sigmoid.

    Gridless: all three bf16 weight matrices (~4.3 MB) are resident in VMEM.
    At M=2 the matmuls are pure weight-read roofline, so tile streaming would
    only add per-grid-step overhead.
    """
    x = x_ref[...]                                                    # (M, 1536) bf16
    h1 = jnp.dot(x, w1_ref[...], preferred_element_type=jnp.float32)
    h1 = jnp.maximum(h1 + b1_ref[...], 0.0)                           # fc1 + ReLU
    h2 = jnp.dot(h1.astype(jnp.bfloat16), w2_ref[...],
                 preferred_element_type=jnp.float32)
    h2 = jnp.maximum(h2 + b2_ref[...], 0.0)                           # fc2 + ReLU
    h2 = h2 * mask_ref[...].astype(jnp.float32)                       # dropout (inverted)
    y = jnp.dot(h2.astype(jnp.bfloat16), w3_ref[...],
                preferred_element_type=jnp.float32) + b3_ref[...]     # fc3 (128 lanes)
    o_ref[...] = 1.0 / (1.0 + jnp.exp(-y))                            # sigmoid


# --------------------------- pallas_call wrappers --------------------------- #

def conv_bn_pool_relu(patches, w_bf16, gamma_row, beta_row, *, pool_size,
                      out_channels=64):
    r, _ = patches.shape
    assert r % pool_size == 0
    m = r // pool_size
    assert m % 8 == 0, "pooled row count must stay (8,128)-tile aligned"
    kernel = functools.partial(_conv_bn_pool_relu_kernel, pool_size=pool_size,
                               pooled_rows=m, out_channels=out_channels)
    return pl.pallas_call(
        kernel,
        out_shape=jax.ShapeDtypeStruct((m, out_channels), jnp.bfloat16),
        in_specs=[_VMEM] * 4,
        out_specs=_VMEM,
    )(patches, w_bf16, gamma_row, beta_row)


def fc_fused(x, w1, b1, w2, b2, w3, b3, drop_mask):
    m = x.shape[0]
    n3 = w3.shape[1]
    return pl.pallas_call(
        _fc_fused_kernel,
        out_shape=jax.ShapeDtypeStruct((m, n3), jnp.float32),
        in_specs=[_VMEM] * 8,
        out_specs=_VMEM,
    )(x, w1, b1, w2, b2, w3, b3, drop_mask)


# ------------------------------- JAX glue ----------------------------------- #

def _im2col_pool_rows_cin1(x_nchw, kh, kw, ph, pw):
    """im2col for cin==1 with pooling-friendly row order (ph, pw, n, hp, wp).
    K order = (kh, kw), matching torch's weight.reshape(Cout, -1)."""
    n, c, h, w = x_nchw.shape
    assert c == 1
    ho, wo = h - kh + 1, w - kw + 1
    hp, wp = ho // ph, wo // pw                  # floor, like nn.MaxPool2d
    cols = [x_nchw[:, 0, i:i + ho, j:j + wo] for i in range(kh) for j in range(kw)]
    p = jnp.stack(cols, axis=-1)                 # (n, ho, wo, kh*kw)
    p = p[:, :hp * ph, :wp * pw, :]
    p = p.reshape(n, hp, ph, wp, pw, kh * kw).transpose(2, 4, 0, 1, 3, 5)
    return p.reshape(ph * pw * n * hp * wp, kh * kw).astype(jnp.bfloat16), hp, wp


def _im2col_pool_rows_nhwc(x_nhwc, kh, kw, ph, pw):
    """NHWC im2col with pooling-friendly row order; K order = (kh, kw, cin)."""
    n, h, w, c = x_nhwc.shape
    ho, wo = h - kh + 1, w - kw + 1
    hp, wp = ho // ph, wo // pw
    cols = [x_nhwc[:, i:i + ho, j:j + wo, :] for i in range(kh) for j in range(kw)]
    p = jnp.stack(cols, axis=3)                  # (n, ho, wo, kh*kw, c)
    p = p.reshape(n, ho, wo, kh * kw * c)
    p = p[:, :hp * ph, :wp * pw, :]
    p = p.reshape(n, hp, ph, wp, pw, kh * kw * c).transpose(2, 4, 0, 1, 3, 5)
    return (p.reshape(ph * pw * n * hp * wp, kh * kw * c).astype(jnp.bfloat16),
            hp, wp)


def _pad_last(a, n):
    pad = n - a.shape[-1]
    if pad <= 0:
        return a
    cfg = [(0, 0)] * (a.ndim - 1) + [(0, pad)]
    return jnp.pad(a, cfg)


# ------------------------------ model setup --------------------------------- #

def init_params(key):
    cfg = NOTE_NET_CFG
    ks = jax.random.split(key, 14)
    p = {}
    p['w_conv1'] = 0.05 * jax.random.normal(ks[0], (64, 1) + cfg['conv1'], jnp.float32)
    p['b_conv1'] = 0.05 * jax.random.normal(ks[1], (64,), jnp.float32)   # cancels under BN
    p['gamma1'] = 1.0 + 0.1 * jax.random.normal(ks[2], (64,), jnp.float32)
    p['beta1'] = 0.1 * jax.random.normal(ks[3], (64,), jnp.float32)
    p['w_conv2'] = 0.05 * jax.random.normal(ks[4], (64, 64) + cfg['conv2'], jnp.float32)
    p['b_conv2'] = 0.05 * jax.random.normal(ks[5], (64,), jnp.float32)   # cancels under BN
    p['gamma2'] = 1.0 + 0.1 * jax.random.normal(ks[6], (64,), jnp.float32)
    p['beta2'] = 0.1 * jax.random.normal(ks[7], (64,), jnp.float32)
    p['w_fc1'] = 0.02 * jax.random.normal(ks[8], (cfg['fc1'], cfg['fc2']), jnp.float32)
    p['b_fc1'] = 0.02 * jax.random.normal(ks[9], (cfg['fc2'],), jnp.float32)
    p['w_fc2'] = 0.02 * jax.random.normal(ks[10], (cfg['fc2'], cfg['fc3']), jnp.float32)
    p['b_fc2'] = 0.02 * jax.random.normal(ks[11], (cfg['fc3'],), jnp.float32)
    p['w_fc3'] = 0.02 * jax.random.normal(ks[12], (cfg['fc3'], 88), jnp.float32)
    p['b_fc3'] = 0.02 * jax.random.normal(ks[13], (88,), jnp.float32)
    return p


def prepare_weights(params):
    """One-time layout/dtype prep: bf16 weights, conv cout zero-padded to 128
    lanes, conv2 weight permuted to (kh,kw,cin,cout) reduction order, fc3
    zero-padded to 128 output lanes."""
    prep = {}
    # conv1: (64,1,25,3) -> (75, 64) -> pad cout to 128, bf16.
    w1 = params['w_conv1'].reshape(64, -1).T
    prep['w1'] = _pad_last(w1, CPAD).astype(jnp.bfloat16)
    # gamma/beta MUST be ZERO-padded: padded lanes then get scale=0, shift=0 so
    # they stay exactly 0 through BN/ReLU/pool before being sliced off.
    prep['g1'] = _pad_last(params['gamma1'].reshape(1, -1), CPAD)
    prep['be1'] = _pad_last(params['beta1'].reshape(1, -1), CPAD)
    # conv2: (64,64,9,3) -> (kh,kw,cin,cout) -> (1728, 64); pad cout ONLY
    # (padding cin would double GEMM K / patch bytes for nothing).
    w2 = params['w_conv2'].transpose(2, 3, 1, 0).reshape(-1, 64)
    prep['w2'] = _pad_last(w2, CPAD).astype(jnp.bfloat16)
    prep['g2'] = _pad_last(params['gamma2'].reshape(1, -1), CPAD)
    prep['be2'] = _pad_last(params['beta2'].reshape(1, -1), CPAD)
    # FC stack: bf16 weights (f32 MXU accumulation in-kernel), f32 row biases.
    prep['wf1'] = params['w_fc1'].astype(jnp.bfloat16)
    prep['bf1'] = params['b_fc1'].reshape(1, -1)
    prep['wf2'] = params['w_fc2'].astype(jnp.bfloat16)
    prep['bf2'] = params['b_fc2'].reshape(1, -1)
    # fc3 zero-padded 88 -> 128 output lanes (unmasked full-lane store).
    prep['wf3'] = _pad_last(params['w_fc3'], CPAD).astype(jnp.bfloat16)
    prep['bf3'] = _pad_last(params['b_fc3'].reshape(1, -1), CPAD)
    return prep


@jax.jit
def notesnet_forward(prep, x_nchw, dropout_key):
    cfg = NOTE_NET_CFG
    n = x_nchw.shape[0]
    kh1, kw1 = cfg['conv1']
    ph1, pw1 = cfg['pool1']
    kh2, kw2 = cfg['conv2']
    ph2, pw2 = cfg['pool2']

    # stage 1: conv1 + BN + maxpool1 + ReLU, ONE fused pallas_call
    p1, hp1, wp1 = _im2col_pool_rows_cin1(x_nchw, kh1, kw1, ph1, pw1)
    feat1 = conv_bn_pool_relu(p1, prep['w1'], prep['g1'], prep['be1'],
                              pool_size=ph1 * pw1)            # (n*hp1*wp1, 64) bf16

    # stage 2: conv2 + BN + maxpool2 + ReLU, ONE fused pallas_call
    p2, hp2, wp2 = _im2col_pool_rows_nhwc(feat1.reshape(n, hp1, wp1, 64),
                                          kh2, kw2, ph2, pw2)
    feat2 = conv_bn_pool_relu(p2, prep['w2'], prep['g2'], prep['be2'],
                              pool_size=ph2 * pw2)            # (n*hp2*wp2, 64) bf16

    # NCHW flatten like torch's x.view(-1, 1536)  (tiny: 48x64 bf16)
    xfc = (feat2.reshape(n, hp2, wp2, 64).transpose(0, 3, 1, 2)
                .reshape(-1, cfg['fc1']))

    # dropout p=0.5 inverted mask, bf16 (values exactly {0, 2}).
    # TODO(synk): generate in-kernel with pltpu.prng_* (it has no interpret/CPU
    # lowering, so the mask is kept host-side with jax.random for portability).
    mask = (jax.random.bernoulli(dropout_key, 0.5, (xfc.shape[0], cfg['fc3']))
            .astype(jnp.bfloat16) * 2.0)

    # fused fc1 -> relu -> fc2 -> relu -> dropout -> fc3 -> sigmoid
    # (gridless, all weights resident in VMEM; logits padded to 128 lanes)
    out = fc_fused(xfc, prep['wf1'], prep['bf1'], prep['wf2'], prep['bf2'],
                   prep['wf3'], prep['bf3'], mask)
    return out[:, :88]


if __name__ == "__main__":
    key = jax.random.PRNGKey(0)
    k_param, k_x, k_drop = jax.random.split(key, 3)
    params = init_params(k_param)
    prep = prepare_weights(params)

    # Input (N=2, C=1, H=120, W=12): features -> (2, 64, 8, 3) -> 1536 = fc1.
    x = jax.random.normal(k_x, (2, 1, 120, 12), jnp.float32)

    out = notesnet_forward(prep, x, k_drop)
    out = jax.block_until_ready(out)

    assert out.shape == (2, 88), out.shape
    assert bool(jnp.all(jnp.isfinite(out)))
    assert bool(jnp.all((out >= 0.0) & (out <= 1.0)))   # sigmoid output range
    print("KERNEL_OK")
</pallas_src>

<mosaic_0001>
module attributes {stable_mosaic.version = 11 : i64} {
  func.func @_conv_bn_pool_relu_kernel(%arg0: memref<1920x75xbf16, #tpu.memory_space<vmem>>, %arg1: memref<75x128xbf16, #tpu.memory_space<vmem>>, %arg2: memref<1x128xf32, #tpu.memory_space<vmem>>, %arg3: memref<1x128xf32, #tpu.memory_space<vmem>>, %arg4: memref<320x64xbf16, #tpu.memory_space<vmem>>) attributes {dimension_semantics = [], scalar_prefetch = 0 : i64, scratch_operands = 0 : i64, tpu.core_type = #tpu.core_type<tc>} {
    %c0 = arith.constant 0 : index
    %c0_0 = arith.constant 0 : index
    %0 = vector.load %arg0[%c0, %c0_0] : memref<1920x75xbf16, #tpu.memory_space<vmem>>, vector<1920x75xbf16>
    %c0_1 = arith.constant 0 : index
    %c0_2 = arith.constant 0 : index
    %1 = vector.load %arg1[%c0_1, %c0_2] : memref<75x128xbf16, #tpu.memory_space<vmem>>, vector<75x128xbf16>
    %cst = arith.constant dense<0.000000e+00> : vector<1920x128xf32>
    %2 = tpu.matmul %0, %1, %cst {dimension_numbers = #tpu.dot_dimension_numbers<[1], [0], [0], [1], [0, 0, 1, 1], [], []>} : vector<1920x75xbf16>, vector<75x128xbf16>, vector<1920x128xf32> -> vector<1920x128xf32>
    %cst_3 = arith.constant dense<0.000000e+00> : vector<128xf32>
    %3 = vector.multi_reduction <add>, %2, %cst_3 [0] : vector<1920x128xf32> to vector<128xf32>
    %4 = vector.shape_cast %3 : vector<128xf32> to vector<1x128xf32>
    %cst_4 = arith.constant 5.2083336E-4 : f32
    %5 = vector.broadcast %cst_4 : f32 to vector<1x128xf32>
    %6 = arith.mulf %4, %5 : vector<1x128xf32>
    %7 = vector.broadcast %6 : vector<1x128xf32> to vector<1920x128xf32>
    %8 = arith.subf %2, %7 : vector<1920x128xf32>
    %9 = arith.mulf %8, %8 : vector<1920x128xf32>
    %cst_5 = arith.constant dense<0.000000e+00> : vector<128xf32>
    %10 = vector.multi_reduction <add>, %9, %cst_5 [0] : vector<1920x128xf32> to vector<128xf32>
    %11 = vector.shape_cast %10 : vector<128xf32> to vector<1x128xf32>
    %cst_6 = arith.constant 5.2083336E-4 : f32
    %12 = vector.broadcast %cst_6 : f32 to vector<1x128xf32>
    %13 = arith.mulf %11, %12 : vector<1x128xf32>
    %c0_7 = arith.constant 0 : index
    %c0_8 = arith.constant 0 : index
    %14 = vector.load %arg2[%c0_7, %c0_8] : memref<1x128xf32, #tpu.memory_space<vmem>>, vector<1x128xf32>
    %cst_9 = arith.constant 9.99999974E-6 : f32
    %15 = vector.broadcast %cst_9 : f32 to vector<1x128xf32>
    %16 = arith.addf %13, %15 : vector<1x128xf32>
    %17 = math.rsqrt %16 : vector<1x128xf32>
    %18 = arith.mulf %14, %17 : vector<1x128xf32>
    %19 = vector.broadcast %18 : vector<1x128xf32> to vector<1920x128xf32>
    %20 = arith.mulf %2, %19 : vector<1920x128xf32>
    %c0_10 = arith.constant 0 : index
    %c0_11 = arith.constant 0 : index
    %21 = vector.load %arg3[%c0_10, %c0_11] : memref<1x128xf32, #tpu.memory_space<vmem>>, vector<1x128xf32>
    %22 = arith.mulf %6, %18 : vector<1x128xf32>
    %23 = arith.subf %21, %22 : vector<1x128xf32>
    %24 = vector.broadcast %23 : vector<1x128xf32> to vector<1920x128xf32>
    %25 = arith.addf %20, %24 : vector<1920x128xf32>
    %26 = vector.extract_strided_slice %25 {offsets = [0, 0], sizes = [320, 128], strides = [1, 1]} : vector<1920x128xf32> to vector<320x128xf32>
    %27 = vector.extract_strided_slice %25 {offsets = [320, 0], sizes = [320, 128], strides = [1, 1]} : vector<1920x128xf32> to vector<320x128xf32>
    %28 = arith.maximumf %26, %27 : vector<320x128xf32>
    %29 = vector.extract_strided_slice %25 {offsets = [640, 0], sizes = [320, 128], strides = [1, 1]} : vector<1920x128xf32> to vector<320x128xf32>
    %30 = arith.maximumf %28, %29 : vector<320x128xf32>
    %31 = vector.extract_strided_slice %25 {offsets = [960, 0], sizes = [320, 128], strides = [1, 1]} : vector<1920x128xf32> to vector<320x128xf32>
    %32 = arith.maximumf %30, %31 : vector<320x128xf32>
    %33 = vector.extract_strided_slice %25 {offsets = [1280, 0], sizes = [320, 128], strides = [1, 1]} : vector<1920x128xf32> to vector<320x128xf32>
    %34 = arith.maximumf %32, %33 : vector<320x128xf32>
    %35 = vector.extract_strided_slice %25 {offsets = [1600, 0], sizes = [320, 128], strides = [1, 1]} : vector<1920x128xf32> to vector<320x128xf32>
    %36 = arith.maximumf %34, %35 : vector<320x128xf32>
    %cst_12 = arith.constant 0.000000e+00 : f32
    %37 = vector.broadcast %cst_12 : f32 to vector<320x128xf32>
    %38 = arith.maximumf %36, %37 : vector<320x128xf32>
    %39 = vector.extract_strided_slice %38 {offsets = [0, 0], sizes = [320, 64], strides = [1, 1]} : vector<320x128xf32> to vector<320x64xf32>
    %40 = arith.truncf %39 : vector<320x64xf32> to vector<320x64xbf16>
    %c0_13 = arith.constant 0 : index
    %c0_14 = arith.constant 0 : index
    %41 = vector.load %arg4[%c0_13, %c0_14] : memref<320x64xbf16, #tpu.memory_space<vmem>>, vector<320x64xbf16>
    tpu.vector_store %arg4[%c0_13, %c0_14], %40 {strides = array<i32>} : memref<320x64xbf16, #tpu.memory_space<vmem>>, vector<320x64xbf16>,
    return
  }
}

module attributes {stable_mosaic.version = 11 : i64} {
  func.func @_conv_bn_pool_relu_kernel(%arg0: memref<144x1728xbf16, #tpu.memory_space<vmem>>, %arg1: memref<1728x128xbf16, #tpu.memory_space<vmem>>, %arg2: memref<1x128xf32, #tpu.memory_space<vmem>>, %arg3: memref<1x128xf32, #tpu.memory_space<vmem>>, %arg4: memref<48x64xbf16, #tpu.memory_space<vmem>>) attributes {dimension_semantics = [], scalar_prefetch = 0 : i64, scratch_operands = 0 : i64, tpu.core_type = #tpu.core_type<tc>} {
    %c0 = arith.constant 0 : index
    %c0_0 = arith.constant 0 : index
    %0 = vector.load %arg0[%c0, %c0_0] : memref<144x1728xbf16, #tpu.memory_space<vmem>>, vector<144x1728xbf16>
    %c0_1 = arith.constant 0 : index
    %c0_2 = arith.constant 0 : index
    %1 = vector.load %arg1[%c0_1, %c0_2] : memref<1728x128xbf16, #tpu.memory_space<vmem>>, vector<1728x128xbf16>
    %cst = arith.constant dense<0.000000e+00> : vector<144x128xf32>
    %2 = tpu.matmul %0, %1, %cst {dimension_numbers = #tpu.dot_dimension_numbers<[1], [0], [0], [1], [0, 0, 1, 1], [], []>} : vector<144x1728xbf16>, vector<1728x128xbf16>, vector<144x128xf32> -> vector<144x128xf32>
    %cst_3 = arith.constant dense<0.000000e+00> : vector<128xf32>
    %3 = vector.multi_reduction <add>, %2, %cst_3 [0] : vector<144x128xf32> to vector<128xf32>
    %4 = vector.shape_cast %3 : vector<128xf32> to vector<1x128xf32>
    %cst_4 = arith.constant 0.0069444445 : f32
    %5 = vector.broadcast %cst_4 : f32 to vector<1x128xf32>
    %6 = arith.mulf %4, %5 : vector<1x128xf32>
    %7 = vector.broadcast %6 : vector<1x128xf32> to vector<144x128xf32>
    %8 = arith.subf %2, %7 : vector<144x128xf32>
    %9 = arith.mulf %8, %8 : vector<144x128xf32>
    %cst_5 = arith.constant dense<0.000000e+00> : vector<128xf32>
    %10 = vector.multi_reduction <add>, %9, %cst_5 [0] : vector<144x128xf32> to vector<128xf32>
    %11 = vector.shape_cast %10 : vector<128xf32> to vector<1x128xf32>
    %cst_6 = arith.constant 0.0069444445 : f32
    %12 = vector.broadcast %cst_6 : f32 to vector<1x128xf32>
    %13 = arith.mulf %11, %12 : vector<1x128xf32>
    %c0_7 = arith.constant 0 : index
    %c0_8 = arith.constant 0 : index
    %14 = vector.load %arg2[%c0_7, %c0_8] : memref<1x128xf32, #tpu.memory_space<vmem>>, vector<1x128xf32>
    %cst_9 = arith.constant 9.99999974E-6 : f32
    %15 = vector.broadcast %cst_9 : f32 to vector<1x128xf32>
    %16 = arith.addf %13, %15 : vector<1x128xf32>
    %17 = math.rsqrt %16 : vector<1x128xf32>
    %18 = arith.mulf %14, %17 : vector<1x128xf32>
    %19 = vector.broadcast %18 : vector<1x128xf32> to vector<144x128xf32>
    %20 = arith.mulf %2, %19 : vector<144x128xf32>
    %c0_10 = arith.constant 0 : index
    %c0_11 = arith.constant 0 : index
    %21 = vector.load %arg3[%c0_10, %c0_11] : memref<1x128xf32, #tpu.memory_space<vmem>>, vector<1x128xf32>
    %22 = arith.mulf %6, %18 : vector<1x128xf32>
    %23 = arith.subf %21, %22 : vector<1x128xf32>
    %24 = vector.broadcast %23 : vector<1x128xf32> to vector<144x128xf32>
    %25 = arith.addf %20, %24 : vector<144x128xf32>
    %26 = vector.extract_strided_slice %25 {offsets = [0, 0], sizes = [48, 128], strides = [1, 1]} : vector<144x128xf32> to vector<48x128xf32>
    %27 = vector.extract_strided_slice %25 {offsets = [48, 0], sizes = [48, 128], strides = [1, 1]} : vector<144x128xf32> to vector<48x128xf32>
    %28 = arith.maximumf %26, %27 : vector<48x128xf32>
    %29 = vector.extract_strided_slice %25 {offsets = [96, 0], sizes = [48, 128], strides = [1, 1]} : vector<144x128xf32> to vector<48x128xf32>
    %30 = arith.maximumf %28, %29 : vector<48x128xf32>
    %cst_12 = arith.constant 0.000000e+00 : f32
    %31 = vector.broadcast %cst_12 : f32 to vector<48x128xf32>
    %32 = arith.maximumf %30, %31 : vector<48x128xf32>
    %33 = vector.extract_strided_slice %32 {offsets = [0, 0], sizes = [48, 64], strides = [1, 1]} : vector<48x128xf32> to vector<48x64xf32>
    %34 = arith.truncf %33 : vector<48x64xf32> to vector<48x64xbf16>
    %c0_13 = arith.constant 0 : index
    %c0_14 = arith.constant 0 : index
    %35 = vector.load %arg4[%c0_13, %c0_14] : memref<48x64xbf16, #tpu.memory_space<vmem>>, vector<48x64xbf16>
    tpu.vector_store %arg4[%c0_13, %c0_14], %34 {strides = array<i32>} : memref<48x64xbf16, #tpu.memory_space<vmem>>, vector<48x64xbf16>,
    return
  }
}

module attributes {stable_mosaic.version = 11 : i64} {
  func.func @_fc_fused_kernel(%arg0: memref<2x1536xbf16, #tpu.memory_space<vmem>>, %arg1: memref<1536x1024xbf16, #tpu.memory_space<vmem>>, %arg2: memref<1x1024xf32, #tpu.memory_space<vmem>>, %arg3: memref<1024x512xbf16, #tpu.memory_space<vmem>>, %arg4: memref<1x512xf32, #tpu.memory_space<vmem>>, %arg5: memref<512x128xbf16, #tpu.memory_space<vmem>>, %arg6: memref<1x128xf32, #tpu.memory_space<vmem>>, %arg7: memref<2x512xbf16, #tpu.memory_space<vmem>>, %arg8: memref<2x128xf32, #tpu.memory_space<vmem>>) attributes {dimension_semantics = [], scalar_prefetch = 0 : i64, scratch_operands = 0 : i64, tpu.core_type = #tpu.core_type<tc>} {
    %c0 = arith.constant 0 : index
    %c0_0 = arith.constant 0 : index
    %0 = vector.load %arg0[%c0, %c0_0] : memref<2x1536xbf16, #tpu.memory_space<vmem>>, vector<2x1536xbf16>
    %c0_1 = arith.constant 0 : index
    %c0_2 = arith.constant 0 : index
    %1 = vector.load %arg1[%c0_1, %c0_2] : memref<1536x1024xbf16, #tpu.memory_space<vmem>>, vector<1536x1024xbf16>
    %cst = arith.constant dense<0.000000e+00> : vector<2x1024xf32>
    %2 = tpu.matmul %0, %1, %cst {dimension_numbers = #tpu.dot_dimension_numbers<[1], [0], [0], [1], [0, 0, 1, 1], [], []>} : vector<2x1536xbf16>, vector<1536x1024xbf16>, vector<2x1024xf32> -> vector<2x1024xf32>
    %c0_3 = arith.constant 0 : index
    %c0_4 = arith.constant 0 : index
    %3 = vector.load %arg2[%c0_3, %c0_4] : memref<1x1024xf32, #tpu.memory_space<vmem>>, vector<1x1024xf32>
    %4 = vector.broadcast %3 : vector<1x1024xf32> to vector<2x1024xf32>
    %5 = arith.addf %2, %4 : vector<2x1024xf32>
    %cst_5 = arith.constant 0.000000e+00 : f32
    %6 = vector.broadcast %cst_5 : f32 to vector<2x1024xf32>
    %7 = arith.maximumf %5, %6 : vector<2x1024xf32>
    %8 = arith.truncf %7 : vector<2x1024xf32> to vector<2x1024xbf16>
    %c0_6 = arith.constant 0 : index
    %c0_7 = arith.constant 0 : index
    %9 = vector.load %arg3[%c0_6, %c0_7] : memref<1024x512xbf16, #tpu.memory_space<vmem>>, vector<1024x512xbf16>
    %cst_8 = arith.constant dense<0.000000e+00> : vector<2x512xf32>
    %10 = tpu.matmul %8, %9, %cst_8 {dimension_numbers = #tpu.dot_dimension_numbers<[1], [0], [0], [1], [0, 0, 1, 1], [], []>} : vector<2x1024xbf16>, vector<1024x512xbf16>, vector<2x512xf32> -> vector<2x512xf32>
    %c0_9 = arith.constant 0 : index
    %c0_10 = arith.constant 0 : index
    %11 = vector.load %arg4[%c0_9, %c0_10] : memref<1x512xf32, #tpu.memory_space<vmem>>, vector<1x512xf32>
    %12 = vector.broadcast %11 : vector<1x512xf32> to vector<2x512xf32>
    %13 = arith.addf %10, %12 : vector<2x512xf32>
    %cst_11 = arith.constant 0.000000e+00 : f32
    %14 = vector.broadcast %cst_11 : f32 to vector<2x512xf32>
    %15 = arith.maximumf %13, %14 : vector<2x512xf32>
    %c0_12 = arith.constant 0 : index
    %c0_13 = arith.constant 0 : index
    %16 = vector.load %arg7[%c0_12, %c0_13] : memref<2x512xbf16, #tpu.memory_space<vmem>>, vector<2x512xbf16>
    %17 = arith.extf %16 : vector<2x512xbf16> to vector<2x512xf32>
    %18 = arith.mulf %15, %17 : vector<2x512xf32>
    %19 = arith.truncf %18 : vector<2x512xf32> to vector<2x512xbf16>
    %c0_14 = arith.constant 0 : index
    %c0_15 = arith.constant 0 : index
    %20 = vector.load %arg5[%c0_14, %c0_15] : memref<512x128xbf16, #tpu.memory_space<vmem>>, vector<512x128xbf16>
    %cst_16 = arith.constant dense<0.000000e+00> : vector<2x128xf32>
    %21 = tpu.matmul %19, %20, %cst_16 {dimension_numbers = #tpu.dot_dimension_numbers<[1], [0], [0], [1], [0, 0, 1, 1], [], []>} : vector<2x512xbf16>, vector<512x128xbf16>, vector<2x128xf32> -> vector<2x128xf32>
    %c0_17 = arith.constant 0 : index
    %c0_18 = arith.constant 0 : index
    %22 = vector.load %arg6[%c0_17, %c0_18] : memref<1x128xf32, #tpu.memory_space<vmem>>, vector<1x128xf32>
    %23 = vector.broadcast %22 : vector<1x128xf32> to vector<2x128xf32>
    %24 = arith.addf %21, %23 : vector<2x128xf32>
    %cst_19 = arith.constant 0.000000e+00 : f32
    %25 = vector.broadcast %cst_19 : f32 to vector<2x128xf32>
    %26 = arith.subf %25, %24 : vector<2x128xf32>
    %27 = math.exp %26 : vector<2x128xf32>
    %cst_20 = arith.constant 1.000000e+00 : f32
    %28 = vector.broadcast %cst_20 : f32 to vector<2x128xf32>
    %29 = arith.addf %28, %27 : vector<2x128xf32>
    %cst_21 = arith.constant 1.000000e+00 : f32
    %30 = vector.broadcast %cst_21 : f32 to vector<2x128xf32>
    %31 = arith.divf %30, %29 : vector<2x128xf32>
    %c0_22 = arith.constant 0 : index
    %c0_23 = arith.constant 0 : index
    %32 = vector.load %arg8[%c0_22, %c0_23] : memref<2x128xf32, #tpu.memory_space<vmem>>, vector<2x128xf32>
    tpu.vector_store %arg8[%c0_22, %c0_23], %31 {strides = array<i32>} : memref<2x128xf32, #tpu.memory_space<vmem>>, vector<2x128xf32>,
    return
  }
}

</mosaic_0001>

<llo_original>
// kernel: notesnet_forward.3
$region0: #{notesnet_forward.3}
  #allocation0 [shape = 'u32[]', space=smem, size = 0x4, offset = 0x4, fixed_abs, tag = 'smem constant byte address 0x4 - core index']
  #allocation1 [shape = 'u32[144,128]{1,0:T(1,128)}', space=vmem, size = 0x12000, scoped, tag = 'internal scratch']
  %s0 = inlined_call_operand.vmem [shape: bf16[1920,75], index: 0, kind: input, shape index: {}]
  %s1 = inlined_call_operand.vmem [shape: bf16[75,128], index: 1, kind: input, shape index: {}]
  %s2 = inlined_call_operand.vmem [shape: f32[1,128], index: 2, kind: input, shape index: {}]
  %s3 = inlined_call_operand.vmem [shape: f32[1,128], index: 3, kind: input, shape index: {}]
  %s4 = inlined_call_operand.vmem [shape: bf16[320,64], index: 4, kind: output, shape index: {}]
  %s5 = sld [smem:[#allocation0]]
  $region26: #{notesnet_forward.3} parent=0
    _
  %s7 = ssub.s32 1, %s5
  %s8 = scalar_select 0, %s7, %s5
  // Predicated region
  $region2: #{notesnet_forward.3} parent=0 // pred_check
    _
  $region3: #{notesnet_forward.3} parent=0 // pred_check_branch
    %10 = sbr.rel (0) target = $region5
  $region4: #{notesnet_forward.3} parent=0 // pred_region
    _
  $region5: #{notesnet_forward.3} parent=0 // pred_fallthru
    _
  // Predicated region
  $region6: #{notesnet_forward.3} parent=0 // pred_check
    _
  $region7: #{notesnet_forward.3} parent=0 // pred_check_branch
    %12 = sbr.rel (0) target = $region9
  $region8: #{notesnet_forward.3} parent=0 // pred_region
    _
  $region9: #{notesnet_forward.3} parent=0 // pred_fallthru
    _
  // Predicated region
  $region10: #{notesnet_forward.3} parent=0 // pred_check
    _
  $region11: #{notesnet_forward.3} parent=0 // pred_check_branch
    %14 = sbr.rel (0) target = $region13
  $region12: #{notesnet_forward.3} parent=0 // pred_region
    _
  $region13: #{notesnet_forward.3} parent=0 // pred_fallthru
    _
  // Predicated region
  $region14: #{notesnet_forward.3} parent=0 // pred_check
    _
  $region15: #{notesnet_forward.3} parent=0 // pred_check_branch
    %16 = sbr.rel (0) target = $region17
  $region16: #{notesnet_forward.3} parent=0 // pred_region
    _
  $region17: #{notesnet_forward.3} parent=0 // pred_fallthru
    _
  %v18 = vld [vmem:[%s0] sm:$0xf]
  %v19 = vld [vmem:[%s0 + $0x4] sm:$0xf]
  %v20 = vld [vmem:[%s0 + $0x8] sm:$0xf]
  %v21 = vld [vmem:[%s0 + $0xc] sm:$0xf]
  %v22 = vld [vmem:[%s0 + $0x10] sm:$0xf]
  %v23 = vld [vmem:[%s0 + $0x14] sm:$0xf]
  %v24 = vld [vmem:[%s0 + $0x18] sm:$0xf]
  %v25 = vld [vmem:[%s0 + $0x1c] sm:$0xf]
  %v26 = vld [vmem:[%s0 + $0x20] sm:$0xf]
  %v27 = vld [vmem:[%s0 + $0x24] sm:$0xf]
  %v28 = vld [vmem:[%s0 + $0x28] sm:$0xf]
  %v29 = vld [vmem:[%s0 + $0x2c] sm:$0xf]
  %v30 = vld [vmem:[%s0 + $0x30] sm:$0xf]
  %v31 = vld [vmem:[%s0 + $0x34] sm:$0xf]
  %v32 = vld [vmem:[%s0 + $0x38] sm:$0xf]
  %v33 = vld [vmem:[%s0 + $0x3c] sm:$0xf]
  %v34 = vld [vmem:[%s0 + $0x40] sm:$0xf]
  %v35 = vld [vmem:[%s0 + $0x44] sm:$0xf]
  %v36 = vld [vmem:[%s0 + $0x48] sm:$0xf]
  %v37 = vld [vmem:[%s0 + $0x4c] sm:$0xf]
  %v38 = vld [vmem:[%s0 + $0x50] sm:$0xf]
  %v39 = vld [vmem:[%s0 + $0x54] sm:$0xf]
  %v40 = vld [vmem:[%s0 + $0x58] sm:$0xf]
  %v41 = vld [vmem:[%s0 + $0x5c] sm:$0xf]
  %v42 = vld [vmem:[%s0 + $0x60] sm:$0xf]
  %v43 = vld [vmem:[%s0 + $0x64] sm:$0xf]
  %v44 = vld [vmem:[%s0 + $0x68] sm:$0xf]
  %v45 = vld [vmem:[%s0 + $0x6c] sm:$0xf]
  %v46 = vld [vmem:[%s0 + $0x70] sm:$0xf]
  %v47 = vld [vmem:[%s0 + $0x74] sm:$0xf]
  %v48 = vld [vmem:[%s0 + $0x78] sm:$0xf]
  %v49 = vld [vmem:[%s0 + $0x7c] sm:$0xf]
  %v50 = vld [vmem:[%s0 + $0x80] sm:$0xf]
  %v51 = vld [vmem:[%s0 + $0x84] sm:$0xf]
  %v52 = vld [vmem:[%s0 + $0x88] sm:$0xf]
  %v53 = vld [vmem:[%s0 + $0x8c] sm:$0xf]
  %v54 = vld [vmem:[%s0 + $0x90] sm:$0xf]
  %v55 = vld [vmem:[%s0 + $0x94] sm:$0xf]
  %v56 = vld [vmem:[%s0 + $0x98] sm:$0xf]
  %v57 = vld [vmem:[%s0 + $0x9c] sm:$0xf]
  %v58 = vld [vmem:[%s0 + $0xa0] sm:$0xf]
  %v59 = vld [vmem:[%s0 + $0xa4] sm:$0xf]
  %v60 = vld [vmem:[%s0 + $0xa8] sm:$0xf]
  %v61 = vld [vmem:[%s0 + $0xac] sm:$0xf]
  %v62 = vld [vmem:[%s0 + $0xb0] sm:$0xf]
  %v63 = vld [vmem:[%s0 + $0xb4] sm:$0xf]
  %v64 = vld [vmem:[%s0 + $0xb8] sm:$0xf]
  %v65 = vld [vmem:[%s0 + $0xbc] sm:$0xf]
  %v66 = vld [vmem:[%s0 + $0xc0] sm:$0xf]
  %v67 = vld [vmem:[%s0 + $0xc4] sm:$0xf]
  %v68 = vld [vmem:[%s0 + $0xc8] sm:$0xf]
  %v69 = vld [vmem:[%s0 + $0xcc] sm:$0xf]
  %v70 = vld [vmem:[%s0 + $0xd0] sm:$0xf]
  %v71 = vld [vmem:[%s0 + $0xd4] sm:$0xf]
  %v72 = vld [vmem:[%s0 + $0xd8] sm:$0xf]
  %v73 = vld [vmem:[%s0 + $0xdc] sm:$0xf]
  %v74 = vld [vmem:[%s0 + $0xe0] sm:$0xf]
  %v75 = vld [vmem:[%s0 + $0xe4] sm:$0xf]
  %v76 = vld [vmem:[%s0 + $0xe8] sm:$0xf]
  %v77 = vld [vmem:[%s0 + $0xec] sm:$0xf]
  %v78 = vld [vmem:[%s0 + $0xf0] sm:$0xf]
  %v79 = vld [vmem:[%s0 + $0xf4] sm:$0xf]
  %v80 = vld [vmem:[%s0 + $0xf8] sm:$0xf]
  %v81 = vld [vmem:[%s0 + $0xfc] sm:$0xf]
  %v82 = vld [vmem:[%s0 + $0x100] sm:$0xf]
  %v83 = vld [vmem:[%s0 + $0x104] sm:$0xf]
  %v84 = vld [vmem:[%s0 + $0x108] sm:$0xf]
  %v85 = vld [vmem:[%s0 + $0x10c] sm:$0xf]
  %v86 = vld [vmem:[%s0 + $0x110] sm:$0xf]
  %v87 = vld [vmem:[%s0 + $0x114] sm:$0xf]
  %v88 = vld [vmem:[%s0 + $0x118] sm:$0xf]
  %v89 = vld [vmem:[%s0 + $0x11c] sm:$0xf]
  %v90 = vld [vmem:[%s0 + $0x120] sm:$0xf]
  %v91 = vld [vmem:[%s0 + $0x124] sm:$0xf]
  %v92 = vld [vmem:[%s0 + $0x128] sm:$0xf]
  %v93 = vld [vmem:[%s0 + $0x12c] sm:$0xf]
  %v94 = vld [vmem:[%s0 + $0x130] sm:$0xf]
  %v95 = vld [vmem:[%s0 + $0x134] sm:$0xf]
  %v96 = vld [vmem:[%s0 + $0x138] sm:$0xf]
  %v97 = vld [vmem:[%s0 + $0x13c] sm:$0xf]
  %v98 = vld [vmem:[%s0 + $0x140] sm:$0xf]
  %v99 = vld [vmem:[%s0 + $0x144] sm:$0xf]
  %v100 = vld [vmem:[%s0 + $0x148] sm:$0xf]
  %v101 = vld [vmem:[%s0 + $0x14c] sm:$0xf]
  %v102 = vld [vmem:[%s0 + $0x150] sm:$0xf]
  %v103 = vld [vmem:[%s0 + $0x154] sm:$0xf]
  %v104 = vld [vmem:[%s0 + $0x158] sm:$0xf]
  %v105 = vld [vmem:[%s0 + $0x15c] sm:$0xf]
  %v106 = vld [vmem:[%s0 + $0x160] sm:$0xf]
  %v107 = vld [vmem:[%s0 + $0x164] sm:$0xf]
  %v108 = vld [vmem:[%s0 + $0x168] sm:$0xf]
  %v109 = vld [vmem:[%s0 + $0x16c] sm:$0xf]
  %v110 = vld [vmem:[%s0 + $0x170] sm:$0xf]
  %v111 = vld [vmem:[%s0 + $0x174] sm:$0xf]
  %v112 = vld [vmem:[%s0 + $0x178] sm:$0xf]
  %v113 = vld [vmem:[%s0 + $0x17c] sm:$0xf]
  %v114 = vld [vmem:[%s0 + $0x180] sm:$0xf]
  %v115 = vld [vmem:[%s0 + $0x184] sm:$0xf]
  %v116 = vld [vmem:[%s0 + $0x188] sm:$0xf]
  %v117 = vld [vmem:[%s0 + $0x18c] sm:$0xf]
  %v118 = vld [vmem:[%s0 + $0x190] sm:$0xf]
  %v119 = vld [vmem:[%s0 + $0x194] sm:$0xf]
  %v120 = vld [vmem:[%s0 + $0x198] sm:$0xf]
  %v121 = vld [vmem:[%s0 + $0x19c] sm:$0xf]
  %v122 = vld [vmem:[%s0 + $0x1a0] sm:$0xf]
  %v123 = vld [vmem:[%s0 + $0x1a4] sm:$0xf]
  %v124 = vld [vmem:[%s0 + $0x1a8] sm:$0xf]
  %v125 = vld [vmem:[%s0 + $0x1ac] sm:$0xf]
  %v126 = vld [vmem:[%s0 + $0x1b0] sm:$0xf]
  %v127 = vld [vmem:[%s0 + $0x1b4] sm:$0xf]
  %v128 = vld [vmem:[%s0 + $0x1b8] sm:$0xf]
  %v129 = vld [vmem:[%s0 + $0x1bc] sm:$0xf]
  %v130 = vld [vmem:[%s0 + $0x1c0] sm:$0xf]
  %v131 = vld [vmem:[%s0 + $0x1c4] sm:$0xf]
  %v132 = vld [vmem:[%s0 + $0x1c8] sm:$0xf]
  %v133 = vld [vmem:[%s0 + $0x1cc] sm:$0xf]
  %v134 = vld [vmem:[%s0 + $0x1d0] sm:$0xf]
  %v135 = vld [vmem:[%s0 + $0x1d4] sm:$0xf]
  %v136 = vld [vmem:[%s0 + $0x1d8] sm:$0xf]
  %v137 = vld [vmem:[%s0 + $0x1dc] sm:$0xf]
  %v138 = vld [vmem:[%s0 + $0x1e0] sm:$0xf]
  %v139 = vld [vmem:[%s0 + $0x1e4] sm:$0xf]
  %v140 = vld [vmem:[%s0 + $0x1e8] sm:$0xf]
  %v141 = vld [vmem:[%s0 + $0x1ec] sm:$0xf]
  %v142 = vld [vmem:[%s0 + $0x1f0] sm:$0xf]
  %v143 = vld [vmem:[%s0 + $0x1f4] sm:$0xf]
  %v144 = vld [vmem:[%s0 + $0x1f8] sm:$0xf]
  %v145 = vld [vmem:[%s0 + $0x1fc] sm:$0xf]
  %v146 = vld [vmem:[%s0 + $0x200] sm:$0xf]
  %v147 = vld [vmem:[%s0 + $0x204] sm:$0xf]
  %v148 = vld [vmem:[%s0 + $0x208] sm:$0xf]
  %v149 = vld [vmem:[%s0 + $0x20c] sm:$0xf]
  %v150 = vld [vmem:[%s0 + $0x210] sm:$0xf]
  %v151 = vld [vmem:[%s0 + $0x214] sm:$0xf]
  %v152 = vld [vmem:[%s0 + $0x218] sm:$0xf]
  %v153 = vld [vmem:[%s0 + $0x21c] sm:$0xf]
  %v154 = vld [vmem:[%s0 + $0x220] sm:$0xf]
  %v155 = vld [vmem:[%s0 + $0x224] sm:$0xf]
  %v156 = vld [vmem:[%s0 + $0x228] sm:$0xf]
  %v157 = vld [vmem:[%s0 + $0x22c] sm:$0xf]
  %v158 = vld [vmem:[%s0 + $0x230] sm:$0xf]
  %v159 = vld [vmem:[%s0 + $0x234] sm:$0xf]
  %v160 = vld [vmem:[%s0 + $0x238] sm:$0xf]
  %v161 = vld [vmem:[%s0 + $0x23c] sm:$0xf]
  %v162 = vld [vmem:[%s0 + $0x240] sm:$0xf]
  %v163 = vld [vmem:[%s0 + $0x244] sm:$0xf]
  %v164 = vld [vmem:[%s0 + $0x248] sm:$0xf]
  %v165 = vld [vmem:[%s0 + $0x24c] sm:$0xf]
  %v166 = vld [vmem:[%s0 + $0x250] sm:$0xf]
  %v167 = vld [vmem:[%s0 + $0x254] sm:$0xf]
  %v168 = vld [vmem:[%s0 + $0x258] sm:$0xf]
  %v169 = vld [vmem:[%s0 + $0x25c] sm:$0xf]
  %v170 = vld [vmem:[%s0 + $0x260] sm:$0xf]
  %v171 = vld [vmem:[%s0 + $0x264] sm:$0xf]
  %v172 = vld [vmem:[%s0 + $0x268] sm:$0xf]
  %v173 = vld [vmem:[%s0 + $0x26c] sm:$0xf]
  %v174 = vld [vmem:[%s0 + $0x270] sm:$0xf]
  %v175 = vld [vmem:[%s0 + $0x274] sm:$0xf]
  %v176 = vld [vmem:[%s0 + $0x278] sm:$0xf]
  %v177 = vld [vmem:[%s0 + $0x27c] sm:$0xf]
  %v178 = vld [vmem:[%s0 + $0x280] sm:$0xf]
  %v179 = vld [vmem:[%s0 + $0x284] sm:$0xf]
  %v180 = vld [vmem:[%s0 + $0x288] sm:$0xf]
  %v181 = vld [vmem:[%s0 + $0x28c] sm:$0xf]
  %v182 = vld [vmem:[%s0 + $0x290] sm:$0xf]
  %v183 = vld [vmem:[%s0 + $0x294] sm:$0xf]
  %v184 = vld [vmem:[%s0 + $0x298] sm:$0xf]
  %v185 = vld [vmem:[%s0 + $0x29c] sm:$0xf]
  %v186 = vld [vmem:[%s0 + $0x2a0] sm:$0xf]
  %v187 = vld [vmem:[%s0 + $0x2a4] sm:$0xf]
  %v188 = vld [vmem:[%s0 + $0x2a8] sm:$0xf]
  %v189 = vld [vmem:[%s0 + $0x2ac] sm:$0xf]
  %v190 = vld [vmem:[%s0 + $0x2b0] sm:$0xf]
  %v191 = vld [vmem:[%s0 + $0x2b4] sm:$0xf]
  %v192 = vld [vmem:[%s0 + $0x2b8] sm:$0xf]
  %v193 = vld [vmem:[%s0 + $0x2bc] sm:$0xf]
  %v194 = vld [vmem:[%s0 + $0x2c0] sm:$0xf]
  %v195 = vld [vmem:[%s0 + $0x2c4] sm:$0xf]
  %v196 = vld [vmem:[%s0 + $0x2c8] sm:$0xf]
  %v197 = vld [vmem:[%s0 + $0x2cc] sm:$0xf]
  %v198 = vld [vmem:[%s0 + $0x2d0] sm:$0xf]
  %v199 = vld [vmem:[%s0 + $0x2d4] sm:$0xf]
  %v200 = vld [vmem:[%s0 + $0x2d8] sm:$0xf]
  %v201 = vld [vmem:[%s0 + $0x2dc] sm:$0xf]
  %v202 = vld [vmem:[%s0 + $0x2e0] sm:$0xf]
  %v203 = vld [vmem:[%s0 + $0x2e4] sm:$0xf]
  %v204 = vld [vmem:[%s0 + $0x2e8] sm:$0xf]
  %v205 = vld [vmem:[%s0 + $0x2ec] sm:$0xf]
  %v206 = vld [vmem:[%s0 + $0x2f0] sm:$0xf]
  %v207 = vld [vmem:[%s0 + $0x2f4] sm:$0xf]
  %v208 = vld [vmem:[%s0 + $0x2f8] sm:$0xf]
  %v209 = vld [vmem:[%s0 + $0x2fc] sm:$0xf]
  %v210 = vld [vmem:[%s0 + $0x300] sm:$0xf]
  %v211 = vld [vmem:[%s0 + $0x304] sm:$0xf]
  %v212 = vld [vmem:[%s0 + $0x308] sm:$0xf]
  %v213 = vld [vmem:[%s0 + $0x30c] sm:$0xf]
  %v214 = vld [vmem:[%s0 + $0x310] sm:$0xf]
  %v215 = vld [vmem:[%s0 + $0x314] sm:$0xf]
  %v216 = vld [vmem:[%s0 + $0x318] sm:$0xf]
  %v217 = vld [vmem:[%s0 + $0x31c] sm:$0xf]
  %v218 = vld [vmem:[%s0 + $0x320] sm:$0xf]
  %v219 = vld [vmem:[%s0 + $0x324] sm:$0xf]
  %v220 = vld [vmem:[%s0 + $0x328] sm:$0xf]
  %v221 = vld [vmem:[%s0 + $0x32c] sm:$0xf]
  %v222 = vld [vmem:[%s0 + $0x330] sm:$0xf]
  %v223 = vld [vmem:[%s0 + $0x334] sm:$0xf]
  %v224 = vld [vmem:[%s0 + $0x338] sm:$0xf]
  %v225 = vld [vmem:[%s0 + $0x33c] sm:$0xf]
  %v226 = vld [vmem:[%s0 + $0x340] sm:$0xf]
  %v227 = vld [vmem:[%s0 + $0x344] sm:$0xf]
  %v228 = vld [vmem:[%s0 + $0x348] sm:$0xf]
  %v229 = vld [vmem:[%s0 + $0x34c] sm:$0xf]
  %v230 = vld [vmem:[%s0 + $0x350] sm:$0xf]
  %v231 = vld [vmem:[%s0 + $0x354] sm:$0xf]
  %v232 = vld [vmem:[%s0 + $0x358] sm:$0xf]
  %v233 = vld [vmem:[%s0 + $0x35c] sm:$0xf]
  %v234 = vld [vmem:[%s0 + $0x360] sm:$0xf]
  %v235 = vld [vmem:[%s0 + $0x364] sm:$0xf]
  %v236 = vld [vmem:[%s0 + $0x368] sm:$0xf]
  %v237 = vld [vmem:[%s0 + $0x36c] sm:$0xf]
  %v238 = vld [vmem:[%s0 + $0x370] sm:$0xf]
  %v239 = vld [vmem:[%s0 + $0x374] sm:$0xf]
  %v240 = vld [vmem:[%s0 + $0x378] sm:$0xf]
  %v241 = vld [vmem:[%s0 + $0x37c] sm:$0xf]
  %v242 = vld [vmem:[%s0 + $0x380] sm:$0xf]
  %v243 = vld [vmem:[%s0 + $0x384] sm:$0xf]
  %v244 = vld [vmem:[%s0 + $0x388] sm:$0xf]
  %v245 = vld [vmem:[%s0 + $0x38c] sm:$0xf]
  %v246 = vld [vmem:[%s0 + $0x390] sm:$0xf]
  %v247 = vld [vmem:[%s0 + $0x394] sm:$0xf]
  %v248 = vld [vmem:[%s0 + $0x398] sm:$0xf]
  %v249 = vld [vmem:[%s0 + $0x39c] sm:$0xf]
  %v250 = vld [vmem:[%s0 + $0x3a0] sm:$0xf]
  %v251 = vld [vmem:[%s0 + $0x3a4] sm:$0xf]
  %v252 = vld [vmem:[%s0 + $0x3a8] sm:$0xf]
  %v253 = vld [vmem:[%s0 + $0x3ac] sm:$0xf]
  %v254 = vld [vmem:[%s0 + $0x3b0] sm:$0xf]
  %v255 = vld [vmem:[%s0 + $0x3b4] sm:$0xf]
  %v256 = vld [vmem:[%s0 + $0x3b8] sm:$0xf]
  %v257 = vld [vmem:[%s0 + $0x3bc] sm:$0xf]
  %v258 = vld [vmem:[%s1] sm:$0xf]
  %v259 = vld [vmem:[%s1 + $0x4] sm:$0xf]
  %v260 = vld [vmem:[%s1 + $0x8] sm:$0xf]
  %v261 = vld [vmem:[%s1 + $0xc] sm:$0xf]
  %v262 = vld [vmem:[%s1 + $0x10] sm:$0xf]
  %v263 = vld [vmem:[%s1 + $0x14] sm:$0xf]
  %v264 = vld [vmem:[%s1 + $0x18] sm:$0xf]
  %v265 = vld [vmem:[%s1 + $0x1c] sm:$0xf]
  %v266 = vld [vmem:[%s1 + $0x20] sm:$0xf]
  %v267 = vld [vmem:[%s1 + $0x24] sm:$0x3]
  %v508 = vunpack.c.l.b16 %v18
  %v509 = vunpack.c.l.b16 %v19
  %v510 = vunpack.c.l.b16 %v20
  %v511 = vunpack.c.l.b16 %v21
  %v512 = vunpack.c.l.b16 %v22
  %v513 = vunpack.c.l.b16 %v23
  %v514 = vunpack.c.l.b16 %v24
  %v515 = vunpack.c.l.b16 %v25
  %v516 = vunpack.c.l.b16 %v26
  %v517 = vunpack.c.l.b16 %v27
  %v518 = vunpack.c.l.b16 %v28
  %v519 = vunpack.c.l.b16 %v29
  %v520 = vunpack.c.l.b16 %v30
  %v521 = vunpack.c.l.b16 %v31
  %v522 = vunpack.c.l.b16 %v32
  %v523 = vunpack.c.l.b16 %v33
  %v524 = vunpack.c.l.b16 %v34
  %v525 = vunpack.c.l.b16 %v35
  %v526 = vunpack.c.l.b16 %v36
  %v527 = vunpack.c.l.b16 %v37
  %v528 = vunpack.c.l.b16 %v38
  %v529 = vunpack.c.l.b16 %v39
  %v530 = vunpack.c.l.b16 %v40
  %v531 = vunpack.c.l.b16 %v41
  %v532 = vunpack.c.l.b16 %v42
  %v533 = vunpack.c.l.b16 %v43
  %v534 = vunpack.c.l.b16 %v44
  %v535 = vunpack.c.l.b16 %v45
  %v536 = vunpack.c.l.b16 %v46
  %v537 = vunpack.c.l.b16 %v47
  %v538 = vunpack.c.l.b16 %v48
  %v539 = vunpack.c.l.b16 %v49
  %v540 = vunpack.c.l.b16 %v50
  %v541 = vunpack.c.l.b16 %v51
  %v542 = vunpack.c.l.b16 %v52
  %v543 = vunpack.c.l.b16 %v53
  %v544 = vunpack.c.l.b16 %v54
  %v545 = vunpack.c.l.b16 %v55
  %v546 = vunpack.c.l.b16 %v56
  %v547 = vunpack.c.l.b16 %v57
  %v548 = vunpack.c.l.b16 %v58
  %v549 = vunpack.c.l.b16 %v59
  %v550 = vunpack.c.l.b16 %v60
  %v551 = vunpack.c.l.b16 %v61
  %v552 = vunpack.c.l.b16 %v62
  %v553 = vunpack.c.l.b16 %v63
  %v554 = vunpack.c.l.b16 %v64
  %v555 = vunpack.c.l.b16 %v65
  %v556 = vunpack.c.l.b16 %v66
  %v557 = vunpack.c.l.b16 %v67
  %v558 = vunpack.c.l.b16 %v68
  %v559 = vunpack.c.l.b16 %v69
  %v560 = vunpack.c.l.b16 %v70
  %v561 = vunpack.c.l.b16 %v71
  %v562 = vunpack.c.l.b16 %v72
  %v563 = vunpack.c.l.b16 %v73
  %v564 = vunpack.c.l.b16 %v74
  %v565 = vunpack.c.l.b16 %v75
  %v566 = vunpack.c.l.b16 %v76
  %v567 = vunpack.c.l.b16 %v77
  %v568 = vunpack.c.l.b16 %v78
  %v569 = vunpack.c.l.b16 %v79
  %v570 = vunpack.c.l.b16 %v80
  %v571 = vunpack.c.l.b16 %v81
  %v572 = vunpack.c.l.b16 %v82
  %v573 = vunpack.c.l.b16 %v83
  %v574 = vunpack.c.l.b16 %v84
  %v575 = vunpack.c.l.b16 %v85
  %v576 = vunpack.c.l.b16 %v86
  %v577 = vunpack.c.l.b16 %v87
  %v578 = vunpack.c.l.b16 %v88
  %v579 = vunpack.c.l.b16 %v89
  %v580 = vunpack.c.l.b16 %v90
  %v581 = vunpack.c.l.b16 %v91
  %v582 = vunpack.c.l.b16 %v92
  %v583 = vunpack.c.l.b16 %v93
  %v584 = vunpack.c.l.b16 %v94
  %v585 = vunpack.c.l.b16 %v95
  %v586 = vunpack.c.l.b16 %v96
  %v587 = vunpack.c.l.b16 %v97
  %v588 = vunpack.c.l.b16 %v98
  %v589 = vunpack.c.l.b16 %v99
  %v590 = vunpack.c.l.b16 %v100
  %v591 = vunpack.c.l.b16 %v101
  %v592 = vunpack.c.l.b16 %v102
  %v593 = vunpack.c.l.b16 %v103
  %v594 = vunpack.c.l.b16 %v104
  %v595 = vunpack.c.l.b16 %v105
  %v596 = vunpack.c.l.b16 %v106
  %v597 = vunpack.c.l.b16 %v107
  %v598 = vunpack.c.l.b16 %v108
  %v599 = vunpack.c.l.b16 %v109
  %v600 = vunpack.c.l.b16 %v110
  %v601 = vunpack.c.l.b16 %v111
  %v602 = vunpack.c.l.b16 %v112
  %v603 = vunpack.c.l.b16 %v113
  %v604 = vunpack.c.l.b16 %v114
  %v605 = vunpack.c.l.b16 %v115
  %v606 = vunpack.c.l.b16 %v116
  %v607 = vunpack.c.l.b16 %v117
  %v608 = vunpack.c.l.b16 %v118
  %v609 = vunpack.c.l.b16 %v119
  %v610 = vunpack.c.l.b16 %v120
  %v611 = vunpack.c.l.b16 %v121
  %v612 = vunpack.c.l.b16 %v122
  %v613 = vunpack.c.l.b16 %v123
  %v614 = vunpack.c.l.b16 %v124
  %v615 = vunpack.c.l.b16 %v125
  %v616 = vunpack.c.l.b16 %v126
  %v617 = vunpack.c.l.b16 %v127
  %v618 = vunpack.c.l.b16 %v128
  %v619 = vunpack.c.l.b16 %v129
  %v620 = vunpack.c.l.b16 %v130
  %v621 = vunpack.c.l.b16 %v131
  %v622 = vunpack.c.l.b16 %v132
  %v623 = vunpack.c.l.b16 %v133
  %v624 = vunpack.c.l.b16 %v134
  %v625 = vunpack.c.l.b16 %v135
  %v626 = vunpack.c.l.b16 %v136
  %v627 = vunpack.c.l.b16 %v137
  %v628 = vunpack.c.l.b16 %v138
  %v629 = vunpack.c.l.b16 %v139
  %v630 = vunpack.c.l.b16 %v140
  %v631 = vunpack.c.l.b16 %v141
  %v632 = vunpack.c.l.b16 %v142
  %v633 = vunpack.c.l.b16 %v143
  %v634 = vunpack.c.l.b16 %v144
  %v635 = vunpack.c.l.b16 %v145
  %v636 = vunpack.c.l.b16 %v146
  %v637 = vunpack.c.l.b16 %v147
  %v638 = vunpack.c.l.b16 %v148
  %v639 = vunpack.c.l.b16 %v149
  %v640 = vunpack.c.l.b16 %v150
  %v641 = vunpack.c.l.b16 %v151
  %v642 = vunpack.c.l.b16 %v152
  %v643 = vunpack.c.l.b16 %v153
  %v644 = vunpack.c.l.b16 %v154
  %v645 = vunpack.c.l.b16 %v155
  %v646 = vunpack.c.l.b16 %v156
  %v647 = vunpack.c.l.b16 %v157
  %v648 = vunpack.c.l.b16 %v158
  %v649 = vunpack.c.l.b16 %v159
  %v650 = vunpack.c.l.b16 %v160
  %v651 = vunpack.c.l.b16 %v161
  %v652 = vunpack.c.l.b16 %v162
  %v653 = vunpack.c.l.b16 %v163
  %v654 = vunpack.c.l.b16 %v164
  %v655 = vunpack.c.l.b16 %v165
  %v656 = vunpack.c.l.b16 %v166
  %v657 = vunpack.c.l.b16 %v167
  %v658 = vunpack.c.l.b16 %v168
  %v659 = vunpack.c.l.b16 %v169
  %v660 = vunpack.c.l.b16 %v170
  %v661 = vunpack.c.l.b16 %v171
  %v662 = vunpack.c.l.b16 %v172
  %v663 = vunpack.c.l.b16 %v173
  %v664 = vunpack.c.l.b16 %v174
  %v665 = vunpack.c.l.b16 %v175
  %v666 = vunpack.c.l.b16 %v176
  %v667 = vunpack.c.l.b16 %v177
  %v668 = vunpack.c.l.b16 %v178
  %v669 = vunpack.c.l.b16 %v179
  %v670 = vunpack.c.l.b16 %v180
  %v671 = vunpack.c.l.b16 %v181
  %v672 = vunpack.c.l.b16 %v182
  %v673 = vunpack.c.l.b16 %v183
  %v674 = vunpack.c.l.b16 %v184
  %v675 = vunpack.c.l.b16 %v185
  %v676 = vunpack.c.l.b16 %v186
  %v677 = vunpack.c.l.b16 %v187
  %v678 = vunpack.c.l.b16 %v188
  %v679 = vunpack.c.l.b16 %v189
  %v680 = vunpack.c.l.b16 %v190
  %v681 = vunpack.c.l.b16 %v191
  %v682 = vunpack.c.l.b16 %v192
  %v683 = vunpack.c.l.b16 %v193
  %v684 = vunpack.c.l.b16 %v194
  %v685 = vunpack.c.l.b16 %v195
  %v686 = vunpack.c.l.b16 %v196
  %v687 = vunpack.c.l.b16 %v197
  %v688 = vunpack.c.l.b16 %v198
  %v689 = vunpack.c.l.b16 %v199
  %v690 = vunpack.c.l.b16 %v200
  %v691 = vunpack.c.l.b16 %v201
  %v692 = vunpack.c.l.b16 %v202
  %v693 = vunpack.c.l.b16 %v203
  %v694 = vunpack.c.l.b16 %v204
  %v695 = vunpack.c.l.b16 %v205
  %v696 = vunpack.c.l.b16 %v206
  %v697 = vunpack.c.l.b16 %v207
  %v698 = vunpack.c.l.b16 %v208
  %v699 = vunpack.c.l.b16 %v209
  %v700 = vunpack.c.l.b16 %v210
  %v701 = vunpack.c.l.b16 %v211
  %v702 = vunpack.c.l.b16 %v212
  %v703 = vunpack.c.l.b16 %v213
  %v704 = vunpack.c.l.b16 %v214
  %v705 = vunpack.c.l.b16 %v215
  %v706 = vunpack.c.l.b16 %v216
  %v707 = vunpack.c.l.b16 %v217
  %v708 = vunpack.c.l.b16 %v218
  %v709 = vunpack.c.l.b16 %v219
  %v710 = vunpack.c.l.b16 %v220
  %v711 = vunpack.c.l.b16 %v221
  %v712 = vunpack.c.l.b16 %v222
  %v713 = vunpack.c.l.b16 %v223
  %v714 = vunpack.c.l.b16 %v224
  %v715 = vunpack.c.l.b16 %v225
  %v716 = vunpack.c.l.b16 %v226
  %v717 = vunpack.c.l.b16 %v227
  %v718 = vunpack.c.l.b16 %v228
  %v719 = vunpack.c.l.b16 %v229
  %v720 = vunpack.c.l.b16 %v230
  %v721 = vunpack.c.l.b16 %v231
  %v722 = vunpack.c.l.b16 %v232
  %v723 = vunpack.c.l.b16 %v233
  %v724 = vunpack.c.l.b16 %v234
  %v725 = vunpack.c.l.b16 %v235
  %v726 = vunpack.c.l.b16 %v236
  %v727 = vunpack.c.l.b16 %v237
  %v728 = vunpack.c.l.b16 %v238
  %v729 = vunpack.c.l.b16 %v239
  %v730 = vunpack.c.l.b16 %v240
  %v731 = vunpack.c.l.b16 %v241
  %v732 = vunpack.c.l.b16 %v242
  %v733 = vunpack.c.l.b16 %v243
  %v734 = vunpack.c.l.b16 %v244
  %v735 = vunpack.c.l.b16 %v245
  %v736 = vunpack.c.l.b16 %v246
  %v737 = vunpack.c.l.b16 %v247
  %v738 = vunpack.c.l.b16 %v248
  %v739 = vunpack.c.l.b16 %v249
  %v740 = vunpack.c.l.b16 %v250
  %v741 = vunpack.c.l.b16 %v251
  %v742 = vunpack.c.l.b16 %v252
  %v743 = vunpack.c.l.b16 %v253
  %v744 = vunpack.c.l.b16 %v254
  %v745 = vunpack.c.l.b16 %v255
  %v746 = vunpack.c.l.b16 %v256
  %v747 = vunpack.c.l.b16 %v257
  %v748 = vpack.c.b16 %v509, %v508
  %v749 = vpack.c.b16 %v511, %v510
  %v750 = vpack.c.b16 %v513, %v512
  %v751 = vpack.c.b16 %v515, %v514
  %v752 = vpack.c.b16 %v517, %v516
  %v753 = vpack.c.b16 %v519, %v518
  %v754 = vpack.c.b16 %v521, %v520
  %v755 = vpack.c.b16 %v523, %v522
  %v756 = vpack.c.b16 %v525, %v524
  %v757 = vpack.c.b16 %v527, %v526
  %v758 = vpack.c.b16 %v529, %v528
  %v759 = vpack.c.b16 %v531, %v530
  %v760 = vpack.c.b16 %v533, %v532
  %v761 = vpack.c.b16 %v535, %v534
  %v762 = vpack.c.b16 %v537, %v536
  %v763 = vpack.c.b16 %v539, %v538
  %v764 = vpack.c.b16 %v541, %v540
  %v765 = vpack.c.b16 %v543, %v542
  %v766 = vpack.c.b16 %v545, %v544
  %v767 = vpack.c.b16 %v547, %v546
  %v768 = vpack.c.b16 %v549, %v548
  %v769 = vpack.c.b16 %v551, %v550
  %v770 = vpack.c.b16 %v553, %v552
  %v771 = vpack.c.b16 %v555, %v554
  %v772 = vpack.c.b16 %v557, %v556
  %v773 = vpack.c.b16 %v559, %v558
  %v774 = vpack.c.b16 %v561, %v560
  %v775 = vpack.c.b16 %v563, %v562
  %v776 = vpack.c.b16 %v565, %v564
  %v777 = vpack.c.b16 %v567, %v566
  %v778 = vpack.c.b16 %v569, %v568
  %v779 = vpack.c.b16 %v571, %v570
  %v780 = vpack.c.b16 %v573, %v572
  %v781 = vpack.c.b16 %v575, %v574
  %v782 = vpack.c.b16 %v577, %v576
  %v783 = vpack.c.b16 %v579, %v578
  %v784 = vpack.c.b16 %v581, %v580
  %v785 = vpack.c.b16 %v583, %v582
  %v786 = vpack.c.b16 %v585, %v584
  %v787 = vpack.c.b16 %v587, %v586
  %v788 = vpack.c.b16 %v589, %v588
  %v789 = vpack.c.b16 %v591, %v590
  %v790 = vpack.c.b16 %v593, %v592
  %v791 = vpack.c.b16 %v595, %v594
  %v792 = vpack.c.b16 %v597, %v596
  %v793 = vpack.c.b16 %v599, %v598
  %v794 = vpack.c.b16 %v601, %v600
  %v795 = vpack.c.b16 %v603, %v602
  %v796 = vpack.c.b16 %v605, %v604
  %v797 = vpack.c.b16 %v607, %v606
  %v798 = vpack.c.b16 %v609, %v608
  %v799 = vpack.c.b16 %v611, %v610
  %v800 = vpack.c.b16 %v613, %v612
  %v801 = vpack.c.b16 %v615, %v614
  %v802 = vpack.c.b16 %v617, %v616
  %v803 = vpack.c.b16 %v619, %v618
  %v804 = vpack.c.b16 %v621, %v620
  %v805 = vpack.c.b16 %v623, %v622
  %v806 = vpack.c.b16 %v625, %v624
  %v807 = vpack.c.b16 %v627, %v626
  %v808 = vpack.c.b16 %v629, %v628
  %v809 = vpack.c.b16 %v631, %v630
  %v810 = vpack.c.b16 %v633, %v632
  %v811 = vpack.c.b16 %v635, %v634
  %v812 = vpack.c.b16 %v637, %v636
  %v813 = vpack.c.b16 %v639, %v638
  %v814 = vpack.c.b16 %v641, %v640
  %v815 = vpack.c.b16 %v643, %v642
  %v816 = vpack.c.b16 %v645, %v644
  %v817 = vpack.c.b16 %v647, %v646
  %v818 = vpack.c.b16 %v649, %v648
  %v819 = vpack.c.b16 %v651, %v650
  %v820 = vpack.c.b16 %v653, %v652
  %v821 = vpack.c.b16 %v655, %v654
  %v822 = vpack.c.b16 %v657, %v656
  %v823 = vpack.c.b16 %v659, %v658
  %v824 = vpack.c.b16 %v661, %v660
  %v825 = vpack.c.b16 %v663, %v662
  %v826 = vpack.c.b16 %v665, %v664
  %v827 = vpack.c.b16 %v667, %v666
  %v828 = vpack.c.b16 %v669, %v668
  %v829 = vpack.c.b16 %v671, %v670
  %v830 = vpack.c.b16 %v673, %v672
  %v831 = vpack.c.b16 %v675, %v674
  %v832 = vpack.c.b16 %v677, %v676
  %v833 = vpack.c.b16 %v679, %v678
  %v834 = vpack.c.b16 %v681, %v680
  %v835 = vpack.c.b16 %v683, %v682
  %v836 = vpack.c.b16 %v685, %v684
  %v837 = vpack.c.b16 %v687, %v686
  %v838 = vpack.c.b16 %v689, %v688
  %v839 = vpack.c.b16 %v691, %v690
  %v840 = vpack.c.b16 %v693, %v692
  %v841 = vpack.c.b16 %v695, %v694
  %v842 = vpack.c.b16 %v697, %v696
  %v843 = vpack.c.b16 %v699, %v698
  %v844 = vpack.c.b16 %v701, %v700
  %v845 = vpack.c.b16 %v703, %v702
  %v846 = vpack.c.b16 %v705, %v704
  %v847 = vpack.c.b16 %v707, %v706
  %v848 = vpack.c.b16 %v709, %v708
  %v849 = vpack.c.b16 %v711, %v710
  %v850 = vpack.c.b16 %v713, %v712
  %v851 = vpack.c.b16 %v715, %v714
  %v852 = vpack.c.b16 %v717, %v716
  %v853 = vpack.c.b16 %v719, %v718
  %v854 = vpack.c.b16 %v721, %v720
  %v855 = vpack.c.b16 %v723, %v722
  %v856 = vpack.c.b16 %v725, %v724
  %v857 = vpack.c.b16 %v727, %v726
  %v858 = vpack.c.b16 %v729, %v728
  %v859 = vpack.c.b16 %v731, %v730
  %v860 = vpack.c.b16 %v733, %v732
  %v861 = vpack.c.b16 %v735, %v734
  %v862 = vpack.c.b16 %v737, %v736
  %v863 = vpack.c.b16 %v739, %v738
  %v864 = vpack.c.b16 %v741, %v740
  %v865 = vpack.c.b16 %v743, %v742
  %v866 = vpack.c.b16 %v745, %v744
  %v867 = vpack.c.b16 %v747, %v746
  %v878 = vunpack.c.l.b16 %v258
  %v879 = vunpack.c.l.b16 %v259
  %v880 = vunpack.c.l.b16 %v260
  %v881 = vunpack.c.l.b16 %v261
  %v882 = vunpack.c.l.b16 %v262
  %v883 = vunpack.c.l.b16 %v263
  %v884 = vunpack.c.l.b16 %v264
  %v885 = vunpack.c.l.b16 %v265
  %v886 = vunpack.c.l.b16 %v266
  %v887 = vunpack.c.l.b16 %v267
  %v888 = vpack.c.b16 %v879, %v878
  %v889 = vpack.c.b16 %v881, %v880
  %v890 = vpack.c.b16 %v883, %v882
  %v891 = vpack.c.b16 %v885, %v884
  %v892 = vpack.c.b16 %v887, %v886
  %vm897 = vcmask 613376
  %v899 = vsel %vm897, %v748, 0
  %v902 = vsel %vm897, %v749, 0
  %v905 = vsel %vm897, %v750, 0
  %v908 = vsel %vm897, %v751, 0
  %v911 = vsel %vm897, %v752, 0
  %v914 = vsel %vm897, %v753, 0
  %v917 = vsel %vm897, %v754, 0
  %v920 = vsel %vm897, %v755, 0
  %v923 = vsel %vm897, %v756, 0
  %v926 = vsel %vm897, %v757, 0
  %v929 = vsel %vm897, %v758, 0
  %v932 = vsel %vm897, %v759, 0
  %v935 = vsel %vm897, %v760, 0
  %v938 = vsel %vm897, %v761, 0
  %v941 = vsel %vm897, %v762, 0
  %v944 = vsel %vm897, %v763, 0
  %v947 = vsel %vm897, %v764, 0
  %v950 = vsel %vm897, %v765, 0
  %v953 = vsel %vm897, %v766, 0
  %v956 = vsel %vm897, %v767, 0
  %v959 = vsel %vm897, %v768, 0
  %v962 = vsel %vm897, %v769, 0
  %v965 = vsel %vm897, %v770, 0
  %v968 = vsel %vm897, %v771, 0
  %v971 = vsel %vm897, %v772, 0
  %v974 = vsel %vm897, %v773, 0
  %v977 = vsel %vm897, %v774, 0
  %v980 = vsel %vm897, %v775, 0
  %v983 = vsel %vm897, %v776, 0
  %v986 = vsel %vm897, %v777, 0
  %v989 = vsel %vm897, %v778, 0
  %v992 = vsel %vm897, %v779, 0
  %v995 = vsel %vm897, %v780, 0
  %v998 = vsel %vm897, %v781, 0
  %v1001 = vsel %vm897, %v782, 0
  %v1004 = vsel %vm897, %v783, 0
  %v1007 = vsel %vm897, %v784, 0
  %v1010 = vsel %vm897, %v785, 0
  %v1013 = vsel %vm897, %v786, 0
  %v1016 = vsel %vm897, %v787, 0
  %v1019 = vsel %vm897, %v788, 0
  %v1022 = vsel %vm897, %v789, 0
  %v1025 = vsel %vm897, %v790, 0
  %v1028 = vsel %vm897, %v791, 0
  %v1031 = vsel %vm897, %v792, 0
  %v1034 = vsel %vm897, %v793, 0
  %v1037 = vsel %vm897, %v794, 0
  %v1040 = vsel %vm897, %v795, 0
  %v1043 = vsel %vm897, %v796, 0
  %v1046 = vsel %vm897, %v797, 0
  %v1049 = vsel %vm897, %v798, 0
  %v1052 = vsel %vm897, %v799, 0
  %v1055 = vsel %vm897, %v800, 0
  %v1058 = vsel %vm897, %v801, 0
  %v1061 = vsel %vm897, %v802, 0
  %v1064 = vsel %vm897, %v803, 0
  %v1067 = vsel %vm897, %v804, 0
  %v1070 = vsel %vm897, %v805, 0
  %v1073 = vsel %vm897, %v806, 0
  %v1076 = vsel %vm897, %v807, 0
  %v1079 = vsel %vm897, %v808, 0
  %v1082 = vsel %vm897, %v809, 0
  %v1085 = vsel %vm897, %v810, 0
  %v1088 = vsel %vm897, %v811, 0
  %v1091 = vsel %vm897, %v812, 0
  %v1094 = vsel %vm897, %v813, 0
  %v1097 = vsel %vm897, %v814, 0
  %v1100 = vsel %vm897, %v815, 0
  %v1103 = vsel %vm897, %v816, 0
  %v1106 = vsel %vm897, %v817, 0
  %v1109 = vsel %vm897, %v818, 0
  %v1112 = vsel %vm897, %v819, 0
  %v1115 = vsel %vm897, %v820, 0
  %v1118 = vsel %vm897, %v821, 0
  %v1121 = vsel %vm897, %v822, 0
  %v1124 = vsel %vm897, %v823, 0
  %v1127 = vsel %vm897, %v824, 0
  %v1130 = vsel %vm897, %v825, 0
  %v1133 = vsel %vm897, %v826, 0
  %v1136 = vsel %vm897, %v827, 0
  %v1139 = vsel %vm897, %v828, 0
  %v1142 = vsel %vm897, %v829, 0
  %v1145 = vsel %vm897, %v830, 0
  %v1148 = vsel %vm897, %v831, 0
  %v1151 = vsel %vm897, %v832, 0
  %v1154 = vsel %vm897, %v833, 0
  %v1157 = vsel %vm897, %v834, 0
  %v1160 = vsel %vm897, %v835, 0
  %v1163 = vsel %vm897, %v836, 0
  %v1166 = vsel %vm897, %v837, 0
  %v1169 = vsel %vm897, %v838, 0
  %v1172 = vsel %vm897, %v839, 0
  %v1175 = vsel %vm897, %v840, 0
  %v1178 = vsel %vm897, %v841, 0
  %v1181 = vsel %vm897, %v842, 0
  %v1184 = vsel %vm897, %v843, 0
  %v1187 = vsel %vm897, %v844, 0
  %v1190 = vsel %vm897, %v845, 0
  %v1193 = vsel %vm897, %v846, 0
  %v1196 = vsel %vm897, %v847, 0
  %v1199 = vsel %vm897, %v848, 0
  %v1202 = vsel %vm897, %v849, 0
  %v1205 = vsel %vm897, %v850, 0
  %v1208 = vsel %vm897, %v851, 0
  %v1211 = vsel %vm897, %v852, 0
  %v1214 = vsel %vm897, %v853, 0
  %v1217 = vsel %vm897, %v854, 0
  %v1220 = vsel %vm897, %v855, 0
  %v1223 = vsel %vm897, %v856, 0
  %v1226 = vsel %vm897, %v857, 0
  %v1229 = vsel %vm897, %v858, 0
  %v1232 = vsel %vm897, %v859, 0
  %v1235 = vsel %vm897, %v860, 0
  %v1238 = vsel %vm897, %v861, 0
  %v1241 = vsel %vm897, %v862, 0
  %v1244 = vsel %vm897, %v863, 0
  %v1247 = vsel %vm897, %v864, 0
  %v1250 = vsel %vm897, %v865, 0
  %v1253 = vsel %vm897, %v866, 0
  %v1256 = vsel %vm897, %v867, 0
  %vm1258 = vcmask 1044480
  %vm1259 = vcmask 1045504
  %v1260 = vsel %vm1258, 4294967295, 65535
  %v1261 = vsel %vm1259, %v1260, 0
  %v1263 = vand.u32 %v892, %v1261
  %1265 = vmatprep.subr.bf16.mxu0 0
  %1266 = vmatpush1.bf16.msra.mxu0 %v888
  %1267 = vmatprep.subr.bf16.mxu0 0
  %1268 = vmatpush1.bf16.msra.mxu0 %v889
  %1269 = vmatprep.subr.bf16.mxu0 0
  %1270 = vmatpush1.bf16.msra.mxu0 %v890
  %1271 = vmatprep.subr.bf16.mxu0 0
  %1272 = vmatpush1.bf16.msra.mxu0 %v891
  %1273 = vmatprep.subr.bf16.mxu0 0
  %1274 = vmatpush1.bf16.msra.mxu0 %v1263
  %1275 = vmatprep.subr.bf16.mxu0 0
  %1276 = vmatpush1.bf16.msra.mxu0 0
  %1277 = vmatprep.subr.bf16.mxu0 0
  %1278 = vmatpush1.bf16.msra.mxu0 0
  %1279 = vmatprep.subr.bf16.mxu0 0
  %1280 = vmatpush1.bf16.msra.mxu0 0
  %1281 = vmatprep.subr.bf16.mxu0 0
  %1282 = vmatpush1.bf16.msra.mxu0 0
  %1283 = vmatprep.subr.bf16.mxu0 0
  %1284 = vmatpush1.bf16.msra.mxu0 0
  %1285 = vmatprep.subr.bf16.mxu0 0
  %1286 = vmatpush1.bf16.msra.mxu0 0
  %1287 = vmatprep.subr.bf16.mxu0 0
  %1288 = vmatpush1.bf16.msra.mxu0 0
  %1289 = vmatprep.subr.bf16.mxu0 0
  %1290 = vmatpush1.bf16.msra.mxu0 0
  %1291 = vmatprep.subr.bf16.mxu0 0
  %1292 = vmatpush1.bf16.msra.mxu0 0
  %1293 = vmatprep.subr.bf16.mxu0 0
  %1294 = vmatpush1.bf16.msra.mxu0 0
  %1295 = vmatprep.subr.bf16.mxu0 0
  %1296 = vmatpush1.bf16.msra.mxu0 0
  %1297 = vmatprep.mubr.bf16.mxu0 0
  %1298 = vmatmul.mubr.bf16.gmra.mrb[0].mxu0 %v899
  %v1299 = vpop.f32.mrb[0].mxu0
  %v1300 = vadd.f32 0.0, %v1299
  %v1301 = vpop.f32.mrb[0].mxu0
  %v1302 = vpop.f32.mrb[0].mxu0
  %v1303 = vadd.f32 0.0, %v1302
  %v1304 = vpop.f32.mrb[0].mxu0
  %1305 = vmatprep.mubr.bf16.mxu0 0
  %1306 = vmatmul.mubr.bf16.gmra.mrb[0].mxu0 %v902
  %v1307 = vpop.f32.mrb[0].mxu0
  %v1308 = vadd.f32 0.0, %v1307
  %v1309 = vpop.f32.mrb[0].mxu0
  %v1310 = vpop.f32.mrb[0].mxu0
  %v1311 = vadd.f32 0.0, %v1310
  %v1312 = vpop.f32.mrb[0].mxu0
  %1313 = vmatprep.mubr.bf16.mxu0 0
  %1314 = vmatmul.mubr.bf16.gmra.mrb[0].mxu0 %v905
  %v1315 = vpop.f32.mrb[0].mxu0
  %v1316 = vadd.f32 0.0, %v1315
  %v1317 = vpop.f32.mrb[0].mxu0
  %v1318 = vpop.f32.mrb[0].mxu0
  %v1319 = vadd.f32 0.0, %v1318
  %v1320 = vpop.f32.mrb[0].mxu0
  %1321 = vmatprep.mubr.bf16.mxu0 0
  %1322 = vmatmul.mubr.bf16.gmra.mrb[0].mxu0 %v908
  %v1323 = vpop.f32.mrb[0].mxu0
  %v1324 = vadd.f32 0.0, %v1323
  %v1325 = vpop.f32.mrb[0].mxu0
  %v1326 = vpop.f32.mrb[0].mxu0
  %v1327 = vadd.f32 0.0, %v1326
  %v1328 = vpop.f32.mrb[0].mxu0
  %1329 = vmatprep.mubr.bf16.mxu0 0
  %1330 = vmatmul.mubr.bf16.gmra.mrb[0].mxu0 %v911
  %v1331 = vpop.f32.mrb[0].mxu0
  %v1332 = vadd.f32 0.0, %v1331
  %v1333 = vpop.f32.mrb[0].mxu0
  %v1334 = vpop.f32.mrb[0].mxu0
  %v1335 = vadd.f32 0.0, %v1334
  %v1336 = vpop.f32.mrb[0].mxu0
  %1337 = vmatprep.mubr.bf16.mxu0 0
  %1338 = vmatmul.mubr.bf16.gmra.mrb[0].mxu0 %v914
  %v1339 = vpop.f32.mrb[0].mxu0
  %v1340 = vadd.f32 0.0, %v1339
  %v1341 = vpop.f32.mrb[0].mxu0
  %v1342 = vpop.f32.mrb[0].mxu0
  %v1343 = vadd.f32 0.0, %v1342
  %v1344 = vpop.f32.mrb[0].mxu0
  %1345 = vmatprep.mubr.bf16.mxu0 0
  %1346 = vmatmul.mubr.bf16.gmra.mrb[0].mxu0 %v917
  %v1347 = vpop.f32.mrb[0].mxu0
  %v1348 = vadd.f32 0.0, %v1347
  %v1349 = vpop.f32.mrb[0].mxu0
  %v1350 = vpop.f32.mrb[0].mxu0
  %v1351 = vadd.f32 0.0, %v1350
  %v1352 = vpop.f32.mrb[0].mxu0
  %1353 = vmatprep.mubr.bf16.mxu0 0
  %1354 = vmatmul.mubr.bf16.gmra.mrb[0].mxu0 %v920
  %v1355 = vpop.f32.mrb[0].mxu0
  %v1356 = vadd.f32 0.0, %v1355
  %v1357 = vpop.f32.mrb[0].mxu0
  %v1358 = vpop.f32.mrb[0].mxu0
  %v1359 = vadd.f32 0.0, %v1358
  %v1360 = vpop.f32.mrb[0].mxu0
  %1361 = vmatprep.mubr.bf16.mxu0 0
  %1362 = vmatmul.mubr.bf16.gmra.mrb[0].mxu0 %v923
  %v1363 = vpop.f32.mrb[0].mxu0
  %v1364 = vadd.f32 0.0, %v1363
  %v1365 = vpop.f32.mrb[0].mxu0
  %v1366 = vpop.f32.mrb[0].mxu0
  %v1367 = vadd.f32 0.0, %v1366
  %v1368 = vpop.f32.mrb[0].mxu0
  %1369 = vmatprep.mubr.bf16.mxu0 0
  %1370 = vmatmul.mubr.bf16.gmra.mrb[0].mxu0 %v926
  %v1371 = vpop.f32.mrb[0].mxu0
  %v1372 = vadd.f32 0.0, %v1371
  %v1373 = vpop.f32.mrb[0].mxu0
  %v1374 = vpop.f32.mrb[0].mxu0
  %v1375 = vadd.f32 0.0, %v1374
  %v1376 = vpop.f32.mrb[0].mxu0
  %1377 = vmatprep.mubr.bf16.mxu0 0
  %1378 = vmatmul.mubr.bf16.gmra.mrb[0].mxu0 %v929
  %v1379 = vpop.f32.mrb[0].mxu0
  %v1380 = vadd.f32 0.0, %v1379
  %v1381 = vpop.f32.mrb[0].mxu0
  %v1382 = vpop.f32.mrb[0].mxu0
  %v1383 = vadd.f32 0.0, %v1382
  %v1384 = vpop.f32.mrb[0].mxu0
  %1385 = vmatprep.mubr.bf16.mxu0 0
  %1386 = vmatmul.mubr.bf16.gmra.mrb[0].mxu0 %v932
  %v1387 = vpop.f32.mrb[0].mxu0
  %v1388 = vadd.f32 0.0, %v1387
  %v1389 = vpop.f32.mrb[0].mxu0
  %v1390 = vpop.f32.mrb[0].mxu0
  %v1391 = vadd.f32 0.0, %v1390
  %v1392 = vpop.f32.mrb[0].mxu0
  %1393 = vmatprep.mubr.bf16.mxu0 0
  %1394 = vmatmul.mubr.bf16.gmra.mrb[0].mxu0 %v935
  %v1395 = vpop.f32.mrb[0].mxu0
  %v1396 = vadd.f32 0.0, %v1395
  %v1397 = vpop.f32.mrb[0].mxu0
  %v1398 = vpop.f32.mrb[0].mxu0
  %v1399 = vadd.f32 0.0, %v1398
  %v1400 = vpop.f32.mrb[0].mxu0
  %1401 = vmatprep.mubr.bf16.mxu0 0
  %1402 = vmatmul.mubr.bf16.gmra.mrb[0].mxu0 %v938
  %v1403 = vpop.f32.mrb[0].mxu0
  %v1404 = vadd.f32 0.0, %v1403
  %v1405 = vpop.f32.mrb[0].mxu0
  %v1406 = vpop.f32.mrb[0].mxu0
  %v1407 = vadd.f32 0.0, %v1406
  %v1408 = vpop.f32.mrb[0].mxu0
  %1409 = vmatprep.mubr.bf16.mxu0 0
  %1410 = vmatmul.mubr.bf16.gmra.mrb[0].mxu0 %v941
  %v1411 = vpop.f32.mrb[0].mxu0
  %v1412 = vadd.f32 0.0, %v1411
  %v1413 = vpop.f32.mrb[0].mxu0
  %v1414 = vpop.f32.mrb[0].mxu0
  %v1415 = vadd.f32 0.0, %v1414
  %v1416 = vpop.f32.mrb[0].mxu0
  %1417 = vmatprep.mubr.bf16.mxu0 0
  %1418 = vmatmul.mubr.bf16.gmra.mrb[0].mxu0 %v944
  %v1419 = vpop.f32.mrb[0].mxu0
  %v1420 = vadd.f32 0.0, %v1419
  %v1421 = vpop.f32.mrb[0].mxu0
  %v1422 = vpop.f32.mrb[0].mxu0
  %v1423 = vadd.f32 0.0, %v1422
  %v1424 = vpop.f32.mrb[0].mxu0
  %1425 = vmatprep.mubr.bf16.mxu0 0
  %1426 = vmatmul.mubr.bf16.gmra.mrb[0].mxu0 %v947
  %v1427 = vpop.f32.mrb[0].mxu0
  %v1428 = vadd.f32 0.0, %v1427
  %v1429 = vpop.f32.mrb[0].mxu0
  %v1430 = vpop.f32.mrb[0].mxu0
  %v1431 = vadd.f32 0.0, %v1430
  %v1432 = vpop.f32.mrb[0].mxu0
  %1433 = vmatprep.mubr.bf16.mxu0 0
  %1434 = vmatmul.mubr.bf16.gmra.mrb[0].mxu0 %v950
  %v1435 = vpop.f32.mrb[0].mxu0
  %v1436 = vadd.f32 0.0, %v1435
  %v1437 = vpop.f32.mrb[0].mxu0
  %v1438 = vpop.f32.mrb[0].mxu0
  %v1439 = vadd.f32 0.0, %v1438
  %v1440 = vpop.f32.mrb[0].mxu0
  %1441 = vmatprep.mubr.bf16.mxu0 0
  %1442 = vmatmul.mubr.bf16.gmra.mrb[0].mxu0 %v953
  %v1443 = vpop.f32.mrb[0].mxu0
  %v1444 = vadd.f32 0.0, %v1443
  %v1445 = vpop.f32.mrb[0].mxu0
  %v1446 = vpop.f32.mrb[0].mxu0
  %v1447 = vadd.f32 0.0, %v1446
  %v1448 = vpop.f32.mrb[0].mxu0
  %1449 = vmatprep.mubr.bf16.mxu0 0
  %1450 = vmatmul.mubr.bf16.gmra.mrb[0].mxu0 %v956
  %v1451 = vpop.f32.mrb[0].mxu0
  %v1452 = vadd.f32 0.0, %v1451
  %v1453 = vpop.f32.mrb[0].mxu0
  %v1454 = vpop.f32.mrb[0].mxu0
  %v1455 = vadd.f32 0.0, %v1454
  %v1456 = vpop.f32.mrb[0].mxu0
  %1457 = vmatprep.mubr.bf16.mxu0 0
  %1458 = vmatmul.mubr.bf16.gmra.mrb[0].mxu0 %v959
  %v1459 = vpop.f32.mrb[0].mxu0
  %v1460 = vadd.f32 0.0, %v1459
  %v1461 = vpop.f32.mrb[0].mxu0
  %v1462 = vpop.f32.mrb[0].mxu0
  %v1463 = vadd.f32 0.0, %v1462
  %v1464 = vpop.f32.mrb[0].mxu0
  %1465 = vmatprep.mubr.bf16.mxu0 0
  %1466 = vmatmul.mubr.bf16.gmra.mrb[0].mxu0 %v962
  %v1467 = vpop.f32.mrb[0].mxu0
  %v1468 = vadd.f32 0.0, %v1467
  %v1469 = vpop.f32.mrb[0].mxu0
  %v1470 = vpop.f32.mrb[0].mxu0
  %v1471 = vadd.f32 0.0, %v1470
  %v1472 = vpop.f32.mrb[0].mxu0
  %1473 = vmatprep.mubr.bf16.mxu0 0
  %1474 = vmatmul.mubr.bf16.gmra.mrb[0].mxu0 %v965
  %v1475 = vpop.f32.mrb[0].mxu0
  %v1476 = vadd.f32 0.0, %v1475
  %v1477 = vpop.f32.mrb[0].mxu0
  %v1478 = vpop.f32.mrb[0].mxu0
  %v1479 = vadd.f32 0.0, %v1478
  %v1480 = vpop.f32.mrb[0].mxu0
  %1481 = vmatprep.mubr.bf16.mxu0 0
  %1482 = vmatmul.mubr.bf16.gmra.mrb[0].mxu0 %v968
  %v1483 = vpop.f32.mrb[0].mxu0
  %v1484 = vadd.f32 0.0, %v1483
  %v1485 = vpop.f32.mrb[0].mxu0
  %v1486 = vpop.f32.mrb[0].mxu0
  %v1487 = vadd.f32 0.0, %v1486
  %v1488 = vpop.f32.mrb[0].mxu0
  %1489 = vmatprep.mubr.bf16.mxu0 0
  %1490 = vmatmul.mubr.bf16.gmra.mrb[0].mxu0 %v971
  %v1491 = vpop.f32.mrb[0].mxu0
  %v1492 = vadd.f32 0.0, %v1491
  %v1493 = vpop.f32.mrb[0].mxu0
  %v1494 = vpop.f32.mrb[0].mxu0
  %v1495 = vadd.f32 0.0, %v1494
  %v1496 = vpop.f32.mrb[0].mxu0
  %1497 = vmatprep.mubr.bf16.mxu0 0
  %1498 = vmatmul.mubr.bf16.gmra.mrb[0].mxu0 %v974
  %v1499 = vpop.f32.mrb[0].mxu0
  %v1500 = vadd.f32 0.0, %v1499
  %v1501 = vpop.f32.mrb[0].mxu0
  %v1502 = vpop.f32.mrb[0].mxu0
  %v1503 = vadd.f32 0.0, %v1502
  %v1504 = vpop.f32.mrb[0].mxu0
  %1505 = vmatprep.mubr.bf16.mxu0 0
  %1506 = vmatmul.mubr.bf16.gmra.mrb[0].mxu0 %v977
  %v1507 = vpop.f32.mrb[0].mxu0
  %v1508 = vadd.f32 0.0, %v1507
  %v1509 = vpop.f32.mrb[0].mxu0
  %v1510 = vpop.f32.mrb[0].mxu0
  %v1511 = vadd.f32 0.0, %v1510
  %v1512 = vpop.f32.mrb[0].mxu0
  %1513 = vmatprep.mubr.bf16.mxu0 0
  %1514 = vmatmul.mubr.bf16.gmra.mrb[0].mxu0 %v980
  %v1515 = vpop.f32.mrb[0].mxu0
  %v1516 = vadd.f32 0.0, %v1515
  %v1517 = vpop.f32.mrb[0].mxu0
  %v1518 = vpop.f32.mrb[0].mxu0
  %v1519 = vadd.f32 0.0, %v1518
  %v1520 = vpop.f32.mrb[0].mxu0
  %1521 = vmatprep.mubr.bf16.mxu0 0
  %1522 = vmatmul.mubr.bf16.gmra.mrb[0].mxu0 %v983
  %v1523 = vpop.f32.mrb[0].mxu0
  %v1524 = vadd.f32 0.0, %v1523
  %v1525 = vpop.f32.mrb[0].mxu0
  %v1526 = vpop.f32.mrb[0].mxu0
  %v1527 = vadd.f32 0.0, %v1526
  %v1528 = vpop.f32.mrb[0].mxu0
  %1529 = vmatprep.mubr.bf16.mxu0 0
  %1530 = vmatmul.mubr.bf16.gmra.mrb[0].mxu0 %v986
  %v1531 = vpop.f32.mrb[0].mxu0
  %v1532 = vadd.f32 0.0, %v1531
  %v1533 = vpop.f32.mrb[0].mxu0
  %v1534 = vpop.f32.mrb[0].mxu0
  %v1535 = vadd.f32 0.0, %v1534
  %v1536 = vpop.f32.mrb[0].mxu0
  %1537 = vmatprep.mubr.bf16.mxu0 0
  %1538 = vmatmul.mubr.bf16.gmra.mrb[0].mxu0 %v989
  %v1539 = vpop.f32.mrb[0].mxu0
  %v1540 = vadd.f32 0.0, %v1539
  %v1541 = vpop.f32.mrb[0].mxu0
  %v1542 = vpop.f32.mrb[0].mxu0
  %v1543 = vadd.f32 0.0, %v1542
  %v1544 = vpop.f32.mrb[0].mxu0
  %1545 = vmatprep.mubr.bf16.mxu0 0
  %1546 = vmatmul.mubr.bf16.gmra.mrb[0].mxu0 %v992
  %v1547 = vpop.f32.mrb[0].mxu0
  %v1548 = vadd.f32 0.0, %v1547
  %v1549 = vpop.f32.mrb[0].mxu0
  %v1550 = vpop.f32.mrb[0].mxu0
  %v1551 = vadd.f32 0.0, %v1550
  %v1552 = vpop.f32.mrb[0].mxu0
  %1553 = vmatprep.mubr.bf16.mxu0 0
  %1554 = vmatmul.mubr.bf16.gmra.mrb[0].mxu0 %v995
  %v1555 = vpop.f32.mrb[0].mxu0
  %v1556 = vadd.f32 0.0, %v1555
  %v1557 = vpop.f32.mrb[0].mxu0
  %v1558 = vpop.f32.mrb[0].mxu0
  %v1559 = vadd.f32 0.0, %v1558
  %v1560 = vpop.f32.mrb[0].mxu0
  %1561 = vmatprep.mubr.bf16.mxu0 0
  %1562 = vmatmul.mubr.bf16.gmra.mrb[0].mxu0 %v998
  %v1563 = vpop.f32.mrb[0].mxu0
  %v1564 = vadd.f32 0.0, %v1563
  %v1565 = vpop.f32.mrb[0].mxu0
  %v1566 = vpop.f32.mrb[0].mxu0
  %v1567 = vadd.f32 0.0, %v1566
  %v1568 = vpop.f32.mrb[0].mxu0
  %1569 = vmatprep.mubr.bf16.mxu0 0
  %1570 = vmatmul.mubr.bf16.gmra.mrb[0].mxu0 %v1001
  %v1571 = vpop.f32.mrb[0].mxu0
  %v1572 = vadd.f32 0.0, %v1571
  %v1573 = vpop.f32.mrb[0].mxu0
  %v1574 = vpop.f32.mrb[0].mxu0
  %v1575 = vadd.f32 0.0, %v1574
  %v1576 = vpop.f32.mrb[0].mxu0
  %1577 = vmatprep.mubr.bf16.mxu0 0
  %1578 = vmatmul.mubr.bf16.gmra.mrb[0].mxu0 %v1004
  %v1579 = vpop.f32.mrb[0].mxu0
  %v1580 = vadd.f32 0.0, %v1579
  %v1581 = vpop.f32.mrb[0].mxu0
  %v1582 = vpop.f32.mrb[0].mxu0
  %v1583 = vadd.f32 0.0, %v1582
  %v1584 = vpop.f32.mrb[0].mxu0
  %1585 = vmatprep.mubr.bf16.mxu0 0
  %1586 = vmatmul.mubr.bf16.gmra.mrb[0].mxu0 %v1007
  %v1587 = vpop.f32.mrb[0].mxu0
  %v1588 = vadd.f32 0.0, %v1587
  %v1589 = vpop.f32.mrb[0].mxu0
  %v1590 = vpop.f32.mrb[0].mxu0
  %v1591 = vadd.f32 0.0, %v1590
  %v1592 = vpop.f32.mrb[0].mxu0
  %1593 = vmatprep.mubr.bf16.mxu0 0
  %1594 = vmatmul.mubr.bf16.gmra.mrb[0].mxu0 %v1010
  %v1595 = vpop.f32.mrb[0].mxu0
  %v1596 = vadd.f32 0.0, %v1595
  %v1597 = vpop.f32.mrb[0].mxu0
  %v1598 = vpop.f32.mrb[0].mxu0
  %v1599 = vadd.f32 0.0, %v1598
  %v1600 = vpop.f32.mrb[0].mxu0
  %1601 = vmatprep.mubr.bf16.mxu0 0
  %1602 = vmatmul.mubr.bf16.gmra.mrb[0].mxu0 %v1013
  %v1603 = vpop.f32.mrb[0].mxu0
  %v1604 = vadd.f32 0.0, %v1603
  %v1605 = vpop.f32.mrb[0].mxu0
  %v1606 = vpop.f32.mrb[0].mxu0
  %v1607 = vadd.f32 0.0, %v1606
  %v1608 = vpop.f32.mrb[0].mxu0
  %1609 = vmatprep.mubr.bf16.mxu0 0
  %1610 = vmatmul.mubr.bf16.gmra.mrb[0].mxu0 %v1016
  %v1611 = vpop.f32.mrb[0].mxu0
  %v1612 = vadd.f32 0.0, %v1611
  %v1613 = vpop.f32.mrb[0].mxu0
  %v1614 = vpop.f32.mrb[0].mxu0
  %v1615 = vadd.f32 0.0, %v1614
  %v1616 = vpop.f32.mrb[0].mxu0
  %1617 = vmatprep.mubr.bf16.mxu0 0
  %1618 = vmatmul.mubr.bf16.gmra.mrb[0].mxu0 %v1019
  %v1619 = vpop.f32.mrb[0].mxu0
  %v1620 = vadd.f32 0.0, %v1619
  %v1621 = vpop.f32.mrb[0].mxu0
  %v1622 = vpop.f32.mrb[0].mxu0
  %v1623 = vadd.f32 0.0, %v1622
  %v1624 = vpop.f32.mrb[0].mxu0
  %1625 = vmatprep.mubr.bf16.mxu0 0
  %1626 = vmatmul.mubr.bf16.gmra.mrb[0].mxu0 %v1022
  %v1627 = vpop.f32.mrb[0].mxu0
  %v1628 = vadd.f32 0.0, %v1627
  %v1629 = vpop.f32.mrb[0].mxu0
  %v1630 = vpop.f32.mrb[0].mxu0
  %v1631 = vadd.f32 0.0, %v1630
  %v1632 = vpop.f32.mrb[0].mxu0
  %1633 = vmatprep.mubr.bf16.mxu0 0
  %1634 = vmatmul.mubr.bf16.gmra.mrb[0].mxu0 %v1025
  %v1635 = vpop.f32.mrb[0].mxu0
  %v1636 = vadd.f32 0.0, %v1635
  %v1637 = vpop.f32.mrb[0].mxu0
  %v1638 = vpop.f32.mrb[0].mxu0
  %v1639 = vadd.f32 0.0, %v1638
  %v1640 = vpop.f32.mrb[0].mxu0
  %1641 = vmatprep.mubr.bf16.mxu0 0
  %1642 = vmatmul.mubr.bf16.gmra.mrb[0].mxu0 %v1028
  %v1643 = vpop.f32.mrb[0].mxu0
  %v1644 = vadd.f32 0.0, %v1643
  %v1645 = vpop.f32.mrb[0].mxu0
  %v1646 = vpop.f32.mrb[0].mxu0
  %v1647 = vadd.f32 0.0, %v1646
  %v1648 = vpop.f32.mrb[0].mxu0
  %1649 = vmatprep.mubr.bf16.mxu0 0
  %1650 = vmatmul.mubr.bf16.gmra.mrb[0].mxu0 %v1031
  %v1651 = vpop.f32.mrb[0].mxu0
  %v1652 = vadd.f32 0.0, %v1651
  %v1653 = vpop.f32.mrb[0].mxu0
  %v1654 = vpop.f32.mrb[0].mxu0
  %v1655 = vadd.f32 0.0, %v1654
  %v1656 = vpop.f32.mrb[0].mxu0
  %1657 = vmatprep.mubr.bf16.mxu0 0
  %1658 = vmatmul.mubr.bf16.gmra.mrb[0].mxu0 %v1034
  %v1659 = vpop.f32.mrb[0].mxu0
  %v1660 = vadd.f32 0.0, %v1659
  %v1661 = vpop.f32.mrb[0].mxu0
  %v1662 = vpop.f32.mrb[0].mxu0
  %v1663 = vadd.f32 0.0, %v1662
  %v1664 = vpop.f32.mrb[0].mxu0
  %1665 = vmatprep.mubr.bf16.mxu0 0
  %1666 = vmatmul.mubr.bf16.gmra.mrb[0].mxu0 %v1037
  %v1667 = vpop.f32.mrb[0].mxu0
  %v1668 = vadd.f32 0.0, %v1667
  %v1669 = vpop.f32.mrb[0].mxu0
  %v1670 = vpop.f32.mrb[0].mxu0
  %v1671 = vadd.f32 0.0, %v1670
  %v1672 = vpop.f32.mrb[0].mxu0
  %1673 = vmatprep.mubr.bf16.mxu0 0
  %1674 = vmatmul.mubr.bf16.gmra.mrb[0].mxu0 %v1040
  %v1675 = vpop.f32.mrb[0].mxu0
  %v1676 = vadd.f32 0.0, %v1675
  %v1677 = vpop.f32.mrb[0].mxu0
  %v1678 = vpop.f32.mrb[0].mxu0
  %v1679 = vadd.f32 0.0, %v1678
  %v1680 = vpop.f32.mrb[0].mxu0
  %1681 = vmatprep.mubr.bf16.mxu0 0
  %1682 = vmatmul.mubr.bf16.gmra.mrb[0].mxu0 %v1043
  %v1683 = vpop.f32.mrb[0].mxu0
  %v1684 = vadd.f32 0.0, %v1683
  %v1685 = vpop.f32.mrb[0].mxu0
  %v1686 = vpop.f32.mrb[0].mxu0
  %v1687 = vadd.f32 0.0, %v1686
  %v1688 = vpop.f32.mrb[0].mxu0
  %1689 = vmatprep.mubr.bf16.mxu0 0
  %1690 = vmatmul.mubr.bf16.gmra.mrb[0].mxu0 %v1046
  %v1691 = vpop.f32.mrb[0].mxu0
  %v1692 = vadd.f32 0.0, %v1691
  %v1693 = vpop.f32.mrb[0].mxu0
  %v1694 = vpop.f32.mrb[0].mxu0
  %v1695 = vadd.f32 0.0, %v1694
  %v1696 = vpop.f32.mrb[0].mxu0
  %1697 = vmatprep.mubr.bf16.mxu0 0
  %1698 = vmatmul.mubr.bf16.gmra.mrb[0].mxu0 %v1049
  %v1699 = vpop.f32.mrb[0].mxu0
  %v1700 = vadd.f32 0.0, %v1699
  %v1701 = vpop.f32.mrb[0].mxu0
  %v1702 = vpop.f32.mrb[0].mxu0
  %v1703 = vadd.f32 0.0, %v1702
  %v1704 = vpop.f32.mrb[0].mxu0
  %1705 = vmatprep.mubr.bf16.mxu0 0
  %1706 = vmatmul.mubr.bf16.gmra.mrb[0].mxu0 %v1052
  %v1707 = vpop.f32.mrb[0].mxu0
  %v1708 = vadd.f32 0.0, %v1707
  %v1709 = vpop.f32.mrb[0].mxu0
  %v1710 = vpop.f32.mrb[0].mxu0
  %v1711 = vadd.f32 0.0, %v1710
  %v1712 = vpop.f32.mrb[0].mxu0
  %1713 = vmatprep.mubr.bf16.mxu0 0
  %1714 = vmatmul.mubr.bf16.gmra.mrb[0].mxu0 %v1055
  %v1715 = vpop.f32.mrb[0].mxu0
  %v1716 = vadd.f32 0.0, %v1715
  %v1717 = vpop.f32.mrb[0].mxu0
  %v1718 = vpop.f32.mrb[0].mxu0
  %v1719 = vadd.f32 0.0, %v1718
  %v1720 = vpop.f32.mrb[0].mxu0
  %1721 = vmatprep.mubr.bf16.mxu0 0
  %1722 = vmatmul.mubr.bf16.gmra.mrb[0].mxu0 %v1058
  %v1723 = vpop.f32.mrb[0].mxu0
  %v1724 = vadd.f32 0.0, %v1723
  %v1725 = vpop.f32.mrb[0].mxu0
  %v1726 = vpop.f32.mrb[0].mxu0
  %v1727 = vadd.f32 0.0, %v1726
  %v1728 = vpop.f32.mrb[0].mxu0
  %1729 = vmatprep.mubr.bf16.mxu0 0
  %1730 = vmatmul.mubr.bf16.gmra.mrb[0].mxu0 %v1061
  %v1731 = vpop.f32.mrb[0].mxu0
  %v1732 = vadd.f32 0.0, %v1731
  %v1733 = vpop.f32.mrb[0].mxu0
  %v1734 = vpop.f32.mrb[0].mxu0
  %v1735 = vadd.f32 0.0, %v1734
  %v1736 = vpop.f32.mrb[0].mxu0
  %1737 = vmatprep.mubr.bf16.mxu0 0
  %1738 = vmatmul.mubr.bf16.gmra.mrb[0].mxu0 %v1064
  %v1739 = vpop.f32.mrb[0].mxu0
  %v1740 = vadd.f32 0.0, %v1739
  %v1741 = vpop.f32.mrb[0].mxu0
  %v1742 = vpop.f32.mrb[0].mxu0
  %v1743 = vadd.f32 0.0, %v1742
  %v1744 = vpop.f32.mrb[0].mxu0
  %1745 = vmatprep.mubr.bf16.mxu0 0
  %1746 = vmatmul.mubr.bf16.gmra.mrb[0].mxu0 %v1067
  %v1747 = vpop.f32.mrb[0].mxu0
  %v1748 = vadd.f32 0.0, %v1747
  %v1749 = vpop.f32.mrb[0].mxu0
  %v1750 = vpop.f32.mrb[0].mxu0
  %v1751 = vadd.f32 0.0, %v1750
  %v1752 = vpop.f32.mrb[0].mxu0
  %1753 = vmatprep.mubr.bf16.mxu0 0
  %1754 = vmatmul.mubr.bf16.gmra.mrb[0].mxu0 %v1070
  %v1755 = vpop.f32.mrb[0].mxu0
  %v1756 = vadd.f32 0.0, %v1755
  %v1757 = vpop.f32.mrb[0].mxu0
  %v1758 = vpop.f32.mrb[0].mxu0
  %v1759 = vadd.f32 0.0, %v1758
  %v1760 = vpop.f32.mrb[0].mxu0
  %1761 = vmatprep.mubr.bf16.mxu0 0
  %1762 = vmatmul.mubr.bf16.gmra.mrb[0].mxu0 %v1073
  %v1763 = vpop.f32.mrb[0].mxu0
  %v1764 = vadd.f32 0.0, %v1763
  %v1765 = vpop.f32.mrb[0].mxu0
  %v1766 = vpop.f32.mrb[0].mxu0
  %v1767 = vadd.f32 0.0, %v1766
  %v1768 = vpop.f32.mrb[0].mxu0
  %1769 = vmatprep.mubr.bf16.mxu0 0
  %1770 = vmatmul.mubr.bf16.gmra.mrb[0].mxu0 %v1076
  %v1771 = vpop.f32.mrb[0].mxu0
  %v1772 = vadd.f32 0.0, %v1771
  %v1773 = vpop.f32.mrb[0].mxu0
  %v1774 = vpop.f32.mrb[0].mxu0
  %v1775 = vadd.f32 0.0, %v1774
  %v1776 = vpop.f32.mrb[0].mxu0
  %1777 = vmatprep.mubr.bf16.mxu0 0
  %1778 = vmatmul.mubr.bf16.gmra.mrb[0].mxu0 %v1079
  %v1779 = vpop.f32.mrb[0].mxu0
  %v1780 = vadd.f32 0.0, %v1779
  %v1781 = vpop.f32.mrb[0].mxu0
  %v1782 = vpop.f32.mrb[0].mxu0
  %v1783 = vadd.f32 0.0, %v1782
  %v1784 = vpop.f32.mrb[0].mxu0
  %1785 = vmatprep.mubr.bf16.mxu0 0
  %1786 = vmatmul.mubr.bf16.gmra.mrb[0].mxu0 %v1082
  %v1787 = vpop.f32.mrb[0].mxu0
  %v1788 = vadd.f32 0.0, %v1787
  %v1789 = vpop.f32.mrb[0].mxu0
  %v1790 = vpop.f32.mrb[0].mxu0
  %v1791 = vadd.f32 0.0, %v1790
  %v1792 = vpop.f32.mrb[0].mxu0
  %1793 = vmatprep.mubr.bf16.mxu0 0
  %1794 = vmatmul.mubr.bf16.gmra.mrb[0].mxu0 %v1085
  %v1795 = vpop.f32.mrb[0].mxu0
  %v1796 = vadd.f32 0.0, %v1795
  %v1797 = vpop.f32.mrb[0].mxu0
  %v1798 = vpop.f32.mrb[0].mxu0
  %v1799 = vadd.f32 0.0, %v1798
  %v1800 = vpop.f32.mrb[0].mxu0
  %1801 = vmatprep.mubr.bf16.mxu0 0
  %1802 = vmatmul.mubr.bf16.gmra.mrb[0].mxu0 %v1088
  %v1803 = vpop.f32.mrb[0].mxu0
  %v1804 = vadd.f32 0.0, %v1803
  %v1805 = vpop.f32.mrb[0].mxu0
  %v1806 = vpop.f32.mrb[0].mxu0
  %v1807 = vadd.f32 0.0, %v1806
  %v1808 = vpop.f32.mrb[0].mxu0
  %1809 = vmatprep.mubr.bf16.mxu0 0
  %1810 = vmatmul.mubr.bf16.gmra.mrb[0].mxu0 %v1091
  %v1811 = vpop.f32.mrb[0].mxu0
  %v1812 = vadd.f32 0.0, %v1811
  %v1813 = vpop.f32.mrb[0].mxu0
  %v1814 = vpop.f32.mrb[0].mxu0
  %v1815 = vadd.f32 0.0, %v1814
  %v1816 = vpop.f32.mrb[0].mxu0
  %1817 = vmatprep.mubr.bf16.mxu0 0
  %1818 = vmatmul.mubr.bf16.gmra.mrb[0].mxu0 %v1094
  %v1819 = vpop.f32.mrb[0].mxu0
  %v1820 = vadd.f32 0.0, %v1819
  %v1821 = vpop.f32.mrb[0].mxu0
  %v1822 = vpop.f32.mrb[0].mxu0
  %v1823 = vadd.f32 0.0, %v1822
  %v1824 = vpop.f32.mrb[0].mxu0
  %1825 = vmatprep.mubr.bf16.mxu0 0
  %1826 = vmatmul.mubr.bf16.gmra.mrb[0].mxu0 %v1097
  %v1827 = vpop.f32.mrb[0].mxu0
  %v1828 = vadd.f32 0.0, %v1827
  %v1829 = vpop.f32.mrb[0].mxu0
  %v1830 = vpop.f32.mrb[0].mxu0
  %v1831 = vadd.f32 0.0, %v1830
  %v1832 = vpop.f32.mrb[0].mxu0
  %1833 = vmatprep.mubr.bf16.mxu0 0
  %1834 = vmatmul.mubr.bf16.gmra.mrb[0].mxu0 %v1100
  %v1835 = vpop.f32.mrb[0].mxu0
  %v1836 = vadd.f32 0.0, %v1835
  %v1837 = vpop.f32.mrb[0].mxu0
  %v1838 = vpop.f32.mrb[0].mxu0
  %v1839 = vadd.f32 0.0, %v1838
  %v1840 = vpop.f32.mrb[0].mxu0
  %1841 = vmatprep.mubr.bf16.mxu0 0
  %1842 = vmatmul.mubr.bf16.gmra.mrb[0].mxu0 %v1103
  %v1843 = vpop.f32.mrb[0].mxu0
  %v1844 = vadd.f32 0.0, %v1843
  %v1845 = vpop.f32.mrb[0].mxu0
  %v1846 = vpop.f32.mrb[0].mxu0
  %v1847 = vadd.f32 0.0, %v1846
  %v1848 = vpop.f32.mrb[0].mxu0
  %1849 = vmatprep.mubr.bf16.mxu0 0
  %1850 = vmatmul.mubr.bf16.gmra.mrb[0].mxu0 %v1106
  %v1851 = vpop.f32.mrb[0].mxu0
  %v1852 = vadd.f32 0.0, %v1851
  %v1853 = vpop.f32.mrb[0].mxu0
  %v1854 = vpop.f32.mrb[0].mxu0
  %v1855 = vadd.f32 0.0, %v1854
  %v1856 = vpop.f32.mrb[0].mxu0
  %1857 = vmatprep.mubr.bf16.mxu0 0
  %1858 = vmatmul.mubr.bf16.gmra.mrb[0].mxu0 %v1109
  %v1859 = vpop.f32.mrb[0].mxu0
  %v1860 = vadd.f32 0.0, %v1859
  %v1861 = vpop.f32.mrb[0].mxu0
  %v1862 = vpop.f32.mrb[0].mxu0
  %v1863 = vadd.f32 0.0, %v1862
  %v1864 = vpop.f32.mrb[0].mxu0
  %1865 = vmatprep.mubr.bf16.mxu0 0
  %1866 = vmatmul.mubr.bf16.gmra.mrb[0].mxu0 %v1112
  %v1867 = vpop.f32.mrb[0].mxu0
  %v1868 = vadd.f32 0.0, %v1867
  %v1869 = vpop.f32.mrb[0].mxu0
  %v1870 = vpop.f32.mrb[0].mxu0
  %v1871 = vadd.f32 0.0, %v1870
  %v1872 = vpop.f32.mrb[0].mxu0
  %1873 = vmatprep.mubr.bf16.mxu0 0
  %1874 = vmatmul.mubr.bf16.gmra.mrb[0].mxu0 %v1115
  %v1875 = vpop.f32.mrb[0].mxu0
  %v1876 = vadd.f32 0.0, %v1875
  %v1877 = vpop.f32.mrb[0].mxu0
  %v1878 = vpop.f32.mrb[0].mxu0
  %v1879 = vadd.f32 0.0, %v1878
  %v1880 = vpop.f32.mrb[0].mxu0
  %1881 = vmatprep.mubr.bf16.mxu0 0
  %1882 = vmatmul.mubr.bf16.gmra.mrb[0].mxu0 %v1118
  %v1883 = vpop.f32.mrb[0].mxu0
  %v1884 = vadd.f32 0.0, %v1883
  %v1885 = vpop.f32.mrb[0].mxu0
  %v1886 = vpop.f32.mrb[0].mxu0
  %v1887 = vadd.f32 0.0, %v1886
  %v1888 = vpop.f32.mrb[0].mxu0
  %1889 = vmatprep.mubr.bf16.mxu0 0
  %1890 = vmatmul.mubr.bf16.gmra.mrb[0].mxu0 %v1121
  %v1891 = vpop.f32.mrb[0].mxu0
  %v1892 = vadd.f32 0.0, %v1891
  %v1893 = vpop.f32.mrb[0].mxu0
  %v1894 = vpop.f32.mrb[0].mxu0
  %v1895 = vadd.f32 0.0, %v1894
  %v1896 = vpop.f32.mrb[0].mxu0
  %1897 = vmatprep.mubr.bf16.mxu0 0
  %1898 = vmatmul.mubr.bf16.gmra.mrb[0].mxu0 %v1124
  %v1899 = vpop.f32.mrb[0].mxu0
  %v1900 = vadd.f32 0.0, %v1899
  %v1901 = vpop.f32.mrb[0].mxu0
  %v1902 = vpop.f32.mrb[0].mxu0
  %v1903 = vadd.f32 0.0, %v1902
  %v1904 = vpop.f32.mrb[0].mxu0
  %1905 = vmatprep.mubr.bf16.mxu0 0
  %1906 = vmatmul.mubr.bf16.gmra.mrb[0].mxu0 %v1127
  %v1907 = vpop.f32.mrb[0].mxu0
  %v1908 = vadd.f32 0.0, %v1907
  %v1909 = vpop.f32.mrb[0].mxu0
  %v1910 = vpop.f32.mrb[0].mxu0
  %v1911 = vadd.f32 0.0, %v1910
  %v1912 = vpop.f32.mrb[0].mxu0
  %1913 = vmatprep.mubr.bf16.mxu0 0
  %1914 = vmatmul.mubr.bf16.gmra.mrb[0].mxu0 %v1130
  %v1915 = vpop.f32.mrb[0].mxu0
  %v1916 = vadd.f32 0.0, %v1915
  %v1917 = vpop.f32.mrb[0].mxu0
  %v1918 = vpop.f32.mrb[0].mxu0
  %v1919 = vadd.f32 0.0, %v1918
  %v1920 = vpop.f32.mrb[0].mxu0
  %1921 = vmatprep.mubr.bf16.mxu0 0
  %1922 = vmatmul.mubr.bf16.gmra.mrb[0].mxu0 %v1133
  %v1923 = vpop.f32.mrb[0].mxu0
  %v1924 = vadd.f32 0.0, %v1923
  %v1925 = vpop.f32.mrb[0].mxu0
  %v1926 = vpop.f32.mrb[0].mxu0
  %v1927 = vadd.f32 0.0, %v1926
  %v1928 = vpop.f32.mrb[0].mxu0
  %1929 = vmatprep.mubr.bf16.mxu0 0
  %1930 = vmatmul.mubr.bf16.gmra.mrb[0].mxu0 %v1136
  %v1931 = vpop.f32.mrb[0].mxu0
  %v1932 = vadd.f32 0.0, %v1931
  %v1933 = vpop.f32.mrb[0].mxu0
  %v1934 = vpop.f32.mrb[0].mxu0
  %v1935 = vadd.f32 0.0, %v1934
  %v1936 = vpop.f32.mrb[0].mxu0
  %1937 = vmatprep.mubr.bf16.mxu0 0
  %1938 = vmatmul.mubr.bf16.gmra.mrb[0].mxu0 %v1139
  %v1939 = vpop.f32.mrb[0].mxu0
  %v1940 = vadd.f32 0.0, %v1939
  %v1941 = vpop.f32.mrb[0].mxu0
  %v1942 = vpop.f32.mrb[0].mxu0
  %v1943 = vadd.f32 0.0, %v1942
  %v1944 = vpop.f32.mrb[0].mxu0
  %1945 = vmatprep.mubr.bf16.mxu0 0
  %1946 = vmatmul.mubr.bf16.gmra.mrb[0].mxu0 %v1142
  %v1947 = vpop.f32.mrb[0].mxu0
  %v1948 = vadd.f32 0.0, %v1947
  %v1949 = vpop.f32.mrb[0].mxu0
  %v1950 = vpop.f32.mrb[0].mxu0
  %v1951 = vadd.f32 0.0, %v1950
  %v1952 = vpop.f32.mrb[0].mxu0
  %1953 = vmatprep.mubr.bf16.mxu0 0
  %1954 = vmatmul.mubr.bf16.gmra.mrb[0].mxu0 %v1145
  %v1955 = vpop.f32.mrb[0].mxu0
  %v1956 = vadd.f32 0.0, %v1955
  %v1957 = vpop.f32.mrb[0].mxu0
  %v1958 = vpop.f32.mrb[0].mxu0
  %v1959 = vadd.f32 0.0, %v1958
  %v1960 = vpop.f32.mrb[0].mxu0
  %1961 = vmatprep.mubr.bf16.mxu0 0
  %1962 = vmatmul.mubr.bf16.gmra.mrb[0].mxu0 %v1148
  %v1963 = vpop.f32.mrb[0].mxu0
  %v1964 = vadd.f32 0.0, %v1963
  %v1965 = vpop.f32.mrb[0].mxu0
  %v1966 = vpop.f32.mrb[0].mxu0
  %v1967 = vadd.f32 0.0, %v1966
  %v1968 = vpop.f32.mrb[0].mxu0
  %1969 = vmatprep.mubr.bf16.mxu0 0
  %1970 = vmatmul.mubr.bf16.gmra.mrb[0].mxu0 %v1151
  %v1971 = vpop.f32.mrb[0].mxu0
  %v1972 = vadd.f32 0.0, %v1971
  %v1973 = vpop.f32.mrb[0].mxu0
  %v1974 = vpop.f32.mrb[0].mxu0
  %v1975 = vadd.f32 0.0, %v1974
  %v1976 = vpop.f32.mrb[0].mxu0
  %1977 = vmatprep.mubr.bf16.mxu0 0
  %1978 = vmatmul.mubr.bf16.gmra.mrb[0].mxu0 %v1154
  %v1979 = vpop.f32.mrb[0].mxu0
  %v1980 = vadd.f32 0.0, %v1979
  %v1981 = vpop.f32.mrb[0].mxu0
  %v1982 = vpop.f32.mrb[0].mxu0
  %v1983 = vadd.f32 0.0, %v1982
  %v1984 = vpop.f32.mrb[0].mxu0
  %1985 = vmatprep.mubr.bf16.mxu0 0
  %1986 = vmatmul.mubr.bf16.gmra.mrb[0].mxu0 %v1157
  %v1987 = vpop.f32.mrb[0].mxu0
  %v1988 = vadd.f32 0.0, %v1987
  %v1989 = vpop.f32.mrb[0].mxu0
  %v1990 = vpop.f32.mrb[0].mxu0
  %v1991 = vadd.f32 0.0, %v1990
  %v1992 = vpop.f32.mrb[0].mxu0
  %1993 = vmatprep.mubr.bf16.mxu0 0
  %1994 = vmatmul.mubr.bf16.gmra.mrb[0].mxu0 %v1160
  %v1995 = vpop.f32.mrb[0].mxu0
  %v1996 = vadd.f32 0.0, %v1995
  %v1997 = vpop.f32.mrb[0].mxu0
  %v1998 = vpop.f32.mrb[0].mxu0
  %v1999 = vadd.f32 0.0, %v1998
  %v2000 = vpop.f32.mrb[0].mxu0
  %2001 = vmatprep.mubr.bf16.mxu0 0
  %2002 = vmatmul.mubr.bf16.gmra.mrb[0].mxu0 %v1163
  %v2003 = vpop.f32.mrb[0].mxu0
  %v2004 = vadd.f32 0.0, %v2003
  %v2005 = vpop.f32.mrb[0].mxu0
  %v2006 = vpop.f32.mrb[0].mxu0
  %v2007 = vadd.f32 0.0, %v2006
  %v2008 = vpop.f32.mrb[0].mxu0
  %2009 = vmatprep.mubr.bf16.mxu0 0
  %2010 = vmatmul.mubr.bf16.gmra.mrb[0].mxu0 %v1166
  %v2011 = vpop.f32.mrb[0].mxu0
  %v2012 = vadd.f32 0.0, %v2011
  %v2013 = vpop.f32.mrb[0].mxu0
  %v2014 = vpop.f32.mrb[0].mxu0
  %v2015 = vadd.f32 0.0, %v2014
  %v2016 = vpop.f32.mrb[0].mxu0
  %2017 = vmatprep.mubr.bf16.mxu0 0
  %2018 = vmatmul.mubr.bf16.gmra.mrb[0].mxu0 %v1169
  %v2019 = vpop.f32.mrb[0].mxu0
  %v2020 = vadd.f32 0.0, %v2019
  %v2021 = vpop.f32.mrb[0].mxu0
  %v2022 = vpop.f32.mrb[0].mxu0
  %v2023 = vadd.f32 0.0, %v2022
  %v2024 = vpop.f32.mrb[0].mxu0
  %2025 = vmatprep.mubr.bf16.mxu0 0
  %2026 = vmatmul.mubr.bf16.gmra.mrb[0].mxu0 %v1172
  %v2027 = vpop.f32.mrb[0].mxu0
  %v2028 = vadd.f32 0.0, %v2027
  %v2029 = vpop.f32.mrb[0].mxu0
  %v2030 = vpop.f32.mrb[0].mxu0
  %v2031 = vadd.f32 0.0, %v2030
  %v2032 = vpop.f32.mrb[0].mxu0
  %2033 = vmatprep.mubr.bf16.mxu0 0
  %2034 = vmatmul.mubr.bf16.gmra.mrb[0].mxu0 %v1175
  %v2035 = vpop.f32.mrb[0].mxu0
  %v2036 = vadd.f32 0.0, %v2035
  %v2037 = vpop.f32.mrb[0].mxu0
  %v2038 = vpop.f32.mrb[0].mxu0
  %v2039 = vadd.f32 0.0, %v2038
  %v2040 = vpop.f32.mrb[0].mxu0
  %2041 = vmatprep.mubr.bf16.mxu0 0
  %2042 = vmatmul.mubr.bf16.gmra.mrb[0].mxu0 %v1178
  %v2043 = vpop.f32.mrb[0].mxu0
  %v2044 = vadd.f32 0.0, %v2043
  %v2045 = vpop.f32.mrb[0].mxu0
  %v2046 = vpop.f32.mrb[0].mxu0
  %v2047 = vadd.f32 0.0, %v2046
  %v2048 = vpop.f32.mrb[0].mxu0
  %2049 = vmatprep.mubr.bf16.mxu0 0
  %2050 = vmatmul.mubr.bf16.gmra.mrb[0].mxu0 %v1181
  %v2051 = vpop.f32.mrb[0].mxu0
  %v2052 = vadd.f32 0.0, %v2051
  %v2053 = vpop.f32.mrb[0].mxu0
  %v2054 = vpop.f32.mrb[0].mxu0
  %v2055 = vadd.f32 0.0, %v2054
  %v2056 = vpop.f32.mrb[0].mxu0
  %2057 = vmatprep.mubr.bf16.mxu0 0
  %2058 = vmatmul.mubr.bf16.gmra.mrb[0].mxu0 %v1184
  %v2059 = vpop.f32.mrb[0].mxu0
  %v2060 = vadd.f32 0.0, %v2059
  %v2061 = vpop.f32.mrb[0].mxu0
  %v2062 = vpop.f32.mrb[0].mxu0
  %v2063 = vadd.f32 0.0, %v2062
  %v2064 = vpop.f32.mrb[0].mxu0
  %2065 = vmatprep.mubr.bf16.mxu0 0
  %2066 = vmatmul.mubr.bf16.gmra.mrb[0].mxu0 %v1187
  %v2067 = vpop.f32.mrb[0].mxu0
  %v2068 = vadd.f32 0.0, %v2067
  %v2069 = vpop.f32.mrb[0].mxu0
  %v2070 = vpop.f32.mrb[0].mxu0
  %v2071 = vadd.f32 0.0, %v2070
  %v2072 = vpop.f32.mrb[0].mxu0
  %2073 = vmatprep.mubr.bf16.mxu0 0
  %2074 = vmatmul.mubr.bf16.gmra.mrb[0].mxu0 %v1190
  %v2075 = vpop.f32.mrb[0].mxu0
  %v2076 = vadd.f32 0.0, %v2075
  %v2077 = vpop.f32.mrb[0].mxu0
  %v2078 = vpop.f32.mrb[0].mxu0
  %v2079 = vadd.f32 0.0, %v2078
  %v2080 = vpop.f32.mrb[0].mxu0
  %2081 = vmatprep.mubr.bf16.mxu0 0
  %2082 = vmatmul.mubr.bf16.gmra.mrb[0].mxu0 %v1193
  %v2083 = vpop.f32.mrb[0].mxu0
  %v2084 = vadd.f32 0.0, %v2083
  %v2085 = vpop.f32.mrb[0].mxu0
  %v2086 = vpop.f32.mrb[0].mxu0
  %v2087 = vadd.f32 0.0, %v2086
  %v2088 = vpop.f32.mrb[0].mxu0
  %2089 = vmatprep.mubr.bf16.mxu0 0
  %2090 = vmatmul.mubr.bf16.gmra.mrb[0].mxu0 %v1196
  %v2091 = vpop.f32.mrb[0].mxu0
  %v2092 = vadd.f32 0.0, %v2091
  %v2093 = vpop.f32.mrb[0].mxu0
  %v2094 = vpop.f32.mrb[0].mxu0
  %v2095 = vadd.f32 0.0, %v2094
  %v2096 = vpop.f32.mrb[0].mxu0
  %2097 = vmatprep.mubr.bf16.mxu0 0
  %2098 = vmatmul.mubr.bf16.gmra.mrb[0].mxu0 %v1199
  %v2099 = vpop.f32.mrb[0].mxu0
  %v2100 = vadd.f32 0.0, %v2099
  %v2101 = vpop.f32.mrb[0].mxu0
  %v2102 = vpop.f32.mrb[0].mxu0
  %v2103 = vadd.f32 0.0, %v2102
  %v2104 = vpop.f32.mrb[0].mxu0
  %2105 = vmatprep.mubr.bf16.mxu0 0
  %2106 = vmatmul.mubr.bf16.gmra.mrb[0].mxu0 %v1202
  %v2107 = vpop.f32.mrb[0].mxu0
  %v2108 = vadd.f32 0.0, %v2107
  %v2109 = vpop.f32.mrb[0].mxu0
  %v2110 = vpop.f32.mrb[0].mxu0
  %v2111 = vadd.f32 0.0, %v2110
  %v2112 = vpop.f32.mrb[0].mxu0
  %2113 = vmatprep.mubr.bf16.mxu0 0
  %2114 = vmatmul.mubr.bf16.gmra.mrb[0].mxu0 %v1205
  %v2115 = vpop.f32.mrb[0].mxu0
  %v2116 = vadd.f32 0.0, %v2115
  %v2117 = vpop.f32.mrb[0].mxu0
  %v2118 = vpop.f32.mrb[0].mxu0
  %v2119 = vadd.f32 0.0, %v2118
  %v2120 = vpop.f32.mrb[0].mxu0
  %2121 = vmatprep.mubr.bf16.mxu0 0
  %2122 = vmatmul.mubr.bf16.gmra.mrb[0].mxu0 %v1208
  %v2123 = vpop.f32.mrb[0].mxu0
  %v2124 = vadd.f32 0.0, %v2123
  %v2125 = vpop.f32.mrb[0].mxu0
  %v2126 = vpop.f32.mrb[0].mxu0
  %v2127 = vadd.f32 0.0, %v2126
  %v2128 = vpop.f32.mrb[0].mxu0
  %2129 = vmatprep.mubr.bf16.mxu0 0
  %2130 = vmatmul.mubr.bf16.gmra.mrb[0].mxu0 %v1211
  %v2131 = vpop.f32.mrb[0].mxu0
  %v2132 = vadd.f32 0.0, %v2131
  %v2133 = vpop.f32.mrb[0].mxu0
  %v2134 = vpop.f32.mrb[0].mxu0
  %v2135 = vadd.f32 0.0, %v2134
  %v2136 = vpop.f32.mrb[0].mxu0
  %2137 = vmatprep.mubr.bf16.mxu0 0
  %2138 = vmatmul.mubr.bf16.gmra.mrb[0].mxu0 %v1214
  %v2139 = vpop.f32.mrb[0].mxu0
  %v2140 = vadd.f32 0.0, %v2139
  %v2141 = vpop.f32.mrb[0].mxu0
  %v2142 = vpop.f32.mrb[0].mxu0
  %v2143 = vadd.f32 0.0, %v2142
  %v2144 = vpop.f32.mrb[0].mxu0
  %2145 = vmatprep.mubr.bf16.mxu0 0
  %2146 = vmatmul.mubr.bf16.gmra.mrb[0].mxu0 %v1217
  %v2147 = vpop.f32.mrb[0].mxu0
  %v2148 = vadd.f32 0.0, %v2147
  %v2149 = vpop.f32.mrb[0].mxu0
  %v2150 = vpop.f32.mrb[0].mxu0
  %v2151 = vadd.f32 0.0, %v2150
  %v2152 = vpop.f32.mrb[0].mxu0
  %2153 = vmatprep.mubr.bf16.mxu0 0
  %2154 = vmatmul.mubr.bf16.gmra.mrb[0].mxu0 %v1220
  %v2155 = vpop.f32.mrb[0].mxu0
  %v2156 = vadd.f32 0.0, %v2155
  %v2157 = vpop.f32.mrb[0].mxu0
  %v2158 = vpop.f32.mrb[0].mxu0
  %v2159 = vadd.f32 0.0, %v2158
  %v2160 = vpop.f32.mrb[0].mxu0
  %2161 = vmatprep.mubr.bf16.mxu0 0
  %2162 = vmatmul.mubr.bf16.gmra.mrb[0].mxu0 %v1223
  %v2163 = vpop.f32.mrb[0].mxu0
  %v2164 = vadd.f32 0.0, %v2163
  %v2165 = vpop.f32.mrb[0].mxu0
  %v2166 = vpop.f32.mrb[0].mxu0
  %v2167 = vadd.f32 0.0, %v2166
  %v2168 = vpop.f32.mrb[0].mxu0
  %2169 = vmatprep.mubr.bf16.mxu0 0
  %2170 = vmatmul.mubr.bf16.gmra.mrb[0].mxu0 %v1226
  %v2171 = vpop.f32.mrb[0].mxu0
  %v2172 = vadd.f32 0.0, %v2171
  %v2173 = vpop.f32.mrb[0].mxu0
  %v2174 = vpop.f32.mrb[0].mxu0
  %v2175 = vadd.f32 0.0, %v2174
  %v2176 = vpop.f32.mrb[0].mxu0
  %2177 = vmatprep.mubr.bf16.mxu0 0
  %2178 = vmatmul.mubr.bf16.gmra.mrb[0].mxu0 %v1229
  %v2179 = vpop.f32.mrb[0].mxu0
  %v2180 = vadd.f32 0.0, %v2179
  %v2181 = vpop.f32.mrb[0].mxu0
  %v2182 = vpop.f32.mrb[0].mxu0
  %v2183 = vadd.f32 0.0, %v2182
  %v2184 = vpop.f32.mrb[0].mxu0
  %2185 = vmatprep.mubr.bf16.mxu0 0
  %2186 = vmatmul.mubr.bf16.gmra.mrb[0].mxu0 %v1232
  %v2187 = vpop.f32.mrb[0].mxu0
  %v2188 = vadd.f32 0.0, %v2187
  %v2189 = vpop.f32.mrb[0].mxu0
  %v2190 = vpop.f32.mrb[0].mxu0
  %v2191 = vadd.f32 0.0, %v2190
  %v2192 = vpop.f32.mrb[0].mxu0
  %2193 = vmatprep.mubr.bf16.mxu0 0
  %2194 = vmatmul.mubr.bf16.gmra.mrb[0].mxu0 %v1235
  %v2195 = vpop.f32.mrb[0].mxu0
  %v2196 = vadd.f32 0.0, %v2195
  %v2197 = vpop.f32.mrb[0].mxu0
  %v2198 = vpop.f32.mrb[0].mxu0
  %v2199 = vadd.f32 0.0, %v2198
  %v2200 = vpop.f32.mrb[0].mxu0
  %2201 = vmatprep.mubr.bf16.mxu0 0
  %2202 = vmatmul.mubr.bf16.gmra.mrb[0].mxu0 %v1238
  %v2203 = vpop.f32.mrb[0].mxu0
  %v2204 = vadd.f32 0.0, %v2203
  %v2205 = vpop.f32.mrb[0].mxu0
  %v2206 = vpop.f32.mrb[0].mxu0
  %v2207 = vadd.f32 0.0, %v2206
  %v2208 = vpop.f32.mrb[0].mxu0
  %2209 = vmatprep.mubr.bf16.mxu0 0
  %2210 = vmatmul.mubr.bf16.gmra.mrb[0].mxu0 %v1241
  %v2211 = vpop.f32.mrb[0].mxu0
  %v2212 = vadd.f32 0.0, %v2211
  %v2213 = vpop.f32.mrb[0].mxu0
  %v2214 = vpop.f32.mrb[0].mxu0
  %v2215 = vadd.f32 0.0, %v2214
  %v2216 = vpop.f32.mrb[0].mxu0
  %2217 = vmatprep.mubr.bf16.mxu0 0
  %2218 = vmatmul.mubr.bf16.gmra.mrb[0].mxu0 %v1244
  %v2219 = vpop.f32.mrb[0].mxu0
  %v2220 = vadd.f32 0.0, %v2219
  %v2221 = vpop.f32.mrb[0].mxu0
  %v2222 = vpop.f32.mrb[0].mxu0
  %v2223 = vadd.f32 0.0, %v2222
  %v2224 = vpop.f32.mrb[0].mxu0
  %2225 = vmatprep.mubr.bf16.mxu0 0
  %2226 = vmatmul.mubr.bf16.gmra.mrb[0].mxu0 %v1247
  %v2227 = vpop.f32.mrb[0].mxu0
  %v2228 = vadd.f32 0.0, %v2227
  %v2229 = vpop.f32.mrb[0].mxu0
  %v2230 = vpop.f32.mrb[0].mxu0
  %v2231 = vadd.f32 0.0, %v2230
  %v2232 = vpop.f32.mrb[0].mxu0
  %2233 = vmatprep.mubr.bf16.mxu0 0
  %2234 = vmatmul.mubr.bf16.gmra.mrb[0].mxu0 %v1250
  %v2235 = vpop.f32.mrb[0].mxu0
  %v2236 = vadd.f32 0.0, %v2235
  %v2237 = vpop.f32.mrb[0].mxu0
  %v2238 = vpop.f32.mrb[0].mxu0
  %v2239 = vadd.f32 0.0, %v2238
  %v2240 = vpop.f32.mrb[0].mxu0
  %2241 = vmatprep.mubr.bf16.mxu0 0
  %2242 = vmatmul.mubr.bf16.gmra.mrb[0].mxu0 %v1253
  %v2243 = vpop.f32.mrb[0].mxu0
  %v2244 = vadd.f32 0.0, %v2243
  %v2245 = vpop.f32.mrb[0].mxu0
  %v2246 = vpop.f32.mrb[0].mxu0
  %v2247 = vadd.f32 0.0, %v2246
  %v2248 = vpop.f32.mrb[0].mxu0
  %2249 = vmatprep.mubr.bf16.mxu0 0
  %2250 = vmatmul.mubr.bf16.gmra.mrb[0].mxu0 %v1256
  %v2251 = vpop.f32.mrb[0].mxu0
  %v2252 = vadd.f32 0.0, %v2251
  %v2253 = vpop.f32.mrb[0].mxu0
  %v2254 = vpop.f32.mrb[0].mxu0
  %v2255 = vadd.f32 0.0, %v2254
  %v2256 = vpop.f32.mrb[0].mxu0
  %2257 = vdwg.mxu0
  %v2258 = vadd.f32 %v1300, %v1303
  %v2259 = vadd.f32 %v2258, %v1308
  %v2260 = vadd.f32 %v2259, %v1311
  %v2261 = vadd.f32 %v2260, %v1316
  %v2262 = vadd.f32 %v2261, %v1319
  %v2263 = vadd.f32 %v2262, %v1324
  %v2264 = vadd.f32 %v2263, %v1327
  %v2265 = vadd.f32 %v2264, %v1332
  %v2266 = vadd.f32 %v2265, %v1335
  %v2267 = vadd.f32 %v2266, %v1340
  %v2268 = vadd.f32 %v2267, %v1343
  %v2269 = vadd.f32 %v2268, %v1348
  %v2270 = vadd.f32 %v2269, %v1351
  %v2271 = vadd.f32 %v2270, %v1356
  %v2272 = vadd.f32 %v2271, %v1359
  %v2273 = vadd.f32 %v2272, %v1364
  %v2274 = vadd.f32 %v2273, %v1367
  %v2275 = vadd.f32 %v2274, %v1372
  %v2276 = vadd.f32 %v2275, %v1375
  %v2277 = vadd.f32 %v2276, %v1380
  %v2278 = vadd.f32 %v2277, %v1383
  %v2279 = vadd.f32 %v2278, %v1388
  %v2280 = vadd.f32 %v2279, %v1391
  %v2281 = vadd.f32 %v2280, %v1396
  %v2282 = vadd.f32 %v2281, %v1399
  %v2283 = vadd.f32 %v2282, %v1404
  %v2284 = vadd.f32 %v2283, %v1407
  %v2285 = vadd.f32 %v2284, %v1412
  %v2286 = vadd.f32 %v2285, %v1415
  %v2287 = vadd.f32 %v2286, %v1420
  %v2288 = vadd.f32 %v2287, %v1423
  %v2289 = vadd.f32 %v2288, %v1428
  %v2290 = vadd.f32 %v2289, %v1431
  %v2291 = vadd.f32 %v2290, %v1436
  %v2292 = vadd.f32 %v2291, %v1439
  %v2293 = vadd.f32 %v2292, %v1444
  %v2294 = vadd.f32 %v2293, %v1447
  %v2295 = vadd.f32 %v2294, %v1452
  %v2296 = vadd.f32 %v2295, %v1455
  %v2297 = vadd.f32 %v2296, %v1460
  %v2298 = vadd.f32 %v2297, %v1463
  %v2299 = vadd.f32 %v2298, %v1468
  %v2300 = vadd.f32 %v2299, %v1471
  %v2301 = vadd.f32 %v2300, %v1476
  %v2302 = vadd.f32 %v2301, %v1479
  %v2303 = vadd.f32 %v2302, %v1484
  %v2304 = vadd.f32 %v2303, %v1487
  %v2305 = vadd.f32 %v2304, %v1492
  %v2306 = vadd.f32 %v2305, %v1495
  %v2307 = vadd.f32 %v2306, %v1500
  %v2308 = vadd.f32 %v2307, %v1503
  %v2309 = vadd.f32 %v2308, %v1508
  %v2310 = vadd.f32 %v2309, %v1511
  %v2311 = vadd.f32 %v2310, %v1516
  %v2312 = vadd.f32 %v2311, %v1519
  %v2313 = vadd.f32 %v2312, %v1524
  %v2314 = vadd.f32 %v2313, %v1527
  %v2315 = vadd.f32 %v2314, %v1532
  %v2316 = vadd.f32 %v2315, %v1535
  %v2317 = vadd.f32 %v2316, %v1540
  %v2318 = vadd.f32 %v2317, %v1543
  %v2319 = vadd.f32 %v2318, %v1548
  %v2320 = vadd.f32 %v2319, %v1551
  %v2321 = vadd.f32 %v2320, %v1556
  %v2322 = vadd.f32 %v2321, %v1559
  %v2323 = vadd.f32 %v2322, %v1564
  %v2324 = vadd.f32 %v2323, %v1567
  %v2325 = vadd.f32 %v2324, %v1572
  %v2326 = vadd.f32 %v2325, %v1575
  %v2327 = vadd.f32 %v2326, %v1580
  %v2328 = vadd.f32 %v2327, %v1583
  %v2329 = vadd.f32 %v2328, %v1588
  %v2330 = vadd.f32 %v2329, %v1591
  %v2331 = vadd.f32 %v2330, %v1596
  %v2332 = vadd.f32 %v2331, %v1599
  %v2333 = vadd.f32 %v2332, %v1604
  %v2334 = vadd.f32 %v2333, %v1607
  %v2335 = vadd.f32 %v2334, %v1612
  %v2336 = vadd.f32 %v2335, %v1615
  %v2337 = vadd.f32 %v2336, %v1620
  %v2338 = vadd.f32 %v2337, %v1623
  %v2339 = vadd.f32 %v2338, %v1628
  %v2340 = vadd.f32 %v2339, %v1631
  %v2341 = vadd.f32 %v2340, %v1636
  %v2342 = vadd.f32 %v2341, %v1639
  %v2343 = vadd.f32 %v2342, %v1644
  %v2344 = vadd.f32 %v2343, %v1647
  %v2345 = vadd.f32 %v2344, %v1652
  %v2346 = vadd.f32 %v2345, %v1655
  %v2347 = vadd.f32 %v2346, %v1660
  %v2348 = vadd.f32 %v2347, %v1663
  %v2349 = vadd.f32 %v2348, %v1668
  %v2350 = vadd.f32 %v2349, %v1671
  %v2351 = vadd.f32 %v2350, %v1676
  %v2352 = vadd.f32 %v2351, %v1679
  %v2353 = vadd.f32 %v2352, %v1684
  %v2354 = vadd.f32 %v2353, %v1687
  %v2355 = vadd.f32 %v2354, %v1692
  %v2356 = vadd.f32 %v2355, %v1695
  %v2357 = vadd.f32 %v2356, %v1700
  %v2358 = vadd.f32 %v2357, %v1703
  %v2359 = vadd.f32 %v2358, %v1708
  %v2360 = vadd.f32 %v2359, %v1711
  %v2361 = vadd.f32 %v2360, %v1716
  %v2362 = vadd.f32 %v2361, %v1719
  %v2363 = vadd.f32 %v2362, %v1724
  %v2364 = vadd.f32 %v2363, %v1727
  %v2365 = vadd.f32 %v2364, %v1732
  %v2366 = vadd.f32 %v2365, %v1735
  %v2367 = vadd.f32 %v2366, %v1740
  %v2368 = vadd.f32 %v2367, %v1743
  %v2369 = vadd.f32 %v2368, %v1748
  %v2370 = vadd.f32 %v2369, %v1751
  %v2371 = vadd.f32 %v2370, %v1756
  %v2372 = vadd.f32 %v2371, %v1759
  %v2373 = vadd.f32 %v2372, %v1764
  %v2374 = vadd.f32 %v2373, %v1767
  %v2375 = vadd.f32 %v2374, %v1772
  %v2376 = vadd.f32 %v2375, %v1775
  %v2377 = vadd.f32 %v2376, %v1780
  %v2378 = vadd.f32 %v2377, %v1783
  %v2379 = vadd.f32 %v2378, %v1788
  %v2380 = vadd.f32 %v2379, %v1791
  %v2381 = vadd.f32 %v2380, %v1796
  %v2382 = vadd.f32 %v2381, %v1799
  %v2383 = vadd.f32 %v2382, %v1804
  %v2384 = vadd.f32 %v2383, %v1807
  %v2385 = vadd.f32 %v2384, %v1812
  %v2386 = vadd.f32 %v2385, %v1815
  %v2387 = vadd.f32 %v2386, %v1820
  %v2388 = vadd.f32 %v2387, %v1823
  %v2389 = vadd.f32 %v2388, %v1828
  %v2390 = vadd.f32 %v2389, %v1831
  %v2391 = vadd.f32 %v2390, %v1836
  %v2392 = vadd.f32 %v2391, %v1839
  %v2393 = vadd.f32 %v2392, %v1844
  %v2394 = vadd.f32 %v2393, %v1847
  %v2395 = vadd.f32 %v2394, %v1852
  %v2396 = vadd.f32 %v2395, %v1855
  %v2397 = vadd.f32 %v2396, %v1860
  %v2398 = vadd.f32 %v2397, %v1863
  %v2399 = vadd.f32 %v2398, %v1868
  %v2400 = vadd.f32 %v2399, %v1871
  %v2401 = vadd.f32 %v2400, %v1876
  %v2402 = vadd.f32 %v2401, %v1879
  %v2403 = vadd.f32 %v2402, %v1884
  %v2404 = vadd.f32 %v2403, %v1887
  %v2405 = vadd.f32 %v2404, %v1892
  %v2406 = vadd.f32 %v2405, %v1895
  %v2407 = vadd.f32 %v2406, %v1900
  %v2408 = vadd.f32 %v2407, %v1903
  %v2409 = vadd.f32 %v2408, %v1908
  %v2410 = vadd.f32 %v2409, %v1911
  %v2411 = vadd.f32 %v2410, %v1916
  %v2412 = vadd.f32 %v2411, %v1919
  %v2413 = vadd.f32 %v2412, %v1924
  %v2414 = vadd.f32 %v2413, %v1927
  %v2415 = vadd.f32 %v2414, %v1932
  %v2416 = vadd.f32 %v2415, %v1935
  %v2417 = vadd.f32 %v2416, %v1940
  %v2418 = vadd.f32 %v2417, %v1943
  %v2419 = vadd.f32 %v2418, %v1948
  %v2420 = vadd.f32 %v2419, %v1951
  %v2421 = vadd.f32 %v2420, %v1956
  %v2422 = vadd.f32 %v2421, %v1959
  %v2423 = vadd.f32 %v2422, %v1964
  %v2424 = vadd.f32 %v2423, %v1967
  %v2425 = vadd.f32 %v2424, %v1972
  %v2426 = vadd.f32 %v2425, %v1975
  %v2427 = vadd.f32 %v2426, %v1980
  %v2428 = vadd.f32 %v2427, %v1983
  %v2429 = vadd.f32 %v2428, %v1988
  %v2430 = vadd.f32 %v2429, %v1991
  %v2431 = vadd.f32 %v2430, %v1996
  %v2432 = vadd.f32 %v2431, %v1999
  %v2433 = vadd.f32 %v2432, %v2004
  %v2434 = vadd.f32 %v2433, %v2007
  %v2435 = vadd.f32 %v2434, %v2012
  %v2436 = vadd.f32 %v2435, %v2015
  %v2437 = vadd.f32 %v2436, %v2020
  %v2438 = vadd.f32 %v2437, %v2023
  %v2439 = vadd.f32 %v2438, %v2028
  %v2440 = vadd.f32 %v2439, %v2031
  %v2441 = vadd.f32 %v2440, %v2036
  %v2442 = vadd.f32 %v2441, %v2039
  %v2443 = vadd.f32 %v2442, %v2044
  %v2444 = vadd.f32 %v2443, %v2047
  %v2445 = vadd.f32 %v2444, %v2052
  %v2446 = vadd.f32 %v2445, %v2055
  %v2447 = vadd.f32 %v2446, %v2060
  %v2448 = vadd.f32 %v2447, %v2063
  %v2449 = vadd.f32 %v2448, %v2068
  %v2450 = vadd.f32 %v2449, %v2071
  %v2451 = vadd.f32 %v2450, %v2076
  %v2452 = vadd.f32 %v2451, %v2079
  %v2453 = vadd.f32 %v2452, %v2084
  %v2454 = vadd.f32 %v2453, %v2087
  %v2455 = vadd.f32 %v2454, %v2092
  %v2456 = vadd.f32 %v2455, %v2095
  %v2457 = vadd.f32 %v2456, %v2100
  %v2458 = vadd.f32 %v2457, %v2103
  %v2459 = vadd.f32 %v2458, %v2108
  %v2460 = vadd.f32 %v2459, %v2111
  %v2461 = vadd.f32 %v2460, %v2116
  %v2462 = vadd.f32 %v2461, %v2119
  %v2463 = vadd.f32 %v2462, %v2124
  %v2464 = vadd.f32 %v2463, %v2127
  %v2465 = vadd.f32 %v2464, %v2132
  %v2466 = vadd.f32 %v2465, %v2135
  %v2467 = vadd.f32 %v2466, %v2140
  %v2468 = vadd.f32 %v2467, %v2143
  %v2469 = vadd.f32 %v2468, %v2148
  %v2470 = vadd.f32 %v2469, %v2151
  %v2471 = vadd.f32 %v2470, %v2156
  %v2472 = vadd.f32 %v2471, %v2159
  %v2473 = vadd.f32 %v2472, %v2164
  %v2474 = vadd.f32 %v2473, %v2167
  %v2475 = vadd.f32 %v2474, %v2172
  %v2476 = vadd.f32 %v2475, %v2175
  %v2477 = vadd.f32 %v2476, %v2180
  %v2478 = vadd.f32 %v2477, %v2183
  %v2479 = vadd.f32 %v2478, %v2188
  %v2480 = vadd.f32 %v2479, %v2191
  %v2481 = vadd.f32 %v2480, %v2196
  %v2482 = vadd.f32 %v2481, %v2199
  %v2483 = vadd.f32 %v2482, %v2204
  %v2484 = vadd.f32 %v2483, %v2207
  %v2485 = vadd.f32 %v2484, %v2212
  %v2486 = vadd.f32 %v2485, %v2215
  %v2487 = vadd.f32 %v2486, %v2220
  %v2488 = vadd.f32 %v2487, %v2223
  %v2489 = vadd.f32 %v2488, %v2228
  %v2490 = vadd.f32 %v2489, %v2231
  %v2491 = vadd.f32 %v2490, %v2236
  %v2492 = vadd.f32 %v2491, %v2239
  %v2493 = vadd.f32 %v2492, %v2244
  %v2494 = vadd.f32 %v2493, %v2247
  %v2495 = vadd.f32 %v2494, %v2252
  %v2496 = vadd.f32 %v2495, %v2255
  %v2497 = vrot.slane %v2496, 4
  %v2498 = vadd.f32 %v2496, %v2497
  %v2499 = vrot.slane %v2498, 2
  %v2500 = vadd.f32 %v2498, %v2499
  %v2501 = vrot.slane %v2500, 1
  %v2502 = vadd.f32 %v2500, %v2501
  %v2503 = vmul.f32 %v2502, 0.00052083336
  %v2504 = vsub.f32 %v1300, %v2503
  %v2505 = vsub.f32 %v1303, %v2503
  %v2506 = vsub.f32 %v1308, %v2503
  %v2507 = vsub.f32 %v1311, %v2503
  %v2508 = vsub.f32 %v1316, %v2503
  %v2509 = vsub.f32 %v1319, %v2503
  %v2510 = vsub.f32 %v1324, %v2503
  %v2511 = vsub.f32 %v1327, %v2503
  %v2512 = vsub.f32 %v1332, %v2503
  %v2513 = vsub.f32 %v1335, %v2503
  %v2514 = vsub.f32 %v1340, %v2503
  %v2515 = vsub.f32 %v1343, %v2503
  %v2516 = vsub.f32 %v1348, %v2503
  %v2517 = vsub.f32 %v1351, %v2503
  %v2518 = vsub.f32 %v1356, %v2503
  %v2519 = vsub.f32 %v1359, %v2503
  %v2520 = vsub.f32 %v1364, %v2503
  %v2521 = vsub.f32 %v1367, %v2503
  %v2522 = vsub.f32 %v1372, %v2503
  %v2523 = vsub.f32 %v1375, %v2503
  %v2524 = vsub.f32 %v1380, %v2503
  %v2525 = vsub.f32 %v1383, %v2503
  %v2526 = vsub.f32 %v1388, %v2503
  %v2527 = vsub.f32 %v1391, %v2503
  %v2528 = vsub.f32 %v1396, %v2503
  %v2529 = vsub.f32 %v1399, %v2503
  %v2530 = vsub.f32 %v1404, %v2503
  %v2531 = vsub.f32 %v1407, %v2503
  %v2532 = vsub.f32 %v1412, %v2503
  %v2533 = vsub.f32 %v1415, %v2503
  %v2534 = vsub.f32 %v1420, %v2503
  %v2535 = vsub.f32 %v1423, %v2503
  %v2536 = vsub.f32 %v1428, %v2503
  %v2537 = vsub.f32 %v1431, %v2503
  %v2538 = vsub.f32 %v1436, %v2503
  %v2539 = vsub.f32 %v1439, %v2503
  %v2540 = vsub.f32 %v1444, %v2503
  %v2541 = vsub.f32 %v1447, %v2503
  %v2542 = vsub.f32 %v1452, %v2503
  %v2543 = vsub.f32 %v1455, %v2503
  %v2544 = vsub.f32 %v1460, %v2503
  %v2545 = vsub.f32 %v1463, %v2503
  %v2546 = vsub.f32 %v1468, %v2503
  %v2547 = vsub.f32 %v1471, %v2503
  %v2548 = vsub.f32 %v1476, %v2503
  %v2549 = vsub.f32 %v1479, %v2503
  %v2550 = vsub.f32 %v1484, %v2503
  %v2551 = vsub.f32 %v1487, %v2503
  %v2552 = vsub.f32 %v1492, %v2503
  %v2553 = vsub.f32 %v1495, %v2503
  %v2554 = vsub.f32 %v1500, %v2503
  %v2555 = vsub.f32 %v1503, %v2503
  %v2556 = vsub.f32 %v1508, %v2503
  %v2557 = vsub.f32 %v1511, %v2503
  %v2558 = vsub.f32 %v1516, %v2503
  %v2559 = vsub.f32 %v1519, %v2503
  %v2560 = vsub.f32 %v1524, %v2503
  %v2561 = vsub.f32 %v1527, %v2503
  %v2562 = vsub.f32 %v1532, %v2503
  %v2563 = vsub.f32 %v1535, %v2503
  %v2564 = vsub.f32 %v1540, %v2503
  %v2565 = vsub.f32 %v1543, %v2503
  %v2566 = vsub.f32 %v1548, %v2503
  %v2567 = vsub.f32 %v1551, %v2503
  %v2568 = vsub.f32 %v1556, %v2503
  %v2569 = vsub.f32 %v1559, %v2503
  %v2570 = vsub.f32 %v1564, %v2503
  %v2571 = vsub.f32 %v1567, %v2503
  %v2572 = vsub.f32 %v1572, %v2503
  %v2573 = vsub.f32 %v1575, %v2503
  %v2574 = vsub.f32 %v1580, %v2503
  %v2575 = vsub.f32 %v1583, %v2503
  %v2576 = vsub.f32 %v1588, %v2503
  %v2577 = vsub.f32 %v1591, %v2503
  %v2578 = vsub.f32 %v1596, %v2503
  %v2579 = vsub.f32 %v1599, %v2503
  %v2580 = vsub.f32 %v1604, %v2503
  %v2581 = vsub.f32 %v1607, %v2503
  %v2582 = vsub.f32 %v1612, %v2503
  %v2583 = vsub.f32 %v1615, %v2503
  %v2584 = vsub.f32 %v1620, %v2503
  %v2585 = vsub.f32 %v1623, %v2503
  %v2586 = vsub.f32 %v1628, %v2503
  %v2587 = vsub.f32 %v1631, %v2503
  %v2588 = vsub.f32 %v1636, %v2503
  %v2589 = vsub.f32 %v1639, %v2503
  %v2590 = vsub.f32 %v1644, %v2503
  %v2591 = vsub.f32 %v1647, %v2503
  %v2592 = vsub.f32 %v1652, %v2503
  %v2593 = vsub.f32 %v1655, %v2503
  %v2594 = vsub.f32 %v1660, %v2503
  %v2595 = vsub.f32 %v1663, %v2503
  %v2596 = vsub.f32 %v1668, %v2503
  %v2597 = vsub.f32 %v1671, %v2503
  %v2598 = vsub.f32 %v1676, %v2503
  %v2599 = vsub.f32 %v1679, %v2503
  %v2600 = vsub.f32 %v1684, %v2503
  %v2601 = vsub.f32 %v1687, %v2503
  %v2602 = vsub.f32 %v1692, %v2503
  %v2603 = vsub.f32 %v1695, %v2503
  %v2604 = vsub.f32 %v1700, %v2503
  %v2605 = vsub.f32 %v1703, %v2503
  %v2606 = vsub.f32 %v1708, %v2503
  %v2607 = vsub.f32 %v1711, %v2503
  %v2608 = vsub.f32 %v1716, %v2503
  %v2609 = vsub.f32 %v1719, %v2503
  %v2610 = vsub.f32 %v1724, %v2503
  %v2611 = vsub.f32 %v1727, %v2503
  %v2612 = vsub.f32 %v1732, %v2503
  %v2613 = vsub.f32 %v1735, %v2503
  %v2614 = vsub.f32 %v1740, %v2503
  %v2615 = vsub.f32 %v1743, %v2503
  %v2616 = vsub.f32 %v1748, %v2503
  %v2617 = vsub.f32 %v1751, %v2503
  %v2618 = vsub.f32 %v1756, %v2503
  %v2619 = vsub.f32 %v1759, %v2503
  %v2620 = vsub.f32 %v1764, %v2503
  %v2621 = vsub.f32 %v1767, %v2503
  %v2622 = vsub.f32 %v1772, %v2503
  %v2623 = vsub.f32 %v1775, %v2503
  %v2624 = vsub.f32 %v1780, %v2503
  %v2625 = vsub.f32 %v1783, %v2503
  %v2626 = vsub.f32 %v1788, %v2503
  %v2627 = vsub.f32 %v1791, %v2503
  %v2628 = vsub.f32 %v1796, %v2503
  %v2629 = vsub.f32 %v1799, %v2503
  %v2630 = vsub.f32 %v1804, %v2503
  %v2631 = vsub.f32 %v1807, %v2503
  %v2632 = vsub.f32 %v1812, %v2503
  %v2633 = vsub.f32 %v1815, %v2503
  %v2634 = vsub.f32 %v1820, %v2503
  %v2635 = vsub.f32 %v1823, %v2503
  %v2636 = vsub.f32 %v1828, %v2503
  %v2637 = vsub.f32 %v1831, %v2503
  %v2638 = vsub.f32 %v1836, %v2503
  %v2639 = vsub.f32 %v1839, %v2503
  %v2640 = vsub.f32 %v1844, %v2503
  %v2641 = vsub.f32 %v1847, %v2503
  %v2642 = vsub.f32 %v1852, %v2503
  %v2643 = vsub.f32 %v1855, %v2503
  %v2644 = vsub.f32 %v1860, %v2503
  %v2645 = vsub.f32 %v1863, %v2503
  %v2646 = vsub.f32 %v1868, %v2503
  %v2647 = vsub.f32 %v1871, %v2503
  %v2648 = vsub.f32 %v1876, %v2503
  %v2649 = vsub.f32 %v1879, %v2503
  %v2650 = vsub.f32 %v1884, %v2503
  %v2651 = vsub.f32 %v1887, %v2503
  %v2652 = vsub.f32 %v1892, %v2503
  %v2653 = vsub.f32 %v1895, %v2503
  %v2654 = vsub.f32 %v1900, %v2503
  %v2655 = vsub.f32 %v1903, %v2503
  %v2656 = vsub.f32 %v1908, %v2503
  %v2657 = vsub.f32 %v1911, %v2503
  %v2658 = vsub.f32 %v1916, %v2503
  %v2659 = vsub.f32 %v1919, %v2503
  %v2660 = vsub.f32 %v1924, %v2503
  %v2661 = vsub.f32 %v1927, %v2503
  %v2662 = vsub.f32 %v1932, %v2503
  %v2663 = vsub.f32 %v1935, %v2503
  %v2664 = vsub.f32 %v1940, %v2503
  %v2665 = vsub.f32 %v1943, %v2503
  %v2666 = vsub.f32 %v1948, %v2503
  %v2667 = vsub.f32 %v1951, %v2503
  %v2668 = vsub.f32 %v1956, %v2503
  %v2669 = vsub.f32 %v1959, %v2503
  %v2670 = vsub.f32 %v1964, %v2503
  %v2671 = vsub.f32 %v1967, %v2503
  %v2672 = vsub.f32 %v1972, %v2503
  %v2673 = vsub.f32 %v1975, %v2503
  %v2674 = vsub.f32 %v1980, %v2503
  %v2675 = vsub.f32 %v1983, %v2503
  %v2676 = vsub.f32 %v1988, %v2503
  %v2677 = vsub.f32 %v1991, %v2503
  %v2678 = vsub.f32 %v1996, %v2503
  %v2679 = vsub.f32 %v1999, %v2503
  %v2680 = vsub.f32 %v2004, %v2503
  %v2681 = vsub.f32 %v2007, %v2503
  %v2682 = vsub.f32 %v2012, %v2503
  %v2683 = vsub.f32 %v2015, %v2503
  %v2684 = vsub.f32 %v2020, %v2503
  %v2685 = vsub.f32 %v2023, %v2503
  %v2686 = vsub.f32 %v2028, %v2503
  %v2687 = vsub.f32 %v2031, %v2503
  %v2688 = vsub.f32 %v2036, %v2503
  %v2689 = vsub.f32 %v2039, %v2503
  %v2690 = vsub.f32 %v2044, %v2503
  %v2691 = vsub.f32 %v2047, %v2503
  %v2692 = vsub.f32 %v2052, %v2503
  %v2693 = vsub.f32 %v2055, %v2503
  %v2694 = vsub.f32 %v2060, %v2503
  %v2695 = vsub.f32 %v2063, %v2503
  %v2696 = vsub.f32 %v2068, %v2503
  %v2697 = vsub.f32 %v2071, %v2503
  %v2698 = vsub.f32 %v2076, %v2503
  %v2699 = vsub.f32 %v2079, %v2503
  %v2700 = vsub.f32 %v2084, %v2503
  %v2701 = vsub.f32 %v2087, %v2503
  %v2702 = vsub.f32 %v2092, %v2503
  %v2703 = vsub.f32 %v2095, %v2503
  %v2704 = vsub.f32 %v2100, %v2503
  %v2705 = vsub.f32 %v2103, %v2503
  %v2706 = vsub.f32 %v2108, %v2503
  %v2707 = vsub.f32 %v2111, %v2503
  %v2708 = vsub.f32 %v2116, %v2503
  %v2709 = vsub.f32 %v2119, %v2503
  %v2710 = vsub.f32 %v2124, %v2503
  %v2711 = vsub.f32 %v2127, %v2503
  %v2712 = vsub.f32 %v2132, %v2503
  %v2713 = vsub.f32 %v2135, %v2503
  %v2714 = vsub.f32 %v2140, %v2503
  %v2715 = vsub.f32 %v2143, %v2503
  %v2716 = vsub.f32 %v2148, %v2503
  %v2717 = vsub.f32 %v2151, %v2503
  %v2718 = vsub.f32 %v2156, %v2503
  %v2719 = vsub.f32 %v2159, %v2503
  %v2720 = vsub.f32 %v2164, %v2503
  %v2721 = vsub.f32 %v2167, %v2503
  %v2722 = vsub.f32 %v2172, %v2503
  %v2723 = vsub.f32 %v2175, %v2503
  %v2724 = vsub.f32 %v2180, %v2503
  %v2725 = vsub.f32 %v2183, %v2503
  %v2726 = vsub.f32 %v2188, %v2503
  %v2727 = vsub.f32 %v2191, %v2503
  %v2728 = vsub.f32 %v2196, %v2503
  %v2729 = vsub.f32 %v2199, %v2503
  %v2730 = vsub.f32 %v2204, %v2503
  %v2731 = vsub.f32 %v2207, %v2503
  %v2732 = vsub.f32 %v2212, %v2503
  %v2733 = vsub.f32 %v2215, %v2503
  %v2734 = vsub.f32 %v2220, %v2503
  %v2735 = vsub.f32 %v2223, %v2503
  %v2736 = vsub.f32 %v2228, %v2503
  %v2737 = vsub.f32 %v2231, %v2503
  %v2738 = vsub.f32 %v2236, %v2503
  %v2739 = vsub.f32 %v2239, %v2503
  %v2740 = vsub.f32 %v2244, %v2503
  %v2741 = vsub.f32 %v2247, %v2503
  %v2742 = vsub.f32 %v2252, %v2503
  %v2743 = vsub.f32 %v2255, %v2503
  %v2744 = vmul.f32 %v2504, %v2504
  %v2745 = vmul.f32 %v2505, %v2505
  %v2746 = vmul.f32 %v2506, %v2506
  %v2747 = vmul.f32 %v2507, %v2507
  %v2748 = vmul.f32 %v2508, %v2508
  %v2749 = vmul.f32 %v2509, %v2509
  %v2750 = vmul.f32 %v2510, %v2510
  %v2751 = vmul.f32 %v2511, %v2511
  %v2752 = vmul.f32 %v2512, %v2512
  %v2753 = vmul.f32 %v2513, %v2513
  %v2754 = vmul.f32 %v2514, %v2514
  %v2755 = vmul.f32 %v2515, %v2515
  %v2756 = vmul.f32 %v2516, %v2516
  %v2757 = vmul.f32 %v2517, %v2517
  %v2758 = vmul.f32 %v2518, %v2518
  %v2759 = vmul.f32 %v2519, %v2519
  %v2760 = vmul.f32 %v2520, %v2520
  %v2761 = vmul.f32 %v2521, %v2521
  %v2762 = vmul.f32 %v2522, %v2522
  %v2763 = vmul.f32 %v2523, %v2523
  %v2764 = vmul.f32 %v2524, %v2524
  %v2765 = vmul.f32 %v2525, %v2525
  %v2766 = vmul.f32 %v2526, %v2526
  %v2767 = vmul.f32 %v2527, %v2527
  %v2768 = vmul.f32 %v2528, %v2528
  %v2769 = vmul.f32 %v2529, %v2529
  %v2770 = vmul.f32 %v2530, %v2530
  %v2771 = vmul.f32 %v2531, %v2531
  %v2772 = vmul.f32 %v2532, %v2532
  %v2773 = vmul.f32 %v2533, %v2533
  %v2774 = vmul.f32 %v2534, %v2534
  %v2775 = vmul.f32 %v2535, %v2535
  %v2776 = vmul.f32 %v2536, %v2536
  %v2777 = vmul.f32 %v2537, %v2537
  %v2778 = vmul.f32 %v2538, %v2538
  %v2779 = vmul.f32 %v2539, %v2539
  %v2780 = vmul.f32 %v2540, %v2540
  %v2781 = vmul.f32 %v2541, %v2541
  %v2782 = vmul.f32 %v2542, %v2542
  %v2783 = vmul.f32 %v2543, %v2543
  %v2784 = vmul.f32 %v2544, %v2544
  %v2785 = vmul.f32 %v2545, %v2545
  %v2786 = vmul.f32 %v2546, %v2546
  %v2787 = vmul.f32 %v2547, %v2547
  %v2788 = vmul.f32 %v2548, %v2548
  %v2789 = vmul.f32 %v2549, %v2549
  %v2790 = vmul.f32 %v2550, %v2550
  %v2791 = vmul.f32 %v2551, %v2551
  %v2792 = vmul.f32 %v2552, %v2552
  %v2793 = vmul.f32 %v2553, %v2553
  %v2794 = vmul.f32 %v2554, %v2554
  %v2795 = vmul.f32 %v2555, %v2555
  %v2796 = vmul.f32 %v2556, %v2556
  %v2797 = vmul.f32 %v2557, %v2557
  %v2798 = vmul.f32 %v2558, %v2558
  %v2799 = vmul.f32 %v2559, %v2559
  %v2800 = vmul.f32 %v2560, %v2560
  %v2801 = vmul.f32 %v2561, %v2561
  %v2802 = vmul.f32 %v2562, %v2562
  %v2803 = vmul.f32 %v2563, %v2563
  %v2804 = vmul.f32 %v2564, %v2564
  %v2805 = vmul.f32 %v2565, %v2565
  %v2806 = vmul.f32 %v2566, %v2566
  %v2807 = vmul.f32 %v2567, %v2567
  %v2808 = vmul.f32 %v2568, %v2568
  %v2809 = vmul.f32 %v2569, %v2569
  %v2810 = vmul.f32 %v2570, %v2570
  %v2811 = vmul.f32 %v2571, %v2571
  %v2812 = vmul.f32 %v2572, %v2572
  %v2813 = vmul.f32 %v2573, %v2573
  %v2814 = vmul.f32 %v2574, %v2574
  %v2815 = vmul.f32 %v2575, %v2575
  %v2816 = vmul.f32 %v2576, %v2576
  %v2817 = vmul.f32 %v2577, %v2577
  %v2818 = vmul.f32 %v2578, %v2578
  %v2819 = vmul.f32 %v2579, %v2579
  %v2820 = vmul.f32 %v2580, %v2580
  %v2821 = vmul.f32 %v2581, %v2581
  %v2822 = vmul.f32 %v2582, %v2582
  %v2823 = vmul.f32 %v2583, %v2583
  %v2824 = vmul.f32 %v2584, %v2584
  %v2825 = vmul.f32 %v2585, %v2585
  %v2826 = vmul.f32 %v2586, %v2586
  %v2827 = vmul.f32 %v2587, %v2587
  %v2828 = vmul.f32 %v2588, %v2588
  %v2829 = vmul.f32 %v2589, %v2589
  %v2830 = vmul.f32 %v2590, %v2590
  %v2831 = vmul.f32 %v2591, %v2591
  %v2832 = vmul.f32 %v2592, %v2592
  %v2833 = vmul.f32 %v2593, %v2593
  %v2834 = vmul.f32 %v2594, %v2594
  %v2835 = vmul.f32 %v2595, %v2595
  %v2836 = vmul.f32 %v2596, %v2596
  %v2837 = vmul.f32 %v2597, %v2597
  %v2838 = vmul.f32 %v2598, %v2598
  %v2839 = vmul.f32 %v2599, %v2599
  %v2840 = vmul.f32 %v2600, %v2600
  %v2841 = vmul.f32 %v2601, %v2601
  %v2842 = vmul.f32 %v2602, %v2602
  %v2843 = vmul.f32 %v2603, %v2603
  %v2844 = vmul.f32 %v2604, %v2604
  %v2845 = vmul.f32 %v2605, %v2605
  %v2846 = vmul.f32 %v2606, %v2606
  %v2847 = vmul.f32 %v2607, %v2607
  %v2848 = vmul.f32 %v2608, %v2608
  %v2849 = vmul.f32 %v2609, %v2609
  %v2850 = vmul.f32 %v2610, %v2610
  %v2851 = vmul.f32 %v2611, %v2611
  %v2852 = vmul.f32 %v2612, %v2612
  %v2853 = vmul.f32 %v2613, %v2613
  %v2854 = vmul.f32 %v2614, %v2614
  %v2855 = vmul.f32 %v2615, %v2615
  %v2856 = vmul.f32 %v2616, %v2616
  %v2857 = vmul.f32 %v2617, %v2617
  %v2858 = vmul.f32 %v2618, %v2618
  %v2859 = vmul.f32 %v2619, %v2619
  %v2860 = vmul.f32 %v2620, %v2620
  %v2861 = vmul.f32 %v2621, %v2621
  %v2862 = vmul.f32 %v2622, %v2622
  %v2863 = vmul.f32 %v2623, %v2623
  %v2864 = vmul.f32 %v2624, %v2624
  %v2865 = vmul.f32 %v2625, %v2625
  %v2866 = vmul.f32 %v2626, %v2626
  %v2867 = vmul.f32 %v2627, %v2627
  %v2868 = vmul.f32 %v2628, %v2628
  %v2869 = vmul.f32 %v2629, %v2629
  %v2870 = vmul.f32 %v2630, %v2630
  %v2871 = vmul.f32 %v2631, %v2631
  %v2872 = vmul.f32 %v2632, %v2632
  %v2873 = vmul.f32 %v2633, %v2633
  %v2874 = vmul.f32 %v2634, %v2634
  %v2875 = vmul.f32 %v2635, %v2635
  %v2876 = vmul.f32 %v2636, %v2636
  %v2877 = vmul.f32 %v2637, %v2637
  %v2878 = vmul.f32 %v2638, %v2638
  %v2879 = vmul.f32 %v2639, %v2639
  %v2880 = vmul.f32 %v2640, %v2640
  %v2881 = vmul.f32 %v2641, %v2641
  %v2882 = vmul.f32 %v2642, %v2642
  %v2883 = vmul.f32 %v2643, %v2643
  %v2884 = vmul.f32 %v2644, %v2644
  %v2885 = vmul.f32 %v2645, %v2645
  %v2886 = vmul.f32 %v2646, %v2646
  %v2887 = vmul.f32 %v2647, %v2647
  %v2888 = vmul.f32 %v2648, %v2648
  %v2889 = vmul.f32 %v2649, %v2649
  %v2890 = vmul.f32 %v2650, %v2650
  %v2891 = vmul.f32 %v2651, %v2651
  %v2892 = vmul.f32 %v2652, %v2652
  %v2893 = vmul.f32 %v2653, %v2653
  %v2894 = vmul.f32 %v2654, %v2654
  %v2895 = vmul.f32 %v2655, %v2655
  %v2896 = vmul.f32 %v2656, %v2656
  %v2897 = vmul.f32 %v2657, %v2657
  %v2898 = vmul.f32 %v2658, %v2658
  %v2899 = vmul.f32 %v2659, %v2659
  %v2900 = vmul.f32 %v2660, %v2660
  %v2901 = vmul.f32 %v2661, %v2661
  %v2902 = vmul.f32 %v2662, %v2662
  %v2903 = vmul.f32 %v2663, %v2663
  %v2904 = vmul.f32 %v2664, %v2664
  %v2905 = vmul.f32 %v2665, %v2665
  %v2906 = vmul.f32 %v2666, %v2666
  %v2907 = vmul.f32 %v2667, %v2667
  %v2908 = vmul.f32 %v2668, %v2668
  %v2909 = vmul.f32 %v2669, %v2669
  %v2910 = vmul.f32 %v2670, %v2670
  %v2911 = vmul.f32 %v2671, %v2671
  %v2912 = vmul.f32 %v2672, %v2672
  %v2913 = vmul.f32 %v2673, %v2673
  %v2914 = vmul.f32 %v2674, %v2674
  %v2915 = vmul.f32 %v2675, %v2675
  %v2916 = vmul.f32 %v2676, %v2676
  %v2917 = vmul.f32 %v2677, %v2677
  %v2918 = vmul.f32 %v2678, %v2678
  %v2919 = vmul.f32 %v2679, %v2679
  %v2920 = vmul.f32 %v2680, %v2680
  %v2921 = vmul.f32 %v2681, %v2681
  %v2922 = vmul.f32 %v2682, %v2682
  %v2923 = vmul.f32 %v2683, %v2683
  %v2924 = vmul.f32 %v2684, %v2684
  %v2925 = vmul.f32 %v2685, %v2685
  %v2926 = vmul.f32 %v2686, %v2686
  %v2927 = vmul.f32 %v2687, %v2687
  %v2928 = vmul.f32 %v2688, %v2688
  %v2929 = vmul.f32 %v2689, %v2689
  %v2930 = vmul.f32 %v2690, %v2690
  %v2931 = vmul.f32 %v2691, %v2691
  %v2932 = vmul.f32 %v2692, %v2692
  %v2933 = vmul.f32 %v2693, %v2693
  %v2934 = vmul.f32 %v2694, %v2694
  %v2935 = vmul.f32 %v2695, %v2695
  %v2936 = vmul.f32 %v2696, %v2696
  %v2937 = vmul.f32 %v2697, %v2697
  %v2938 = vmul.f32 %v2698, %v2698
  %v2939 = vmul.f32 %v2699, %v2699
  %v2940 = vmul.f32 %v2700, %v2700
  %v2941 = vmul.f32 %v2701, %v2701
  %v2942 = vmul.f32 %v2702, %v2702
  %v2943 = vmul.f32 %v2703, %v2703
  %v2944 = vmul.f32 %v2704, %v2704
  %v2945 = vmul.f32 %v2705, %v2705
  %v2946 = vmul.f32 %v2706, %v2706
  %v2947 = vmul.f32 %v2707, %v2707
  %v2948 = vmul.f32 %v2708, %v2708
  %v2949 = vmul.f32 %v2709, %v2709
  %v2950 = vmul.f32 %v2710, %v2710
  %v2951 = vmul.f32 %v2711, %v2711
  %v2952 = vmul.f32 %v2712, %v2712
  %v2953 = vmul.f32 %v2713, %v2713
  %v2954 = vmul.f32 %v2714, %v2714
  %v2955 = vmul.f32 %v2715, %v2715
  %v2956 = vmul.f32 %v2716, %v2716
  %v2957 = vmul.f32 %v2717, %v2717
  %v2958 = vmul.f32 %v2718, %v2718
  %v2959 = vmul.f32 %v2719, %v2719
  %v2960 = vmul.f32 %v2720, %v2720
  %v2961 = vmul.f32 %v2721, %v2721
  %v2962 = vmul.f32 %v2722, %v2722
  %v2963 = vmul.f32 %v2723, %v2723
  %v2964 = vmul.f32 %v2724, %v2724
  %v2965 = vmul.f32 %v2725, %v2725
  %v2966 = vmul.f32 %v2726, %v2726
  %v2967 = vmul.f32 %v2727, %v2727
  %v2968 = vmul.f32 %v2728, %v2728
  %v2969 = vmul.f32 %v2729, %v2729
  %v2970 = vmul.f32 %v2730, %v2730
  %v2971 = vmul.f32 %v2731, %v2731
  %v2972 = vmul.f32 %v2732, %v2732
  %v2973 = vmul.f32 %v2733, %v2733
  %v2974 = vmul.f32 %v2734, %v2734
  %v2975 = vmul.f32 %v2735, %v2735
  %v2976 = vmul.f32 %v2736, %v2736
  %v2977 = vmul.f32 %v2737, %v2737
  %v2978 = vmul.f32 %v2738, %v2738
  %v2979 = vmul.f32 %v2739, %v2739
  %v2980 = vmul.f32 %v2740, %v2740
  %v2981 = vmul.f32 %v2741, %v2741
  %v2982 = vmul.f32 %v2742, %v2742
  %v2983 = vmul.f32 %v2743, %v2743
  %v2984 = vadd.f32 %v2744, %v2745
  %v2985 = vadd.f32 %v2984, %v2746
  %v2986 = vadd.f32 %v2985, %v2747
  %v2987 = vadd.f32 %v2986, %v2748
  %v2988 = vadd.f32 %v2987, %v2749
  %v2989 = vadd.f32 %v2988, %v2750
  %v2990 = vadd.f32 %v2989, %v2751
  %v2991 = vadd.f32 %v2990, %v2752
  %v2992 = vadd.f32 %v2991, %v2753
  %v2993 = vadd.f32 %v2992, %v2754
  %v2994 = vadd.f32 %v2993, %v2755
  %v2995 = vadd.f32 %v2994, %v2756
  %v2996 = vadd.f32 %v2995, %v2757
  %v2997 = vadd.f32 %v2996, %v2758
  %v2998 = vadd.f32 %v2997, %v2759
  %v2999 = vadd.f32 %v2998, %v2760
  %v3000 = vadd.f32 %v2999, %v2761
  %v3001 = vadd.f32 %v3000, %v2762
  %v3002 = vadd.f32 %v3001, %v2763
  %v3003 = vadd.f32 %v3002, %v2764
  %v3004 = vadd.f32 %v3003, %v2765
  %v3005 = vadd.f32 %v3004, %v2766
  %v3006 = vadd.f32 %v3005, %v2767
  %v3007 = vadd.f32 %v3006, %v2768
  %v3008 = vadd.f32 %v3007, %v2769
  %v3009 = vadd.f32 %v3008, %v2770
  %v3010 = vadd.f32 %v3009, %v2771
  %v3011 = vadd.f32 %v3010, %v2772
  %v3012 = vadd.f32 %v3011, %v2773
  %v3013 = vadd.f32 %v3012, %v2774
  %v3014 = vadd.f32 %v3013, %v2775
  %v3015 = vadd.f32 %v3014, %v2776
  %v3016 = vadd.f32 %v3015, %v2777
  %v3017 = vadd.f32 %v3016, %v2778
  %v3018 = vadd.f32 %v3017, %v2779
  %v3019 = vadd.f32 %v3018, %v2780
  %v3020 = vadd.f32 %v3019, %v2781
  %v3021 = vadd.f32 %v3020, %v2782
  %v3022 = vadd.f32 %v3021, %v2783
  %v3023 = vadd.f32 %v3022, %v2784
  %v3024 = vadd.f32 %v3023, %v2785
  %v3025 = vadd.f32 %v3024, %v2786
  %v3026 = vadd.f32 %v3025, %v2787
  %v3027 = vadd.f32 %v3026, %v2788
  %v3028 = vadd.f32 %v3027, %v2789
  %v3029 = vadd.f32 %v3028, %v2790
  %v3030 = vadd.f32 %v3029, %v2791
  %v3031 = vadd.f32 %v3030, %v2792
  %v3032 = vadd.f32 %v3031, %v2793
  %v3033 = vadd.f32 %v3032, %v2794
  %v3034 = vadd.f32 %v3033, %v2795
  %v3035 = vadd.f32 %v3034, %v2796
  %v3036 = vadd.f32 %v3035, %v2797
  %v3037 = vadd.f32 %v3036, %v2798
  %v3038 = vadd.f32 %v3037, %v2799
  %v3039 = vadd.f32 %v3038, %v2800
  %v3040 = vadd.f32 %v3039, %v2801
  %v3041 = vadd.f32 %v3040, %v2802
  %v3042 = vadd.f32 %v3041, %v2803
  %v3043 = vadd.f32 %v3042, %v2804
  %v3044 = vadd.f32 %v3043, %v2805
  %v3045 = vadd.f32 %v3044, %v2806
  %v3046 = vadd.f32 %v3045, %v2807
  %v3047 = vadd.f32 %v3046, %v2808
  %v3048 = vadd.f32 %v3047, %v2809
  %v3049 = vadd.f32 %v3048, %v2810
  %v3050 = vadd.f32 %v3049, %v2811
  %v3051 = vadd.f32 %v3050, %v2812
  %v3052 = vadd.f32 %v3051, %v2813
  %v3053 = vadd.f32 %v3052, %v2814
  %v3054 = vadd.f32 %v3053, %v2815
  %v3055 = vadd.f32 %v3054, %v2816
  %v3056 = vadd.f32 %v3055, %v2817
  %v3057 = vadd.f32 %v3056, %v2818
  %v3058 = vadd.f32 %v3057, %v2819
  %v3059 = vadd.f32 %v3058, %v2820
  %v3060 = vadd.f32 %v3059, %v2821
  %v3061 = vadd.f32 %v3060, %v2822
  %v3062 = vadd.f32 %v3061, %v2823
  %v3063 = vadd.f32 %v3062, %v2824
  %v3064 = vadd.f32 %v3063, %v2825
  %v3065 = vadd.f32 %v3064, %v2826
  %v3066 = vadd.f32 %v3065, %v2827
  %v3067 = vadd.f32 %v3066, %v2828
  %v3068 = vadd.f32 %v3067, %v2829
  %v3069 = vadd.f32 %v3068, %v2830
  %v3070 = vadd.f32 %v3069, %v2831
  %v3071 = vadd.f32 %v3070, %v2832
  %v3072 = vadd.f32 %v3071, %v2833
  %v3073 = vadd.f32 %v3072, %v2834
  %v3074 = vadd.f32 %v3073, %v2835
  %v3075 = vadd.f32 %v3074, %v2836
  %v3076 = vadd.f32 %v3075, %v2837
  %v3077 = vadd.f32 %v3076, %v2838
  %v3078 = vadd.f32 %v3077, %v2839
  %v3079 = vadd.f32 %v3078, %v2840
  %v3080 = vadd.f32 %v3079, %v2841
  %v3081 = vadd.f32 %v3080, %v2842
  %v3082 = vadd.f32 %v3081, %v2843
  %v3083 = vadd.f32 %v3082, %v2844
  %v3084 = vadd.f32 %v3083, %v2845
  %v3085 = vadd.f32 %v3084, %v2846
  %v3086 = vadd.f32 %v3085, %v2847
  %v3087 = vadd.f32 %v3086, %v2848
  %v3088 = vadd.f32 %v3087, %v2849
  %v3089 = vadd.f32 %v3088, %v2850
  %v3090 = vadd.f32 %v3089, %v2851
  %v3091 = vadd.f32 %v3090, %v2852
  %v3092 = vadd.f32 %v3091, %v2853
  %v3093 = vadd.f32 %v3092, %v2854
  %v3094 = vadd.f32 %v3093, %v2855
  %v3095 = vadd.f32 %v3094, %v2856
  %v3096 = vadd.f32 %v3095, %v2857
  %v3097 = vadd.f32 %v3096, %v2858
  %v3098 = vadd.f32 %v3097, %v2859
  %v3099 = vadd.f32 %v3098, %v2860
  %v3100 = vadd.f32 %v3099, %v2861
  %v3101 = vadd.f32 %v3100, %v2862
  %v3102 = vadd.f32 %v3101, %v2863
  %v3103 = vadd.f32 %v3102, %v2864
  %v3104 = vadd.f32 %v3103, %v2865
  %v3105 = vadd.f32 %v3104, %v2866
  %v3106 = vadd.f32 %v3105, %v2867
  %v3107 = vadd.f32 %v3106, %v2868
  %v3108 = vadd.f32 %v3107, %v2869
  %v3109 = vadd.f32 %v3108, %v2870
  %v3110 = vadd.f32 %v3109, %v2871
  %v3111 = vadd.f32 %v3110, %v2872
  %v3112 = vadd.f32 %v3111, %v2873
  %v3113 = vadd.f32 %v3112, %v2874
  %v3114 = vadd.f32 %v3113, %v2875
  %v3115 = vadd.f32 %v3114, %v2876
  %v3116 = vadd.f32 %v3115, %v2877
  %v3117 = vadd.f32 %v3116, %v2878
  %v3118 = vadd.f32 %v3117, %v2879
  %v3119 = vadd.f32 %v3118, %v2880
  %v3120 = vadd.f32 %v3119, %v2881
  %v3121 = vadd.f32 %v3120, %v2882
  %v3122 = vadd.f32 %v3121, %v2883
  %v3123 = vadd.f32 %v3122, %v2884
  %v3124 = vadd.f32 %v3123, %v2885
  %v3125 = vadd.f32 %v3124, %v2886
  %v3126 = vadd.f32 %v3125, %v2887
  %v3127 = vadd.f32 %v3126, %v2888
  %v3128 = vadd.f32 %v3127, %v2889
  %v3129 = vadd.f32 %v3128, %v2890
  %v3130 = vadd.f32 %v3129, %v2891
  %v3131 = vadd.f32 %v3130, %v2892
  %v3132 = vadd.f32 %v3131, %v2893
  %v3133 = vadd.f32 %v3132, %v2894
  %v3134 = vadd.f32 %v3133, %v2895
  %v3135 = vadd.f32 %v3134, %v2896
  %v3136 = vadd.f32 %v3135, %v2897
  %v3137 = vadd.f32 %v3136, %v2898
  %v3138 = vadd.f32 %v3137, %v2899
  %v3139 = vadd.f32 %v3138, %v2900
  %v3140 = vadd.f32 %v3139, %v2901
  %v3141 = vadd.f32 %v3140, %v2902
  %v3142 = vadd.f32 %v3141, %v2903
  %v3143 = vadd.f32 %v3142, %v2904
  %v3144 = vadd.f32 %v3143, %v2905
  %v3145 = vadd.f32 %v3144, %v2906
  %v3146 = vadd.f32 %v3145, %v2907
  %v3147 = vadd.f32 %v3146, %v2908
  %v3148 = vadd.f32 %v3147, %v2909
  %v3149 = vadd.f32 %v3148, %v2910
  %v3150 = vadd.f32 %v3149, %v2911
  %v3151 = vadd.f32 %v3150, %v2912
  %v3152 = vadd.f32 %v3151, %v2913
  %v3153 = vadd.f32 %v3152, %v2914
  %v3154 = vadd.f32 %v3153, %v2915
  %v3155 = vadd.f32 %v3154, %v2916
  %v3156 = vadd.f32 %v3155, %v2917
  %v3157 = vadd.f32 %v3156, %v2918
  %v3158 = vadd.f32 %v3157, %v2919
  %v3159 = vadd.f32 %v3158, %v2920
  %v3160 = vadd.f32 %v3159, %v2921
  %v3161 = vadd.f32 %v3160, %v2922
  %v3162 = vadd.f32 %v3161, %v2923
  %v3163 = vadd.f32 %v3162, %v2924
  %v3164 = vadd.f32 %v3163, %v2925
  %v3165 = vadd.f32 %v3164, %v2926
  %v3166 = vadd.f32 %v3165, %v2927
  %v3167 = vadd.f32 %v3166, %v2928
  %v3168 = vadd.f32 %v3167, %v2929
  %v3169 = vadd.f32 %v3168, %v2930
  %v3170 = vadd.f32 %v3169, %v2931
  %v3171 = vadd.f32 %v3170, %v2932
  %v3172 = vadd.f32 %v3171, %v2933
  %v3173 = vadd.f32 %v3172, %v2934
  %v3174 = vadd.f32 %v3173, %v2935
  %v3175 = vadd.f32 %v3174, %v2936
  %v3176 = vadd.f32 %v3175, %v2937
  %v3177 = vadd.f32 %v3176, %v2938
  %v3178 = vadd.f32 %v3177, %v2939
  %v3179 = vadd.f32 %v3178, %v2940
  %v3180 = vadd.f32 %v3179, %v2941
  %v3181 = vadd.f32 %v3180, %v2942
  %v3182 = vadd.f32 %v3181, %v2943
  %v3183 = vadd.f32 %v3182, %v2944
  %v3184 = vadd.f32 %v3183, %v2945
  %v3185 = vadd.f32 %v3184, %v2946
  %v3186 = vadd.f32 %v3185, %v2947
  %v3187 = vadd.f32 %v3186, %v2948
  %v3188 = vadd.f32 %v3187, %v2949
  %v3189 = vadd.f32 %v3188, %v2950
  %v3190 = vadd.f32 %v3189, %v2951
  %v3191 = vadd.f32 %v3190, %v2952
  %v3192 = vadd.f32 %v3191, %v2953
  %v3193 = vadd.f32 %v3192, %v2954
  %v3194 = vadd.f32 %v3193, %v2955
  %v3195 = vadd.f32 %v3194, %v2956
  %v3196 = vadd.f32 %v3195, %v2957
  %v3197 = vadd.f32 %v3196, %v2958
  %v3198 = vadd.f32 %v3197, %v2959
  %v3199 = vadd.f32 %v3198, %v2960
  %v3200 = vadd.f32 %v3199, %v2961
  %v3201 = vadd.f32 %v3200, %v2962
  %v3202 = vadd.f32 %v3201, %v2963
  %v3203 = vadd.f32 %v3202, %v2964
  %v3204 = vadd.f32 %v3203, %v2965
  %v3205 = vadd.f32 %v3204, %v2966
  %v3206 = vadd.f32 %v3205, %v2967
  %v3207 = vadd.f32 %v3206, %v2968
  %v3208 = vadd.f32 %v3207, %v2969
  %v3209 = vadd.f32 %v3208, %v2970
  %v3210 = vadd.f32 %v3209, %v2971
  %v3211 = vadd.f32 %v3210, %v2972
  %v3212 = vadd.f32 %v3211, %v2973
  %v3213 = vadd.f32 %v3212, %v2974
  %v3214 = vadd.f32 %v3213, %v2975
  %v3215 = vadd.f32 %v3214, %v2976
  %v3216 = vadd.f32 %v3215, %v2977
  %v3217 = vadd.f32 %v3216, %v2978
  %v3218 = vadd.f32 %v3217, %v2979
  %v3219 = vadd.f32 %v3218, %v2980
  %v3220 = vadd.f32 %v3219, %v2981
  %v3221 = vadd.f32 %v3220, %v2982
  %v3222 = vadd.f32 %v3221, %v2983
  %v3223 = vrot.slane %v3222, 4
  %v3224 = vadd.f32 %v3222, %v3223
  %v3225 = vrot.slane %v3224, 2
  %v3226 = vadd.f32 %v3224, %v3225
  %v3227 = vrot.slane %v3226, 1
  %v3228 = vadd.f32 %v3226, %v3227
  %v3229 = vmul.f32 %v3228, 0.00052083336
  %v3230 = vld [vmem:[%s2] sm:$0x1]
  %v3231 = vadd.f32 %v3229, 1e-05
  %v3232 = vrsqrt.pop %v3231
  %v3233 = vmul.f32 %v3230, %v3232
  %v3235 = vlaneseq
  %v3236 = vshrl.u32 %v3235, 7
  %v3237 = vsub.s32 0, %v3236
  %v3238 = vrot.slane %v3233, %v3237
  %v3240 = vmul.f32 %v1300, %v3238
  %v3241 = vmul.f32 %v1303, %v3238
  %v3242 = vmul.f32 %v1308, %v3238
  %v3243 = vmul.f32 %v1311, %v3238
  %v3244 = vmul.f32 %v1316, %v3238
  %v3245 = vmul.f32 %v1319, %v3238
  %v3246 = vmul.f32 %v1324, %v3238
  %v3247 = vmul.f32 %v1327, %v3238
  %v3248 = vmul.f32 %v1332, %v3238
  %v3249 = vmul.f32 %v1335, %v3238
  %v3250 = vmul.f32 %v1340, %v3238
  %v3251 = vmul.f32 %v1343, %v3238
  %v3252 = vmul.f32 %v1348, %v3238
  %v3253 = vmul.f32 %v1351, %v3238
  %v3254 = vmul.f32 %v1356, %v3238
  %v3255 = vmul.f32 %v1359, %v3238
  %v3256 = vmul.f32 %v1364, %v3238
  %v3257 = vmul.f32 %v1367, %v3238
  %v3258 = vmul.f32 %v1372, %v3238
  %v3259 = vmul.f32 %v1375, %v3238
  %v3260 = vmul.f32 %v1380, %v3238
  %v3261 = vmul.f32 %v1383, %v3238
  %v3262 = vmul.f32 %v1388, %v3238
  %v3263 = vmul.f32 %v1391, %v3238
  %v3264 = vmul.f32 %v1396, %v3238
  %v3265 = vmul.f32 %v1399, %v3238
  %v3266 = vmul.f32 %v1404, %v3238
  %v3267 = vmul.f32 %v1407, %v3238
  %v3268 = vmul.f32 %v1412, %v3238
  %v3269 = vmul.f32 %v1415, %v3238
  %v3270 = vmul.f32 %v1420, %v3238
  %v3271 = vmul.f32 %v1423, %v3238
  %v3272 = vmul.f32 %v1428, %v3238
  %v3273 = vmul.f32 %v1431, %v3238
  %v3274 = vmul.f32 %v1436, %v3238
  %v3275 = vmul.f32 %v1439, %v3238
  %v3276 = vmul.f32 %v1444, %v3238
  %v3277 = vmul.f32 %v1447, %v3238
  %v3278 = vmul.f32 %v1452, %v3238
  %v3279 = vmul.f32 %v1455, %v3238
  %v3280 = vmul.f32 %v1460, %v3238
  %v3281 = vmul.f32 %v1463, %v3238
  %v3282 = vmul.f32 %v1468, %v3238
  %v3283 = vmul.f32 %v1471, %v3238
  %v3284 = vmul.f32 %v1476, %v3238
  %v3285 = vmul.f32 %v1479, %v3238
  %v3286 = vmul.f32 %v1484, %v3238
  %v3287 = vmul.f32 %v1487, %v3238
  %v3288 = vmul.f32 %v1492, %v3238
  %v3289 = vmul.f32 %v1495, %v3238
  %v3290 = vmul.f32 %v1500, %v3238
  %v3291 = vmul.f32 %v1503, %v3238
  %v3292 = vmul.f32 %v1508, %v3238
  %v3293 = vmul.f32 %v1511, %v3238
  %v3294 = vmul.f32 %v1516, %v3238
  %v3295 = vmul.f32 %v1519, %v3238
  %v3296 = vmul.f32 %v1524, %v3238
  %v3297 = vmul.f32 %v1527, %v3238
  %v3298 = vmul.f32 %v1532, %v3238
  %v3299 = vmul.f32 %v1535, %v3238
  %v3300 = vmul.f32 %v1540, %v3238
  %v3301 = vmul.f32 %v1543, %v3238
  %v3302 = vmul.f32 %v1548, %v3238
  %v3303 = vmul.f32 %v1551, %v3238
  %v3304 = vmul.f32 %v1556, %v3238
  %v3305 = vmul.f32 %v1559, %v3238
  %v3306 = vmul.f32 %v1564, %v3238
  %v3307 = vmul.f32 %v1567, %v3238
  %v3308 = vmul.f32 %v1572, %v3238
  %v3309 = vmul.f32 %v1575, %v3238
  %v3310 = vmul.f32 %v1580, %v3238
  %v3311 = vmul.f32 %v1583, %v3238
  %v3312 = vmul.f32 %v1588, %v3238
  %v3313 = vmul.f32 %v1591, %v3238
  %v3314 = vmul.f32 %v1596, %v3238
  %v3315 = vmul.f32 %v1599, %v3238
  %v3316 = vmul.f32 %v1604, %v3238
  %v3317 = vmul.f32 %v1607, %v3238
  %v3318 = vmul.f32 %v1612, %v3238
  %v3319 = vmul.f32 %v1615, %v3238
  %v3320 = vmul.f32 %v1620, %v3238
  %v3321 = vmul.f32 %v1623, %v3238
  %v3322 = vmul.f32 %v1628, %v3238
  %v3323 = vmul.f32 %v1631, %v3238
  %v3324 = vmul.f32 %v1636, %v3238
  %v3325 = vmul.f32 %v1639, %v3238
  %v3326 = vmul.f32 %v1644, %v3238
  %v3327 = vmul.f32 %v1647, %v3238
  %v3328 = vmul.f32 %v1652, %v3238
  %v3329 = vmul.f32 %v1655, %v3238
  %v3330 = vmul.f32 %v1660, %v3238
  %v3331 = vmul.f32 %v1663, %v3238
  %v3332 = vmul.f32 %v1668, %v3238
  %v3333 = vmul.f32 %v1671, %v3238
  %v3334 = vmul.f32 %v1676, %v3238
  %v3335 = vmul.f32 %v1679, %v3238
  %v3336 = vmul.f32 %v1684, %v3238
  %v3337 = vmul.f32 %v1687, %v3238
  %v3338 = vmul.f32 %v1692, %v3238
  %v3339 = vmul.f32 %v1695, %v3238
  %v3340 = vmul.f32 %v1700, %v3238
  %v3341 = vmul.f32 %v1703, %v3238
  %v3342 = vmul.f32 %v1708, %v3238
  %v3343 = vmul.f32 %v1711, %v3238
  %v3344 = vmul.f32 %v1716, %v3238
  %v3345 = vmul.f32 %v1719, %v3238
  %v3346 = vmul.f32 %v1724, %v3238
  %v3347 = vmul.f32 %v1727, %v3238
  %v3348 = vmul.f32 %v1732, %v3238
  %v3349 = vmul.f32 %v1735, %v3238
  %v3350 = vmul.f32 %v1740, %v3238
  %v3351 = vmul.f32 %v1743, %v3238
  %v3352 = vmul.f32 %v1748, %v3238
  %v3353 = vmul.f32 %v1751, %v3238
  %v3354 = vmul.f32 %v1756, %v3238
  %v3355 = vmul.f32 %v1759, %v3238
  %v3356 = vmul.f32 %v1764, %v3238
  %v3357 = vmul.f32 %v1767, %v3238
  %v3358 = vmul.f32 %v1772, %v3238
  %v3359 = vmul.f32 %v1775, %v3238
  %v3360 = vmul.f32 %v1780, %v3238
  %v3361 = vmul.f32 %v1783, %v3238
  %v3362 = vmul.f32 %v1788, %v3238
  %v3363 = vmul.f32 %v1791, %v3238
  %v3364 = vmul.f32 %v1796, %v3238
  %v3365 = vmul.f32 %v1799, %v3238
  %v3366 = vmul.f32 %v1804, %v3238
  %v3367 = vmul.f32 %v1807, %v3238
  %v3368 = vmul.f32 %v1812, %v3238
  %v3369 = vmul.f32 %v1815, %v3238
  %v3370 = vmul.f32 %v1820, %v3238
  %v3371 = vmul.f32 %v1823, %v3238
  %v3372 = vmul.f32 %v1828, %v3238
  %v3373 = vmul.f32 %v1831, %v3238
  %v3374 = vmul.f32 %v1836, %v3238
  %v3375 = vmul.f32 %v1839, %v3238
  %v3376 = vmul.f32 %v1844, %v3238
  %v3377 = vmul.f32 %v1847, %v3238
  %v3378 = vmul.f32 %v1852, %v3238
  %v3379 = vmul.f32 %v1855, %v3238
  %v3380 = vmul.f32 %v1860, %v3238
  %v3381 = vmul.f32 %v1863, %v3238
  %v3382 = vmul.f32 %v1868, %v3238
  %v3383 = vmul.f32 %v1871, %v3238
  %v3384 = vmul.f32 %v1876, %v3238
  %v3385 = vmul.f32 %v1879, %v3238
  %v3386 = vmul.f32 %v1884, %v3238
  %v3387 = vmul.f32 %v1887, %v3238
  %v3388 = vmul.f32 %v1892, %v3238
  %v3389 = vmul.f32 %v1895, %v3238
  %v3390 = vmul.f32 %v1900, %v3238
  %v3391 = vmul.f32 %v1903, %v3238
  %v3392 = vmul.f32 %v1908, %v3238
  %v3393 = vmul.f32 %v1911, %v3238
  %v3394 = vmul.f32 %v1916, %v3238
  %v3395 = vmul.f32 %v1919, %v3238
  %v3396 = vmul.f32 %v1924, %v3238
  %v3397 = vmul.f32 %v1927, %v3238
  %v3398 = vmul.f32 %v1932, %v3238
  %v3399 = vmul.f32 %v1935, %v3238
  %v3400 = vmul.f32 %v1940, %v3238
  %v3401 = vmul.f32 %v1943, %v3238
  %v3402 = vmul.f32 %v1948, %v3238
  %v3403 = vmul.f32 %v1951, %v3238
  %v3404 = vmul.f32 %v1956, %v3238
  %v3405 = vmul.f32 %v1959, %v3238
  %v3406 = vmul.f32 %v1964, %v3238
  %v3407 = vmul.f32 %v1967, %v3238
  %v3408 = vmul.f32 %v1972, %v3238
  %v3409 = vmul.f32 %v1975, %v3238
  %v3410 = vmul.f32 %v1980, %v3238
  %v3411 = vmul.f32 %v1983, %v3238
  %v3412 = vmul.f32 %v1988, %v3238
  %v3413 = vmul.f32 %v1991, %v3238
  %v3414 = vmul.f32 %v1996, %v3238
  %v3415 = vmul.f32 %v1999, %v3238
  %v3416 = vmul.f32 %v2004, %v3238
  %v3417 = vmul.f32 %v2007, %v3238
  %v3418 = vmul.f32 %v2012, %v3238
  %v3419 = vmul.f32 %v2015, %v3238
  %v3420 = vmul.f32 %v2020, %v3238
  %v3421 = vmul.f32 %v2023, %v3238
  %v3422 = vmul.f32 %v2028, %v3238
  %v3423 = vmul.f32 %v2031, %v3238
  %v3424 = vmul.f32 %v2036, %v3238
  %v3425 = vmul.f32 %v2039, %v3238
  %v3426 = vmul.f32 %v2044, %v3238
  %v3427 = vmul.f32 %v2047, %v3238
  %v3428 = vmul.f32 %v2052, %v3238
  %v3429 = vmul.f32 %v2055, %v3238
  %v3430 = vmul.f32 %v2060, %v3238
  %v3431 = vmul.f32 %v2063, %v3238
  %v3432 = vmul.f32 %v2068, %v3238
  %v3433 = vmul.f32 %v2071, %v3238
  %v3434 = vmul.f32 %v2076, %v3238
  %v3435 = vmul.f32 %v2079, %v3238
  %v3436 = vmul.f32 %v2084, %v3238
  %v3437 = vmul.f32 %v2087, %v3238
  %v3438 = vmul.f32 %v2092, %v3238
  %v3439 = vmul.f32 %v2095, %v3238
  %v3440 = vmul.f32 %v2100, %v3238
  %v3441 = vmul.f32 %v2103, %v3238
  %v3442 = vmul.f32 %v2108, %v3238
  %v3443 = vmul.f32 %v2111, %v3238
  %v3444 = vmul.f32 %v2116, %v3238
  %v3445 = vmul.f32 %v2119, %v3238
  %v3446 = vmul.f32 %v2124, %v3238
  %v3447 = vmul.f32 %v2127, %v3238
  %v3448 = vmul.f32 %v2132, %v3238
  %v3449 = vmul.f32 %v2135, %v3238
  %v3450 = vmul.f32 %v2140, %v3238
  %v3451 = vmul.f32 %v2143, %v3238
  %v3452 = vmul.f32 %v2148, %v3238
  %v3453 = vmul.f32 %v2151, %v3238
  %v3454 = vmul.f32 %v2156, %v3238
  %v3455 = vmul.f32 %v2159, %v3238
  %v3456 = vmul.f32 %v2164, %v3238
  %v3457 = vmul.f32 %v2167, %v3238
  %v3458 = vmul.f32 %v2172, %v3238
  %v3459 = vmul.f32 %v2175, %v3238
  %v3460 = vmul.f32 %v2180, %v3238
  %v3461 = vmul.f32 %v2183, %v3238
  %v3462 = vmul.f32 %v2188, %v3238
  %v3463 = vmul.f32 %v2191, %v3238
  %v3464 = vmul.f32 %v2196, %v3238
  %v3465 = vmul.f32 %v2199, %v3238
  %v3466 = vmul.f32 %v2204, %v3238
  %v3467 = vmul.f32 %v2207, %v3238
  %v3468 = vmul.f32 %v2212, %v3238
  %v3469 = vmul.f32 %v2215, %v3238
  %v3470 = vmul.f32 %v2220, %v3238
  %v3471 = vmul.f32 %v2223, %v3238
  %v3472 = vmul.f32 %v2228, %v3238
  %v3473 = vmul.f32 %v2231, %v3238
  %v3474 = vmul.f32 %v2236, %v3238
  %v3475 = vmul.f32 %v2239, %v3238
  %v3476 = vmul.f32 %v2244, %v3238
  %v3477 = vmul.f32 %v2247, %v3238
  %v3478 = vmul.f32 %v2252, %v3238
  %v3479 = vmul.f32 %v2255, %v3238
  %v3480 = vld [vmem:[%s3] sm:$0x1]
  %v3481 = vmul.f32 %v2503, %v3233
  %v3482 = vsub.f32 %v3480, %v3481
  %v3484 = vlaneseq
  %v3485 = vshrl.u32 %v3484, 7
  %v3486 = vsub.s32 0, %v3485
  %v3487 = vrot.slane %v3482, %v3486
  %v3489 = vadd.f32 %v3240, %v3487
  %v3490 = vadd.f32 %v3241, %v3487
  %v3491 = vadd.f32 %v3242, %v3487
  %v3492 = vadd.f32 %v3243, %v3487
  %v3493 = vadd.f32 %v3244, %v3487
  %v3494 = vadd.f32 %v3245, %v3487
  %v3495 = vadd.f32 %v3246, %v3487
  %v3496 = vadd.f32 %v3247, %v3487
  %v3497 = vadd.f32 %v3248, %v3487
  %v3498 = vadd.f32 %v3249, %v3487
  %v3499 = vadd.f32 %v3250, %v3487
  %v3500 = vadd.f32 %v3251, %v3487
  %v3501 = vadd.f32 %v3252, %v3487
  %v3502 = vadd.f32 %v3253, %v3487
  %v3503 = vadd.f32 %v3254, %v3487
  %v3504 = vadd.f32 %v3255, %v3487
  %v3505 = vadd.f32 %v3256, %v3487
  %v3506 = vadd.f32 %v3257, %v3487
  %v3507 = vadd.f32 %v3258, %v3487
  %v3508 = vadd.f32 %v3259, %v3487
  %v3509 = vadd.f32 %v3260, %v3487
  %v3510 = vadd.f32 %v3261, %v3487
  %v3511 = vadd.f32 %v3262, %v3487
  %v3512 = vadd.f32 %v3263, %v3487
  %v3513 = vadd.f32 %v3264, %v3487
  %v3514 = vadd.f32 %v3265, %v3487
  %v3515 = vadd.f32 %v3266, %v3487
  %v3516 = vadd.f32 %v3267, %v3487
  %v3517 = vadd.f32 %v3268, %v3487
  %v3518 = vadd.f32 %v3269, %v3487
  %v3519 = vadd.f32 %v3270, %v3487
  %v3520 = vadd.f32 %v3271, %v3487
  %v3521 = vadd.f32 %v3272, %v3487
  %v3522 = vadd.f32 %v3273, %v3487
  %v3523 = vadd.f32 %v3274, %v3487
  %v3524 = vadd.f32 %v3275, %v3487
  %v3525 = vadd.f32 %v3276, %v3487
  %v3526 = vadd.f32 %v3277, %v3487
  %v3527 = vadd.f32 %v3278, %v3487
  %v3528 = vadd.f32 %v3279, %v3487
  %v3529 = vadd.f32 %v3280, %v3487
  %v3530 = vadd.f32 %v3281, %v3487
  %v3531 = vadd.f32 %v3282, %v3487
  %v3532 = vadd.f32 %v3283, %v3487
  %v3533 = vadd.f32 %v3284, %v3487
  %v3534 = vadd.f32 %v3285, %v3487
  %v3535 = vadd.f32 %v3286, %v3487
  %v3536 = vadd.f32 %v3287, %v3487
  %v3537 = vadd.f32 %v3288, %v3487
  %v3538 = vadd.f32 %v3289, %v3487
  %v3539 = vadd.f32 %v3290, %v3487
  %v3540 = vadd.f32 %v3291, %v3487
  %v3541 = vadd.f32 %v3292, %v3487
  %v3542 = vadd.f32 %v3293, %v3487
  %v3543 = vadd.f32 %v3294, %v3487
  %v3544 = vadd.f32 %v3295, %v3487
  %v3545 = vadd.f32 %v3296, %v3487
  %v3546 = vadd.f32 %v3297, %v3487
  %v3547 = vadd.f32 %v3298, %v3487
  %v3548 = vadd.f32 %v3299, %v3487
  %v3549 = vadd.f32 %v3300, %v3487
  %v3550 = vadd.f32 %v3301, %v3487
  %v3551 = vadd.f32 %v3302, %v3487
  %v3552 = vadd.f32 %v3303, %v3487
  %v3553 = vadd.f32 %v3304, %v3487
  %v3554 = vadd.f32 %v3305, %v3487
  %v3555 = vadd.f32 %v3306, %v3487
  %v3556 = vadd.f32 %v3307, %v3487
  %v3557 = vadd.f32 %v3308, %v3487
  %v3558 = vadd.f32 %v3309, %v3487
  %v3559 = vadd.f32 %v3310, %v3487
  %v3560 = vadd.f32 %v3311, %v3487
  %v3561 = vadd.f32 %v3312, %v3487
  %v3562 = vadd.f32 %v3313, %v3487
  %v3563 = vadd.f32 %v3314, %v3487
  %v3564 = vadd.f32 %v3315, %v3487
  %v3565 = vadd.f32 %v3316, %v3487
  %v3566 = vadd.f32 %v3317, %v3487
  %v3567 = vadd.f32 %v3318, %v3487
  %v3568 = vadd.f32 %v3319, %v3487
  %v3569 = vadd.f32 %v3320, %v3487
  %v3570 = vadd.f32 %v3321, %v3487
  %v3571 = vadd.f32 %v3322, %v3487
  %v3572 = vadd.f32 %v3323, %v3487
  %v3573 = vadd.f32 %v3324, %v3487
  %v3574 = vadd.f32 %v3325, %v3487
  %v3575 = vadd.f32 %v3326, %v3487
  %v3576 = vadd.f32 %v3327, %v3487
  %v3577 = vadd.f32 %v3328, %v3487
  %v3578 = vadd.f32 %v3329, %v3487
  %v3579 = vadd.f32 %v3330, %v3487
  %v3580 = vadd.f32 %v3331, %v3487
  %v3581 = vadd.f32 %v3332, %v3487
  %v3582 = vadd.f32 %v3333, %v3487
  %v3583 = vadd.f32 %v3334, %v3487
  %v3584 = vadd.f32 %v3335, %v3487
  %v3585 = vadd.f32 %v3336, %v3487
  %v3586 = vadd.f32 %v3337, %v3487
  %v3587 = vadd.f32 %v3338, %v3487
  %v3588 = vadd.f32 %v3339, %v3487
  %v3589 = vadd.f32 %v3340, %v3487
  %v3590 = vadd.f32 %v3341, %v3487
  %v3591 = vadd.f32 %v3342, %v3487
  %v3592 = vadd.f32 %v3343, %v3487
  %v3593 = vadd.f32 %v3344, %v3487
  %v3594 = vadd.f32 %v3345, %v3487
  %v3595 = vadd.f32 %v3346, %v3487
  %v3596 = vadd.f32 %v3347, %v3487
  %v3597 = vadd.f32 %v3348, %v3487
  %v3598 = vadd.f32 %v3349, %v3487
  %v3599 = vadd.f32 %v3350, %v3487
  %v3600 = vadd.f32 %v3351, %v3487
  %v3601 = vadd.f32 %v3352, %v3487
  %v3602 = vadd.f32 %v3353, %v3487
  %v3603 = vadd.f32 %v3354, %v3487
  %v3604 = vadd.f32 %v3355, %v3487
  %v3605 = vadd.f32 %v3356, %v3487
  %v3606 = vadd.f32 %v3357, %v3487
  %v3607 = vadd.f32 %v3358, %v3487
  %v3608 = vadd.f32 %v3359, %v3487
  %v3609 = vadd.f32 %v3360, %v3487
  %v3610 = vadd.f32 %v3361, %v3487
  %v3611 = vadd.f32 %v3362, %v3487
  %v3612 = vadd.f32 %v3363, %v3487
  %v3613 = vadd.f32 %v3364, %v3487
  %v3614 = vadd.f32 %v3365, %v3487
  %v3615 = vadd.f32 %v3366, %v3487
  %v3616 = vadd.f32 %v3367, %v3487
  %v3617 = vadd.f32 %v3368, %v3487
  %v3618 = vadd.f32 %v3369, %v3487
  %v3619 = vadd.f32 %v3370, %v3487
  %v3620 = vadd.f32 %v3371, %v3487
  %v3621 = vadd.f32 %v3372, %v3487
  %v3622 = vadd.f32 %v3373, %v3487
  %v3623 = vadd.f32 %v3374, %v3487
  %v3624 = vadd.f32 %v3375, %v3487
  %v3625 = vadd.f32 %v3376, %v3487
  %v3626 = vadd.f32 %v3377, %v3487
  %v3627 = vadd.f32 %v3378, %v3487
  %v3628 = vadd.f32 %v3379, %v3487
  %v3629 = vadd.f32 %v3380, %v3487
  %v3630 = vadd.f32 %v3381, %v3487
  %v3631 = vadd.f32 %v3382, %v3487
  %v3632 = vadd.f32 %v3383, %v3487
  %v3633 = vadd.f32 %v3384, %v3487
  %v3634 = vadd.f32 %v3385, %v3487
  %v3635 = vadd.f32 %v3386, %v3487
  %v3636 = vadd.f32 %v3387, %v3487
  %v3637 = vadd.f32 %v3388, %v3487
  %v3638 = vadd.f32 %v3389, %v3487
  %v3639 = vadd.f32 %v3390, %v3487
  %v3640 = vadd.f32 %v3391, %v3487
  %v3641 = vadd.f32 %v3392, %v3487
  %v3642 = vadd.f32 %v3393, %v3487
  %v3643 = vadd.f32 %v3394, %v3487
  %v3644 = vadd.f32 %v3395, %v3487
  %v3645 = vadd.f32 %v3396, %v3487
  %v3646 = vadd.f32 %v3397, %v3487
  %v3647 = vadd.f32 %v3398, %v3487
  %v3648 = vadd.f32 %v3399, %v3487
  %v3649 = vadd.f32 %v3400, %v3487
  %v3650 = vadd.f32 %v3401, %v3487
  %v3651 = vadd.f32 %v3402, %v3487
  %v3652 = vadd.f32 %v3403, %v3487
  %v3653 = vadd.f32 %v3404, %v3487
  %v3654 = vadd.f32 %v3405, %v3487
  %v3655 = vadd.f32 %v3406, %v3487
  %v3656 = vadd.f32 %v3407, %v3487
  %v3657 = vadd.f32 %v3408, %v3487
  %v3658 = vadd.f32 %v3409, %v3487
  %v3659 = vadd.f32 %v3410, %v3487
  %v3660 = vadd.f32 %v3411, %v3487
  %v3661 = vadd.f32 %v3412, %v3487
  %v3662 = vadd.f32 %v3413, %v3487
  %v3663 = vadd.f32 %v3414, %v3487
  %v3664 = vadd.f32 %v3415, %v3487
  %v3665 = vadd.f32 %v3416, %v3487
  %v3666 = vadd.f32 %v3417, %v3487
  %v3667 = vadd.f32 %v3418, %v3487
  %v3668 = vadd.f32 %v3419, %v3487
  %v3669 = vadd.f32 %v3420, %v3487
  %v3670 = vadd.f32 %v3421, %v3487
  %v3671 = vadd.f32 %v3422, %v3487
  %v3672 = vadd.f32 %v3423, %v3487
  %v3673 = vadd.f32 %v3424, %v3487
  %v3674 = vadd.f32 %v3425, %v3487
  %v3675 = vadd.f32 %v3426, %v3487
  %v3676 = vadd.f32 %v3427, %v3487
  %v3677 = vadd.f32 %v3428, %v3487
  %v3678 = vadd.f32 %v3429, %v3487
  %v3679 = vadd.f32 %v3430, %v3487
  %v3680 = vadd.f32 %v3431, %v3487
  %v3681 = vadd.f32 %v3432, %v3487
  %v3682 = vadd.f32 %v3433, %v3487
  %v3683 = vadd.f32 %v3434, %v3487
  %v3684 = vadd.f32 %v3435, %v3487
  %v3685 = vadd.f32 %v3436, %v3487
  %v3686 = vadd.f32 %v3437, %v3487
  %v3687 = vadd.f32 %v3438, %v3487
  %v3688 = vadd.f32 %v3439, %v3487
  %v3689 = vadd.f32 %v3440, %v3487
  %v3690 = vadd.f32 %v3441, %v3487
  %v3691 = vadd.f32 %v3442, %v3487
  %v3692 = vadd.f32 %v3443, %v3487
  %v3693 = vadd.f32 %v3444, %v3487
  %v3694 = vadd.f32 %v3445, %v3487
  %v3695 = vadd.f32 %v3446, %v3487
  %v3696 = vadd.f32 %v3447, %v3487
  %v3697 = vadd.f32 %v3448, %v3487
  %v3698 = vadd.f32 %v3449, %v3487
  %v3699 = vadd.f32 %v3450, %v3487
  %v3700 = vadd.f32 %v3451, %v3487
  %v3701 = vadd.f32 %v3452, %v3487
  %v3702 = vadd.f32 %v3453, %v3487
  %v3703 = vadd.f32 %v3454, %v3487
  %v3704 = vadd.f32 %v3455, %v3487
  %v3705 = vadd.f32 %v3456, %v3487
  %v3706 = vadd.f32 %v3457, %v3487
  %v3707 = vadd.f32 %v3458, %v3487
  %v3708 = vadd.f32 %v3459, %v3487
  %v3709 = vadd.f32 %v3460, %v3487
  %v3710 = vadd.f32 %v3461, %v3487
  %v3711 = vadd.f32 %v3462, %v3487
  %v3712 = vadd.f32 %v3463, %v3487
  %v3713 = vadd.f32 %v3464, %v3487
  %v3714 = vadd.f32 %v3465, %v3487
  %v3715 = vadd.f32 %v3466, %v3487
  %v3716 = vadd.f32 %v3467, %v3487
  %v3717 = vadd.f32 %v3468, %v3487
  %v3718 = vadd.f32 %v3469, %v3487
  %v3719 = vadd.f32 %v3470, %v3487
  %v3720 = vadd.f32 %v3471, %v3487
  %v3721 = vadd.f32 %v3472, %v3487
  %v3722 = vadd.f32 %v3473, %v3487
  %v3723 = vadd.f32 %v3474, %v3487
  %v3724 = vadd.f32 %v3475, %v3487
  %v3725 = vadd.f32 %v3476, %v3487
  %v3726 = vadd.f32 %v3477, %v3487
  %v3727 = vadd.f32 %v3478, %v3487
  %v3728 = vadd.f32 %v3479, %v3487
  %v3729 = vmax.f32 %v3489, %v3529
  %v3730 = vmax.f32 %v3490, %v3530
  %v3731 = vmax.f32 %v3491, %v3531
  %v3732 = vmax.f32 %v3492, %v3532
  %v3733 = vmax.f32 %v3493, %v3533
  %v3734 = vmax.f32 %v3494, %v3534
  %v3735 = vmax.f32 %v3495, %v3535
  %v3736 = vmax.f32 %v3496, %v3536
  %v3737 = vmax.f32 %v3497, %v3537
  %v3738 = vmax.f32 %v3498, %v3538
  %v3739 = vmax.f32 %v3499, %v3539
  %v3740 = vmax.f32 %v3500, %v3540
  %v3741 = vmax.f32 %v3501, %v3541
  %v3742 = vmax.f32 %v3502, %v3542
  %v3743 = vmax.f32 %v3503, %v3543
  %v3744 = vmax.f32 %v3504, %v3544
  %v3745 = vmax.f32 %v3505, %v3545
  %v3746 = vmax.f32 %v3506, %v3546
  %v3747 = vmax.f32 %v3507, %v3547
  %v3748 = vmax.f32 %v3508, %v3548
  %v3749 = vmax.f32 %v3509, %v3549
  %v3750 = vmax.f32 %v3510, %v3550
  %v3751 = vmax.f32 %v3511, %v3551
  %v3752 = vmax.f32 %v3512, %v3552
  %v3753 = vmax.f32 %v3513, %v3553
  %v3754 = vmax.f32 %v3514, %v3554
  %v3755 = vmax.f32 %v3515, %v3555
  %v3756 = vmax.f32 %v3516, %v3556
  %v3757 = vmax.f32 %v3517, %v3557
  %v3758 = vmax.f32 %v3518, %v3558
  %v3759 = vmax.f32 %v3519, %v3559
  %v3760 = vmax.f32 %v3520, %v3560
  %v3761 = vmax.f32 %v3521, %v3561
  %v3762 = vmax.f32 %v3522, %v3562
  %v3763 = vmax.f32 %v3523, %v3563
  %v3764 = vmax.f32 %v3524, %v3564
  %v3765 = vmax.f32 %v3525, %v3565
  %v3766 = vmax.f32 %v3526, %v3566
  %v3767 = vmax.f32 %v3527, %v3567
  %v3768 = vmax.f32 %v3528, %v3568
  %v3769 = vmax.f32 %v3729, %v3569
  %v3770 = vmax.f32 %v3730, %v3570
  %v3771 = vmax.f32 %v3731, %v3571
  %v3772 = vmax.f32 %v3732, %v3572
  %v3773 = vmax.f32 %v3733, %v3573
  %v3774 = vmax.f32 %v3734, %v3574
  %v3775 = vmax.f32 %v3735, %v3575
  %v3776 = vmax.f32 %v3736, %v3576
  %v3777 = vmax.f32 %v3737, %v3577
  %v3778 = vmax.f32 %v3738, %v3578
  %v3779 = vmax.f32 %v3739, %v3579
  %v3780 = vmax.f32 %v3740, %v3580
  %v3781 = vmax.f32 %v3741, %v3581
  %v3782 = vmax.f32 %v3742, %v3582
  %v3783 = vmax.f32 %v3743, %v3583
  %v3784 = vmax.f32 %v3744, %v3584
  %v3785 = vmax.f32 %v3745, %v3585
  %v3786 = vmax.f32 %v3746, %v3586
  %v3787 = vmax.f32 %v3747, %v3587
  %v3788 = vmax.f32 %v3748, %v3588
  %v3789 = vmax.f32 %v3749, %v3589
  %v3790 = vmax.f32 %v3750, %v3590
  %v3791 = vmax.f32 %v3751, %v3591
  %v3792 = vmax.f32 %v3752, %v3592
  %v3793 = vmax.f32 %v3753, %v3593
  %v3794 = vmax.f32 %v3754, %v3594
  %v3795 = vmax.f32 %v3755, %v3595
  %v3796 = vmax.f32 %v3756, %v3596
  %v3797 = vmax.f32 %v3757, %v3597
  %v3798 = vmax.f32 %v3758, %v3598
  %v3799 = vmax.f32 %v3759, %v3599
  %v3800 = vmax.f32 %v3760, %v3600
  %v3801 = vmax.f32 %v3761, %v3601
  %v3802 = vmax.f32 %v3762, %v3602
  %v3803 = vmax.f32 %v3763, %v3603
  %v3804 = vmax.f32 %v3764, %v3604
  %v3805 = vmax.f32 %v3765, %v3605
  %v3806 = vmax.f32 %v3766, %v3606
  %v3807 = vmax.f32 %v3767, %v3607
  %v3808 = vmax.f32 %v3768, %v3608
  %v3809 = vmax.f32 %v3769, %v3609
  %v3810 = vmax.f32 %v3770, %v3610
  %v3811 = vmax.f32 %v3771, %v3611
  %v3812 = vmax.f32 %v3772, %v3612
  %v3813 = vmax.f32 %v3773, %v3613
  %v3814 = vmax.f32 %v3774, %v3614
  %v3815 = vmax.f32 %v3775, %v3615
  %v3816 = vmax.f32 %v3776, %v3616
  %v3817 = vmax.f32 %v3777, %v3617
  %v3818 = vmax.f32 %v3778, %v3618
  %v3819 = vmax.f32 %v3779, %v3619
  %v3820 = vmax.f32 %v3780, %v3620
  %v3821 = vmax.f32 %v3781, %v3621
  %v3822 = vmax.f32 %v3782, %v3622
  %v3823 = vmax.f32 %v3783, %v3623
  %v3824 = vmax.f32 %v3784, %v3624
  %v3825 = vmax.f32 %v3785, %v3625
  %v3826 = vmax.f32 %v3786, %v3626
  %v3827 = vmax.f32 %v3787, %v3627
  %v3828 = vmax.f32 %v3788, %v3628
  %v3829 = vmax.f32 %v3789, %v3629
  %v3830 = vmax.f32 %v3790, %v3630
  %v3831 = vmax.f32 %v3791, %v3631
  %v3832 = vmax.f32 %v3792, %v3632
  %v3833 = vmax.f32 %v3793, %v3633
  %v3834 = vmax.f32 %v3794, %v3634
  %v3835 = vmax.f32 %v3795, %v3635
  %v3836 = vmax.f32 %v3796, %v3636
  %v3837 = vmax.f32 %v3797, %v3637
  %v3838 = vmax.f32 %v3798, %v3638
  %v3839 = vmax.f32 %v3799, %v3639
  %v3840 = vmax.f32 %v3800, %v3640
  %v3841 = vmax.f32 %v3801, %v3641
  %v3842 = vmax.f32 %v3802, %v3642
  %v3843 = vmax.f32 %v3803, %v3643
  %v3844 = vmax.f32 %v3804, %v3644
  %v3845 = vmax.f32 %v3805, %v3645
  %v3846 = vmax.f32 %v3806, %v3646
  %v3847 = vmax.f32 %v3807, %v3647
  %v3848 = vmax.f32 %v3808, %v3648
  %v3849 = vmax.f32 %v3809, %v3649
  %v3850 = vmax.f32 %v3810, %v3650
  %v3851 = vmax.f32 %v3811, %v3651
  %v3852 = vmax.f32 %v3812, %v3652
  %v3853 = vmax.f32 %v3813, %v3653
  %v3854 = vmax.f32 %v3814, %v3654
  %v3855 = vmax.f32 %v3815, %v3655
  %v3856 = vmax.f32 %v3816, %v3656
  %v3857 = vmax.f32 %v3817, %v3657
  %v3858 = vmax.f32 %v3818, %v3658
  %v3859 = vmax.f32 %v3819, %v3659
  %v3860 = vmax.f32 %v3820, %v3660
  %v3861 = vmax.f32 %v3821, %v3661
  %v3862 = vmax.f32 %v3822, %v3662
  %v3863 = vmax.f32 %v3823, %v3663
  %v3864 = vmax.f32 %v3824, %v3664
  %v3865 = vmax.f32 %v3825, %v3665
  %v3866 = vmax.f32 %v3826, %v3666
  %v3867 = vmax.f32 %v3827, %v3667
  %v3868 = vmax.f32 %v3828, %v3668
  %v3869 = vmax.f32 %v3829, %v3669
  %v3870 = vmax.f32 %v3830, %v3670
  %v3871 = vmax.f32 %v3831, %v3671
  %v3872 = vmax.f32 %v3832, %v3672
  %v3873 = vmax.f32 %v3833, %v3673
  %v3874 = vmax.f32 %v3834, %v3674
  %v3875 = vmax.f32 %v3835, %v3675
  %v3876 = vmax.f32 %v3836, %v3676
  %v3877 = vmax.f32 %v3837, %v3677
  %v3878 = vmax.f32 %v3838, %v3678
  %v3879 = vmax.f32 %v3839, %v3679
  %v3880 = vmax.f32 %v3840, %v3680
  %v3881 = vmax.f32 %v3841, %v3681
  %v3882 = vmax.f32 %v3842, %v3682
  %v3883 = vmax.f32 %v3843, %v3683
  %v3884 = vmax.f32 %v3844, %v3684
  %v3885 = vmax.f32 %v3845, %v3685
  %v3886 = vmax.f32 %v3846, %v3686
  %v3887 = vmax.f32 %v3847, %v3687
  %v3888 = vmax.f32 %v3848, %v3688
  %v3889 = vmax.f32 %v3849, %v3689
  %v3890 = vmax.f32 %v3850, %v3690
  %v3891 = vmax.f32 %v3851, %v3691
  %v3892 = vmax.f32 %v3852, %v3692
  %v3893 = vmax.f32 %v3853, %v3693
  %v3894 = vmax.f32 %v3854, %v3694
  %v3895 = vmax.f32 %v3855, %v3695
  %v3896 = vmax.f32 %v3856, %v3696
  %v3897 = vmax.f32 %v3857, %v3697
  %v3898 = vmax.f32 %v3858, %v3698
  %v3899 = vmax.f32 %v3859, %v3699
  %v3900 = vmax.f32 %v3860, %v3700
  %v3901 = vmax.f32 %v3861, %v3701
  %v3902 = vmax.f32 %v3862, %v3702
  %v3903 = vmax.f32 %v3863, %v3703
  %v3904 = vmax.f32 %v3864, %v3704
  %v3905 = vmax.f32 %v3865, %v3705
  %v3906 = vmax.f32 %v3866, %v3706
  %v3907 = vmax.f32 %v3867, %v3707
  %v3908 = vmax.f32 %v3868, %v3708
  %v3909 = vmax.f32 %v3869, %v3709
  %v3910 = vmax.f32 %v3870, %v3710
  %v3911 = vmax.f32 %v3871, %v3711
  %v3912 = vmax.f32 %v3872, %v3712
  %v3913 = vmax.f32 %v3873, %v3713
  %v3914 = vmax.f32 %v3874, %v3714
  %v3915 = vmax.f32 %v3875, %v3715
  %v3916 = vmax.f32 %v3876, %v3716
  %v3917 = vmax.f32 %v3877, %v3717
  %v3918 = vmax.f32 %v3878, %v3718
  %v3919 = vmax.f32 %v3879, %v3719
  %v3920 = vmax.f32 %v3880, %v3720
  %v3921 = vmax.f32 %v3881, %v3721
  %v3922 = vmax.f32 %v3882, %v3722
  %v3923 = vmax.f32 %v3883, %v3723
  %v3924 = vmax.f32 %v3884, %v3724
  %v3925 = vmax.f32 %v3885, %v3725
  %v3926 = vmax.f32 %v3886, %v3726
  %v3927 = vmax.f32 %v3887, %v3727
  %v3928 = vmax.f32 %v3888, %v3728
  %v3929 = vmax.f32 %v3889, 0.0
  %v3930 = vmax.f32 %v3890, 0.0
  %v3931 = vmax.f32 %v3891, 0.0
  %v3932 = vmax.f32 %v3892, 0.0
  %v3933 = vmax.f32 %v3893, 0.0
  %v3934 = vmax.f32 %v3894, 0.0
  %v3935 = vmax.f32 %v3895, 0.0
  %v3936 = vmax.f32 %v3896, 0.0
  %v3937 = vmax.f32 %v3897, 0.0
  %v3938 = vmax.f32 %v3898, 0.0
  %v3939 = vmax.f32 %v3899, 0.0
  %v3940 = vmax.f32 %v3900, 0.0
  %v3941 = vmax.f32 %v3901, 0.0
  %v3942 = vmax.f32 %v3902, 0.0
  %v3943 = vmax.f32 %v3903, 0.0
  %v3944 = vmax.f32 %v3904, 0.0
  %v3945 = vmax.f32 %v3905, 0.0
  %v3946 = vmax.f32 %v3906, 0.0
  %v3947 = vmax.f32 %v3907, 0.0
  %v3948 = vmax.f32 %v3908, 0.0
  %v3949 = vmax.f32 %v3909, 0.0
  %v3950 = vmax.f32 %v3910, 0.0
  %v3951 = vmax.f32 %v3911, 0.0
  %v3952 = vmax.f32 %v3912, 0.0
  %v3953 = vmax.f32 %v3913, 0.0
  %v3954 = vmax.f32 %v3914, 0.0
  %v3955 = vmax.f32 %v3915, 0.0
  %v3956 = vmax.f32 %v3916, 0.0
  %v3957 = vmax.f32 %v3917, 0.0
  %v3958 = vmax.f32 %v3918, 0.0
  %v3959 = vmax.f32 %v3919, 0.0
  %v3960 = vmax.f32 %v3920, 0.0
  %v3961 = vmax.f32 %v3921, 0.0
  %v3962 = vmax.f32 %v3922, 0.0
  %v3963 = vmax.f32 %v3923, 0.0
  %v3964 = vmax.f32 %v3924, 0.0
  %v3965 = vmax.f32 %v3925, 0.0
  %v3966 = vmax.f32 %v3926, 0.0
  %v3967 = vmax.f32 %v3927, 0.0
  %v3968 = vmax.f32 %v3928, 0.0
  %v3969 = vpack.c.bf16 %v3930, %v3929
  %v3970 = vpack.c.bf16 %v3932, %v3931
  %v3971 = vpack.c.bf16 %v3934, %v3933
  %v3972 = vpack.c.bf16 %v3936, %v3935
  %v3973 = vpack.c.bf16 %v3938, %v3937
  %v3974 = vpack.c.bf16 %v3940, %v3939
  %v3975 = vpack.c.bf16 %v3942, %v3941
  %v3976 = vpack.c.bf16 %v3944, %v3943
  %v3977 = vpack.c.bf16 %v3946, %v3945
  %v3978 = vpack.c.bf16 %v3948, %v3947
  %v3979 = vpack.c.bf16 %v3950, %v3949
  %v3980 = vpack.c.bf16 %v3952, %v3951
  %v3981 = vpack.c.bf16 %v3954, %v3953
  %v3982 = vpack.c.bf16 %v3956, %v3955
  %v3983 = vpack.c.bf16 %v3958, %v3957
  %v3984 = vpack.c.bf16 %v3960, %v3959
  %v3985 = vpack.c.bf16 %v3962, %v3961
  %v3986 = vpack.c.bf16 %v3964, %v3963
  %v3987 = vpack.c.bf16 %v3966, %v3965
  %v3988 = vpack.c.bf16 %v3968, %v3967
  %v4009 = vunpack.c.l.b16 %v3969
  %v4010 = vunpack.c.h.b16 %v3969
  %v4011 = vunpack.c.l.b16 %v3970
  %v4012 = vunpack.c.h.b16 %v3970
  %v4013 = vunpack.c.l.b16 %v3971
  %v4014 = vunpack.c.h.b16 %v3971
  %v4015 = vunpack.c.l.b16 %v3972
  %v4016 = vunpack.c.h.b16 %v3972
  %v4017 = vunpack.c.l.b16 %v3973
  %v4018 = vunpack.c.h.b16 %v3973
  %v4019 = vunpack.c.l.b16 %v3974
  %v4020 = vunpack.c.h.b16 %v3974
  %v4021 = vunpack.c.l.b16 %v3975
  %v4022 = vunpack.c.h.b16 %v3975
  %v4023 = vunpack.c.l.b16 %v3976
  %v4024 = vunpack.c.h.b16 %v3976
  %v4025 = vunpack.c.l.b16 %v3977
  %v4026 = vunpack.c.h.b16 %v3977
  %v4027 = vunpack.c.l.b16 %v3978
  %v4028 = vunpack.c.h.b16 %v3978
  %v4029 = vunpack.c.l.b16 %v3979
  %v4030 = vunpack.c.h.b16 %v3979
  %v4031 = vunpack.c.l.b16 %v3980
  %v4032 = vunpack.c.h.b16 %v3980
  %v4033 = vunpack.c.l.b16 %v3981
  %v4034 = vunpack.c.h.b16 %v3981
  %v4035 = vunpack.c.l.b16 %v3982
  %v4036 = vunpack.c.h.b16 %v3982
  %v4037 = vunpack.c.l.b16 %v3983
  %v4038 = vunpack.c.h.b16 %v3983
  %v4039 = vunpack.c.l.b16 %v3984
  %v4040 = vunpack.c.h.b16 %v3984
  %v4041 = vunpack.c.l.b16 %v3985
  %v4042 = vunpack.c.h.b16 %v3985
  %v4043 = vunpack.c.l.b16 %v3986
  %v4044 = vunpack.c.h.b16 %v3986
  %v4045 = vunpack.c.l.b16 %v3987
  %v4046 = vunpack.c.h.b16 %v3987
  %v4047 = vunpack.c.l.b16 %v3988
  %v4048 = vunpack.c.h.b16 %v3988
  %v4049 = vpack.c.b16 %v4009, %v4009
  %v4050 = vpack.c.b16 %v4010, %v4010
  %v4051 = vpack.c.b16 %v4011, %v4011
  %v4052 = vpack.c.b16 %v4012, %v4012
  %v4053 = vpack.c.b16 %v4013, %v4013
  %v4054 = vpack.c.b16 %v4014, %v4014
  %v4055 = vpack.c.b16 %v4015, %v4015
  %v4056 = vpack.c.b16 %v4016, %v4016
  %v4057 = vpack.c.b16 %v4017, %v4017
  %v4058 = vpack.c.b16 %v4018, %v4018
  %v4059 = vpack.c.b16 %v4019, %v4019
  %v4060 = vpack.c.b16 %v4020, %v4020
  %v4061 = vpack.c.b16 %v4021, %v4021
  %v4062 = vpack.c.b16 %v4022, %v4022
  %v4063 = vpack.c.b16 %v4023, %v4023
  %v4064 = vpack.c.b16 %v4024, %v4024
  %v4065 = vpack.c.b16 %v4025, %v4025
  %v4066 = vpack.c.b16 %v4026, %v4026
  %v4067 = vpack.c.b16 %v4027, %v4027
  %v4068 = vpack.c.b16 %v4028, %v4028
  %v4069 = vpack.c.b16 %v4029, %v4029
  %v4070 = vpack.c.b16 %v4030, %v4030
  %v4071 = vpack.c.b16 %v4031, %v4031
  %v4072 = vpack.c.b16 %v4032, %v4032
  %v4073 = vpack.c.b16 %v4033, %v4033
  %v4074 = vpack.c.b16 %v4034, %v4034
  %v4075 = vpack.c.b16 %v4035, %v4035
  %v4076 = vpack.c.b16 %v4036, %v4036
  %v4077 = vpack.c.b16 %v4037, %v4037
  %v4078 = vpack.c.b16 %v4038, %v4038
  %v4079 = vpack.c.b16 %v4039, %v4039
  %v4080 = vpack.c.b16 %v4040, %v4040
  %v4081 = vpack.c.b16 %v4041, %v4041
  %v4082 = vpack.c.b16 %v4042, %v4042
  %v4083 = vpack.c.b16 %v4043, %v4043
  %v4084 = vpack.c.b16 %v4044, %v4044
  %v4085 = vpack.c.b16 %v4045, %v4045
  %v4086 = vpack.c.b16 %v4046, %v4046
  %v4087 = vpack.c.b16 %v4047, %v4047
  %v4088 = vpack.c.b16 %v4048, %v4048
  %vm4129 = vcmask 519168
  %4130 = vst.msk [vmem:[%s4] sm:$0xf] %vm4129, %v4049
  %4131 = vst.msk [vmem:[%s4 + $0x4] sm:$0xf] %vm4129, %v4050
  %4132 = vst.msk [vmem:[%s4 + $0x8] sm:$0xf] %vm4129, %v4051
  %4133 = vst.msk [vmem:[%s4 + $0xc] sm:$0xf] %vm4129, %v4052
  %4134 = vst.msk [vmem:[%s4 + $0x10] sm:$0xf] %vm4129, %v4053
  %4135 = vst.msk [vmem:[%s4 + $0x14] sm:$0xf] %vm4129, %v4054
  %4136 = vst.msk [vmem:[%s4 + $0x18] sm:$0xf] %vm4129, %v4055
  %4137 = vst.msk [vmem:[%s4 + $0x1c] sm:$0xf] %vm4129, %v4056
  %4138 = vst.msk [vmem:[%s4 + $0x20] sm:$0xf] %vm4129, %v4057
  %4139 = vst.msk [vmem:[%s4 + $0x24] sm:$0xf] %vm4129, %v4058
  %4140 = vst.msk [vmem:[%s4 + $0x28] sm:$0xf] %vm4129, %v4059
  %4141 = vst.msk [vmem:[%s4 + $0x2c] sm:$0xf] %vm4129, %v4060
  %4142 = vst.msk [vmem:[%s4 + $0x30] sm:$0xf] %vm4129, %v4061
  %4143 = vst.msk [vmem:[%s4 + $0x34] sm:$0xf] %vm4129, %v4062
  %4144 = vst.msk [vmem:[%s4 + $0x38] sm:$0xf] %vm4129, %v4063
  %4145 = vst.msk [vmem:[%s4 + $0x3c] sm:$0xf] %vm4129, %v4064
  %4146 = vst.msk [vmem:[%s4 + $0x40] sm:$0xf] %vm4129, %v4065
  %4147 = vst.msk [vmem:[%s4 + $0x44] sm:$0xf] %vm4129, %v4066
  %4148 = vst.msk [vmem:[%s4 + $0x48] sm:$0xf] %vm4129, %v4067
  %4149 = vst.msk [vmem:[%s4 + $0x4c] sm:$0xf] %vm4129, %v4068
  %4150 = vst.msk [vmem:[%s4 + $0x50] sm:$0xf] %vm4129, %v4069
  %4151 = vst.msk [vmem:[%s4 + $0x54] sm:$0xf] %vm4129, %v4070
  %4152 = vst.msk [vmem:[%s4 + $0x58] sm:$0xf] %vm4129, %v4071
  %4153 = vst.msk [vmem:[%s4 + $0x5c] sm:$0xf] %vm4129, %v4072
  %4154 = vst.msk [vmem:[%s4 + $0x60] sm:$0xf] %vm4129, %v4073
  %4155 = vst.msk [vmem:[%s4 + $0x64] sm:$0xf] %vm4129, %v4074
  %4156 = vst.msk [vmem:[%s4 + $0x68] sm:$0xf] %vm4129, %v4075
  %4157 = vst.msk [vmem:[%s4 + $0x6c] sm:$0xf] %vm4129, %v4076
  %4158 = vst.msk [vmem:[%s4 + $0x70] sm:$0xf] %vm4129, %v4077
  %4159 = vst.msk [vmem:[%s4 + $0x74] sm:$0xf] %vm4129, %v4078
  %4160 = vst.msk [vmem:[%s4 + $0x78] sm:$0xf] %vm4129, %v4079
  %4161 = vst.msk [vmem:[%s4 + $0x7c] sm:$0xf] %vm4129, %v4080
  %4162 = vst.msk [vmem:[%s4 + $0x80] sm:$0xf] %vm4129, %v4081
  %4163 = vst.msk [vmem:[%s4 + $0x84] sm:$0xf] %vm4129, %v4082
  %4164 = vst.msk [vmem:[%s4 + $0x88] sm:$0xf] %vm4129, %v4083
  %4165 = vst.msk [vmem:[%s4 + $0x8c] sm:$0xf] %vm4129, %v4084
  %4166 = vst.msk [vmem:[%s4 + $0x90] sm:$0xf] %vm4129, %v4085
  %4167 = vst.msk [vmem:[%s4 + $0x94] sm:$0xf] %vm4129, %v4086
  %4168 = vst.msk [vmem:[%s4 + $0x98] sm:$0xf] %vm4129, %v4087
  %4169 = vst.msk [vmem:[%s4 + $0x9c] sm:$0xf] %vm4129, %v4088
  // Predicated region
  $region18: #{notesnet_forward.3} parent=0 // pred_check
    _
  $region19: #{notesnet_forward.3} parent=0 // pred_check_branch
    %4171 = sbr.rel (0) target = $region21
  $region20: #{notesnet_forward.3} parent=0 // pred_region
    _
  $region21: #{notesnet_forward.3} parent=0 // pred_fallthru
    _
  // Predicated region
  $region22: #{notesnet_forward.3} parent=0 // pred_check
    _
  $region23: #{notesnet_forward.3} parent=0 // pred_check_branch
    %4173 = sbr.rel (0) target = $region25
  $region24: #{notesnet_forward.3} parent=0 // pred_region
    _
  $region25: #{notesnet_forward.3} parent=0 // pred_fallthru
    _

// kernel: notesnet_forward.4
$region0: #{notesnet_forward.4}
  #allocation0 [shape = 'u32[]', space=smem, size = 0x4, offset = 0x4, fixed_abs, tag = 'smem constant byte address 0x4 - core index']
  #allocation1 [shape = 'u32[144,128]{1,0:T(1,128)}', space=vmem, size = 0x12000, scoped, tag = 'internal scratch']
  %s0 = inlined_call_operand.vmem [shape: bf16[144,1728], index: 0, kind: input, shape index: {}]
  %s1 = inlined_call_operand.vmem [shape: bf16[1728,128], index: 1, kind: input, shape index: {}]
  %s2 = inlined_call_operand.vmem [shape: f32[1,128], index: 2, kind: input, shape index: {}]
  %s3 = inlined_call_operand.vmem [shape: f32[1,128], index: 3, kind: input, shape index: {}]
  %s4 = inlined_call_operand.vmem [shape: bf16[48,64], index: 4, kind: output, shape index: {}]
  %s5 = sld [smem:[#allocation0]]
  $region26: #{notesnet_forward.4} parent=0
    _
  %s7 = ssub.s32 1, %s5
  %s8 = scalar_select 0, %s7, %s5
  // Predicated region
  $region2: #{notesnet_forward.4} parent=0 // pred_check
    _
  $region3: #{notesnet_forward.4} parent=0 // pred_check_branch
    %10 = sbr.rel (0) target = $region5
  $region4: #{notesnet_forward.4} parent=0 // pred_region
    _
  $region5: #{notesnet_forward.4} parent=0 // pred_fallthru
    _
  // Predicated region
  $region6: #{notesnet_forward.4} parent=0 // pred_check
    _
  $region7: #{notesnet_forward.4} parent=0 // pred_check_branch
    %12 = sbr.rel (0) target = $region9
  $region8: #{notesnet_forward.4} parent=0 // pred_region
    _
  $region9: #{notesnet_forward.4} parent=0 // pred_fallthru
    _
  // Predicated region
  $region10: #{notesnet_forward.4} parent=0 // pred_check
    _
  $region11: #{notesnet_forward.4} parent=0 // pred_check_branch
    %14 = sbr.rel (0) target = $region13
  $region12: #{notesnet_forward.4} parent=0 // pred_region
    _
  $region13: #{notesnet_forward.4} parent=0 // pred_fallthru
    _
  // Predicated region
  $region14: #{notesnet_forward.4} parent=0 // pred_check
    _
  $region15: #{notesnet_forward.4} parent=0 // pred_check_branch
    %16 = sbr.rel (0) target = $region17
  $region16: #{notesnet_forward.4} parent=0 // pred_region
    _
  $region17: #{notesnet_forward.4} parent=0 // pred_fallthru
    _
  %v18 = vld [vmem:[%s0] sm:$0xff]
  %v19 = vld [vmem:[%s0 + $0x8] sm:$0xff]
  %v20 = vld [vmem:[%s0 + $0x10] sm:$0xff]
  %v21 = vld [vmem:[%s0 + $0x18] sm:$0xff]
  %v22 = vld [vmem:[%s0 + $0x20] sm:$0xff]
  %v23 = vld [vmem:[%s0 + $0x28] sm:$0xff]
  %v24 = vld [vmem:[%s0 + $0x30] sm:$0xff]
  %v25 = vld [vmem:[%s0 + $0x38] sm:$0xff]
  %v26 = vld [vmem:[%s0 + $0x40] sm:$0xff]
  %v27 = vld [vmem:[%s0 + $0x48] sm:$0xff]
  %v28 = vld [vmem:[%s0 + $0x50] sm:$0xff]
  %v29 = vld [vmem:[%s0 + $0x58] sm:$0xff]
  %v30 = vld [vmem:[%s0 + $0x60] sm:$0xff]
  %v31 = vld [vmem:[%s0 + $0x68] sm:$0xff]
  %v32 = vld [vmem:[%s0 + $0x70] sm:$0xff]
  %v33 = vld [vmem:[%s0 + $0x78] sm:$0xff]
  %v34 = vld [vmem:[%s0 + $0x80] sm:$0xff]
  %v35 = vld [vmem:[%s0 + $0x88] sm:$0xff]
  %v36 = vld [vmem:[%s0 + $0x90] sm:$0xff]
  %v37 = vld [vmem:[%s0 + $0x98] sm:$0xff]
  %v38 = vld [vmem:[%s0 + $0xa0] sm:$0xff]
  %v39 = vld [vmem:[%s0 + $0xa8] sm:$0xff]
  %v40 = vld [vmem:[%s0 + $0xb0] sm:$0xff]
  %v41 = vld [vmem:[%s0 + $0xb8] sm:$0xff]
  %v42 = vld [vmem:[%s0 + $0xc0] sm:$0xff]
  %v43 = vld [vmem:[%s0 + $0xc8] sm:$0xff]
  %v44 = vld [vmem:[%s0 + $0xd0] sm:$0xff]
  %v45 = vld [vmem:[%s0 + $0xd8] sm:$0xff]
  %v46 = vld [vmem:[%s0 + $0xe0] sm:$0xff]
  %v47 = vld [vmem:[%s0 + $0xe8] sm:$0xff]
  %v48 = vld [vmem:[%s0 + $0xf0] sm:$0xff]
  %v49 = vld [vmem:[%s0 + $0xf8] sm:$0xff]
  %v50 = vld [vmem:[%s0 + $0x100] sm:$0xff]
  %v51 = vld [vmem:[%s0 + $0x108] sm:$0xff]
  %v52 = vld [vmem:[%s0 + $0x110] sm:$0xff]
  %v53 = vld [vmem:[%s0 + $0x118] sm:$0xff]
  %v54 = vld [vmem:[%s0 + $0x120] sm:$0xff]
  %v55 = vld [vmem:[%s0 + $0x128] sm:$0xff]
  %v56 = vld [vmem:[%s0 + $0x130] sm:$0xff]
  %v57 = vld [vmem:[%s0 + $0x138] sm:$0xff]
  %v58 = vld [vmem:[%s0 + $0x140] sm:$0xff]
  %v59 = vld [vmem:[%s0 + $0x148] sm:$0xff]
  %v60 = vld [vmem:[%s0 + $0x150] sm:$0xff]
  %v61 = vld [vmem:[%s0 + $0x158] sm:$0xff]
  %v62 = vld [vmem:[%s0 + $0x160] sm:$0xff]
  %v63 = vld [vmem:[%s0 + $0x168] sm:$0xff]
  %v64 = vld [vmem:[%s0 + $0x170] sm:$0xff]
  %v65 = vld [vmem:[%s0 + $0x178] sm:$0xff]
  %v66 = vld [vmem:[%s0 + $0x180] sm:$0xff]
  %v67 = vld [vmem:[%s0 + $0x188] sm:$0xff]
  %v68 = vld [vmem:[%s0 + $0x190] sm:$0xff]
  %v69 = vld [vmem:[%s0 + $0x198] sm:$0xff]
  %v70 = vld [vmem:[%s0 + $0x1a0] sm:$0xff]
  %v71 = vld [vmem:[%s0 + $0x1a8] sm:$0xff]
  %v72 = vld [vmem:[%s0 + $0x1b0] sm:$0xff]
  %v73 = vld [vmem:[%s0 + $0x1b8] sm:$0xff]
  %v74 = vld [vmem:[%s0 + $0x1c0] sm:$0xff]
  %v75 = vld [vmem:[%s0 + $0x1c8] sm:$0xff]
  %v76 = vld [vmem:[%s0 + $0x1d0] sm:$0xff]
  %v77 = vld [vmem:[%s0 + $0x1d8] sm:$0xff]
  %v78 = vld [vmem:[%s0 + $0x1e0] sm:$0xff]
  %v79 = vld [vmem:[%s0 + $0x1e8] sm:$0xff]
  %v80 = vld [vmem:[%s0 + $0x1f0] sm:$0xff]
  %v81 = vld [vmem:[%s0 + $0x1f8] sm:$0xff]
  %v82 = vld [vmem:[%s0 + $0x200] sm:$0xff]
  %v83 = vld [vmem:[%s0 + $0x208] sm:$0xff]
  %v84 = vld [vmem:[%s0 + $0x210] sm:$0xff]
  %v85 = vld [vmem:[%s0 + $0x218] sm:$0xff]
  %v86 = vld [vmem:[%s0 + $0x220] sm:$0xff]
  %v87 = vld [vmem:[%s0 + $0x228] sm:$0xff]
  %v88 = vld [vmem:[%s0 + $0x230] sm:$0xff]
  %v89 = vld [vmem:[%s0 + $0x238] sm:$0xff]
  %v90 = vld [vmem:[%s0 + $0x240] sm:$0xff]
  %v91 = vld [vmem:[%s0 + $0x248] sm:$0xff]
  %v92 = vld [vmem:[%s0 + $0x250] sm:$0xff]
  %v93 = vld [vmem:[%s0 + $0x258] sm:$0xff]
  %v94 = vld [vmem:[%s0 + $0x260] sm:$0xff]
  %v95 = vld [vmem:[%s0 + $0x268] sm:$0xff]
  %v96 = vld [vmem:[%s0 + $0x270] sm:$0xff]
  %v97 = vld [vmem:[%s0 + $0x278] sm:$0xff]
  %v98 = vld [vmem:[%s0 + $0x280] sm:$0xff]
  %v99 = vld [vmem:[%s0 + $0x288] sm:$0xff]
  %v100 = vld [vmem:[%s0 + $0x290] sm:$0xff]
  %v101 = vld [vmem:[%s0 + $0x298] sm:$0xff]
  %v102 = vld [vmem:[%s0 + $0x2a0] sm:$0xff]
  %v103 = vld [vmem:[%s0 + $0x2a8] sm:$0xff]
  %v104 = vld [vmem:[%s0 + $0x2b0] sm:$0xff]
  %v105 = vld [vmem:[%s0 + $0x2b8] sm:$0xff]
  %v106 = vld [vmem:[%s0 + $0x2c0] sm:$0xff]
  %v107 = vld [vmem:[%s0 + $0x2c8] sm:$0xff]
  %v108 = vld [vmem:[%s0 + $0x2d0] sm:$0xff]
  %v109 = vld [vmem:[%s0 + $0x2d8] sm:$0xff]
  %v110 = vld [vmem:[%s0 + $0x2e0] sm:$0xff]
  %v111 = vld [vmem:[%s0 + $0x2e8] sm:$0xff]
  %v112 = vld [vmem:[%s0 + $0x2f0] sm:$0xff]
  %v113 = vld [vmem:[%s0 + $0x2f8] sm:$0xff]
  %v114 = vld [vmem:[%s0 + $0x300] sm:$0xff]
  %v115 = vld [vmem:[%s0 + $0x308] sm:$0xff]
  %v116 = vld [vmem:[%s0 + $0x310] sm:$0xff]
  %v117 = vld [vmem:[%s0 + $0x318] sm:$0xff]
  %v118 = vld [vmem:[%s0 + $0x320] sm:$0xff]
  %v119 = vld [vmem:[%s0 + $0x328] sm:$0xff]
  %v120 = vld [vmem:[%s0 + $0x330] sm:$0xff]
  %v121 = vld [vmem:[%s0 + $0x338] sm:$0xff]
  %v122 = vld [vmem:[%s0 + $0x340] sm:$0xff]
  %v123 = vld [vmem:[%s0 + $0x348] sm:$0xff]
  %v124 = vld [vmem:[%s0 + $0x350] sm:$0xff]
  %v125 = vld [vmem:[%s0 + $0x358] sm:$0xff]
  %v126 = vld [vmem:[%s0 + $0x360] sm:$0xff]
  %v127 = vld [vmem:[%s0 + $0x368] sm:$0xff]
  %v128 = vld [vmem:[%s0 + $0x370] sm:$0xff]
  %v129 = vld [vmem:[%s0 + $0x378] sm:$0xff]
  %v130 = vld [vmem:[%s0 + $0x380] sm:$0xff]
  %v131 = vld [vmem:[%s0 + $0x388] sm:$0xff]
  %v132 = vld [vmem:[%s0 + $0x390] sm:$0xff]
  %v133 = vld [vmem:[%s0 + $0x398] sm:$0xff]
  %v134 = vld [vmem:[%s0 + $0x3a0] sm:$0xff]
  %v135 = vld [vmem:[%s0 + $0x3a8] sm:$0xff]
  %v136 = vld [vmem:[%s0 + $0x3b0] sm:$0xff]
  %v137 = vld [vmem:[%s0 + $0x3b8] sm:$0xff]
  %v138 = vld [vmem:[%s0 + $0x3c0] sm:$0xff]
  %v139 = vld [vmem:[%s0 + $0x3c8] sm:$0xff]
  %v140 = vld [vmem:[%s0 + $0x3d0] sm:$0xff]
  %v141 = vld [vmem:[%s0 + $0x3d8] sm:$0xff]
  %v142 = vld [vmem:[%s0 + $0x3e0] sm:$0xff]
  %v143 = vld [vmem:[%s0 + $0x3e8] sm:$0xff]
  %v144 = vld [vmem:[%s1] sm:$0xf]
  %v145 = vld [vmem:[%s1 + $0x4] sm:$0xf]
  %v146 = vld [vmem:[%s1 + $0x8] sm:$0xf]
  %v147 = vld [vmem:[%s1 + $0xc] sm:$0xf]
  %v148 = vld [vmem:[%s1 + $0x10] sm:$0xf]
  %v149 = vld [vmem:[%s1 + $0x14] sm:$0xf]
  %v150 = vld [vmem:[%s1 + $0x18] sm:$0xf]
  %v151 = vld [vmem:[%s1 + $0x1c] sm:$0xf]
  %v152 = vld [vmem:[%s1 + $0x20] sm:$0xf]
  %v153 = vld [vmem:[%s1 + $0x24] sm:$0xf]
  %v154 = vld [vmem:[%s1 + $0x28] sm:$0xf]
  %v155 = vld [vmem:[%s1 + $0x2c] sm:$0xf]
  %v156 = vld [vmem:[%s1 + $0x30] sm:$0xf]
  %v157 = vld [vmem:[%s1 + $0x34] sm:$0xf]
  %v158 = vld [vmem:[%s1 + $0x38] sm:$0xf]
  %v159 = vld [vmem:[%s1 + $0x3c] sm:$0xf]
  %v160 = vld [vmem:[%s1 + $0x40] sm:$0xf]
  %v161 = vld [vmem:[%s1 + $0x44] sm:$0xf]
  %v162 = vld [vmem:[%s1 + $0x48] sm:$0xf]
  %v163 = vld [vmem:[%s1 + $0x4c] sm:$0xf]
  %v164 = vld [vmem:[%s1 + $0x50] sm:$0xf]
  %v165 = vld [vmem:[%s1 + $0x54] sm:$0xf]
  %v166 = vld [vmem:[%s1 + $0x58] sm:$0xf]
  %v167 = vld [vmem:[%s1 + $0x5c] sm:$0xf]
  %v168 = vld [vmem:[%s1 + $0x60] sm:$0xf]
  %v169 = vld [vmem:[%s1 + $0x64] sm:$0xf]
  %v170 = vld [vmem:[%s1 + $0x68] sm:$0xf]
  %v171 = vld [vmem:[%s1 + $0x6c] sm:$0xf]
  %v172 = vld [vmem:[%s1 + $0x70] sm:$0xf]
  %v173 = vld [vmem:[%s1 + $0x74] sm:$0xf]
  %v174 = vld [vmem:[%s1 + $0x78] sm:$0xf]
  %v175 = vld [vmem:[%s1 + $0x7c] sm:$0xf]
  %v176 = vld [vmem:[%s1 + $0x80] sm:$0xf]
  %v177 = vld [vmem:[%s1 + $0x84] sm:$0xf]
  %v178 = vld [vmem:[%s1 + $0x88] sm:$0xf]
  %v179 = vld [vmem:[%s1 + $0x8c] sm:$0xf]
  %v180 = vld [vmem:[%s1 + $0x90] sm:$0xf]
  %v181 = vld [vmem:[%s1 + $0x94] sm:$0xf]
  %v182 = vld [vmem:[%s1 + $0x98] sm:$0xf]
  %v183 = vld [vmem:[%s1 + $0x9c] sm:$0xf]
  %v184 = vld [vmem:[%s1 + $0xa0] sm:$0xf]
  %v185 = vld [vmem:[%s1 + $0xa4] sm:$0xf]
  %v186 = vld [vmem:[%s1 + $0xa8] sm:$0xf]
  %v187 = vld [vmem:[%s1 + $0xac] sm:$0xf]
  %v188 = vld [vmem:[%s1 + $0xb0] sm:$0xf]
  %v189 = vld [vmem:[%s1 + $0xb4] sm:$0xf]
  %v190 = vld [vmem:[%s1 + $0xb8] sm:$0xf]
  %v191 = vld [vmem:[%s1 + $0xbc] sm:$0xf]
  %v192 = vld [vmem:[%s1 + $0xc0] sm:$0xf]
  %v193 = vld [vmem:[%s1 + $0xc4] sm:$0xf]
  %v194 = vld [vmem:[%s1 + $0xc8] sm:$0xf]
  %v195 = vld [vmem:[%s1 + $0xcc] sm:$0xf]
  %v196 = vld [vmem:[%s1 + $0xd0] sm:$0xf]
  %v197 = vld [vmem:[%s1 + $0xd4] sm:$0xf]
  %v198 = vld [vmem:[%s1 + $0xd8] sm:$0xf]
  %v199 = vld [vmem:[%s1 + $0xdc] sm:$0xf]
  %v200 = vld [vmem:[%s1 + $0xe0] sm:$0xf]
  %v201 = vld [vmem:[%s1 + $0xe4] sm:$0xf]
  %v202 = vld [vmem:[%s1 + $0xe8] sm:$0xf]
  %v203 = vld [vmem:[%s1 + $0xec] sm:$0xf]
  %v204 = vld [vmem:[%s1 + $0xf0] sm:$0xf]
  %v205 = vld [vmem:[%s1 + $0xf4] sm:$0xf]
  %v206 = vld [vmem:[%s1 + $0xf8] sm:$0xf]
  %v207 = vld [vmem:[%s1 + $0xfc] sm:$0xf]
  %v208 = vld [vmem:[%s1 + $0x100] sm:$0xf]
  %v209 = vld [vmem:[%s1 + $0x104] sm:$0xf]
  %v210 = vld [vmem:[%s1 + $0x108] sm:$0xf]
  %v211 = vld [vmem:[%s1 + $0x10c] sm:$0xf]
  %v212 = vld [vmem:[%s1 + $0x110] sm:$0xf]
  %v213 = vld [vmem:[%s1 + $0x114] sm:$0xf]
  %v214 = vld [vmem:[%s1 + $0x118] sm:$0xf]
  %v215 = vld [vmem:[%s1 + $0x11c] sm:$0xf]
  %v216 = vld [vmem:[%s1 + $0x120] sm:$0xf]
  %v217 = vld [vmem:[%s1 + $0x124] sm:$0xf]
  %v218 = vld [vmem:[%s1 + $0x128] sm:$0xf]
  %v219 = vld [vmem:[%s1 + $0x12c] sm:$0xf]
  %v220 = vld [vmem:[%s1 + $0x130] sm:$0xf]
  %v221 = vld [vmem:[%s1 + $0x134] sm:$0xf]
  %v222 = vld [vmem:[%s1 + $0x138] sm:$0xf]
  %v223 = vld [vmem:[%s1 + $0x13c] sm:$0xf]
  %v224 = vld [vmem:[%s1 + $0x140] sm:$0xf]
  %v225 = vld [vmem:[%s1 + $0x144] sm:$0xf]
  %v226 = vld [vmem:[%s1 + $0x148] sm:$0xf]
  %v227 = vld [vmem:[%s1 + $0x14c] sm:$0xf]
  %v228 = vld [vmem:[%s1 + $0x150] sm:$0xf]
  %v229 = vld [vmem:[%s1 + $0x154] sm:$0xf]
  %v230 = vld [vmem:[%s1 + $0x158] sm:$0xf]
  %v231 = vld [vmem:[%s1 + $0x15c] sm:$0xf]
  %v232 = vld [vmem:[%s1 + $0x160] sm:$0xf]
  %v233 = vld [vmem:[%s1 + $0x164] sm:$0xf]
  %v234 = vld [vmem:[%s1 + $0x168] sm:$0xf]
  %v235 = vld [vmem:[%s1 + $0x16c] sm:$0xf]
  %v236 = vld [vmem:[%s1 + $0x170] sm:$0xf]
  %v237 = vld [vmem:[%s1 + $0x174] sm:$0xf]
  %v238 = vld [vmem:[%s1 + $0x178] sm:$0xf]
  %v239 = vld [vmem:[%s1 + $0x17c] sm:$0xf]
  %v240 = vld [vmem:[%s1 + $0x180] sm:$0xf]
  %v241 = vld [vmem:[%s1 + $0x184] sm:$0xf]
  %v242 = vld [vmem:[%s1 + $0x188] sm:$0xf]
  %v243 = vld [vmem:[%s1 + $0x18c] sm:$0xf]
  %v244 = vld [vmem:[%s1 + $0x190] sm:$0xf]
  %v245 = vld [vmem:[%s1 + $0x194] sm:$0xf]
  %v246 = vld [vmem:[%s1 + $0x198] sm:$0xf]
  %v247 = vld [vmem:[%s1 + $0x19c] sm:$0xf]
  %v248 = vld [vmem:[%s1 + $0x1a0] sm:$0xf]
  %v249 = vld [vmem:[%s1 + $0x1a4] sm:$0xf]
  %v250 = vld [vmem:[%s1 + $0x1a8] sm:$0xf]
  %v251 = vld [vmem:[%s1 + $0x1ac] sm:$0xf]
  %v252 = vld [vmem:[%s1 + $0x1b0] sm:$0xf]
  %v253 = vld [vmem:[%s1 + $0x1b4] sm:$0xf]
  %v254 = vld [vmem:[%s1 + $0x1b8] sm:$0xf]
  %v255 = vld [vmem:[%s1 + $0x1bc] sm:$0xf]
  %v256 = vld [vmem:[%s1 + $0x1c0] sm:$0xf]
  %v257 = vld [vmem:[%s1 + $0x1c4] sm:$0xf]
  %v258 = vld [vmem:[%s1 + $0x1c8] sm:$0xf]
  %v259 = vld [vmem:[%s1 + $0x1cc] sm:$0xf]
  %v260 = vld [vmem:[%s1 + $0x1d0] sm:$0xf]
  %v261 = vld [vmem:[%s1 + $0x1d4] sm:$0xf]
  %v262 = vld [vmem:[%s1 + $0x1d8] sm:$0xf]
  %v263 = vld [vmem:[%s1 + $0x1dc] sm:$0xf]
  %v264 = vld [vmem:[%s1 + $0x1e0] sm:$0xf]
  %v265 = vld [vmem:[%s1 + $0x1e4] sm:$0xf]
  %v266 = vld [vmem:[%s1 + $0x1e8] sm:$0xf]
  %v267 = vld [vmem:[%s1 + $0x1ec] sm:$0xf]
  %v268 = vld [vmem:[%s1 + $0x1f0] sm:$0xf]
  %v269 = vld [vmem:[%s1 + $0x1f4] sm:$0xf]
  %v270 = vld [vmem:[%s1 + $0x1f8] sm:$0xf]
  %v271 = vld [vmem:[%s1 + $0x1fc] sm:$0xf]
  %v272 = vld [vmem:[%s1 + $0x200] sm:$0xf]
  %v273 = vld [vmem:[%s1 + $0x204] sm:$0xf]
  %v274 = vld [vmem:[%s1 + $0x208] sm:$0xf]
  %v275 = vld [vmem:[%s1 + $0x20c] sm:$0xf]
  %v276 = vld [vmem:[%s1 + $0x210] sm:$0xf]
  %v277 = vld [vmem:[%s1 + $0x214] sm:$0xf]
  %v278 = vld [vmem:[%s1 + $0x218] sm:$0xf]
  %v279 = vld [vmem:[%s1 + $0x21c] sm:$0xf]
  %v280 = vld [vmem:[%s1 + $0x220] sm:$0xf]
  %v281 = vld [vmem:[%s1 + $0x224] sm:$0xf]
  %v282 = vld [vmem:[%s1 + $0x228] sm:$0xf]
  %v283 = vld [vmem:[%s1 + $0x22c] sm:$0xf]
  %v284 = vld [vmem:[%s1 + $0x230] sm:$0xf]
  %v285 = vld [vmem:[%s1 + $0x234] sm:$0xf]
  %v286 = vld [vmem:[%s1 + $0x238] sm:$0xf]
  %v287 = vld [vmem:[%s1 + $0x23c] sm:$0xf]
  %v288 = vld [vmem:[%s1 + $0x240] sm:$0xf]
  %v289 = vld [vmem:[%s1 + $0x244] sm:$0xf]
  %v290 = vld [vmem:[%s1 + $0x248] sm:$0xf]
  %v291 = vld [vmem:[%s1 + $0x24c] sm:$0xf]
  %v292 = vld [vmem:[%s1 + $0x250] sm:$0xf]
  %v293 = vld [vmem:[%s1 + $0x254] sm:$0xf]
  %v294 = vld [vmem:[%s1 + $0x258] sm:$0xf]
  %v295 = vld [vmem:[%s1 + $0x25c] sm:$0xf]
  %v296 = vld [vmem:[%s1 + $0x260] sm:$0xf]
  %v297 = vld [vmem:[%s1 + $0x264] sm:$0xf]
  %v298 = vld [vmem:[%s1 + $0x268] sm:$0xf]
  %v299 = vld [vmem:[%s1 + $0x26c] sm:$0xf]
  %v300 = vld [vmem:[%s1 + $0x270] sm:$0xf]
  %v301 = vld [vmem:[%s1 + $0x274] sm:$0xf]
  %v302 = vld [vmem:[%s1 + $0x278] sm:$0xf]
  %v303 = vld [vmem:[%s1 + $0x27c] sm:$0xf]
  %v304 = vld [vmem:[%s1 + $0x280] sm:$0xf]
  %v305 = vld [vmem:[%s1 + $0x284] sm:$0xf]
  %v306 = vld [vmem:[%s1 + $0x288] sm:$0xf]
  %v307 = vld [vmem:[%s1 + $0x28c] sm:$0xf]
  %v308 = vld [vmem:[%s1 + $0x290] sm:$0xf]
  %v309 = vld [vmem:[%s1 + $0x294] sm:$0xf]
  %v310 = vld [vmem:[%s1 + $0x298] sm:$0xf]
  %v311 = vld [vmem:[%s1 + $0x29c] sm:$0xf]
  %v312 = vld [vmem:[%s1 + $0x2a0] sm:$0xf]
  %v313 = vld [vmem:[%s1 + $0x2a4] sm:$0xf]
  %v314 = vld [vmem:[%s1 + $0x2a8] sm:$0xf]
  %v315 = vld [vmem:[%s1 + $0x2ac] sm:$0xf]
  %v316 = vld [vmem:[%s1 + $0x2b0] sm:$0xf]
  %v317 = vld [vmem:[%s1 + $0x2b4] sm:$0xf]
  %v318 = vld [vmem:[%s1 + $0x2b8] sm:$0xf]
  %v319 = vld [vmem:[%s1 + $0x2bc] sm:$0xf]
  %v320 = vld [vmem:[%s1 + $0x2c0] sm:$0xf]
  %v321 = vld [vmem:[%s1 + $0x2c4] sm:$0xf]
  %v322 = vld [vmem:[%s1 + $0x2c8] sm:$0xf]
  %v323 = vld [vmem:[%s1 + $0x2cc] sm:$0xf]
  %v324 = vld [vmem:[%s1 + $0x2d0] sm:$0xf]
  %v325 = vld [vmem:[%s1 + $0x2d4] sm:$0xf]
  %v326 = vld [vmem:[%s1 + $0x2d8] sm:$0xf]
  %v327 = vld [vmem:[%s1 + $0x2dc] sm:$0xf]
  %v328 = vld [vmem:[%s1 + $0x2e0] sm:$0xf]
  %v329 = vld [vmem:[%s1 + $0x2e4] sm:$0xf]
  %v330 = vld [vmem:[%s1 + $0x2e8] sm:$0xf]
  %v331 = vld [vmem:[%s1 + $0x2ec] sm:$0xf]
  %v332 = vld [vmem:[%s1 + $0x2f0] sm:$0xf]
  %v333 = vld [vmem:[%s1 + $0x2f4] sm:$0xf]
  %v334 = vld [vmem:[%s1 + $0x2f8] sm:$0xf]
  %v335 = vld [vmem:[%s1 + $0x2fc] sm:$0xf]
  %v336 = vld [vmem:[%s1 + $0x300] sm:$0xf]
  %v337 = vld [vmem:[%s1 + $0x304] sm:$0xf]
  %v338 = vld [vmem:[%s1 + $0x308] sm:$0xf]
  %v339 = vld [vmem:[%s1 + $0x30c] sm:$0xf]
  %v340 = vld [vmem:[%s1 + $0x310] sm:$0xf]
  %v341 = vld [vmem:[%s1 + $0x314] sm:$0xf]
  %v342 = vld [vmem:[%s1 + $0x318] sm:$0xf]
  %v343 = vld [vmem:[%s1 + $0x31c] sm:$0xf]
  %v344 = vld [vmem:[%s1 + $0x320] sm:$0xf]
  %v345 = vld [vmem:[%s1 + $0x324] sm:$0xf]
  %v346 = vld [vmem:[%s1 + $0x328] sm:$0xf]
  %v347 = vld [vmem:[%s1 + $0x32c] sm:$0xf]
  %v348 = vld [vmem:[%s1 + $0x330] sm:$0xf]
  %v349 = vld [vmem:[%s1 + $0x334] sm:$0xf]
  %v350 = vld [vmem:[%s1 + $0x338] sm:$0xf]
  %v351 = vld [vmem:[%s1 + $0x33c] sm:$0xf]
  %v352 = vld [vmem:[%s1 + $0x340] sm:$0xf]
  %v353 = vld [vmem:[%s1 + $0x344] sm:$0xf]
  %v354 = vld [vmem:[%s1 + $0x348] sm:$0xf]
  %v355 = vld [vmem:[%s1 + $0x34c] sm:$0xf]
  %v356 = vld [vmem:[%s1 + $0x350] sm:$0xf]
  %v357 = vld [vmem:[%s1 + $0x354] sm:$0xf]
  %v358 = vld [vmem:[%s1 + $0x358] sm:$0xf]
  %v359 = vld [vmem:[%s1 + $0x35c] sm:$0xf]
  %v486 = vunpack.c.l.b16 %v18
  %v487 = vunpack.c.h.b16 %v18
  %v488 = vunpack.c.l.b16 %v19
  %v489 = vunpack.c.h.b16 %v19
  %v490 = vunpack.c.l.b16 %v20
  %v491 = vunpack.c.h.b16 %v20
  %v492 = vunpack.c.l.b16 %v21
  %v493 = vunpack.c.h.b16 %v21
  %v494 = vunpack.c.l.b16 %v22
  %v495 = vunpack.c.h.b16 %v22
  %v496 = vunpack.c.l.b16 %v23
  %v497 = vunpack.c.h.b16 %v23
  %v498 = vunpack.c.l.b16 %v24
  %v499 = vunpack.c.h.b16 %v24
  %v500 = vunpack.c.l.b16 %v25
  %v501 = vunpack.c.h.b16 %v25
  %v502 = vunpack.c.l.b16 %v26
  %v503 = vunpack.c.h.b16 %v26
  %v504 = vunpack.c.l.b16 %v27
  %v505 = vunpack.c.h.b16 %v27
  %v506 = vunpack.c.l.b16 %v28
  %v507 = vunpack.c.h.b16 %v28
  %v508 = vunpack.c.l.b16 %v29
  %v509 = vunpack.c.h.b16 %v29
  %v510 = vunpack.c.l.b16 %v30
  %v511 = vunpack.c.h.b16 %v30
  %v512 = vunpack.c.l.b16 %v31
  %v513 = vunpack.c.h.b16 %v31
  %v514 = vunpack.c.l.b16 %v32
  %v515 = vunpack.c.h.b16 %v32
  %v516 = vunpack.c.l.b16 %v33
  %v517 = vunpack.c.h.b16 %v33
  %v518 = vunpack.c.l.b16 %v34
  %v519 = vunpack.c.h.b16 %v34
  %v520 = vunpack.c.l.b16 %v35
  %v521 = vunpack.c.h.b16 %v35
  %v522 = vunpack.c.l.b16 %v36
  %v523 = vunpack.c.h.b16 %v36
  %v524 = vunpack.c.l.b16 %v37
  %v525 = vunpack.c.h.b16 %v37
  %v526 = vunpack.c.l.b16 %v38
  %v527 = vunpack.c.h.b16 %v38
  %v528 = vunpack.c.l.b16 %v39
  %v529 = vunpack.c.h.b16 %v39
  %v530 = vunpack.c.l.b16 %v40
  %v531 = vunpack.c.h.b16 %v40
  %v532 = vunpack.c.l.b16 %v41
  %v533 = vunpack.c.h.b16 %v41
  %v534 = vunpack.c.l.b16 %v42
  %v535 = vunpack.c.h.b16 %v42
  %v536 = vunpack.c.l.b16 %v43
  %v537 = vunpack.c.h.b16 %v43
  %v538 = vunpack.c.l.b16 %v44
  %v539 = vunpack.c.h.b16 %v44
  %v540 = vunpack.c.l.b16 %v45
  %v541 = vunpack.c.h.b16 %v45
  %v542 = vunpack.c.l.b16 %v46
  %v543 = vunpack.c.h.b16 %v46
  %v544 = vunpack.c.l.b16 %v47
  %v545 = vunpack.c.h.b16 %v47
  %v546 = vunpack.c.l.b16 %v48
  %v547 = vunpack.c.h.b16 %v48
  %v548 = vunpack.c.l.b16 %v49
  %v549 = vunpack.c.h.b16 %v49
  %v550 = vunpack.c.l.b16 %v50
  %v551 = vunpack.c.h.b16 %v50
  %v552 = vunpack.c.l.b16 %v51
  %v553 = vunpack.c.h.b16 %v51
  %v554 = vunpack.c.l.b16 %v52
  %v555 = vunpack.c.h.b16 %v52
  %v556 = vunpack.c.l.b16 %v53
  %v557 = vunpack.c.h.b16 %v53
  %v558 = vunpack.c.l.b16 %v54
  %v559 = vunpack.c.h.b16 %v54
  %v560 = vunpack.c.l.b16 %v55
  %v561 = vunpack.c.h.b16 %v55
  %v562 = vunpack.c.l.b16 %v56
  %v563 = vunpack.c.h.b16 %v56
  %v564 = vunpack.c.l.b16 %v57
  %v565 = vunpack.c.h.b16 %v57
  %v566 = vunpack.c.l.b16 %v58
  %v567 = vunpack.c.h.b16 %v58
  %v568 = vunpack.c.l.b16 %v59
  %v569 = vunpack.c.h.b16 %v59
  %v570 = vunpack.c.l.b16 %v60
  %v571 = vunpack.c.h.b16 %v60
  %v572 = vunpack.c.l.b16 %v61
  %v573 = vunpack.c.h.b16 %v61
  %v574 = vunpack.c.l.b16 %v62
  %v575 = vunpack.c.h.b16 %v62
  %v576 = vunpack.c.l.b16 %v63
  %v577 = vunpack.c.h.b16 %v63
  %v578 = vunpack.c.l.b16 %v64
  %v579 = vunpack.c.h.b16 %v64
  %v580 = vunpack.c.l.b16 %v65
  %v581 = vunpack.c.h.b16 %v65
  %v582 = vunpack.c.l.b16 %v66
  %v583 = vunpack.c.h.b16 %v66
  %v584 = vunpack.c.l.b16 %v67
  %v585 = vunpack.c.h.b16 %v67
  %v586 = vunpack.c.l.b16 %v68
  %v587 = vunpack.c.h.b16 %v68
  %v588 = vunpack.c.l.b16 %v69
  %v589 = vunpack.c.h.b16 %v69
  %v590 = vunpack.c.l.b16 %v70
  %v591 = vunpack.c.h.b16 %v70
  %v592 = vunpack.c.l.b16 %v71
  %v593 = vunpack.c.h.b16 %v71
  %v594 = vunpack.c.l.b16 %v72
  %v595 = vunpack.c.h.b16 %v72
  %v596 = vunpack.c.l.b16 %v73
  %v597 = vunpack.c.h.b16 %v73
  %v598 = vunpack.c.l.b16 %v74
  %v599 = vunpack.c.h.b16 %v74
  %v600 = vunpack.c.l.b16 %v75
  %v601 = vunpack.c.h.b16 %v75
  %v602 = vunpack.c.l.b16 %v76
  %v603 = vunpack.c.h.b16 %v76
  %v604 = vunpack.c.l.b16 %v77
  %v605 = vunpack.c.h.b16 %v77
  %v606 = vunpack.c.l.b16 %v78
  %v607 = vunpack.c.h.b16 %v78
  %v608 = vunpack.c.l.b16 %v79
  %v609 = vunpack.c.h.b16 %v79
  %v610 = vunpack.c.l.b16 %v80
  %v611 = vunpack.c.h.b16 %v80
  %v612 = vunpack.c.l.b16 %v81
  %v613 = vunpack.c.h.b16 %v81
  %v614 = vunpack.c.l.b16 %v82
  %v615 = vunpack.c.h.b16 %v82
  %v616 = vunpack.c.l.b16 %v83
  %v617 = vunpack.c.h.b16 %v83
  %v618 = vunpack.c.l.b16 %v84
  %v619 = vunpack.c.h.b16 %v84
  %v620 = vunpack.c.l.b16 %v85
  %v621 = vunpack.c.h.b16 %v85
  %v622 = vunpack.c.l.b16 %v86
  %v623 = vunpack.c.h.b16 %v86
  %v624 = vunpack.c.l.b16 %v87
  %v625 = vunpack.c.h.b16 %v87
  %v626 = vunpack.c.l.b16 %v88
  %v627 = vunpack.c.h.b16 %v88
  %v628 = vunpack.c.l.b16 %v89
  %v629 = vunpack.c.h.b16 %v89
  %v630 = vunpack.c.l.b16 %v90
  %v631 = vunpack.c.h.b16 %v90
  %v632 = vunpack.c.l.b16 %v91
  %v633 = vunpack.c.h.b16 %v91
  %v634 = vunpack.c.l.b16 %v92
  %v635 = vunpack.c.h.b16 %v92
  %v636 = vunpack.c.l.b16 %v93
  %v637 = vunpack.c.h.b16 %v93
  %v638 = vunpack.c.l.b16 %v94
  %v639 = vunpack.c.h.b16 %v94
  %v640 = vunpack.c.l.b16 %v95
  %v641 = vunpack.c.h.b16 %v95
  %v642 = vunpack.c.l.b16 %v96
  %v643 = vunpack.c.h.b16 %v96
  %v644 = vunpack.c.l.b16 %v97
  %v645 = vunpack.c.h.b16 %v97
  %v646 = vunpack.c.l.b16 %v98
  %v647 = vunpack.c.h.b16 %v98
  %v648 = vunpack.c.l.b16 %v99
  %v649 = vunpack.c.h.b16 %v99
  %v650 = vunpack.c.l.b16 %v100
  %v651 = vunpack.c.h.b16 %v100
  %v652 = vunpack.c.l.b16 %v101
  %v653 = vunpack.c.h.b16 %v101
  %v654 = vunpack.c.l.b16 %v102
  %v655 = vunpack.c.h.b16 %v102
  %v656 = vunpack.c.l.b16 %v103
  %v657 = vunpack.c.h.b16 %v103
  %v658 = vunpack.c.l.b16 %v104
  %v659 = vunpack.c.h.b16 %v104
  %v660 = vunpack.c.l.b16 %v105
  %v661 = vunpack.c.h.b16 %v105
  %v662 = vunpack.c.l.b16 %v106
  %v663 = vunpack.c.h.b16 %v106
  %v664 = vunpack.c.l.b16 %v107
  %v665 = vunpack.c.h.b16 %v107
  %v666 = vunpack.c.l.b16 %v108
  %v667 = vunpack.c.h.b16 %v108
  %v668 = vunpack.c.l.b16 %v109
  %v669 = vunpack.c.h.b16 %v109
  %v670 = vunpack.c.l.b16 %v110
  %v671 = vunpack.c.h.b16 %v110
  %v672 = vunpack.c.l.b16 %v111
  %v673 = vunpack.c.h.b16 %v111
  %v674 = vunpack.c.l.b16 %v112
  %v675 = vunpack.c.h.b16 %v112
  %v676 = vunpack.c.l.b16 %v113
  %v677 = vunpack.c.h.b16 %v113
  %v678 = vunpack.c.l.b16 %v114
  %v679 = vunpack.c.h.b16 %v114
  %v680 = vunpack.c.l.b16 %v115
  %v681 = vunpack.c.h.b16 %v115
  %v682 = vunpack.c.l.b16 %v116
  %v683 = vunpack.c.h.b16 %v116
  %v684 = vunpack.c.l.b16 %v117
  %v685 = vunpack.c.h.b16 %v117
  %v686 = vunpack.c.l.b16 %v118
  %v687 = vunpack.c.h.b16 %v118
  %v688 = vunpack.c.l.b16 %v119
  %v689 = vunpack.c.h.b16 %v119
  %v690 = vunpack.c.l.b16 %v120
  %v691 = vunpack.c.h.b16 %v120
  %v692 = vunpack.c.l.b16 %v121
  %v693 = vunpack.c.h.b16 %v121
  %v694 = vunpack.c.l.b16 %v122
  %v695 = vunpack.c.h.b16 %v122
  %v696 = vunpack.c.l.b16 %v123
  %v697 = vunpack.c.h.b16 %v123
  %v698 = vunpack.c.l.b16 %v124
  %v699 = vunpack.c.h.b16 %v124
  %v700 = vunpack.c.l.b16 %v125
  %v701 = vunpack.c.h.b16 %v125
  %v702 = vunpack.c.l.b16 %v126
  %v703 = vunpack.c.h.b16 %v126
  %v704 = vunpack.c.l.b16 %v127
  %v705 = vunpack.c.h.b16 %v127
  %v706 = vunpack.c.l.b16 %v128
  %v707 = vunpack.c.h.b16 %v128
  %v708 = vunpack.c.l.b16 %v129
  %v709 = vunpack.c.h.b16 %v129
  %v710 = vunpack.c.l.b16 %v130
  %v711 = vunpack.c.h.b16 %v130
  %v712 = vunpack.c.l.b16 %v131
  %v713 = vunpack.c.h.b16 %v131
  %v714 = vunpack.c.l.b16 %v132
  %v715 = vunpack.c.h.b16 %v132
  %v716 = vunpack.c.l.b16 %v133
  %v717 = vunpack.c.h.b16 %v133
  %v718 = vunpack.c.l.b16 %v134
  %v719 = vunpack.c.h.b16 %v134
  %v720 = vunpack.c.l.b16 %v135
  %v721 = vunpack.c.h.b16 %v135
  %v722 = vunpack.c.l.b16 %v136
  %v723 = vunpack.c.h.b16 %v136
  %v724 = vunpack.c.l.b16 %v137
  %v725 = vunpack.c.h.b16 %v137
  %v726 = vunpack.c.l.b16 %v138
  %v727 = vunpack.c.h.b16 %v138
  %v728 = vunpack.c.l.b16 %v139
  %v729 = vunpack.c.h.b16 %v139
  %v730 = vunpack.c.l.b16 %v140
  %v731 = vunpack.c.h.b16 %v140
  %v732 = vunpack.c.l.b16 %v141
  %v733 = vunpack.c.h.b16 %v141
  %v734 = vunpack.c.l.b16 %v142
  %v735 = vunpack.c.h.b16 %v142
  %v736 = vunpack.c.l.b16 %v143
  %v737 = vunpack.c.h.b16 %v143
  %v738 = vpack.c.b16 %v500, %v486
  %v739 = vpack.c.b16 %v501, %v487
  %v740 = vpack.c.b16 %v502, %v488
  %v741 = vpack.c.b16 %v503, %v489
  %v742 = vpack.c.b16 %v504, %v490
  %v743 = vpack.c.b16 %v505, %v491
  %v744 = vpack.c.b16 %v506, %v492
  %v745 = vpack.c.b16 %v507, %v493
  %v746 = vpack.c.b16 %v508, %v494
  %v747 = vpack.c.b16 %v509, %v495
  %v748 = vpack.c.b16 %v510, %v496
  %v749 = vpack.c.b16 %v511, %v497
  %v750 = vpack.c.b16 %v512, %v498
  %v751 = vpack.c.b16 %v513, %v499
  %v752 = vpack.c.b16 %v528, %v514
  %v753 = vpack.c.b16 %v529, %v515
  %v754 = vpack.c.b16 %v530, %v516
  %v755 = vpack.c.b16 %v531, %v517
  %v756 = vpack.c.b16 %v532, %v518
  %v757 = vpack.c.b16 %v533, %v519
  %v758 = vpack.c.b16 %v534, %v520
  %v759 = vpack.c.b16 %v535, %v521
  %v760 = vpack.c.b16 %v536, %v522
  %v761 = vpack.c.b16 %v537, %v523
  %v762 = vpack.c.b16 %v538, %v524
  %v763 = vpack.c.b16 %v539, %v525
  %v764 = vpack.c.b16 %v540, %v526
  %v765 = vpack.c.b16 %v541, %v527
  %v766 = vpack.c.b16 %v556, %v542
  %v767 = vpack.c.b16 %v557, %v543
  %v768 = vpack.c.b16 %v558, %v544
  %v769 = vpack.c.b16 %v559, %v545
  %v770 = vpack.c.b16 %v560, %v546
  %v771 = vpack.c.b16 %v561, %v547
  %v772 = vpack.c.b16 %v562, %v548
  %v773 = vpack.c.b16 %v563, %v549
  %v774 = vpack.c.b16 %v564, %v550
  %v775 = vpack.c.b16 %v565, %v551
  %v776 = vpack.c.b16 %v566, %v552
  %v777 = vpack.c.b16 %v567, %v553
  %v778 = vpack.c.b16 %v568, %v554
  %v779 = vpack.c.b16 %v569, %v555
  %v780 = vpack.c.b16 %v584, %v570
  %v781 = vpack.c.b16 %v585, %v571
  %v782 = vpack.c.b16 %v586, %v572
  %v783 = vpack.c.b16 %v587, %v573
  %v784 = vpack.c.b16 %v588, %v574
  %v785 = vpack.c.b16 %v589, %v575
  %v786 = vpack.c.b16 %v590, %v576
  %v787 = vpack.c.b16 %v591, %v577
  %v788 = vpack.c.b16 %v592, %v578
  %v789 = vpack.c.b16 %v593, %v579
  %v790 = vpack.c.b16 %v594, %v580
  %v791 = vpack.c.b16 %v595, %v581
  %v792 = vpack.c.b16 %v596, %v582
  %v793 = vpack.c.b16 %v597, %v583
  %v794 = vpack.c.b16 %v612, %v598
  %v795 = vpack.c.b16 %v613, %v599
  %v796 = vpack.c.b16 %v614, %v600
  %v797 = vpack.c.b16 %v615, %v601
  %v798 = vpack.c.b16 %v616, %v602
  %v799 = vpack.c.b16 %v617, %v603
  %v800 = vpack.c.b16 %v618, %v604
  %v801 = vpack.c.b16 %v619, %v605
  %v802 = vpack.c.b16 %v620, %v606
  %v803 = vpack.c.b16 %v621, %v607
  %v804 = vpack.c.b16 %v622, %v608
  %v805 = vpack.c.b16 %v623, %v609
  %v806 = vpack.c.b16 %v624, %v610
  %v807 = vpack.c.b16 %v625, %v611
  %v808 = vpack.c.b16 %v640, %v626
  %v809 = vpack.c.b16 %v641, %v627
  %v810 = vpack.c.b16 %v642, %v628
  %v811 = vpack.c.b16 %v643, %v629
  %v812 = vpack.c.b16 %v644, %v630
  %v813 = vpack.c.b16 %v645, %v631
  %v814 = vpack.c.b16 %v646, %v632
  %v815 = vpack.c.b16 %v647, %v633
  %v816 = vpack.c.b16 %v648, %v634
  %v817 = vpack.c.b16 %v649, %v635
  %v818 = vpack.c.b16 %v650, %v636
  %v819 = vpack.c.b16 %v651, %v637
  %v820 = vpack.c.b16 %v652, %v638
  %v821 = vpack.c.b16 %v653, %v639
  %v822 = vpack.c.b16 %v668, %v654
  %v823 = vpack.c.b16 %v669, %v655
  %v824 = vpack.c.b16 %v670, %v656
  %v825 = vpack.c.b16 %v671, %v657
  %v826 = vpack.c.b16 %v672, %v658
  %v827 = vpack.c.b16 %v673, %v659
  %v828 = vpack.c.b16 %v674, %v660
  %v829 = vpack.c.b16 %v675, %v661
  %v830 = vpack.c.b16 %v676, %v662
  %v831 = vpack.c.b16 %v677, %v663
  %v832 = vpack.c.b16 %v678, %v664
  %v833 = vpack.c.b16 %v679, %v665
  %v834 = vpack.c.b16 %v680, %v666
  %v835 = vpack.c.b16 %v681, %v667
  %v836 = vpack.c.b16 %v696, %v682
  %v837 = vpack.c.b16 %v697, %v683
  %v838 = vpack.c.b16 %v698, %v684
  %v839 = vpack.c.b16 %v699, %v685
  %v840 = vpack.c.b16 %v700, %v686
  %v841 = vpack.c.b16 %v701, %v687
  %v842 = vpack.c.b16 %v702, %v688
  %v843 = vpack.c.b16 %v703, %v689
  %v844 = vpack.c.b16 %v704, %v690
  %v845 = vpack.c.b16 %v705, %v691
  %v846 = vpack.c.b16 %v706, %v692
  %v847 = vpack.c.b16 %v707, %v693
  %v848 = vpack.c.b16 %v708, %v694
  %v849 = vpack.c.b16 %v709, %v695
  %v850 = vpack.c.b16 %v724, %v710
  %v851 = vpack.c.b16 %v725, %v711
  %v852 = vpack.c.b16 %v726, %v712
  %v853 = vpack.c.b16 %v727, %v713
  %v854 = vpack.c.b16 %v728, %v714
  %v855 = vpack.c.b16 %v729, %v715
  %v856 = vpack.c.b16 %v730, %v716
  %v857 = vpack.c.b16 %v731, %v717
  %v858 = vpack.c.b16 %v732, %v718
  %v859 = vpack.c.b16 %v733, %v719
  %v860 = vpack.c.b16 %v734, %v720
  %v861 = vpack.c.b16 %v735, %v721
  %v862 = vpack.c.b16 %v736, %v722
  %v863 = vpack.c.b16 %v737, %v723
  %v1197 = vunpack.c.l.b16 %v144
  %v1198 = vunpack.c.l.b16 %v145
  %v1199 = vunpack.c.l.b16 %v146
  %v1200 = vunpack.c.l.b16 %v147
  %v1201 = vunpack.c.l.b16 %v148
  %v1202 = vunpack.c.l.b16 %v149
  %v1203 = vunpack.c.l.b16 %v150
  %v1204 = vunpack.c.l.b16 %v151
  %v1205 = vunpack.c.l.b16 %v152
  %v1206 = vunpack.c.l.b16 %v153
  %v1207 = vunpack.c.l.b16 %v154
  %v1208 = vunpack.c.l.b16 %v155
  %v1209 = vunpack.c.l.b16 %v156
  %v1210 = vunpack.c.l.b16 %v157
  %v1211 = vunpack.c.l.b16 %v158
  %v1212 = vunpack.c.l.b16 %v159
  %v1213 = vunpack.c.l.b16 %v160
  %v1214 = vunpack.c.l.b16 %v161
  %v1215 = vunpack.c.l.b16 %v162
  %v1216 = vunpack.c.l.b16 %v163
  %v1217 = vunpack.c.l.b16 %v164
  %v1218 = vunpack.c.l.b16 %v165
  %v1219 = vunpack.c.l.b16 %v166
  %v1220 = vunpack.c.l.b16 %v167
  %v1221 = vunpack.c.l.b16 %v168
  %v1222 = vunpack.c.l.b16 %v169
  %v1223 = vunpack.c.l.b16 %v170
  %v1224 = vunpack.c.l.b16 %v171
  %v1225 = vunpack.c.l.b16 %v172
  %v1226 = vunpack.c.l.b16 %v173
  %v1227 = vunpack.c.l.b16 %v174
  %v1228 = vunpack.c.l.b16 %v175
  %v1229 = vunpack.c.l.b16 %v176
  %v1230 = vunpack.c.l.b16 %v177
  %v1231 = vunpack.c.l.b16 %v178
  %v1232 = vunpack.c.l.b16 %v179
  %v1233 = vunpack.c.l.b16 %v180
  %v1234 = vunpack.c.l.b16 %v181
  %v1235 = vunpack.c.l.b16 %v182
  %v1236 = vunpack.c.l.b16 %v183
  %v1237 = vunpack.c.l.b16 %v184
  %v1238 = vunpack.c.l.b16 %v185
  %v1239 = vunpack.c.l.b16 %v186
  %v1240 = vunpack.c.l.b16 %v187
  %v1241 = vunpack.c.l.b16 %v188
  %v1242 = vunpack.c.l.b16 %v189
  %v1243 = vunpack.c.l.b16 %v190
  %v1244 = vunpack.c.l.b16 %v191
  %v1245 = vunpack.c.l.b16 %v192
  %v1246 = vunpack.c.l.b16 %v193
  %v1247 = vunpack.c.l.b16 %v194
  %v1248 = vunpack.c.l.b16 %v195
  %v1249 = vunpack.c.l.b16 %v196
  %v1250 = vunpack.c.l.b16 %v197
  %v1251 = vunpack.c.l.b16 %v198
  %v1252 = vunpack.c.l.b16 %v199
  %v1253 = vunpack.c.l.b16 %v200
  %v1254 = vunpack.c.l.b16 %v201
  %v1255 = vunpack.c.l.b16 %v202
  %v1256 = vunpack.c.l.b16 %v203
  %v1257 = vunpack.c.l.b16 %v204
  %v1258 = vunpack.c.l.b16 %v205
  %v1259 = vunpack.c.l.b16 %v206
  %v1260 = vunpack.c.l.b16 %v207
  %v1261 = vunpack.c.l.b16 %v208
  %v1262 = vunpack.c.l.b16 %v209
  %v1263 = vunpack.c.l.b16 %v210
  %v1264 = vunpack.c.l.b16 %v211
  %v1265 = vunpack.c.l.b16 %v212
  %v1266 = vunpack.c.l.b16 %v213
  %v1267 = vunpack.c.l.b16 %v214
  %v1268 = vunpack.c.l.b16 %v215
  %v1269 = vunpack.c.l.b16 %v216
  %v1270 = vunpack.c.l.b16 %v217
  %v1271 = vunpack.c.l.b16 %v218
  %v1272 = vunpack.c.l.b16 %v219
  %v1273 = vunpack.c.l.b16 %v220
  %v1274 = vunpack.c.l.b16 %v221
  %v1275 = vunpack.c.l.b16 %v222
  %v1276 = vunpack.c.l.b16 %v223
  %v1277 = vunpack.c.l.b16 %v224
  %v1278 = vunpack.c.l.b16 %v225
  %v1279 = vunpack.c.l.b16 %v226
  %v1280 = vunpack.c.l.b16 %v227
  %v1281 = vunpack.c.l.b16 %v228
  %v1282 = vunpack.c.l.b16 %v229
  %v1283 = vunpack.c.l.b16 %v230
  %v1284 = vunpack.c.l.b16 %v231
  %v1285 = vunpack.c.l.b16 %v232
  %v1286 = vunpack.c.l.b16 %v233
  %v1287 = vunpack.c.l.b16 %v234
  %v1288 = vunpack.c.l.b16 %v235
  %v1289 = vunpack.c.l.b16 %v236
  %v1290 = vunpack.c.l.b16 %v237
  %v1291 = vunpack.c.l.b16 %v238
  %v1292 = vunpack.c.l.b16 %v239
  %v1293 = vunpack.c.l.b16 %v240
  %v1294 = vunpack.c.l.b16 %v241
  %v1295 = vunpack.c.l.b16 %v242
  %v1296 = vunpack.c.l.b16 %v243
  %v1297 = vunpack.c.l.b16 %v244
  %v1298 = vunpack.c.l.b16 %v245
  %v1299 = vunpack.c.l.b16 %v246
  %v1300 = vunpack.c.l.b16 %v247
  %v1301 = vunpack.c.l.b16 %v248
  %v1302 = vunpack.c.l.b16 %v249
  %v1303 = vunpack.c.l.b16 %v250
  %v1304 = vunpack.c.l.b16 %v251
  %v1305 = vunpack.c.l.b16 %v252
  %v1306 = vunpack.c.l.b16 %v253
  %v1307 = vunpack.c.l.b16 %v254
  %v1308 = vunpack.c.l.b16 %v255
  %v1309 = vunpack.c.l.b16 %v256
  %v1310 = vunpack.c.l.b16 %v257
  %v1311 = vunpack.c.l.b16 %v258
  %v1312 = vunpack.c.l.b16 %v259
  %v1313 = vunpack.c.l.b16 %v260
  %v1314 = vunpack.c.l.b16 %v261
  %v1315 = vunpack.c.l.b16 %v262
  %v1316 = vunpack.c.l.b16 %v263
  %v1317 = vunpack.c.l.b16 %v264
  %v1318 = vunpack.c.l.b16 %v265
  %v1319 = vunpack.c.l.b16 %v266
  %v1320 = vunpack.c.l.b16 %v267
  %v1321 = vunpack.c.l.b16 %v268
  %v1322 = vunpack.c.l.b16 %v269
  %v1323 = vunpack.c.l.b16 %v270
  %v1324 = vunpack.c.l.b16 %v271
  %v1325 = vunpack.c.l.b16 %v272
  %v1326 = vunpack.c.l.b16 %v273
  %v1327 = vunpack.c.l.b16 %v274
  %v1328 = vunpack.c.l.b16 %v275
  %v1329 = vunpack.c.l.b16 %v276
  %v1330 = vunpack.c.l.b16 %v277
  %v1331 = vunpack.c.l.b16 %v278
  %v1332 = vunpack.c.l.b16 %v279
  %v1333 = vunpack.c.l.b16 %v280
  %v1334 = vunpack.c.l.b16 %v281
  %v1335 = vunpack.c.l.b16 %v282
  %v1336 = vunpack.c.l.b16 %v283
  %v1337 = vunpack.c.l.b16 %v284
  %v1338 = vunpack.c.l.b16 %v285
  %v1339 = vunpack.c.l.b16 %v286
  %v1340 = vunpack.c.l.b16 %v287
  %v1341 = vunpack.c.l.b16 %v288
  %v1342 = vunpack.c.l.b16 %v289
  %v1343 = vunpack.c.l.b16 %v290
  %v1344 = vunpack.c.l.b16 %v291
  %v1345 = vunpack.c.l.b16 %v292
  %v1346 = vunpack.c.l.b16 %v293
  %v1347 = vunpack.c.l.b16 %v294
  %v1348 = vunpack.c.l.b16 %v295
  %v1349 = vunpack.c.l.b16 %v296
  %v1350 = vunpack.c.l.b16 %v297
  %v1351 = vunpack.c.l.b16 %v298
  %v1352 = vunpack.c.l.b16 %v299
  %v1353 = vunpack.c.l.b16 %v300
  %v1354 = vunpack.c.l.b16 %v301
  %v1355 = vunpack.c.l.b16 %v302
  %v1356 = vunpack.c.l.b16 %v303
  %v1357 = vunpack.c.l.b16 %v304
  %v1358 = vunpack.c.l.b16 %v305
  %v1359 = vunpack.c.l.b16 %v306
  %v1360 = vunpack.c.l.b16 %v307
  %v1361 = vunpack.c.l.b16 %v308
  %v1362 = vunpack.c.l.b16 %v309
  %v1363 = vunpack.c.l.b16 %v310
  %v1364 = vunpack.c.l.b16 %v311
  %v1365 = vunpack.c.l.b16 %v312
  %v1366 = vunpack.c.l.b16 %v313
  %v1367 = vunpack.c.l.b16 %v314
  %v1368 = vunpack.c.l.b16 %v315
  %v1369 = vunpack.c.l.b16 %v316
  %v1370 = vunpack.c.l.b16 %v317
  %v1371 = vunpack.c.l.b16 %v318
  %v1372 = vunpack.c.l.b16 %v319
  %v1373 = vunpack.c.l.b16 %v320
  %v1374 = vunpack.c.l.b16 %v321
  %v1375 = vunpack.c.l.b16 %v322
  %v1376 = vunpack.c.l.b16 %v323
  %v1377 = vunpack.c.l.b16 %v324
  %v1378 = vunpack.c.l.b16 %v325
  %v1379 = vunpack.c.l.b16 %v326
  %v1380 = vunpack.c.l.b16 %v327
  %v1381 = vunpack.c.l.b16 %v328
  %v1382 = vunpack.c.l.b16 %v329
  %v1383 = vunpack.c.l.b16 %v330
  %v1384 = vunpack.c.l.b16 %v331
  %v1385 = vunpack.c.l.b16 %v332
  %v1386 = vunpack.c.l.b16 %v333
  %v1387 = vunpack.c.l.b16 %v334
  %v1388 = vunpack.c.l.b16 %v335
  %v1389 = vunpack.c.l.b16 %v336
  %v1390 = vunpack.c.l.b16 %v337
  %v1391 = vunpack.c.l.b16 %v338
  %v1392 = vunpack.c.l.b16 %v339
  %v1393 = vunpack.c.l.b16 %v340
  %v1394 = vunpack.c.l.b16 %v341
  %v1395 = vunpack.c.l.b16 %v342
  %v1396 = vunpack.c.l.b16 %v343
  %v1397 = vunpack.c.l.b16 %v344
  %v1398 = vunpack.c.l.b16 %v345
  %v1399 = vunpack.c.l.b16 %v346
  %v1400 = vunpack.c.l.b16 %v347
  %v1401 = vunpack.c.l.b16 %v348
  %v1402 = vunpack.c.l.b16 %v349
  %v1403 = vunpack.c.l.b16 %v350
  %v1404 = vunpack.c.l.b16 %v351
  %v1405 = vunpack.c.l.b16 %v352
  %v1406 = vunpack.c.l.b16 %v353
  %v1407 = vunpack.c.l.b16 %v354
  %v1408 = vunpack.c.l.b16 %v355
  %v1409 = vunpack.c.l.b16 %v356
  %v1410 = vunpack.c.l.b16 %v357
  %v1411 = vunpack.c.l.b16 %v358
  %v1412 = vunpack.c.l.b16 %v359
  %v1413 = vpack.c.b16 %v1198, %v1197
  %v1414 = vpack.c.b16 %v1200, %v1199
  %v1415 = vpack.c.b16 %v1202, %v1201
  %v1416 = vpack.c.b16 %v1204, %v1203
  %v1417 = vpack.c.b16 %v1206, %v1205
  %v1418 = vpack.c.b16 %v1208, %v1207
  %v1419 = vpack.c.b16 %v1210, %v1209
  %v1420 = vpack.c.b16 %v1212, %v1211
  %v1421 = vpack.c.b16 %v1214, %v1213
  %v1422 = vpack.c.b16 %v1216, %v1215
  %v1423 = vpack.c.b16 %v1218, %v1217
  %v1424 = vpack.c.b16 %v1220, %v1219
  %v1425 = vpack.c.b16 %v1222, %v1221
  %v1426 = vpack.c.b16 %v1224, %v1223
  %v1427 = vpack.c.b16 %v1226, %v1225
  %v1428 = vpack.c.b16 %v1228, %v1227
  %v1429 = vpack.c.b16 %v1230, %v1229
  %v1430 = vpack.c.b16 %v1232, %v1231
  %v1431 = vpack.c.b16 %v1234, %v1233
  %v1432 = vpack.c.b16 %v1236, %v1235
  %v1433 = vpack.c.b16 %v1238, %v1237
  %v1434 = vpack.c.b16 %v1240, %v1239
  %v1435 = vpack.c.b16 %v1242, %v1241
  %v1436 = vpack.c.b16 %v1244, %v1243
  %v1437 = vpack.c.b16 %v1246, %v1245
  %v1438 = vpack.c.b16 %v1248, %v1247
  %v1439 = vpack.c.b16 %v1250, %v1249
  %v1440 = vpack.c.b16 %v1252, %v1251
  %v1441 = vpack.c.b16 %v1254, %v1253
  %v1442 = vpack.c.b16 %v1256, %v1255
  %v1443 = vpack.c.b16 %v1258, %v1257
  %v1444 = vpack.c.b16 %v1260, %v1259
  %v1445 = vpack.c.b16 %v1262, %v1261
  %v1446 = vpack.c.b16 %v1264, %v1263
  %v1447 = vpack.c.b16 %v1266, %v1265
  %v1448 = vpack.c.b16 %v1268, %v1267
  %v1449 = vpack.c.b16 %v1270, %v1269
  %v1450 = vpack.c.b16 %v1272, %v1271
  %v1451 = vpack.c.b16 %v1274, %v1273
  %v1452 = vpack.c.b16 %v1276, %v1275
  %v1453 = vpack.c.b16 %v1278, %v1277
  %v1454 = vpack.c.b16 %v1280, %v1279
  %v1455 = vpack.c.b16 %v1282, %v1281
  %v1456 = vpack.c.b16 %v1284, %v1283
  %v1457 = vpack.c.b16 %v1286, %v1285
  %v1458 = vpack.c.b16 %v1288, %v1287
  %v1459 = vpack.c.b16 %v1290, %v1289
  %v1460 = vpack.c.b16 %v1292, %v1291
  %v1461 = vpack.c.b16 %v1294, %v1293
  %v1462 = vpack.c.b16 %v1296, %v1295
  %v1463 = vpack.c.b16 %v1298, %v1297
  %v1464 = vpack.c.b16 %v1300, %v1299
  %v1465 = vpack.c.b16 %v1302, %v1301
  %v1466 = vpack.c.b16 %v1304, %v1303
  %v1467 = vpack.c.b16 %v1306, %v1305
  %v1468 = vpack.c.b16 %v1308, %v1307
  %v1469 = vpack.c.b16 %v1310, %v1309
  %v1470 = vpack.c.b16 %v1312, %v1311
  %v1471 = vpack.c.b16 %v1314, %v1313
  %v1472 = vpack.c.b16 %v1316, %v1315
  %v1473 = vpack.c.b16 %v1318, %v1317
  %v1474 = vpack.c.b16 %v1320, %v1319
  %v1475 = vpack.c.b16 %v1322, %v1321
  %v1476 = vpack.c.b16 %v1324, %v1323
  %v1477 = vpack.c.b16 %v1326, %v1325
  %v1478 = vpack.c.b16 %v1328, %v1327
  %v1479 = vpack.c.b16 %v1330, %v1329
  %v1480 = vpack.c.b16 %v1332, %v1331
  %v1481 = vpack.c.b16 %v1334, %v1333
  %v1482 = vpack.c.b16 %v1336, %v1335
  %v1483 = vpack.c.b16 %v1338, %v1337
  %v1484 = vpack.c.b16 %v1340, %v1339
  %v1485 = vpack.c.b16 %v1342, %v1341
  %v1486 = vpack.c.b16 %v1344, %v1343
  %v1487 = vpack.c.b16 %v1346, %v1345
  %v1488 = vpack.c.b16 %v1348, %v1347
  %v1489 = vpack.c.b16 %v1350, %v1349
  %v1490 = vpack.c.b16 %v1352, %v1351
  %v1491 = vpack.c.b16 %v1354, %v1353
  %v1492 = vpack.c.b16 %v1356, %v1355
  %v1493 = vpack.c.b16 %v1358, %v1357
  %v1494 = vpack.c.b16 %v1360, %v1359
  %v1495 = vpack.c.b16 %v1362, %v1361
  %v1496 = vpack.c.b16 %v1364, %v1363
  %v1497 = vpack.c.b16 %v1366, %v1365
  %v1498 = vpack.c.b16 %v1368, %v1367
  %v1499 = vpack.c.b16 %v1370, %v1369
  %v1500 = vpack.c.b16 %v1372, %v1371
  %v1501 = vpack.c.b16 %v1374, %v1373
  %v1502 = vpack.c.b16 %v1376, %v1375
  %v1503 = vpack.c.b16 %v1378, %v1377
  %v1504 = vpack.c.b16 %v1380, %v1379
  %v1505 = vpack.c.b16 %v1382, %v1381
  %v1506 = vpack.c.b16 %v1384, %v1383
  %v1507 = vpack.c.b16 %v1386, %v1385
  %v1508 = vpack.c.b16 %v1388, %v1387
  %v1509 = vpack.c.b16 %v1390, %v1389
  %v1510 = vpack.c.b16 %v1392, %v1391
  %v1511 = vpack.c.b16 %v1394, %v1393
  %v1512 = vpack.c.b16 %v1396, %v1395
  %v1513 = vpack.c.b16 %v1398, %v1397
  %v1514 = vpack.c.b16 %v1400, %v1399
  %v1515 = vpack.c.b16 %v1402, %v1401
  %v1516 = vpack.c.b16 %v1404, %v1403
  %v1517 = vpack.c.b16 %v1406, %v1405
  %v1518 = vpack.c.b16 %v1408, %v1407
  %v1519 = vpack.c.b16 %v1410, %v1409
  %v1520 = vpack.c.b16 %v1412, %v1411
  %vm1629 = vcmask 523264
  %v1631 = vsel %vm1629, %v751, 0
  %v1634 = vsel %vm1629, %v765, 0
  %v1637 = vsel %vm1629, %v779, 0
  %v1640 = vsel %vm1629, %v793, 0
  %v1643 = vsel %vm1629, %v807, 0
  %v1646 = vsel %vm1629, %v821, 0
  %v1649 = vsel %vm1629, %v835, 0
  %v1652 = vsel %vm1629, %v849, 0
  %v1655 = vsel %vm1629, %v863, 0
  %1657 = vmatprep.subr.bf16.mxu0 0
  %1658 = vmatpush1.bf16.msra.mxu0 %v1413
  %1659 = vmatprep.subr.bf16.mxu0 0
  %1660 = vmatpush1.bf16.msra.mxu0 %v1414
  %1661 = vmatprep.subr.bf16.mxu0 0
  %1662 = vmatpush1.bf16.msra.mxu0 %v1415
  %1663 = vmatprep.subr.bf16.mxu0 0
  %1664 = vmatpush1.bf16.msra.mxu0 %v1416
  %1665 = vmatprep.subr.bf16.mxu0 0
  %1666 = vmatpush1.bf16.msra.mxu0 %v1417
  %1667 = vmatprep.subr.bf16.mxu0 0
  %1668 = vmatpush1.bf16.msra.mxu0 %v1418
  %1669 = vmatprep.subr.bf16.mxu0 0
  %1670 = vmatpush1.bf16.msra.mxu0 %v1419
  %1671 = vmatprep.subr.bf16.mxu0 0
  %1672 = vmatpush1.bf16.msra.mxu0 %v1420
  %1673 = vmatprep.subr.bf16.mxu0 0
  %1674 = vmatpush1.bf16.msra.mxu0 %v1421
  %1675 = vmatprep.subr.bf16.mxu0 0
  %1676 = vmatpush1.bf16.msra.mxu0 %v1422
  %1677 = vmatprep.subr.bf16.mxu0 0
  %1678 = vmatpush1.bf16.msra.mxu0 %v1423
  %1679 = vmatprep.subr.bf16.mxu0 0
  %1680 = vmatpush1.bf16.msra.mxu0 %v1424
  %1681 = vmatprep.subr.bf16.mxu0 0
  %1682 = vmatpush1.bf16.msra.mxu0 %v1425
  %1683 = vmatprep.subr.bf16.mxu0 0
  %1684 = vmatpush1.bf16.msra.mxu0 %v1426
  %1685 = vmatprep.subr.bf16.mxu0 0
  %1686 = vmatpush1.bf16.msra.mxu0 %v1427
  %1687 = vmatprep.subr.bf16.mxu0 0
  %1688 = vmatpush1.bf16.msra.mxu0 %v1428
  %1689 = vmatprep.mubr.bf16.mxu0 %v739
  %1690 = vmatmul.mubr.bf16.gmra.mrb[0].mxu0 %v738
  %v1691 = vpop.f32.mrb[0].mxu0
  %v1692 = vadd.f32 0.0, %v1691
  %v1693 = vpop.f32.mrb[0].mxu0
  %v1694 = vpop.f32.mrb[0].mxu0
  %v1695 = vadd.f32 0.0, %v1694
  %v1696 = vpop.f32.mrb[0].mxu0
  %1697 = vmatprep.mubr.bf16.mxu0 %v753
  %1698 = vmatmul.mubr.bf16.gmra.mrb[0].mxu0 %v752
  %v1699 = vpop.f32.mrb[0].mxu0
  %v1700 = vadd.f32 0.0, %v1699
  %v1701 = vpop.f32.mrb[0].mxu0
  %v1702 = vpop.f32.mrb[0].mxu0
  %v1703 = vadd.f32 0.0, %v1702
  %v1704 = vpop.f32.mrb[0].mxu0
  %1705 = vmatprep.mubr.bf16.mxu0 %v767
  %1706 = vmatmul.mubr.bf16.gmra.mrb[0].mxu0 %v766
  %v1707 = vpop.f32.mrb[0].mxu0
  %v1708 = vadd.f32 0.0, %v1707
  %v1709 = vpop.f32.mrb[0].mxu0
  %v1710 = vpop.f32.mrb[0].mxu0
  %v1711 = vadd.f32 0.0, %v1710
  %v1712 = vpop.f32.mrb[0].mxu0
  %1713 = vmatprep.mubr.bf16.mxu0 %v781
  %1714 = vmatmul.mubr.bf16.gmra.mrb[0].mxu0 %v780
  %v1715 = vpop.f32.mrb[0].mxu0
  %v1716 = vadd.f32 0.0, %v1715
  %v1717 = vpop.f32.mrb[0].mxu0
  %v1718 = vpop.f32.mrb[0].mxu0
  %v1719 = vadd.f32 0.0, %v1718
  %v1720 = vpop.f32.mrb[0].mxu0
  %1721 = vmatprep.mubr.bf16.mxu0 %v795
  %1722 = vmatmul.mubr.bf16.gmra.mrb[0].mxu0 %v794
  %v1723 = vpop.f32.mrb[0].mxu0
  %v1724 = vadd.f32 0.0, %v1723
  %v1725 = vpop.f32.mrb[0].mxu0
  %v1726 = vpop.f32.mrb[0].mxu0
  %v1727 = vadd.f32 0.0, %v1726
  %v1728 = vpop.f32.mrb[0].mxu0
  %1729 = vmatprep.mubr.bf16.mxu0 %v809
  %1730 = vmatmul.mubr.bf16.gmra.mrb[0].mxu0 %v808
  %v1731 = vpop.f32.mrb[0].mxu0
  %v1732 = vadd.f32 0.0, %v1731
  %v1733 = vpop.f32.mrb[0].mxu0
  %v1734 = vpop.f32.mrb[0].mxu0
  %v1735 = vadd.f32 0.0, %v1734
  %v1736 = vpop.f32.mrb[0].mxu0
  %1737 = vmatprep.mubr.bf16.mxu0 %v823
  %1738 = vmatmul.mubr.bf16.gmra.mrb[0].mxu0 %v822
  %v1739 = vpop.f32.mrb[0].mxu0
  %v1740 = vadd.f32 0.0, %v1739
  %v1741 = vpop.f32.mrb[0].mxu0
  %v1742 = vpop.f32.mrb[0].mxu0
  %v1743 = vadd.f32 0.0, %v1742
  %v1744 = vpop.f32.mrb[0].mxu0
  %1745 = vmatprep.mubr.bf16.mxu0 %v837
  %1746 = vmatmul.mubr.bf16.gmra.mrb[0].mxu0 %v836
  %v1747 = vpop.f32.mrb[0].mxu0
  %v1748 = vadd.f32 0.0, %v1747
  %v1749 = vpop.f32.mrb[0].mxu0
  %v1750 = vpop.f32.mrb[0].mxu0
  %v1751 = vadd.f32 0.0, %v1750
  %v1752 = vpop.f32.mrb[0].mxu0
  %1753 = vmatprep.mubr.bf16.mxu0 %v851
  %1754 = vmatmul.mubr.bf16.gmra.mrb[0].mxu0 %v850
  %v1755 = vpop.f32.mrb[0].mxu0
  %v1756 = vadd.f32 0.0, %v1755
  %v1757 = vpop.f32.mrb[0].mxu0
  %v1758 = vpop.f32.mrb[0].mxu0
  %v1759 = vadd.f32 0.0, %v1758
  %v1760 = vpop.f32.mrb[0].mxu0
  %1761 = vdwg.mxu0
  %1762 = vmatprep.subr.bf16.mxu0 0
  %1763 = vmatpush1.bf16.msra.mxu0 %v1429
  %1764 = vmatprep.subr.bf16.mxu0 0
  %1765 = vmatpush1.bf16.msra.mxu0 %v1430
  %1766 = vmatprep.subr.bf16.mxu0 0
  %1767 = vmatpush1.bf16.msra.mxu0 %v1431
  %1768 = vmatprep.subr.bf16.mxu0 0
  %1769 = vmatpush1.bf16.msra.mxu0 %v1432
  %1770 = vmatprep.subr.bf16.mxu0 0
  %1771 = vmatpush1.bf16.msra.mxu0 %v1433
  %1772 = vmatprep.subr.bf16.mxu0 0
  %1773 = vmatpush1.bf16.msra.mxu0 %v1434
  %1774 = vmatprep.subr.bf16.mxu0 0
  %1775 = vmatpush1.bf16.msra.mxu0 %v1435
  %1776 = vmatprep.subr.bf16.mxu0 0
  %1777 = vmatpush1.bf16.msra.mxu0 %v1436
  %1778 = vmatprep.subr.bf16.mxu0 0
  %1779 = vmatpush1.bf16.msra.mxu0 %v1437
  %1780 = vmatprep.subr.bf16.mxu0 0
  %1781 = vmatpush1.bf16.msra.mxu0 %v1438
  %1782 = vmatprep.subr.bf16.mxu0 0
  %1783 = vmatpush1.bf16.msra.mxu0 %v1439
  %1784 = vmatprep.subr.bf16.mxu0 0
  %1785 = vmatpush1.bf16.msra.mxu0 %v1440
  %1786 = vmatprep.subr.bf16.mxu0 0
  %1787 = vmatpush1.bf16.msra.mxu0 %v1441
  %1788 = vmatprep.subr.bf16.mxu0 0
  %1789 = vmatpush1.bf16.msra.mxu0 %v1442
  %1790 = vmatprep.subr.bf16.mxu0 0
  %1791 = vmatpush1.bf16.msra.mxu0 %v1443
  %1792 = vmatprep.subr.bf16.mxu0 0
  %1793 = vmatpush1.bf16.msra.mxu0 %v1444
  %1794 = vmatprep.mubr.bf16.mxu0 %v741
  %1795 = vmatmul.mubr.bf16.gmra.mrb[0].mxu0 %v740
  %v1796 = vpop.f32.mrb[0].mxu0
  %v1797 = vadd.f32 %v1692, %v1796
  %v1798 = vpop.f32.mrb[0].mxu0
  %v1799 = vpop.f32.mrb[0].mxu0
  %v1800 = vadd.f32 %v1695, %v1799
  %v1801 = vpop.f32.mrb[0].mxu0
  %1802 = vmatprep.mubr.bf16.mxu0 %v755
  %1803 = vmatmul.mubr.bf16.gmra.mrb[0].mxu0 %v754
  %v1804 = vpop.f32.mrb[0].mxu0
  %v1805 = vadd.f32 %v1700, %v1804
  %v1806 = vpop.f32.mrb[0].mxu0
  %v1807 = vpop.f32.mrb[0].mxu0
  %v1808 = vadd.f32 %v1703, %v1807
  %v1809 = vpop.f32.mrb[0].mxu0
  %1810 = vmatprep.mubr.bf16.mxu0 %v769
  %1811 = vmatmul.mubr.bf16.gmra.mrb[0].mxu0 %v768
  %v1812 = vpop.f32.mrb[0].mxu0
  %v1813 = vadd.f32 %v1708, %v1812
  %v1814 = vpop.f32.mrb[0].mxu0
  %v1815 = vpop.f32.mrb[0].mxu0
  %v1816 = vadd.f32 %v1711, %v1815
  %v1817 = vpop.f32.mrb[0].mxu0
  %1818 = vmatprep.mubr.bf16.mxu0 %v783
  %1819 = vmatmul.mubr.bf16.gmra.mrb[0].mxu0 %v782
  %v1820 = vpop.f32.mrb[0].mxu0
  %v1821 = vadd.f32 %v1716, %v1820
  %v1822 = vpop.f32.mrb[0].mxu0
  %v1823 = vpop.f32.mrb[0].mxu0
  %v1824 = vadd.f32 %v1719, %v1823
  %v1825 = vpop.f32.mrb[0].mxu0
  %1826 = vmatprep.mubr.bf16.mxu0 %v797
  %1827 = vmatmul.mubr.bf16.gmra.mrb[0].mxu0 %v796
  %v1828 = vpop.f32.mrb[0].mxu0
  %v1829 = vadd.f32 %v1724, %v1828
  %v1830 = vpop.f32.mrb[0].mxu0
  %v1831 = vpop.f32.mrb[0].mxu0
  %v1832 = vadd.f32 %v1727, %v1831
  %v1833 = vpop.f32.mrb[0].mxu0
  %1834 = vmatprep.mubr.bf16.mxu0 %v811
  %1835 = vmatmul.mubr.bf16.gmra.mrb[0].mxu0 %v810
  %v1836 = vpop.f32.mrb[0].mxu0
  %v1837 = vadd.f32 %v1732, %v1836
  %v1838 = vpop.f32.mrb[0].mxu0
  %v1839 = vpop.f32.mrb[0].mxu0
  %v1840 = vadd.f32 %v1735, %v1839
  %v1841 = vpop.f32.mrb[0].mxu0
  %1842 = vmatprep.mubr.bf16.mxu0 %v825
  %1843 = vmatmul.mubr.bf16.gmra.mrb[0].mxu0 %v824
  %v1844 = vpop.f32.mrb[0].mxu0
  %v1845 = vadd.f32 %v1740, %v1844
  %v1846 = vpop.f32.mrb[0].mxu0
  %v1847 = vpop.f32.mrb[0].mxu0
  %v1848 = vadd.f32 %v1743, %v1847
  %v1849 = vpop.f32.mrb[0].mxu0
  %1850 = vmatprep.mubr.bf16.mxu0 %v839
  %1851 = vmatmul.mubr.bf16.gmra.mrb[0].mxu0 %v838
  %v1852 = vpop.f32.mrb[0].mxu0
  %v1853 = vadd.f32 %v1748, %v1852
  %v1854 = vpop.f32.mrb[0].mxu0
  %v1855 = vpop.f32.mrb[0].mxu0
  %v1856 = vadd.f32 %v1751, %v1855
  %v1857 = vpop.f32.mrb[0].mxu0
  %1858 = vmatprep.mubr.bf16.mxu0 %v853
  %1859 = vmatmul.mubr.bf16.gmra.mrb[0].mxu0 %v852
  %v1860 = vpop.f32.mrb[0].mxu0
  %v1861 = vadd.f32 %v1756, %v1860
  %v1862 = vpop.f32.mrb[0].mxu0
  %v1863 = vpop.f32.mrb[0].mxu0
  %v1864 = vadd.f32 %v1759, %v1863
  %v1865 = vpop.f32.mrb[0].mxu0
  %1866 = vdwg.mxu0
  %1867 = vmatprep.subr.bf16.mxu0 0
  %1868 = vmatpush1.bf16.msra.mxu0 %v1445
  %1869 = vmatprep.subr.bf16.mxu0 0
  %1870 = vmatpush1.bf16.msra.mxu0 %v1446
  %1871 = vmatprep.subr.bf16.mxu0 0
  %1872 = vmatpush1.bf16.msra.mxu0 %v1447
  %1873 = vmatprep.subr.bf16.mxu0 0
  %1874 = vmatpush1.bf16.msra.mxu0 %v1448
  %1875 = vmatprep.subr.bf16.mxu0 0
  %1876 = vmatpush1.bf16.msra.mxu0 %v1449
  %1877 = vmatprep.subr.bf16.mxu0 0
  %1878 = vmatpush1.bf16.msra.mxu0 %v1450
  %1879 = vmatprep.subr.bf16.mxu0 0
  %1880 = vmatpush1.bf16.msra.mxu0 %v1451
  %1881 = vmatprep.subr.bf16.mxu0 0
  %1882 = vmatpush1.bf16.msra.mxu0 %v1452
  %1883 = vmatprep.subr.bf16.mxu0 0
  %1884 = vmatpush1.bf16.msra.mxu0 %v1453
  %1885 = vmatprep.subr.bf16.mxu0 0
  %1886 = vmatpush1.bf16.msra.mxu0 %v1454
  %1887 = vmatprep.subr.bf16.mxu0 0
  %1888 = vmatpush1.bf16.msra.mxu0 %v1455
  %1889 = vmatprep.subr.bf16.mxu0 0
  %1890 = vmatpush1.bf16.msra.mxu0 %v1456
  %1891 = vmatprep.subr.bf16.mxu0 0
  %1892 = vmatpush1.bf16.msra.mxu0 %v1457
  %1893 = vmatprep.subr.bf16.mxu0 0
  %1894 = vmatpush1.bf16.msra.mxu0 %v1458
  %1895 = vmatprep.subr.bf16.mxu0 0
  %1896 = vmatpush1.bf16.msra.mxu0 %v1459
  %1897 = vmatprep.subr.bf16.mxu0 0
  %1898 = vmatpush1.bf16.msra.mxu0 %v1460
  %1899 = vmatprep.mubr.bf16.mxu0 %v743
  %1900 = vmatmul.mubr.bf16.gmra.mrb[0].mxu0 %v742
  %v1901 = vpop.f32.mrb[0].mxu0
  %v1902 = vadd.f32 %v1797, %v1901
  %v1903 = vpop.f32.mrb[0].mxu0
  %v1904 = vpop.f32.mrb[0].mxu0
  %v1905 = vadd.f32 %v1800, %v1904
  %v1906 = vpop.f32.mrb[0].mxu0
  %1907 = vmatprep.mubr.bf16.mxu0 %v757
  %1908 = vmatmul.mubr.bf16.gmra.mrb[0].mxu0 %v756
  %v1909 = vpop.f32.mrb[0].mxu0
  %v1910 = vadd.f32 %v1805, %v1909
  %v1911 = vpop.f32.mrb[0].mxu0
  %v1912 = vpop.f32.mrb[0].mxu0
  %v1913 = vadd.f32 %v1808, %v1912
  %v1914 = vpop.f32.mrb[0].mxu0
  %1915 = vmatprep.mubr.bf16.mxu0 %v771
  %1916 = vmatmul.mubr.bf16.gmra.mrb[0].mxu0 %v770
  %v1917 = vpop.f32.mrb[0].mxu0
  %v1918 = vadd.f32 %v1813, %v1917
  %v1919 = vpop.f32.mrb[0].mxu0
  %v1920 = vpop.f32.mrb[0].mxu0
  %v1921 = vadd.f32 %v1816, %v1920
  %v1922 = vpop.f32.mrb[0].mxu0
  %1923 = vmatprep.mubr.bf16.mxu0 %v785
  %1924 = vmatmul.mubr.bf16.gmra.mrb[0].mxu0 %v784
  %v1925 = vpop.f32.mrb[0].mxu0
  %v1926 = vadd.f32 %v1821, %v1925
  %v1927 = vpop.f32.mrb[0].mxu0
  %v1928 = vpop.f32.mrb[0].mxu0
  %v1929 = vadd.f32 %v1824, %v1928
  %v1930 = vpop.f32.mrb[0].mxu0
  %1931 = vmatprep.mubr.bf16.mxu0 %v799
  %1932 = vmatmul.mubr.bf16.gmra.mrb[0].mxu0 %v798
  %v1933 = vpop.f32.mrb[0].mxu0
  %v1934 = vadd.f32 %v1829, %v1933
  %v1935 = vpop.f32.mrb[0].mxu0
  %v1936 = vpop.f32.mrb[0].mxu0
  %v1937 = vadd.f32 %v1832, %v1936
  %v1938 = vpop.f32.mrb[0].mxu0
  %1939 = vmatprep.mubr.bf16.mxu0 %v813
  %1940 = vmatmul.mubr.bf16.gmra.mrb[0].mxu0 %v812
  %v1941 = vpop.f32.mrb[0].mxu0
  %v1942 = vadd.f32 %v1837, %v1941
  %v1943 = vpop.f32.mrb[0].mxu0
  %v1944 = vpop.f32.mrb[0].mxu0
  %v1945 = vadd.f32 %v1840, %v1944
  %v1946 = vpop.f32.mrb[0].mxu0
  %1947 = vmatprep.mubr.bf16.mxu0 %v827
  %1948 = vmatmul.mubr.bf16.gmra.mrb[0].mxu0 %v826
  %v1949 = vpop.f32.mrb[0].mxu0
  %v1950 = vadd.f32 %v1845, %v1949
  %v1951 = vpop.f32.mrb[0].mxu0
  %v1952 = vpop.f32.mrb[0].mxu0
  %v1953 = vadd.f32 %v1848, %v1952
  %v1954 = vpop.f32.mrb[0].mxu0
  %1955 = vmatprep.mubr.bf16.mxu0 %v841
  %1956 = vmatmul.mubr.bf16.gmra.mrb[0].mxu0 %v840
  %v1957 = vpop.f32.mrb[0].mxu0
  %v1958 = vadd.f32 %v1853, %v1957
  %v1959 = vpop.f32.mrb[0].mxu0
  %v1960 = vpop.f32.mrb[0].mxu0
  %v1961 = vadd.f32 %v1856, %v1960
  %v1962 = vpop.f32.mrb[0].mxu0
  %1963 = vmatprep.mubr.bf16.mxu0 %v855
  %1964 = vmatmul.mubr.bf16.gmra.mrb[0].mxu0 %v854
  %v1965 = vpop.f32.mrb[0].mxu0
  %v1966 = vadd.f32 %v1861, %v1965
  %v1967 = vpop.f32.mrb[0].mxu0
  %v1968 = vpop.f32.mrb[0].mxu0
  %v1969 = vadd.f32 %v1864, %v1968
  %v1970 = vpop.f32.mrb[0].mxu0
  %1971 = vdwg.mxu0
  %1972 = vmatprep.subr.bf16.mxu0 0
  %1973 = vmatpush1.bf16.msra.mxu0 %v1461
  %1974 = vmatprep.subr.bf16.mxu0 0
  %1975 = vmatpush1.bf16.msra.mxu0 %v1462
  %1976 = vmatprep.subr.bf16.mxu0 0
  %1977 = vmatpush1.bf16.msra.mxu0 %v1463
  %1978 = vmatprep.subr.bf16.mxu0 0
  %1979 = vmatpush1.bf16.msra.mxu0 %v1464
  %1980 = vmatprep.subr.bf16.mxu0 0
  %1981 = vmatpush1.bf16.msra.mxu0 %v1465
  %1982 = vmatprep.subr.bf16.mxu0 0
  %1983 = vmatpush1.bf16.msra.mxu0 %v1466
  %1984 = vmatprep.subr.bf16.mxu0 0
  %1985 = vmatpush1.bf16.msra.mxu0 %v1467
  %1986 = vmatprep.subr.bf16.mxu0 0
  %1987 = vmatpush1.bf16.msra.mxu0 %v1468
  %1988 = vmatprep.subr.bf16.mxu0 0
  %1989 = vmatpush1.bf16.msra.mxu0 %v1469
  %1990 = vmatprep.subr.bf16.mxu0 0
  %1991 = vmatpush1.bf16.msra.mxu0 %v1470
  %1992 = vmatprep.subr.bf16.mxu0 0
  %1993 = vmatpush1.bf16.msra.mxu0 %v1471
  %1994 = vmatprep.subr.bf16.mxu0 0
  %1995 = vmatpush1.bf16.msra.mxu0 %v1472
  %1996 = vmatprep.subr.bf16.mxu0 0
  %1997 = vmatpush1.bf16.msra.mxu0 %v1473
  %1998 = vmatprep.subr.bf16.mxu0 0
  %1999 = vmatpush1.bf16.msra.mxu0 %v1474
  %2000 = vmatprep.subr.bf16.mxu0 0
  %2001 = vmatpush1.bf16.msra.mxu0 %v1475
  %2002 = vmatprep.subr.bf16.mxu0 0
  %2003 = vmatpush1.bf16.msra.mxu0 %v1476
  %2004 = vmatprep.mubr.bf16.mxu0 %v745
  %2005 = vmatmul.mubr.bf16.gmra.mrb[0].mxu0 %v744
  %v2006 = vpop.f32.mrb[0].mxu0
  %v2007 = vadd.f32 %v1902, %v2006
  %v2008 = vpop.f32.mrb[0].mxu0
  %v2009 = vpop.f32.mrb[0].mxu0
  %v2010 = vadd.f32 %v1905, %v2009
  %v2011 = vpop.f32.mrb[0].mxu0
  %2012 = vmatprep.mubr.bf16.mxu0 %v759
  %2013 = vmatmul.mubr.bf16.gmra.mrb[0].mxu0 %v758
  %v2014 = vpop.f32.mrb[0].mxu0
  %v2015 = vadd.f32 %v1910, %v2014
  %v2016 = vpop.f32.mrb[0].mxu0
  %v2017 = vpop.f32.mrb[0].mxu0
  %v2018 = vadd.f32 %v1913, %v2017
  %v2019 = vpop.f32.mrb[0].mxu0
  %2020 = vmatprep.mubr.bf16.mxu0 %v773
  %2021 = vmatmul.mubr.bf16.gmra.mrb[0].mxu0 %v772
  %v2022 = vpop.f32.mrb[0].mxu0
  %v2023 = vadd.f32 %v1918, %v2022
  %v2024 = vpop.f32.mrb[0].mxu0
  %v2025 = vpop.f32.mrb[0].mxu0
  %v2026 = vadd.f32 %v1921, %v2025
  %v2027 = vpop.f32.mrb[0].mxu0
  %2028 = vmatprep.mubr.bf16.mxu0 %v787
  %2029 = vmatmul.mubr.bf16.gmra.mrb[0].mxu0 %v786
  %v2030 = vpop.f32.mrb[0].mxu0
  %v2031 = vadd.f32 %v1926, %v2030
  %v2032 = vpop.f32.mrb[0].mxu0
  %v2033 = vpop.f32.mrb[0].mxu0
  %v2034 = vadd.f32 %v1929, %v2033
  %v2035 = vpop.f32.mrb[0].mxu0
  %2036 = vmatprep.mubr.bf16.mxu0 %v801
  %2037 = vmatmul.mubr.bf16.gmra.mrb[0].mxu0 %v800
  %v2038 = vpop.f32.mrb[0].mxu0
  %v2039 = vadd.f32 %v1934, %v2038
  %v2040 = vpop.f32.mrb[0].mxu0
  %v2041 = vpop.f32.mrb[0].mxu0
  %v2042 = vadd.f32 %v1937, %v2041
  %v2043 = vpop.f32.mrb[0].mxu0
  %2044 = vmatprep.mubr.bf16.mxu0 %v815
  %2045 = vmatmul.mubr.bf16.gmra.mrb[0].mxu0 %v814
  %v2046 = vpop.f32.mrb[0].mxu0
  %v2047 = vadd.f32 %v1942, %v2046
  %v2048 = vpop.f32.mrb[0].mxu0
  %v2049 = vpop.f32.mrb[0].mxu0
  %v2050 = vadd.f32 %v1945, %v2049
  %v2051 = vpop.f32.mrb[0].mxu0
  %2052 = vmatprep.mubr.bf16.mxu0 %v829
  %2053 = vmatmul.mubr.bf16.gmra.mrb[0].mxu0 %v828
  %v2054 = vpop.f32.mrb[0].mxu0
  %v2055 = vadd.f32 %v1950, %v2054
  %v2056 = vpop.f32.mrb[0].mxu0
  %v2057 = vpop.f32.mrb[0].mxu0
  %v2058 = vadd.f32 %v1953, %v2057
  %v2059 = vpop.f32.mrb[0].mxu0
  %2060 = vmatprep.mubr.bf16.mxu0 %v843
  %2061 = vmatmul.mubr.bf16.gmra.mrb[0].mxu0 %v842
  %v2062 = vpop.f32.mrb[0].mxu0
  %v2063 = vadd.f32 %v1958, %v2062
  %v2064 = vpop.f32.mrb[0].mxu0
  %v2065 = vpop.f32.mrb[0].mxu0
  %v2066 = vadd.f32 %v1961, %v2065
  %v2067 = vpop.f32.mrb[0].mxu0
  %2068 = vmatprep.mubr.bf16.mxu0 %v857
  %2069 = vmatmul.mubr.bf16.gmra.mrb[0].mxu0 %v856
  %v2070 = vpop.f32.mrb[0].mxu0
  %v2071 = vadd.f32 %v1966, %v2070
  %v2072 = vpop.f32.mrb[0].mxu0
  %v2073 = vpop.f32.mrb[0].mxu0
  %v2074 = vadd.f32 %v1969, %v2073
  %v2075 = vpop.f32.mrb[0].mxu0
  %2076 = vdwg.mxu0
  %2077 = vmatprep.subr.bf16.mxu0 0
  %2078 = vmatpush1.bf16.msra.mxu0 %v1477
  %2079 = vmatprep.subr.bf16.mxu0 0
  %2080 = vmatpush1.bf16.msra.mxu0 %v1478
  %2081 = vmatprep.subr.bf16.mxu0 0
  %2082 = vmatpush1.bf16.msra.mxu0 %v1479
  %2083 = vmatprep.subr.bf16.mxu0 0
  %2084 = vmatpush1.bf16.msra.mxu0 %v1480
  %2085 = vmatprep.subr.bf16.mxu0 0
  %2086 = vmatpush1.bf16.msra.mxu0 %v1481
  %2087 = vmatprep.subr.bf16.mxu0 0
  %2088 = vmatpush1.bf16.msra.mxu0 %v1482
  %2089 = vmatprep.subr.bf16.mxu0 0
  %2090 = vmatpush1.bf16.msra.mxu0 %v1483
  %2091 = vmatprep.subr.bf16.mxu0 0
  %2092 = vmatpush1.bf16.msra.mxu0 %v1484
  %2093 = vmatprep.subr.bf16.mxu0 0
  %2094 = vmatpush1.bf16.msra.mxu0 %v1485
  %2095 = vmatprep.subr.bf16.mxu0 0
  %2096 = vmatpush1.bf16.msra.mxu0 %v1486
  %2097 = vmatprep.subr.bf16.mxu0 0
  %2098 = vmatpush1.bf16.msra.mxu0 %v1487
  %2099 = vmatprep.subr.bf16.mxu0 0
  %2100 = vmatpush1.bf16.msra.mxu0 %v1488
  %2101 = vmatprep.subr.bf16.mxu0 0
  %2102 = vmatpush1.bf16.msra.mxu0 %v1489
  %2103 = vmatprep.subr.bf16.mxu0 0
  %2104 = vmatpush1.bf16.msra.mxu0 %v1490
  %2105 = vmatprep.subr.bf16.mxu0 0
  %2106 = vmatpush1.bf16.msra.mxu0 %v1491
  %2107 = vmatprep.subr.bf16.mxu0 0
  %2108 = vmatpush1.bf16.msra.mxu0 %v1492
  %2109 = vmatprep.mubr.bf16.mxu0 %v747
  %2110 = vmatmul.mubr.bf16.gmra.mrb[0].mxu0 %v746
  %v2111 = vpop.f32.mrb[0].mxu0
  %v2112 = vadd.f32 %v2007, %v2111
  %v2113 = vpop.f32.mrb[0].mxu0
  %v2114 = vpop.f32.mrb[0].mxu0
  %v2115 = vadd.f32 %v2010, %v2114
  %v2116 = vpop.f32.mrb[0].mxu0
  %2117 = vmatprep.mubr.bf16.mxu0 %v761
  %2118 = vmatmul.mubr.bf16.gmra.mrb[0].mxu0 %v760
  %v2119 = vpop.f32.mrb[0].mxu0
  %v2120 = vadd.f32 %v2015, %v2119
  %v2121 = vpop.f32.mrb[0].mxu0
  %v2122 = vpop.f32.mrb[0].mxu0
  %v2123 = vadd.f32 %v2018, %v2122
  %v2124 = vpop.f32.mrb[0].mxu0
  %2125 = vmatprep.mubr.bf16.mxu0 %v775
  %2126 = vmatmul.mubr.bf16.gmra.mrb[0].mxu0 %v774
  %v2127 = vpop.f32.mrb[0].mxu0
  %v2128 = vadd.f32 %v2023, %v2127
  %v2129 = vpop.f32.mrb[0].mxu0
  %v2130 = vpop.f32.mrb[0].mxu0
  %v2131 = vadd.f32 %v2026, %v2130
  %v2132 = vpop.f32.mrb[0].mxu0
  %2133 = vmatprep.mubr.bf16.mxu0 %v789
  %2134 = vmatmul.mubr.bf16.gmra.mrb[0].mxu0 %v788
  %v2135 = vpop.f32.mrb[0].mxu0
  %v2136 = vadd.f32 %v2031, %v2135
  %v2137 = vpop.f32.mrb[0].mxu0
  %v2138 = vpop.f32.mrb[0].mxu0
  %v2139 = vadd.f32 %v2034, %v2138
  %v2140 = vpop.f32.mrb[0].mxu0
  %2141 = vmatprep.mubr.bf16.mxu0 %v803
  %2142 = vmatmul.mubr.bf16.gmra.mrb[0].mxu0 %v802
  %v2143 = vpop.f32.mrb[0].mxu0
  %v2144 = vadd.f32 %v2039, %v2143
  %v2145 = vpop.f32.mrb[0].mxu0
  %v2146 = vpop.f32.mrb[0].mxu0
  %v2147 = vadd.f32 %v2042, %v2146
  %v2148 = vpop.f32.mrb[0].mxu0
  %2149 = vmatprep.mubr.bf16.mxu0 %v817
  %2150 = vmatmul.mubr.bf16.gmra.mrb[0].mxu0 %v816
  %v2151 = vpop.f32.mrb[0].mxu0
  %v2152 = vadd.f32 %v2047, %v2151
  %v2153 = vpop.f32.mrb[0].mxu0
  %v2154 = vpop.f32.mrb[0].mxu0
  %v2155 = vadd.f32 %v2050, %v2154
  %v2156 = vpop.f32.mrb[0].mxu0
  %2157 = vmatprep.mubr.bf16.mxu0 %v831
  %2158 = vmatmul.mubr.bf16.gmra.mrb[0].mxu0 %v830
  %v2159 = vpop.f32.mrb[0].mxu0
  %v2160 = vadd.f32 %v2055, %v2159
  %v2161 = vpop.f32.mrb[0].mxu0
  %v2162 = vpop.f32.mrb[0].mxu0
  %v2163 = vadd.f32 %v2058, %v2162
  %v2164 = vpop.f32.mrb[0].mxu0
  %2165 = vmatprep.mubr.bf16.mxu0 %v845
  %2166 = vmatmul.mubr.bf16.gmra.mrb[0].mxu0 %v844
  %v2167 = vpop.f32.mrb[0].mxu0
  %v2168 = vadd.f32 %v2063, %v2167
  %v2169 = vpop.f32.mrb[0].mxu0
  %v2170 = vpop.f32.mrb[0].mxu0
  %v2171 = vadd.f32 %v2066, %v2170
  %v2172 = vpop.f32.mrb[0].mxu0
  %2173 = vmatprep.mubr.bf16.mxu0 %v859
  %2174 = vmatmul.mubr.bf16.gmra.mrb[0].mxu0 %v858
  %v2175 = vpop.f32.mrb[0].mxu0
  %v2176 = vadd.f32 %v2071, %v2175
  %v2177 = vpop.f32.mrb[0].mxu0
  %v2178 = vpop.f32.mrb[0].mxu0
  %v2179 = vadd.f32 %v2074, %v2178
  %v2180 = vpop.f32.mrb[0].mxu0
  %2181 = vdwg.mxu0
  %2182 = vmatprep.subr.bf16.mxu0 0
  %2183 = vmatpush1.bf16.msra.mxu0 %v1493
  %2184 = vmatprep.subr.bf16.mxu0 0
  %2185 = vmatpush1.bf16.msra.mxu0 %v1494
  %2186 = vmatprep.subr.bf16.mxu0 0
  %2187 = vmatpush1.bf16.msra.mxu0 %v1495
  %2188 = vmatprep.subr.bf16.mxu0 0
  %2189 = vmatpush1.bf16.msra.mxu0 %v1496
  %2190 = vmatprep.subr.bf16.mxu0 0
  %2191 = vmatpush1.bf16.msra.mxu0 %v1497
  %2192 = vmatprep.subr.bf16.mxu0 0
  %2193 = vmatpush1.bf16.msra.mxu0 %v1498
  %2194 = vmatprep.subr.bf16.mxu0 0
  %2195 = vmatpush1.bf16.msra.mxu0 %v1499
  %2196 = vmatprep.subr.bf16.mxu0 0
  %2197 = vmatpush1.bf16.msra.mxu0 %v1500
  %2198 = vmatprep.subr.bf16.mxu0 0
  %2199 = vmatpush1.bf16.msra.mxu0 %v1501
  %2200 = vmatprep.subr.bf16.mxu0 0
  %2201 = vmatpush1.bf16.msra.mxu0 %v1502
  %2202 = vmatprep.subr.bf16.mxu0 0
  %2203 = vmatpush1.bf16.msra.mxu0 %v1503
  %2204 = vmatprep.subr.bf16.mxu0 0
  %2205 = vmatpush1.bf16.msra.mxu0 %v1504
  %2206 = vmatprep.subr.bf16.mxu0 0
  %2207 = vmatpush1.bf16.msra.mxu0 %v1505
  %2208 = vmatprep.subr.bf16.mxu0 0
  %2209 = vmatpush1.bf16.msra.mxu0 %v1506
  %2210 = vmatprep.subr.bf16.mxu0 0
  %2211 = vmatpush1.bf16.msra.mxu0 %v1507
  %2212 = vmatprep.subr.bf16.mxu0 0
  %2213 = vmatpush1.bf16.msra.mxu0 %v1508
  %2214 = vmatprep.mubr.bf16.mxu0 %v749
  %2215 = vmatmul.mubr.bf16.gmra.mrb[0].mxu0 %v748
  %v2216 = vpop.f32.mrb[0].mxu0
  %v2217 = vadd.f32 %v2112, %v2216
  %v2218 = vpop.f32.mrb[0].mxu0
  %v2219 = vpop.f32.mrb[0].mxu0
  %v2220 = vadd.f32 %v2115, %v2219
  %v2221 = vpop.f32.mrb[0].mxu0
  %2222 = vmatprep.mubr.bf16.mxu0 %v763
  %2223 = vmatmul.mubr.bf16.gmra.mrb[0].mxu0 %v762
  %v2224 = vpop.f32.mrb[0].mxu0
  %v2225 = vadd.f32 %v2120, %v2224
  %v2226 = vpop.f32.mrb[0].mxu0
  %v2227 = vpop.f32.mrb[0].mxu0
  %v2228 = vadd.f32 %v2123, %v2227
  %v2229 = vpop.f32.mrb[0].mxu0
  %2230 = vmatprep.mubr.bf16.mxu0 %v777
  %2231 = vmatmul.mubr.bf16.gmra.mrb[0].mxu0 %v776
  %v2232 = vpop.f32.mrb[0].mxu0
  %v2233 = vadd.f32 %v2128, %v2232
  %v2234 = vpop.f32.mrb[0].mxu0
  %v2235 = vpop.f32.mrb[0].mxu0
  %v2236 = vadd.f32 %v2131, %v2235
  %v2237 = vpop.f32.mrb[0].mxu0
  %2238 = vmatprep.mubr.bf16.mxu0 %v791
  %2239 = vmatmul.mubr.bf16.gmra.mrb[0].mxu0 %v790
  %v2240 = vpop.f32.mrb[0].mxu0
  %v2241 = vadd.f32 %v2136, %v2240
  %v2242 = vpop.f32.mrb[0].mxu0
  %v2243 = vpop.f32.mrb[0].mxu0
  %v2244 = vadd.f32 %v2139, %v2243
  %v2245 = vpop.f32.mrb[0].mxu0
  %2246 = vmatprep.mubr.bf16.mxu0 %v805
  %2247 = vmatmul.mubr.bf16.gmra.mrb[0].mxu0 %v804
  %v2248 = vpop.f32.mrb[0].mxu0
  %v2249 = vadd.f32 %v2144, %v2248
  %v2250 = vpop.f32.mrb[0].mxu0
  %v2251 = vpop.f32.mrb[0].mxu0
  %v2252 = vadd.f32 %v2147, %v2251
  %v2253 = vpop.f32.mrb[0].mxu0
  %2254 = vmatprep.mubr.bf16.mxu0 %v819
  %2255 = vmatmul.mubr.bf16.gmra.mrb[0].mxu0 %v818
  %v2256 = vpop.f32.mrb[0].mxu0
  %v2257 = vadd.f32 %v2152, %v2256
  %v2258 = vpop.f32.mrb[0].mxu0
  %v2259 = vpop.f32.mrb[0].mxu0
  %v2260 = vadd.f32 %v2155, %v2259
  %v2261 = vpop.f32.mrb[0].mxu0
  %2262 = vmatprep.mubr.bf16.mxu0 %v833
  %2263 = vmatmul.mubr.bf16.gmra.mrb[0].mxu0 %v832
  %v2264 = vpop.f32.mrb[0].mxu0
  %v2265 = vadd.f32 %v2160, %v2264
  %v2266 = vpop.f32.mrb[0].mxu0
  %v2267 = vpop.f32.mrb[0].mxu0
  %v2268 = vadd.f32 %v2163, %v2267
  %v2269 = vpop.f32.mrb[0].mxu0
  %2270 = vmatprep.mubr.bf16.mxu0 %v847
  %2271 = vmatmul.mubr.bf16.gmra.mrb[0].mxu0 %v846
  %v2272 = vpop.f32.mrb[0].mxu0
  %v2273 = vadd.f32 %v2168, %v2272
  %v2274 = vpop.f32.mrb[0].mxu0
  %v2275 = vpop.f32.mrb[0].mxu0
  %v2276 = vadd.f32 %v2171, %v2275
  %v2277 = vpop.f32.mrb[0].mxu0
  %2278 = vmatprep.mubr.bf16.mxu0 %v861
  %2279 = vmatmul.mubr.bf16.gmra.mrb[0].mxu0 %v860
  %v2280 = vpop.f32.mrb[0].mxu0
  %v2281 = vadd.f32 %v2176, %v2280
  %v2282 = vpop.f32.mrb[0].mxu0
  %v2283 = vpop.f32.mrb[0].mxu0
  %v2284 = vadd.f32 %v2179, %v2283
  %v2285 = vpop.f32.mrb[0].mxu0
  %2286 = vdwg.mxu0
  %2287 = vmatprep.subr.bf16.mxu0 0
  %2288 = vmatpush1.bf16.msra.mxu0 %v1509
  %2289 = vmatprep.subr.bf16.mxu0 0
  %2290 = vmatpush1.bf16.msra.mxu0 %v1510
  %2291 = vmatprep.subr.bf16.mxu0 0
  %2292 = vmatpush1.bf16.msra.mxu0 %v1511
  %2293 = vmatprep.subr.bf16.mxu0 0
  %2294 = vmatpush1.bf16.msra.mxu0 %v1512
  %2295 = vmatprep.subr.bf16.mxu0 0
  %2296 = vmatpush1.bf16.msra.mxu0 %v1513
  %2297 = vmatprep.subr.bf16.mxu0 0
  %2298 = vmatpush1.bf16.msra.mxu0 %v1514
  %2299 = vmatprep.subr.bf16.mxu0 0
  %2300 = vmatpush1.bf16.msra.mxu0 %v1515
  %2301 = vmatprep.subr.bf16.mxu0 0
  %2302 = vmatpush1.bf16.msra.mxu0 %v1516
  %2303 = vmatprep.subr.bf16.mxu0 0
  %2304 = vmatpush1.bf16.msra.mxu0 %v1517
  %2305 = vmatprep.subr.bf16.mxu0 0
  %2306 = vmatpush1.bf16.msra.mxu0 %v1518
  %2307 = vmatprep.subr.bf16.mxu0 0
  %2308 = vmatpush1.bf16.msra.mxu0 %v1519
  %2309 = vmatprep.subr.bf16.mxu0 0
  %2310 = vmatpush1.bf16.msra.mxu0 %v1520
  %2311 = vmatprep.subr.bf16.mxu0 0
  %2312 = vmatpush1.bf16.msra.mxu0 0
  %2313 = vmatprep.subr.bf16.mxu0 0
  %2314 = vmatpush1.bf16.msra.mxu0 0
  %2315 = vmatprep.subr.bf16.mxu0 0
  %2316 = vmatpush1.bf16.msra.mxu0 0
  %2317 = vmatprep.subr.bf16.mxu0 0
  %2318 = vmatpush1.bf16.msra.mxu0 0
  %2319 = vmatprep.mubr.bf16.mxu0 %v1631
  %2320 = vmatmul.mubr.bf16.gmra.mrb[0].mxu0 %v750
  %v2321 = vpop.f32.mrb[0].mxu0
  %v2322 = vadd.f32 %v2217, %v2321
  %v2323 = vpop.f32.mrb[0].mxu0
  %v2324 = vpop.f32.mrb[0].mxu0
  %v2325 = vadd.f32 %v2220, %v2324
  %v2326 = vpop.f32.mrb[0].mxu0
  %2327 = vmatprep.mubr.bf16.mxu0 %v1634
  %2328 = vmatmul.mubr.bf16.gmra.mrb[0].mxu0 %v764
  %v2329 = vpop.f32.mrb[0].mxu0
  %v2330 = vadd.f32 %v2225, %v2329
  %v2331 = vpop.f32.mrb[0].mxu0
  %v2332 = vpop.f32.mrb[0].mxu0
  %v2333 = vadd.f32 %v2228, %v2332
  %v2334 = vpop.f32.mrb[0].mxu0
  %2335 = vmatprep.mubr.bf16.mxu0 %v1637
  %2336 = vmatmul.mubr.bf16.gmra.mrb[0].mxu0 %v778
  %v2337 = vpop.f32.mrb[0].mxu0
  %v2338 = vadd.f32 %v2233, %v2337
  %v2339 = vpop.f32.mrb[0].mxu0
  %v2340 = vpop.f32.mrb[0].mxu0
  %v2341 = vadd.f32 %v2236, %v2340
  %v2342 = vpop.f32.mrb[0].mxu0
  %2343 = vmatprep.mubr.bf16.mxu0 %v1640
  %2344 = vmatmul.mubr.bf16.gmra.mrb[0].mxu0 %v792
  %v2345 = vpop.f32.mrb[0].mxu0
  %v2346 = vadd.f32 %v2241, %v2345
  %v2347 = vpop.f32.mrb[0].mxu0
  %v2348 = vpop.f32.mrb[0].mxu0
  %v2349 = vadd.f32 %v2244, %v2348
  %v2350 = vpop.f32.mrb[0].mxu0
  %2351 = vmatprep.mubr.bf16.mxu0 %v1643
  %2352 = vmatmul.mubr.bf16.gmra.mrb[0].mxu0 %v806
  %v2353 = vpop.f32.mrb[0].mxu0
  %v2354 = vadd.f32 %v2249, %v2353
  %v2355 = vpop.f32.mrb[0].mxu0
  %v2356 = vpop.f32.mrb[0].mxu0
  %v2357 = vadd.f32 %v2252, %v2356
  %v2358 = vpop.f32.mrb[0].mxu0
  %2359 = vmatprep.mubr.bf16.mxu0 %v1646
  %2360 = vmatmul.mubr.bf16.gmra.mrb[0].mxu0 %v820
  %v2361 = vpop.f32.mrb[0].mxu0
  %v2362 = vadd.f32 %v2257, %v2361
  %v2363 = vpop.f32.mrb[0].mxu0
  %v2364 = vpop.f32.mrb[0].mxu0
  %v2365 = vadd.f32 %v2260, %v2364
  %v2366 = vpop.f32.mrb[0].mxu0
  %2367 = vmatprep.mubr.bf16.mxu0 %v1649
  %2368 = vmatmul.mubr.bf16.gmra.mrb[0].mxu0 %v834
  %v2369 = vpop.f32.mrb[0].mxu0
  %v2370 = vadd.f32 %v2265, %v2369
  %v2371 = vpop.f32.mrb[0].mxu0
  %v2372 = vpop.f32.mrb[0].mxu0
  %v2373 = vadd.f32 %v2268, %v2372
  %v2374 = vpop.f32.mrb[0].mxu0
  %2375 = vmatprep.mubr.bf16.mxu0 %v1652
  %2376 = vmatmul.mubr.bf16.gmra.mrb[0].mxu0 %v848
  %v2377 = vpop.f32.mrb[0].mxu0
  %v2378 = vadd.f32 %v2273, %v2377
  %v2379 = vpop.f32.mrb[0].mxu0
  %v2380 = vpop.f32.mrb[0].mxu0
  %v2381 = vadd.f32 %v2276, %v2380
  %v2382 = vpop.f32.mrb[0].mxu0
  %2383 = vmatprep.mubr.bf16.mxu0 %v1655
  %2384 = vmatmul.mubr.bf16.gmra.mrb[0].mxu0 %v862
  %v2385 = vpop.f32.mrb[0].mxu0
  %v2386 = vadd.f32 %v2281, %v2385
  %v2387 = vpop.f32.mrb[0].mxu0
  %v2388 = vpop.f32.mrb[0].mxu0
  %v2389 = vadd.f32 %v2284, %v2388
  %v2390 = vpop.f32.mrb[0].mxu0
  %2391 = vdwg.mxu0
  %v2392 = vadd.f32 %v2322, %v2325
  %v2393 = vadd.f32 %v2392, %v2330
  %v2394 = vadd.f32 %v2393, %v2333
  %v2395 = vadd.f32 %v2394, %v2338
  %v2396 = vadd.f32 %v2395, %v2341
  %v2397 = vadd.f32 %v2396, %v2346
  %v2398 = vadd.f32 %v2397, %v2349
  %v2399 = vadd.f32 %v2398, %v2354
  %v2400 = vadd.f32 %v2399, %v2357
  %v2401 = vadd.f32 %v2400, %v2362
  %v2402 = vadd.f32 %v2401, %v2365
  %v2403 = vadd.f32 %v2402, %v2370
  %v2404 = vadd.f32 %v2403, %v2373
  %v2405 = vadd.f32 %v2404, %v2378
  %v2406 = vadd.f32 %v2405, %v2381
  %v2407 = vadd.f32 %v2406, %v2386
  %v2408 = vadd.f32 %v2407, %v2389
  %v2409 = vrot.slane %v2408, 4
  %v2410 = vadd.f32 %v2408, %v2409
  %v2411 = vrot.slane %v2410, 2
  %v2412 = vadd.f32 %v2410, %v2411
  %v2413 = vrot.slane %v2412, 1
  %v2414 = vadd.f32 %v2412, %v2413
  %v2415 = vmul.f32 %v2414, 0.0069444445
  %v2416 = vsub.f32 %v2322, %v2415
  %v2417 = vsub.f32 %v2325, %v2415
  %v2418 = vsub.f32 %v2330, %v2415
  %v2419 = vsub.f32 %v2333, %v2415
  %v2420 = vsub.f32 %v2338, %v2415
  %v2421 = vsub.f32 %v2341, %v2415
  %v2422 = vsub.f32 %v2346, %v2415
  %v2423 = vsub.f32 %v2349, %v2415
  %v2424 = vsub.f32 %v2354, %v2415
  %v2425 = vsub.f32 %v2357, %v2415
  %v2426 = vsub.f32 %v2362, %v2415
  %v2427 = vsub.f32 %v2365, %v2415
  %v2428 = vsub.f32 %v2370, %v2415
  %v2429 = vsub.f32 %v2373, %v2415
  %v2430 = vsub.f32 %v2378, %v2415
  %v2431 = vsub.f32 %v2381, %v2415
  %v2432 = vsub.f32 %v2386, %v2415
  %v2433 = vsub.f32 %v2389, %v2415
  %v2434 = vmul.f32 %v2416, %v2416
  %v2435 = vmul.f32 %v2417, %v2417
  %v2436 = vmul.f32 %v2418, %v2418
  %v2437 = vmul.f32 %v2419, %v2419
  %v2438 = vmul.f32 %v2420, %v2420
  %v2439 = vmul.f32 %v2421, %v2421
  %v2440 = vmul.f32 %v2422, %v2422
  %v2441 = vmul.f32 %v2423, %v2423
  %v2442 = vmul.f32 %v2424, %v2424
  %v2443 = vmul.f32 %v2425, %v2425
  %v2444 = vmul.f32 %v2426, %v2426
  %v2445 = vmul.f32 %v2427, %v2427
  %v2446 = vmul.f32 %v2428, %v2428
  %v2447 = vmul.f32 %v2429, %v2429
  %v2448 = vmul.f32 %v2430, %v2430
  %v2449 = vmul.f32 %v2431, %v2431
  %v2450 = vmul.f32 %v2432, %v2432
  %v2451 = vmul.f32 %v2433, %v2433
  %v2452 = vadd.f32 %v2434, %v2435
  %v2453 = vadd.f32 %v2452, %v2436
  %v2454 = vadd.f32 %v2453, %v2437
  %v2455 = vadd.f32 %v2454, %v2438
  %v2456 = vadd.f32 %v2455, %v2439
  %v2457 = vadd.f32 %v2456, %v2440
  %v2458 = vadd.f32 %v2457, %v2441
  %v2459 = vadd.f32 %v2458, %v2442
  %v2460 = vadd.f32 %v2459, %v2443
  %v2461 = vadd.f32 %v2460, %v2444
  %v2462 = vadd.f32 %v2461, %v2445
  %v2463 = vadd.f32 %v2462, %v2446
  %v2464 = vadd.f32 %v2463, %v2447
  %v2465 = vadd.f32 %v2464, %v2448
  %v2466 = vadd.f32 %v2465, %v2449
  %v2467 = vadd.f32 %v2466, %v2450
  %v2468 = vadd.f32 %v2467, %v2451
  %v2469 = vrot.slane %v2468, 4
  %v2470 = vadd.f32 %v2468, %v2469
  %v2471 = vrot.slane %v2470, 2
  %v2472 = vadd.f32 %v2470, %v2471
  %v2473 = vrot.slane %v2472, 1
  %v2474 = vadd.f32 %v2472, %v2473
  %v2475 = vmul.f32 %v2474, 0.0069444445
  %v2476 = vld [vmem:[%s2] sm:$0x1]
  %v2477 = vadd.f32 %v2475, 1e-05
  %v2478 = vrsqrt.pop %v2477
  %v2479 = vmul.f32 %v2476, %v2478
  %v2481 = vlaneseq
  %v2482 = vshrl.u32 %v2481, 7
  %v2483 = vsub.s32 0, %v2482
  %v2484 = vrot.slane %v2479, %v2483
  %v2486 = vmul.f32 %v2322, %v2484
  %v2487 = vmul.f32 %v2325, %v2484
  %v2488 = vmul.f32 %v2330, %v2484
  %v2489 = vmul.f32 %v2333, %v2484
  %v2490 = vmul.f32 %v2338, %v2484
  %v2491 = vmul.f32 %v2341, %v2484
  %v2492 = vmul.f32 %v2346, %v2484
  %v2493 = vmul.f32 %v2349, %v2484
  %v2494 = vmul.f32 %v2354, %v2484
  %v2495 = vmul.f32 %v2357, %v2484
  %v2496 = vmul.f32 %v2362, %v2484
  %v2497 = vmul.f32 %v2365, %v2484
  %v2498 = vmul.f32 %v2370, %v2484
  %v2499 = vmul.f32 %v2373, %v2484
  %v2500 = vmul.f32 %v2378, %v2484
  %v2501 = vmul.f32 %v2381, %v2484
  %v2502 = vmul.f32 %v2386, %v2484
  %v2503 = vmul.f32 %v2389, %v2484
  %v2504 = vld [vmem:[%s3] sm:$0x1]
  %v2505 = vmul.f32 %v2415, %v2479
  %v2506 = vsub.f32 %v2504, %v2505
  %v2508 = vlaneseq
  %v2509 = vshrl.u32 %v2508, 7
  %v2510 = vsub.s32 0, %v2509
  %v2511 = vrot.slane %v2506, %v2510
  %v2513 = vadd.f32 %v2486, %v2511
  %v2514 = vadd.f32 %v2487, %v2511
  %v2515 = vadd.f32 %v2488, %v2511
  %v2516 = vadd.f32 %v2489, %v2511
  %v2517 = vadd.f32 %v2490, %v2511
  %v2518 = vadd.f32 %v2491, %v2511
  %v2519 = vadd.f32 %v2492, %v2511
  %v2520 = vadd.f32 %v2493, %v2511
  %v2521 = vadd.f32 %v2494, %v2511
  %v2522 = vadd.f32 %v2495, %v2511
  %v2523 = vadd.f32 %v2496, %v2511
  %v2524 = vadd.f32 %v2497, %v2511
  %v2525 = vadd.f32 %v2498, %v2511
  %v2526 = vadd.f32 %v2499, %v2511
  %v2527 = vadd.f32 %v2500, %v2511
  %v2528 = vadd.f32 %v2501, %v2511
  %v2529 = vadd.f32 %v2502, %v2511
  %v2530 = vadd.f32 %v2503, %v2511
  %v2531 = vmax.f32 %v2513, %v2519
  %v2532 = vmax.f32 %v2514, %v2520
  %v2533 = vmax.f32 %v2515, %v2521
  %v2534 = vmax.f32 %v2516, %v2522
  %v2535 = vmax.f32 %v2517, %v2523
  %v2536 = vmax.f32 %v2518, %v2524
  %v2537 = vmax.f32 %v2531, %v2525
  %v2538 = vmax.f32 %v2532, %v2526
  %v2539 = vmax.f32 %v2533, %v2527
  %v2540 = vmax.f32 %v2534, %v2528
  %v2541 = vmax.f32 %v2535, %v2529
  %v2542 = vmax.f32 %v2536, %v2530
  %v2543 = vmax.f32 %v2537, 0.0
  %v2544 = vmax.f32 %v2538, 0.0
  %v2545 = vmax.f32 %v2539, 0.0
  %v2546 = vmax.f32 %v2540, 0.0
  %v2547 = vmax.f32 %v2541, 0.0
  %v2548 = vmax.f32 %v2542, 0.0
  %v2549 = vpack.c.bf16 %v2544, %v2543
  %v2550 = vpack.c.bf16 %v2546, %v2545
  %v2551 = vpack.c.bf16 %v2548, %v2547
  %v2555 = vunpack.c.l.b16 %v2549
  %v2556 = vunpack.c.h.b16 %v2549
  %v2557 = vunpack.c.l.b16 %v2550
  %v2558 = vunpack.c.h.b16 %v2550
  %v2559 = vunpack.c.l.b16 %v2551
  %v2560 = vunpack.c.h.b16 %v2551
  %v2561 = vpack.c.b16 %v2555, %v2555
  %v2562 = vpack.c.b16 %v2556, %v2556
  %v2563 = vpack.c.b16 %v2557, %v2557
  %v2564 = vpack.c.b16 %v2558, %v2558
  %v2565 = vpack.c.b16 %v2559, %v2559
  %v2566 = vpack.c.b16 %v2560, %v2560
  %vm2573 = vcmask 519168
  %2574 = vst.msk [vmem:[%s4] sm:$0xf] %vm2573, %v2561
  %2575 = vst.msk [vmem:[%s4 + $0x4] sm:$0xf] %vm2573, %v2562
  %2576 = vst.msk [vmem:[%s4 + $0x8] sm:$0xf] %vm2573, %v2563
  %2577 = vst.msk [vmem:[%s4 + $0xc] sm:$0xf] %vm2573, %v2564
  %2578 = vst.msk [vmem:[%s4 + $0x10] sm:$0xf] %vm2573, %v2565
  %2579 = vst.msk [vmem:[%s4 + $0x14] sm:$0xf] %vm2573, %v2566
  // Predicated region
  $region18: #{notesnet_forward.4} parent=0 // pred_check
    _
  $region19: #{notesnet_forward.4} parent=0 // pred_check_branch
    %2581 = sbr.rel (0) target = $region21
  $region20: #{notesnet_forward.4} parent=0 // pred_region
    _
  $region21: #{notesnet_forward.4} parent=0 // pred_fallthru
    _
  // Predicated region
  $region22: #{notesnet_forward.4} parent=0 // pred_check
    _
  $region23: #{notesnet_forward.4} parent=0 // pred_check_branch
    %2583 = sbr.rel (0) target = $region25
  $region24: #{notesnet_forward.4} parent=0 // pred_region
    _
  $region25: #{notesnet_forward.4} parent=0 // pred_fallthru
    _

// kernel: notesnet_forward.5
$region0: #{notesnet_forward.5}
  #allocation0 [shape = 'u32[]', space=smem, size = 0x4, offset = 0x4, fixed_abs, tag = 'smem constant byte address 0x4 - core index']
  #allocation1 [shape = 'u32[144,128]{1,0:T(1,128)}', space=vmem, size = 0x12000, scoped, tag = 'internal scratch']
  %s0 = inlined_call_operand.vmem [shape: bf16[2,1536], index: 0, kind: input, shape index: {}]
  %s1 = inlined_call_operand.vmem [shape: bf16[1536,1024], index: 1, kind: input, shape index: {}]
  %s2 = inlined_call_operand.vmem [shape: f32[1,1024], index: 2, kind: input, shape index: {}]
  %s3 = inlined_call_operand.vmem [shape: bf16[1024,512], index: 3, kind: input, shape index: {}]
  %s4 = inlined_call_operand.vmem [shape: f32[1,512], index: 4, kind: input, shape index: {}]
  %s5 = inlined_call_operand.vmem [shape: bf16[512,128], index: 5, kind: input, shape index: {}]
  %s6 = inlined_call_operand.vmem [shape: f32[1,128], index: 6, kind: input, shape index: {}]
  %s7 = inlined_call_operand.vmem [shape: bf16[2,512], index: 7, kind: input, shape index: {}]
  %s8 = inlined_call_operand.hbm [shape: f32[2,128], index: 8, kind: output, shape index: {}]
  %s9 = sld [smem:[#allocation0]]
  $region42: #{notesnet_forward.5} parent=0
    _
  %s11 = ssub.s32 1, %s9
  %s12 = scalar_select 0, %s11, %s9
  $region1: #{notesnet_forward.5} parent=0
    #allocation2 [shape = 'u8[1024]{0}', space=vmem, size = 0x400, scoped, tag = 'output window, operand 0, single buffered']
    #allocation3 [shape = 's32[1]{0}', space=sflag, size = 0x4, scoped, tag = 'scoped memory for notesnet_forward.5']
    %13 = vsyncpa [#allocation3], 0
    // Predicated region
    $region2: #{notesnet_forward.5} parent=1 // pred_check
      _
    $region3: #{notesnet_forward.5} parent=1 // pred_check_branch
      %15 = sbr.rel (0) target = $region5
    $region4: #{notesnet_forward.5} parent=1 // pred_region
      _
    $region5: #{notesnet_forward.5} parent=1 // pred_fallthru
      _
    // Predicated region
    $region6: #{notesnet_forward.5} parent=1 // pred_check
      _
    $region7: #{notesnet_forward.5} parent=1 // pred_check_branch
      %17 = sbr.rel (0) target = $region9
    $region8: #{notesnet_forward.5} parent=1 // pred_region
      _
    $region9: #{notesnet_forward.5} parent=1 // pred_fallthru
      _
    // Predicated region
    $region10: #{notesnet_forward.5} parent=1 // pred_check
      _
    $region11: #{notesnet_forward.5} parent=1 // pred_check_branch
      %19 = sbr.rel (0) target = $region13
    $region12: #{notesnet_forward.5} parent=1 // pred_region
      _
    $region13: #{notesnet_forward.5} parent=1 // pred_fallthru
      _
    // Predicated region
    $region14: #{notesnet_forward.5} parent=1 // pred_check
      _
    $region15: #{notesnet_forward.5} parent=1 // pred_check_branch
      %21 = sbr.rel (0) target = $region17
    $region16: #{notesnet_forward.5} parent=1 // pred_region
      _
    $region17: #{notesnet_forward.5} parent=1 // pred_fallthru
      _
    // Predicated region
    $region18: #{notesnet_forward.5} parent=1 // pred_check
      _
    $region19: #{notesnet_forward.5} parent=1 // pred_check_branch
      %23 = sbr.rel (0) target = $region21
    $region20: #{notesnet_forward.5} parent=1 // pred_region
      _
    $region21: #{notesnet_forward.5} parent=1 // pred_fallthru
      _
    // Predicated region
    $region22: #{notesnet_forward.5} parent=1 // pred_check
      _
    $region23: #{notesnet_forward.5} parent=1 // pred_check_branch
      %25 = sbr.rel (0) target = $region25
    $region24: #{notesnet_forward.5} parent=1 // pred_region
      _
    $region25: #{notesnet_forward.5} parent=1 // pred_fallthru
      _
    // Predicated region
    $region26: #{notesnet_forward.5} parent=1 // pred_check
      _
    $region27: #{notesnet_forward.5} parent=1 // pred_check_branch
      %27 = sbr.rel (0) target = $region29
    $region28: #{notesnet_forward.5} parent=1 // pred_region
      _
    $region29: #{notesnet_forward.5} parent=1 // pred_fallthru
      _
    // Predicated region
    $region30: #{notesnet_forward.5} parent=1 // pred_check
      _
    $region31: #{notesnet_forward.5} parent=1 // pred_check_branch
      %29 = sbr.rel (0) target = $region33
    $region32: #{notesnet_forward.5} parent=1 // pred_region
      _
    $region33: #{notesnet_forward.5} parent=1 // pred_fallthru
      _
    %v31 = vld [vmem:[%s0] sm:$0xff]
    %v32 = vld [vmem:[%s0 + $0x8] sm:$0xf]
    %v33 = vld [vmem:[%s1] sm:$0xff]
    %v34 = vld [vmem:[%s1 + $0x8] sm:$0xff]
    %v35 = vld [vmem:[%s1 + $0x10] sm:$0xff]
    %v36 = vld [vmem:[%s1 + $0x18] sm:$0xff]
    %v37 = vld [vmem:[%s1 + $0x20] sm:$0xff]
    %v38 = vld [vmem:[%s1 + $0x28] sm:$0xff]
    %v39 = vld [vmem:[%s1 + $0x30] sm:$0xff]
    %v40 = vld [vmem:[%s1 + $0x38] sm:$0xff]
    %v41 = vld [vmem:[%s1 + $0x40] sm:$0xff]
    %v42 = vld [vmem:[%s1 + $0x48] sm:$0xff]
    %v43 = vld [vmem:[%s1 + $0x50] sm:$0xff]
    %v44 = vld [vmem:[%s1 + $0x58] sm:$0xff]
    %v45 = vld [vmem:[%s1 + $0x60] sm:$0xff]
    %v46 = vld [vmem:[%s1 + $0x68] sm:$0xff]
    %v47 = vld [vmem:[%s1 + $0x70] sm:$0xff]
    %v48 = vld [vmem:[%s1 + $0x78] sm:$0xff]
    %v49 = vld [vmem:[%s1 + $0x80] sm:$0xff]
    %v50 = vld [vmem:[%s1 + $0x88] sm:$0xff]
    %v51 = vld [vmem:[%s1 + $0x90] sm:$0xff]
    %v52 = vld [vmem:[%s1 + $0x98] sm:$0xff]
    %v53 = vld [vmem:[%s1 + $0xa0] sm:$0xff]
    %v54 = vld [vmem:[%s1 + $0xa8] sm:$0xff]
    %v55 = vld [vmem:[%s1 + $0xb0] sm:$0xff]
    %v56 = vld [vmem:[%s1 + $0xb8] sm:$0xff]
    %v57 = vld [vmem:[%s1 + $0xc0] sm:$0xff]
    %v58 = vld [vmem:[%s1 + $0xc8] sm:$0xff]
    %v59 = vld [vmem:[%s1 + $0xd0] sm:$0xff]
    %v60 = vld [vmem:[%s1 + $0xd8] sm:$0xff]
    %v61 = vld [vmem:[%s1 + $0xe0] sm:$0xff]
    %v62 = vld [vmem:[%s1 + $0xe8] sm:$0xff]
    %v63 = vld [vmem:[%s1 + $0xf0] sm:$0xff]
    %v64 = vld [vmem:[%s1 + $0xf8] sm:$0xff]
    %v65 = vld [vmem:[%s1 + $0x100] sm:$0xff]
    %v66 = vld [vmem:[%s1 + $0x108] sm:$0xff]
    %v67 = vld [vmem:[%s1 + $0x110] sm:$0xff]
    %v68 = vld [vmem:[%s1 + $0x118] sm:$0xff]
    %v69 = vld [vmem:[%s1 + $0x120] sm:$0xff]
    %v70 = vld [vmem:[%s1 + $0x128] sm:$0xff]
    %v71 = vld [vmem:[%s1 + $0x130] sm:$0xff]
    %v72 = vld [vmem:[%s1 + $0x138] sm:$0xff]
    %v73 = vld [vmem:[%s1 + $0x140] sm:$0xff]
    %v74 = vld [vmem:[%s1 + $0x148] sm:$0xff]
    %v75 = vld [vmem:[%s1 + $0x150] sm:$0xff]
    %v76 = vld [vmem:[%s1 + $0x158] sm:$0xff]
    %v77 = vld [vmem:[%s1 + $0x160] sm:$0xff]
    %v78 = vld [vmem:[%s1 + $0x168] sm:$0xff]
    %v79 = vld [vmem:[%s1 + $0x170] sm:$0xff]
    %v80 = vld [vmem:[%s1 + $0x178] sm:$0xff]
    %v81 = vld [vmem:[%s1 + $0x180] sm:$0xff]
    %v82 = vld [vmem:[%s1 + $0x188] sm:$0xff]
    %v83 = vld [vmem:[%s1 + $0x190] sm:$0xff]
    %v84 = vld [vmem:[%s1 + $0x198] sm:$0xff]
    %v85 = vld [vmem:[%s1 + $0x1a0] sm:$0xff]
    %v86 = vld [vmem:[%s1 + $0x1a8] sm:$0xff]
    %v87 = vld [vmem:[%s1 + $0x1b0] sm:$0xff]
    %v88 = vld [vmem:[%s1 + $0x1b8] sm:$0xff]
    %v89 = vld [vmem:[%s1 + $0x1c0] sm:$0xff]
    %v90 = vld [vmem:[%s1 + $0x1c8] sm:$0xff]
    %v91 = vld [vmem:[%s1 + $0x1d0] sm:$0xff]
    %v92 = vld [vmem:[%s1 + $0x1d8] sm:$0xff]
    %v93 = vld [vmem:[%s1 + $0x1e0] sm:$0xff]
    %v94 = vld [vmem:[%s1 + $0x1e8] sm:$0xff]
    %v95 = vld [vmem:[%s1 + $0x1f0] sm:$0xff]
    %v96 = vld [vmem:[%s1 + $0x1f8] sm:$0xff]
    %v97 = vld [vmem:[%s1 + $0x200] sm:$0xff]
    %v98 = vld [vmem:[%s1 + $0x208] sm:$0xff]
    %v99 = vld [vmem:[%s1 + $0x210] sm:$0xff]
    %v100 = vld [vmem:[%s1 + $0x218] sm:$0xff]
    %v101 = vld [vmem:[%s1 + $0x220] sm:$0xff]
    %v102 = vld [vmem:[%s1 + $0x228] sm:$0xff]
    %v103 = vld [vmem:[%s1 + $0x230] sm:$0xff]
    %v104 = vld [vmem:[%s1 + $0x238] sm:$0xff]
    %v105 = vld [vmem:[%s1 + $0x240] sm:$0xff]
    %v106 = vld [vmem:[%s1 + $0x248] sm:$0xff]
    %v107 = vld [vmem:[%s1 + $0x250] sm:$0xff]
    %v108 = vld [vmem:[%s1 + $0x258] sm:$0xff]
    %v109 = vld [vmem:[%s1 + $0x260] sm:$0xff]
    %v110 = vld [vmem:[%s1 + $0x268] sm:$0xff]
    %v111 = vld [vmem:[%s1 + $0x270] sm:$0xff]
    %v112 = vld [vmem:[%s1 + $0x278] sm:$0xff]
    %v113 = vld [vmem:[%s1 + $0x280] sm:$0xff]
    %v114 = vld [vmem:[%s1 + $0x288] sm:$0xff]
    %v115 = vld [vmem:[%s1 + $0x290] sm:$0xff]
    %v116 = vld [vmem:[%s1 + $0x298] sm:$0xff]
    %v117 = vld [vmem:[%s1 + $0x2a0] sm:$0xff]
    %v118 = vld [vmem:[%s1 + $0x2a8] sm:$0xff]
    %v119 = vld [vmem:[%s1 + $0x2b0] sm:$0xff]
    %v120 = vld [vmem:[%s1 + $0x2b8] sm:$0xff]
    %v121 = vld [vmem:[%s1 + $0x2c0] sm:$0xff]
    %v122 = vld [vmem:[%s1 + $0x2c8] sm:$0xff]
    %v123 = vld [vmem:[%s1 + $0x2d0] sm:$0xff]
    %v124 = vld [vmem:[%s1 + $0x2d8] sm:$0xff]
    %v125 = vld [vmem:[%s1 + $0x2e0] sm:$0xff]
    %v126 = vld [vmem:[%s1 + $0x2e8] sm:$0xff]
    %v127 = vld [vmem:[%s1 + $0x2f0] sm:$0xff]
    %v128 = vld [vmem:[%s1 + $0x2f8] sm:$0xff]
    %v129 = vld [vmem:[%s1 + $0x300] sm:$0xff]
    %v130 = vld [vmem:[%s1 + $0x308] sm:$0xff]
    %v131 = vld [vmem:[%s1 + $0x310] sm:$0xff]
    %v132 = vld [vmem:[%s1 + $0x318] sm:$0xff]
    %v133 = vld [vmem:[%s1 + $0x320] sm:$0xff]
    %v134 = vld [vmem:[%s1 + $0x328] sm:$0xff]
    %v135 = vld [vmem:[%s1 + $0x330] sm:$0xff]
    %v136 = vld [vmem:[%s1 + $0x338] sm:$0xff]
    %v137 = vld [vmem:[%s1 + $0x340] sm:$0xff]
    %v138 = vld [vmem:[%s1 + $0x348] sm:$0xff]
    %v139 = vld [vmem:[%s1 + $0x350] sm:$0xff]
    %v140 = vld [vmem:[%s1 + $0x358] sm:$0xff]
    %v141 = vld [vmem:[%s1 + $0x360] sm:$0xff]
    %v142 = vld [vmem:[%s1 + $0x368] sm:$0xff]
    %v143 = vld [vmem:[%s1 + $0x370] sm:$0xff]
    %v144 = vld [vmem:[%s1 + $0x378] sm:$0xff]
    %v145 = vld [vmem:[%s1 + $0x380] sm:$0xff]
    %v146 = vld [vmem:[%s1 + $0x388] sm:$0xff]
    %v147 = vld [vmem:[%s1 + $0x390] sm:$0xff]
    %v148 = vld [vmem:[%s1 + $0x398] sm:$0xff]
    %v149 = vld [vmem:[%s1 + $0x3a0] sm:$0xff]
    %v150 = vld [vmem:[%s1 + $0x3a8] sm:$0xff]
    %v151 = vld [vmem:[%s1 + $0x3b0] sm:$0xff]
    %v152 = vld [vmem:[%s1 + $0x3b8] sm:$0xff]
    %v153 = vld [vmem:[%s1 + $0x3c0] sm:$0xff]
    %v154 = vld [vmem:[%s1 + $0x3c8] sm:$0xff]
    %v155 = vld [vmem:[%s1 + $0x3d0] sm:$0xff]
    %v156 = vld [vmem:[%s1 + $0x3d8] sm:$0xff]
    %v157 = vld [vmem:[%s1 + $0x3e0] sm:$0xff]
    %v158 = vld [vmem:[%s1 + $0x3e8] sm:$0xff]
    %v159 = vld [vmem:[%s1 + $0x3f0] sm:$0xff]
    %v160 = vld [vmem:[%s1 + $0x3f8] sm:$0xff]
    %v161 = vld [vmem:[%s1 + $0x400] sm:$0xff]
    %v162 = vld [vmem:[%s1 + $0x408] sm:$0xff]
    %v163 = vld [vmem:[%s1 + $0x410] sm:$0xff]
    %v164 = vld [vmem:[%s1 + $0x418] sm:$0xff]
    %v165 = vld [vmem:[%s1 + $0x420] sm:$0xff]
    %v166 = vld [vmem:[%s1 + $0x428] sm:$0xff]
    %v167 = vld [vmem:[%s1 + $0x430] sm:$0xff]
    %v168 = vld [vmem:[%s1 + $0x438] sm:$0xff]
    %v169 = vld [vmem:[%s1 + $0x440] sm:$0xff]
    %v170 = vld [vmem:[%s1 + $0x448] sm:$0xff]
    %v171 = vld [vmem:[%s1 + $0x450] sm:$0xff]
    %v172 = vld [vmem:[%s1 + $0x458] sm:$0xff]
    %v173 = vld [vmem:[%s1 + $0x460] sm:$0xff]
    %v174 = vld [vmem:[%s1 + $0x468] sm:$0xff]
    %v175 = vld [vmem:[%s1 + $0x470] sm:$0xff]
    %v176 = vld [vmem:[%s1 + $0x478] sm:$0xff]
    %v177 = vld [vmem:[%s1 + $0x480] sm:$0xff]
    %v178 = vld [vmem:[%s1 + $0x488] sm:$0xff]
    %v179 = vld [vmem:[%s1 + $0x490] sm:$0xff]
    %v180 = vld [vmem:[%s1 + $0x498] sm:$0xff]
    %v181 = vld [vmem:[%s1 + $0x4a0] sm:$0xff]
    %v182 = vld [vmem:[%s1 + $0x4a8] sm:$0xff]
    %v183 = vld [vmem:[%s1 + $0x4b0] sm:$0xff]
    %v184 = vld [vmem:[%s1 + $0x4b8] sm:$0xff]
    %v185 = vld [vmem:[%s1 + $0x4c0] sm:$0xff]
    %v186 = vld [vmem:[%s1 + $0x4c8] sm:$0xff]
    %v187 = vld [vmem:[%s1 + $0x4d0] sm:$0xff]
    %v188 = vld [vmem:[%s1 + $0x4d8] sm:$0xff]
    %v189 = vld [vmem:[%s1 + $0x4e0] sm:$0xff]
    %v190 = vld [vmem:[%s1 + $0x4e8] sm:$0xff]
    %v191 = vld [vmem:[%s1 + $0x4f0] sm:$0xff]
    %v192 = vld [vmem:[%s1 + $0x4f8] sm:$0xff]
    %v193 = vld [vmem:[%s1 + $0x500] sm:$0xff]
    %v194 = vld [vmem:[%s1 + $0x508] sm:$0xff]
    %v195 = vld [vmem:[%s1 + $0x510] sm:$0xff]
    %v196 = vld [vmem:[%s1 + $0x518] sm:$0xff]
    %v197 = vld [vmem:[%s1 + $0x520] sm:$0xff]
    %v198 = vld [vmem:[%s1 + $0x528] sm:$0xff]
    %v199 = vld [vmem:[%s1 + $0x530] sm:$0xff]
    %v200 = vld [vmem:[%s1 + $0x538] sm:$0xff]
    %v201 = vld [vmem:[%s1 + $0x540] sm:$0xff]
    %v202 = vld [vmem:[%s1 + $0x548] sm:$0xff]
    %v203 = vld [vmem:[%s1 + $0x550] sm:$0xff]
    %v204 = vld [vmem:[%s1 + $0x558] sm:$0xff]
    %v205 = vld [vmem:[%s1 + $0x560] sm:$0xff]
    %v206 = vld [vmem:[%s1 + $0x568] sm:$0xff]
    %v207 = vld [vmem:[%s1 + $0x570] sm:$0xff]
    %v208 = vld [vmem:[%s1 + $0x578] sm:$0xff]
    %v209 = vld [vmem:[%s1 + $0x580] sm:$0xff]
    %v210 = vld [vmem:[%s1 + $0x588] sm:$0xff]
    %v211 = vld [vmem:[%s1 + $0x590] sm:$0xff]
    %v212 = vld [vmem:[%s1 + $0x598] sm:$0xff]
    %v213 = vld [vmem:[%s1 + $0x5a0] sm:$0xff]
    %v214 = vld [vmem:[%s1 + $0x5a8] sm:$0xff]
    %v215 = vld [vmem:[%s1 + $0x5b0] sm:$0xff]
    %v216 = vld [vmem:[%s1 + $0x5b8] sm:$0xff]
    %v217 = vld [vmem:[%s1 + $0x5c0] sm:$0xff]
    %v218 = vld [vmem:[%s1 + $0x5c8] sm:$0xff]
    %v219 = vld [vmem:[%s1 + $0x5d0] sm:$0xff]
    %v220 = vld [vmem:[%s1 + $0x5d8] sm:$0xff]
    %v221 = vld [vmem:[%s1 + $0x5e0] sm:$0xff]
    %v222 = vld [vmem:[%s1 + $0x5e8] sm:$0xff]
    %v223 = vld [vmem:[%s1 + $0x5f0] sm:$0xff]
    %v224 = vld [vmem:[%s1 + $0x5f8] sm:$0xff]
    %v225 = vld [vmem:[%s1 + $0x600] sm:$0xff]
    %v226 = vld [vmem:[%s1 + $0x608] sm:$0xff]
    %v227 = vld [vmem:[%s1 + $0x610] sm:$0xff]
    %v228 = vld [vmem:[%s1 + $0x618] sm:$0xff]
    %v229 = vld [vmem:[%s1 + $0x620] sm:$0xff]
    %v230 = vld [vmem:[%s1 + $0x628] sm:$0xff]
    %v231 = vld [vmem:[%s1 + $0x630] sm:$0xff]
    %v232 = vld [vmem:[%s1 + $0x638] sm:$0xff]
    %v233 = vld [vmem:[%s1 + $0x640] sm:$0xff]
    %v234 = vld [vmem:[%s1 + $0x648] sm:$0xff]
    %v235 = vld [vmem:[%s1 + $0x650] sm:$0xff]
    %v236 = vld [vmem:[%s1 + $0x658] sm:$0xff]
    %v237 = vld [vmem:[%s1 + $0x660] sm:$0xff]
    %v238 = vld [vmem:[%s1 + $0x668] sm:$0xff]
    %v239 = vld [vmem:[%s1 + $0x670] sm:$0xff]
    %v240 = vld [vmem:[%s1 + $0x678] sm:$0xff]
    %v241 = vld [vmem:[%s1 + $0x680] sm:$0xff]
    %v242 = vld [vmem:[%s1 + $0x688] sm:$0xff]
    %v243 = vld [vmem:[%s1 + $0x690] sm:$0xff]
    %v244 = vld [vmem:[%s1 + $0x698] sm:$0xff]
    %v245 = vld [vmem:[%s1 + $0x6a0] sm:$0xff]
    %v246 = vld [vmem:[%s1 + $0x6a8] sm:$0xff]
    %v247 = vld [vmem:[%s1 + $0x6b0] sm:$0xff]
    %v248 = vld [vmem:[%s1 + $0x6b8] sm:$0xff]
    %v249 = vld [vmem:[%s1 + $0x6c0] sm:$0xff]
    %v250 = vld [vmem:[%s1 + $0x6c8] sm:$0xff]
    %v251 = vld [vmem:[%s1 + $0x6d0] sm:$0xff]
    %v252 = vld [vmem:[%s1 + $0x6d8] sm:$0xff]
    %v253 = vld [vmem:[%s1 + $0x6e0] sm:$0xff]
    %v254 = vld [vmem:[%s1 + $0x6e8] sm:$0xff]
    %v255 = vld [vmem:[%s1 + $0x6f0] sm:$0xff]
    %v256 = vld [vmem:[%s1 + $0x6f8] sm:$0xff]
    %v257 = vld [vmem:[%s1 + $0x700] sm:$0xff]
    %v258 = vld [vmem:[%s1 + $0x708] sm:$0xff]
    %v259 = vld [vmem:[%s1 + $0x710] sm:$0xff]
    %v260 = vld [vmem:[%s1 + $0x718] sm:$0xff]
    %v261 = vld [vmem:[%s1 + $0x720] sm:$0xff]
    %v262 = vld [vmem:[%s1 + $0x728] sm:$0xff]
    %v263 = vld [vmem:[%s1 + $0x730] sm:$0xff]
    %v264 = vld [vmem:[%s1 + $0x738] sm:$0xff]
    %v265 = vld [vmem:[%s1 + $0x740] sm:$0xff]
    %v266 = vld [vmem:[%s1 + $0x748] sm:$0xff]
    %v267 = vld [vmem:[%s1 + $0x750] sm:$0xff]
    %v268 = vld [vmem:[%s1 + $0x758] sm:$0xff]
    %v269 = vld [vmem:[%s1 + $0x760] sm:$0xff]
    %v270 = vld [vmem:[%s1 + $0x768] sm:$0xff]
    %v271 = vld [vmem:[%s1 + $0x770] sm:$0xff]
    %v272 = vld [vmem:[%s1 + $0x778] sm:$0xff]
    %v273 = vld [vmem:[%s1 + $0x780] sm:$0xff]
    %v274 = vld [vmem:[%s1 + $0x788] sm:$0xff]
    %v275 = vld [vmem:[%s1 + $0x790] sm:$0xff]
    %v276 = vld [vmem:[%s1 + $0x798] sm:$0xff]
    %v277 = vld [vmem:[%s1 + $0x7a0] sm:$0xff]
    %v278 = vld [vmem:[%s1 + $0x7a8] sm:$0xff]
    %v279 = vld [vmem:[%s1 + $0x7b0] sm:$0xff]
    %v280 = vld [vmem:[%s1 + $0x7b8] sm:$0xff]
    %v281 = vld [vmem:[%s1 + $0x7c0] sm:$0xff]
    %v282 = vld [vmem:[%s1 + $0x7c8] sm:$0xff]
    %v283 = vld [vmem:[%s1 + $0x7d0] sm:$0xff]
    %v284 = vld [vmem:[%s1 + $0x7d8] sm:$0xff]
    %v285 = vld [vmem:[%s1 + $0x7e0] sm:$0xff]
    %v286 = vld [vmem:[%s1 + $0x7e8] sm:$0xff]
    %v287 = vld [vmem:[%s1 + $0x7f0] sm:$0xff]
    %v288 = vld [vmem:[%s1 + $0x7f8] sm:$0xff]
    %v289 = vld [vmem:[%s1 + $0x800] sm:$0xff]
    %v290 = vld [vmem:[%s1 + $0x808] sm:$0xff]
    %v291 = vld [vmem:[%s1 + $0x810] sm:$0xff]
    %v292 = vld [vmem:[%s1 + $0x818] sm:$0xff]
    %v293 = vld [vmem:[%s1 + $0x820] sm:$0xff]
    %v294 = vld [vmem:[%s1 + $0x828] sm:$0xff]
    %v295 = vld [vmem:[%s1 + $0x830] sm:$0xff]
    %v296 = vld [vmem:[%s1 + $0x838] sm:$0xff]
    %v297 = vld [vmem:[%s1 + $0x840] sm:$0xff]
    %v298 = vld [vmem:[%s1 + $0x848] sm:$0xff]
    %v299 = vld [vmem:[%s1 + $0x850] sm:$0xff]
    %v300 = vld [vmem:[%s1 + $0x858] sm:$0xff]
    %v301 = vld [vmem:[%s1 + $0x860] sm:$0xff]
    %v302 = vld [vmem:[%s1 + $0x868] sm:$0xff]
    %v303 = vld [vmem:[%s1 + $0x870] sm:$0xff]
    %v304 = vld [vmem:[%s1 + $0x878] sm:$0xff]
    %v305 = vld [vmem:[%s1 + $0x880] sm:$0xff]
    %v306 = vld [vmem:[%s1 + $0x888] sm:$0xff]
    %v307 = vld [vmem:[%s1 + $0x890] sm:$0xff]
    %v308 = vld [vmem:[%s1 + $0x898] sm:$0xff]
    %v309 = vld [vmem:[%s1 + $0x8a0] sm:$0xff]
    %v310 = vld [vmem:[%s1 + $0x8a8] sm:$0xff]
    %v311 = vld [vmem:[%s1 + $0x8b0] sm:$0xff]
    %v312 = vld [vmem:[%s1 + $0x8b8] sm:$0xff]
    %v313 = vld [vmem:[%s1 + $0x8c0] sm:$0xff]
    %v314 = vld [vmem:[%s1 + $0x8c8] sm:$0xff]
    %v315 = vld [vmem:[%s1 + $0x8d0] sm:$0xff]
    %v316 = vld [vmem:[%s1 + $0x8d8] sm:$0xff]
    %v317 = vld [vmem:[%s1 + $0x8e0] sm:$0xff]
    %v318 = vld [vmem:[%s1 + $0x8e8] sm:$0xff]
    %v319 = vld [vmem:[%s1 + $0x8f0] sm:$0xff]
    %v320 = vld [vmem:[%s1 + $0x8f8] sm:$0xff]
    %v321 = vld [vmem:[%s1 + $0x900] sm:$0xff]
    %v322 = vld [vmem:[%s1 + $0x908] sm:$0xff]
    %v323 = vld [vmem:[%s1 + $0x910] sm:$0xff]
    %v324 = vld [vmem:[%s1 + $0x918] sm:$0xff]
    %v325 = vld [vmem:[%s1 + $0x920] sm:$0xff]
    %v326 = vld [vmem:[%s1 + $0x928] sm:$0xff]
    %v327 = vld [vmem:[%s1 + $0x930] sm:$0xff]
    %v328 = vld [vmem:[%s1 + $0x938] sm:$0xff]
    %v329 = vld [vmem:[%s1 + $0x940] sm:$0xff]
    %v330 = vld [vmem:[%s1 + $0x948] sm:$0xff]
    %v331 = vld [vmem:[%s1 + $0x950] sm:$0xff]
    %v332 = vld [vmem:[%s1 + $0x958] sm:$0xff]
    %v333 = vld [vmem:[%s1 + $0x960] sm:$0xff]
    %v334 = vld [vmem:[%s1 + $0x968] sm:$0xff]
    %v335 = vld [vmem:[%s1 + $0x970] sm:$0xff]
    %v336 = vld [vmem:[%s1 + $0x978] sm:$0xff]
    %v337 = vld [vmem:[%s1 + $0x980] sm:$0xff]
    %v338 = vld [vmem:[%s1 + $0x988] sm:$0xff]
    %v339 = vld [vmem:[%s1 + $0x990] sm:$0xff]
    %v340 = vld [vmem:[%s1 + $0x998] sm:$0xff]
    %v341 = vld [vmem:[%s1 + $0x9a0] sm:$0xff]
    %v342 = vld [vmem:[%s1 + $0x9a8] sm:$0xff]
    %v343 = vld [vmem:[%s1 + $0x9b0] sm:$0xff]
    %v344 = vld [vmem:[%s1 + $0x9b8] sm:$0xff]
    %v345 = vld [vmem:[%s1 + $0x9c0] sm:$0xff]
    %v346 = vld [vmem:[%s1 + $0x9c8] sm:$0xff]
    %v347 = vld [vmem:[%s1 + $0x9d0] sm:$0xff]
    %v348 = vld [vmem:[%s1 + $0x9d8] sm:$0xff]
    %v349 = vld [vmem:[%s1 + $0x9e0] sm:$0xff]
    %v350 = vld [vmem:[%s1 + $0x9e8] sm:$0xff]
    %v351 = vld [vmem:[%s1 + $0x9f0] sm:$0xff]
    %v352 = vld [vmem:[%s1 + $0x9f8] sm:$0xff]
    %v353 = vld [vmem:[%s1 + $0xa00] sm:$0xff]
    %v354 = vld [vmem:[%s1 + $0xa08] sm:$0xff]
    %v355 = vld [vmem:[%s1 + $0xa10] sm:$0xff]
    %v356 = vld [vmem:[%s1 + $0xa18] sm:$0xff]
    %v357 = vld [vmem:[%s1 + $0xa20] sm:$0xff]
    %v358 = vld [vmem:[%s1 + $0xa28] sm:$0xff]
    %v359 = vld [vmem:[%s1 + $0xa30] sm:$0xff]
    %v360 = vld [vmem:[%s1 + $0xa38] sm:$0xff]
    %v361 = vld [vmem:[%s1 + $0xa40] sm:$0xff]
    %v362 = vld [vmem:[%s1 + $0xa48] sm:$0xff]
    %v363 = vld [vmem:[%s1 + $0xa50] sm:$0xff]
    %v364 = vld [vmem:[%s1 + $0xa58] sm:$0xff]
    %v365 = vld [vmem:[%s1 + $0xa60] sm:$0xff]
    %v366 = vld [vmem:[%s1 + $0xa68] sm:$0xff]
    %v367 = vld [vmem:[%s1 + $0xa70] sm:$0xff]
    %v368 = vld [vmem:[%s1 + $0xa78] sm:$0xff]
    %v369 = vld [vmem:[%s1 + $0xa80] sm:$0xff]
    %v370 = vld [vmem:[%s1 + $0xa88] sm:$0xff]
    %v371 = vld [vmem:[%s1 + $0xa90] sm:$0xff]
    %v372 = vld [vmem:[%s1 + $0xa98] sm:$0xff]
    %v373 = vld [vmem:[%s1 + $0xaa0] sm:$0xff]
    %v374 = vld [vmem:[%s1 + $0xaa8] sm:$0xff]
    %v375 = vld [vmem:[%s1 + $0xab0] sm:$0xff]
    %v376 = vld [vmem:[%s1 + $0xab8] sm:$0xff]
    %v377 = vld [vmem:[%s1 + $0xac0] sm:$0xff]
    %v378 = vld [vmem:[%s1 + $0xac8] sm:$0xff]
    %v379 = vld [vmem:[%s1 + $0xad0] sm:$0xff]
    %v380 = vld [vmem:[%s1 + $0xad8] sm:$0xff]
    %v381 = vld [vmem:[%s1 + $0xae0] sm:$0xff]
    %v382 = vld [vmem:[%s1 + $0xae8] sm:$0xff]
    %v383 = vld [vmem:[%s1 + $0xaf0] sm:$0xff]
    %v384 = vld [vmem:[%s1 + $0xaf8] sm:$0xff]
    %v385 = vld [vmem:[%s1 + $0xb00] sm:$0xff]
    %v386 = vld [vmem:[%s1 + $0xb08] sm:$0xff]
    %v387 = vld [vmem:[%s1 + $0xb10] sm:$0xff]
    %v388 = vld [vmem:[%s1 + $0xb18] sm:$0xff]
    %v389 = vld [vmem:[%s1 + $0xb20] sm:$0xff]
    %v390 = vld [vmem:[%s1 + $0xb28] sm:$0xff]
    %v391 = vld [vmem:[%s1 + $0xb30] sm:$0xff]
    %v392 = vld [vmem:[%s1 + $0xb38] sm:$0xff]
    %v393 = vld [vmem:[%s1 + $0xb40] sm:$0xff]
    %v394 = vld [vmem:[%s1 + $0xb48] sm:$0xff]
    %v395 = vld [vmem:[%s1 + $0xb50] sm:$0xff]
    %v396 = vld [vmem:[%s1 + $0xb58] sm:$0xff]
    %v397 = vld [vmem:[%s1 + $0xb60] sm:$0xff]
    %v398 = vld [vmem:[%s1 + $0xb68] sm:$0xff]
    %v399 = vld [vmem:[%s1 + $0xb70] sm:$0xff]
    %v400 = vld [vmem:[%s1 + $0xb78] sm:$0xff]
    %v401 = vld [vmem:[%s1 + $0xb80] sm:$0xff]
    %v402 = vld [vmem:[%s1 + $0xb88] sm:$0xff]
    %v403 = vld [vmem:[%s1 + $0xb90] sm:$0xff]
    %v404 = vld [vmem:[%s1 + $0xb98] sm:$0xff]
    %v405 = vld [vmem:[%s1 + $0xba0] sm:$0xff]
    %v406 = vld [vmem:[%s1 + $0xba8] sm:$0xff]
    %v407 = vld [vmem:[%s1 + $0xbb0] sm:$0xff]
    %v408 = vld [vmem:[%s1 + $0xbb8] sm:$0xff]
    %v409 = vld [vmem:[%s1 + $0xbc0] sm:$0xff]
    %v410 = vld [vmem:[%s1 + $0xbc8] sm:$0xff]
    %v411 = vld [vmem:[%s1 + $0xbd0] sm:$0xff]
    %v412 = vld [vmem:[%s1 + $0xbd8] sm:$0xff]
    %v413 = vld [vmem:[%s1 + $0xbe0] sm:$0xff]
    %v414 = vld [vmem:[%s1 + $0xbe8] sm:$0xff]
    %v415 = vld [vmem:[%s1 + $0xbf0] sm:$0xff]
    %v416 = vld [vmem:[%s1 + $0xbf8] sm:$0xff]
    %v417 = vld [vmem:[%s1 + $0xc00] sm:$0xff]
    %v418 = vld [vmem:[%s1 + $0xc08] sm:$0xff]
    %v419 = vld [vmem:[%s1 + $0xc10] sm:$0xff]
    %v420 = vld [vmem:[%s1 + $0xc18] sm:$0xff]
    %v421 = vld [vmem:[%s1 + $0xc20] sm:$0xff]
    %v422 = vld [vmem:[%s1 + $0xc28] sm:$0xff]
    %v423 = vld [vmem:[%s1 + $0xc30] sm:$0xff]
    %v424 = vld [vmem:[%s1 + $0xc38] sm:$0xff]
    %v425 = vld [vmem:[%s1 + $0xc40] sm:$0xff]
    %v426 = vld [vmem:[%s1 + $0xc48] sm:$0xff]
    %v427 = vld [vmem:[%s1 + $0xc50] sm:$0xff]
    %v428 = vld [vmem:[%s1 + $0xc58] sm:$0xff]
    %v429 = vld [vmem:[%s1 + $0xc60] sm:$0xff]
    %v430 = vld [vmem:[%s1 + $0xc68] sm:$0xff]
    %v431 = vld [vmem:[%s1 + $0xc70] sm:$0xff]
    %v432 = vld [vmem:[%s1 + $0xc78] sm:$0xff]
    %v433 = vld [vmem:[%s1 + $0xc80] sm:$0xff]
    %v434 = vld [vmem:[%s1 + $0xc88] sm:$0xff]
    %v435 = vld [vmem:[%s1 + $0xc90] sm:$0xff]
    %v436 = vld [vmem:[%s1 + $0xc98] sm:$0xff]
    %v437 = vld [vmem:[%s1 + $0xca0] sm:$0xff]
    %v438 = vld [vmem:[%s1 + $0xca8] sm:$0xff]
    %v439 = vld [vmem:[%s1 + $0xcb0] sm:$0xff]
    %v440 = vld [vmem:[%s1 + $0xcb8] sm:$0xff]
    %v441 = vld [vmem:[%s1 + $0xcc0] sm:$0xff]
    %v442 = vld [vmem:[%s1 + $0xcc8] sm:$0xff]
    %v443 = vld [vmem:[%s1 + $0xcd0] sm:$0xff]
    %v444 = vld [vmem:[%s1 + $0xcd8] sm:$0xff]
    %v445 = vld [vmem:[%s1 + $0xce0] sm:$0xff]
    %v446 = vld [vmem:[%s1 + $0xce8] sm:$0xff]
    %v447 = vld [vmem:[%s1 + $0xcf0] sm:$0xff]
    %v448 = vld [vmem:[%s1 + $0xcf8] sm:$0xff]
    %v449 = vld [vmem:[%s1 + $0xd00] sm:$0xff]
    %v450 = vld [vmem:[%s1 + $0xd08] sm:$0xff]
    %v451 = vld [vmem:[%s1 + $0xd10] sm:$0xff]
    %v452 = vld [vmem:[%s1 + $0xd18] sm:$0xff]
    %v453 = vld [vmem:[%s1 + $0xd20] sm:$0xff]
    %v454 = vld [vmem:[%s1 + $0xd28] sm:$0xff]
    %v455 = vld [vmem:[%s1 + $0xd30] sm:$0xff]
    %v456 = vld [vmem:[%s1 + $0xd38] sm:$0xff]
    %v457 = vld [vmem:[%s1 + $0xd40] sm:$0xff]
    %v458 = vld [vmem:[%s1 + $0xd48] sm:$0xff]
    %v459 = vld [vmem:[%s1 + $0xd50] sm:$0xff]
    %v460 = vld [vmem:[%s1 + $0xd58] sm:$0xff]
    %v461 = vld [vmem:[%s1 + $0xd60] sm:$0xff]
    %v462 = vld [vmem:[%s1 + $0xd68] sm:$0xff]
    %v463 = vld [vmem:[%s1 + $0xd70] sm:$0xff]
    %v464 = vld [vmem:[%s1 + $0xd78] sm:$0xff]
    %v465 = vld [vmem:[%s1 + $0xd80] sm:$0xff]
    %v466 = vld [vmem:[%s1 + $0xd88] sm:$0xff]
    %v467 = vld [vmem:[%s1 + $0xd90] sm:$0xff]
    %v468 = vld [vmem:[%s1 + $0xd98] sm:$0xff]
    %v469 = vld [vmem:[%s1 + $0xda0] sm:$0xff]
    %v470 = vld [vmem:[%s1 + $0xda8] sm:$0xff]
    %v471 = vld [vmem:[%s1 + $0xdb0] sm:$0xff]
    %v472 = vld [vmem:[%s1 + $0xdb8] sm:$0xff]
    %v473 = vld [vmem:[%s1 + $0xdc0] sm:$0xff]
    %v474 = vld [vmem:[%s1 + $0xdc8] sm:$0xff]
    %v475 = vld [vmem:[%s1 + $0xdd0] sm:$0xff]
    %v476 = vld [vmem:[%s1 + $0xdd8] sm:$0xff]
    %v477 = vld [vmem:[%s1 + $0xde0] sm:$0xff]
    %v478 = vld [vmem:[%s1 + $0xde8] sm:$0xff]
    %v479 = vld [vmem:[%s1 + $0xdf0] sm:$0xff]
    %v480 = vld [vmem:[%s1 + $0xdf8] sm:$0xff]
    %v481 = vld [vmem:[%s1 + $0xe00] sm:$0xff]
    %v482 = vld [vmem:[%s1 + $0xe08] sm:$0xff]
    %v483 = vld [vmem:[%s1 + $0xe10] sm:$0xff]
    %v484 = vld [vmem:[%s1 + $0xe18] sm:$0xff]
    %v485 = vld [vmem:[%s1 + $0xe20] sm:$0xff]
    %v486 = vld [vmem:[%s1 + $0xe28] sm:$0xff]
    %v487 = vld [vmem:[%s1 + $0xe30] sm:$0xff]
    %v488 = vld [vmem:[%s1 + $0xe38] sm:$0xff]
    %v489 = vld [vmem:[%s1 + $0xe40] sm:$0xff]
    %v490 = vld [vmem:[%s1 + $0xe48] sm:$0xff]
    %v491 = vld [vmem:[%s1 + $0xe50] sm:$0xff]
    %v492 = vld [vmem:[%s1 + $0xe58] sm:$0xff]
    %v493 = vld [vmem:[%s1 + $0xe60] sm:$0xff]
    %v494 = vld [vmem:[%s1 + $0xe68] sm:$0xff]
    %v495 = vld [vmem:[%s1 + $0xe70] sm:$0xff]
    %v496 = vld [vmem:[%s1 + $0xe78] sm:$0xff]
    %v497 = vld [vmem:[%s1 + $0xe80] sm:$0xff]
    %v498 = vld [vmem:[%s1 + $0xe88] sm:$0xff]
    %v499 = vld [vmem:[%s1 + $0xe90] sm:$0xff]
    %v500 = vld [vmem:[%s1 + $0xe98] sm:$0xff]
    %v501 = vld [vmem:[%s1 + $0xea0] sm:$0xff]
    %v502 = vld [vmem:[%s1 + $0xea8] sm:$0xff]
    %v503 = vld [vmem:[%s1 + $0xeb0] sm:$0xff]
    %v504 = vld [vmem:[%s1 + $0xeb8] sm:$0xff]
    %v505 = vld [vmem:[%s1 + $0xec0] sm:$0xff]
    %v506 = vld [vmem:[%s1 + $0xec8] sm:$0xff]
    %v507 = vld [vmem:[%s1 + $0xed0] sm:$0xff]
    %v508 = vld [vmem:[%s1 + $0xed8] sm:$0xff]
    %v509 = vld [vmem:[%s1 + $0xee0] sm:$0xff]
    %v510 = vld [vmem:[%s1 + $0xee8] sm:$0xff]
    %v511 = vld [vmem:[%s1 + $0xef0] sm:$0xff]
    %v512 = vld [vmem:[%s1 + $0xef8] sm:$0xff]
    %v513 = vld [vmem:[%s1 + $0xf00] sm:$0xff]
    %v514 = vld [vmem:[%s1 + $0xf08] sm:$0xff]
    %v515 = vld [vmem:[%s1 + $0xf10] sm:$0xff]
    %v516 = vld [vmem:[%s1 + $0xf18] sm:$0xff]
    %v517 = vld [vmem:[%s1 + $0xf20] sm:$0xff]
    %v518 = vld [vmem:[%s1 + $0xf28] sm:$0xff]
    %v519 = vld [vmem:[%s1 + $0xf30] sm:$0xff]
    %v520 = vld [vmem:[%s1 + $0xf38] sm:$0xff]
    %v521 = vld [vmem:[%s1 + $0xf40] sm:$0xff]
    %v522 = vld [vmem:[%s1 + $0xf48] sm:$0xff]
    %v523 = vld [vmem:[%s1 + $0xf50] sm:$0xff]
    %v524 = vld [vmem:[%s1 + $0xf58] sm:$0xff]
    %v525 = vld [vmem:[%s1 + $0xf60] sm:$0xff]
    %v526 = vld [vmem:[%s1 + $0xf68] sm:$0xff]
    %v527 = vld [vmem:[%s1 + $0xf70] sm:$0xff]
    %v528 = vld [vmem:[%s1 + $0xf78] sm:$0xff]
    %v529 = vld [vmem:[%s1 + $0xf80] sm:$0xff]
    %v530 = vld [vmem:[%s1 + $0xf88] sm:$0xff]
    %v531 = vld [vmem:[%s1 + $0xf90] sm:$0xff]
    %v532 = vld [vmem:[%s1 + $0xf98] sm:$0xff]
    %v533 = vld [vmem:[%s1 + $0xfa0] sm:$0xff]
    %v534 = vld [vmem:[%s1 + $0xfa8] sm:$0xff]
    %v535 = vld [vmem:[%s1 + $0xfb0] sm:$0xff]
    %v536 = vld [vmem:[%s1 + $0xfb8] sm:$0xff]
    %v537 = vld [vmem:[%s1 + $0xfc0] sm:$0xff]
    %v538 = vld [vmem:[%s1 + $0xfc8] sm:$0xff]
    %v539 = vld [vmem:[%s1 + $0xfd0] sm:$0xff]
    %v540 = vld [vmem:[%s1 + $0xfd8] sm:$0xff]
    %v541 = vld [vmem:[%s1 + $0xfe0] sm:$0xff]
    %v542 = vld [vmem:[%s1 + $0xfe8] sm:$0xff]
    %v543 = vld [vmem:[%s1 + $0xff0] sm:$0xff]
    %v544 = vld [vmem:[%s1 + $0xff8] sm:$0xff]
    %v545 = vld [vmem:[%s1 + $0x1000] sm:$0xff]
    %v546 = vld [vmem:[%s1 + $0x1008] sm:$0xff]
    %v547 = vld [vmem:[%s1 + $0x1010] sm:$0xff]
    %v548 = vld [vmem:[%s1 + $0x1018] sm:$0xff]
    %v549 = vld [vmem:[%s1 + $0x1020] sm:$0xff]
    %v550 = vld [vmem:[%s1 + $0x1028] sm:$0xff]
    %v551 = vld [vmem:[%s1 + $0x1030] sm:$0xff]
    %v552 = vld [vmem:[%s1 + $0x1038] sm:$0xff]
    %v553 = vld [vmem:[%s1 + $0x1040] sm:$0xff]
    %v554 = vld [vmem:[%s1 + $0x1048] sm:$0xff]
    %v555 = vld [vmem:[%s1 + $0x1050] sm:$0xff]
    %v556 = vld [vmem:[%s1 + $0x1058] sm:$0xff]
    %v557 = vld [vmem:[%s1 + $0x1060] sm:$0xff]
    %v558 = vld [vmem:[%s1 + $0x1068] sm:$0xff]
    %v559 = vld [vmem:[%s1 + $0x1070] sm:$0xff]
    %v560 = vld [vmem:[%s1 + $0x1078] sm:$0xff]
    %v561 = vld [vmem:[%s1 + $0x1080] sm:$0xff]
    %v562 = vld [vmem:[%s1 + $0x1088] sm:$0xff]
    %v563 = vld [vmem:[%s1 + $0x1090] sm:$0xff]
    %v564 = vld [vmem:[%s1 + $0x1098] sm:$0xff]
    %v565 = vld [vmem:[%s1 + $0x10a0] sm:$0xff]
    %v566 = vld [vmem:[%s1 + $0x10a8] sm:$0xff]
    %v567 = vld [vmem:[%s1 + $0x10b0] sm:$0xff]
    %v568 = vld [vmem:[%s1 + $0x10b8] sm:$0xff]
    %v569 = vld [vmem:[%s1 + $0x10c0] sm:$0xff]
    %v570 = vld [vmem:[%s1 + $0x10c8] sm:$0xff]
    %v571 = vld [vmem:[%s1 + $0x10d0] sm:$0xff]
    %v572 = vld [vmem:[%s1 + $0x10d8] sm:$0xff]
    %v573 = vld [vmem:[%s1 + $0x10e0] sm:$0xff]
    %v574 = vld [vmem:[%s1 + $0x10e8] sm:$0xff]
    %v575 = vld [vmem:[%s1 + $0x10f0] sm:$0xff]
    %v576 = vld [vmem:[%s1 + $0x10f8] sm:$0xff]
    %v577 = vld [vmem:[%s1 + $0x1100] sm:$0xff]
    %v578 = vld [vmem:[%s1 + $0x1108] sm:$0xff]
    %v579 = vld [vmem:[%s1 + $0x1110] sm:$0xff]
    %v580 = vld [vmem:[%s1 + $0x1118] sm:$0xff]
    %v581 = vld [vmem:[%s1 + $0x1120] sm:$0xff]
    %v582 = vld [vmem:[%s1 + $0x1128] sm:$0xff]
    %v583 = vld [vmem:[%s1 + $0x1130] sm:$0xff]
    %v584 = vld [vmem:[%s1 + $0x1138] sm:$0xff]
    %v585 = vld [vmem:[%s1 + $0x1140] sm:$0xff]
    %v586 = vld [vmem:[%s1 + $0x1148] sm:$0xff]
    %v587 = vld [vmem:[%s1 + $0x1150] sm:$0xff]
    %v588 = vld [vmem:[%s1 + $0x1158] sm:$0xff]
    %v589 = vld [vmem:[%s1 + $0x1160] sm:$0xff]
    %v590 = vld [vmem:[%s1 + $0x1168] sm:$0xff]
    %v591 = vld [vmem:[%s1 + $0x1170] sm:$0xff]
    %v592 = vld [vmem:[%s1 + $0x1178] sm:$0xff]
    %v593 = vld [vmem:[%s1 + $0x1180] sm:$0xff]
    %v594 = vld [vmem:[%s1 + $0x1188] sm:$0xff]
    %v595 = vld [vmem:[%s1 + $0x1190] sm:$0xff]
    %v596 = vld [vmem:[%s1 + $0x1198] sm:$0xff]
    %v597 = vld [vmem:[%s1 + $0x11a0] sm:$0xff]
    %v598 = vld [vmem:[%s1 + $0x11a8] sm:$0xff]
    %v599 = vld [vmem:[%s1 + $0x11b0] sm:$0xff]
    %v600 = vld [vmem:[%s1 + $0x11b8] sm:$0xff]
    %v601 = vld [vmem:[%s1 + $0x11c0] sm:$0xff]
    %v602 = vld [vmem:[%s1 + $0x11c8] sm:$0xff]
    %v603 = vld [vmem:[%s1 + $0x11d0] sm:$0xff]
    %v604 = vld [vmem:[%s1 + $0x11d8] sm:$0xff]
    %v605 = vld [vmem:[%s1 + $0x11e0] sm:$0xff]
    %v606 = vld [vmem:[%s1 + $0x11e8] sm:$0xff]
    %v607 = vld [vmem:[%s1 + $0x11f0] sm:$0xff]
    %v608 = vld [vmem:[%s1 + $0x11f8] sm:$0xff]
    %v609 = vld [vmem:[%s1 + $0x1200] sm:$0xff]
    %v610 = vld [vmem:[%s1 + $0x1208] sm:$0xff]
    %v611 = vld [vmem:[%s1 + $0x1210] sm:$0xff]
    %v612 = vld [vmem:[%s1 + $0x1218] sm:$0xff]
    %v613 = vld [vmem:[%s1 + $0x1220] sm:$0xff]
    %v614 = vld [vmem:[%s1 + $0x1228] sm:$0xff]
    %v615 = vld [vmem:[%s1 + $0x1230] sm:$0xff]
    %v616 = vld [vmem:[%s1 + $0x1238] sm:$0xff]
    %v617 = vld [vmem:[%s1 + $0x1240] sm:$0xff]
    %v618 = vld [vmem:[%s1 + $0x1248] sm:$0xff]
    %v619 = vld [vmem:[%s1 + $0x1250] sm:$0xff]
    %v620 = vld [vmem:[%s1 + $0x1258] sm:$0xff]
    %v621 = vld [vmem:[%s1 + $0x1260] sm:$0xff]
    %v622 = vld [vmem:[%s1 + $0x1268] sm:$0xff]
    %v623 = vld [vmem:[%s1 + $0x1270] sm:$0xff]
    %v624 = vld [vmem:[%s1 + $0x1278] sm:$0xff]
    %v625 = vld [vmem:[%s1 + $0x1280] sm:$0xff]
    %v626 = vld [vmem:[%s1 + $0x1288] sm:$0xff]
    %v627 = vld [vmem:[%s1 + $0x1290] sm:$0xff]
    %v628 = vld [vmem:[%s1 + $0x1298] sm:$0xff]
    %v629 = vld [vmem:[%s1 + $0x12a0] sm:$0xff]
    %v630 = vld [vmem:[%s1 + $0x12a8] sm:$0xff]
    %v631 = vld [vmem:[%s1 + $0x12b0] sm:$0xff]
    %v632 = vld [vmem:[%s1 + $0x12b8] sm:$0xff]
    %v633 = vld [vmem:[%s1 + $0x12c0] sm:$0xff]
    %v634 = vld [vmem:[%s1 + $0x12c8] sm:$0xff]
    %v635 = vld [vmem:[%s1 + $0x12d0] sm:$0xff]
    %v636 = vld [vmem:[%s1 + $0x12d8] sm:$0xff]
    %v637 = vld [vmem:[%s1 + $0x12e0] sm:$0xff]
    %v638 = vld [vmem:[%s1 + $0x12e8] sm:$0xff]
    %v639 = vld [vmem:[%s1 + $0x12f0] sm:$0xff]
    %v640 = vld [vmem:[%s1 + $0x12f8] sm:$0xff]
    %v641 = vld [vmem:[%s1 + $0x1300] sm:$0xff]
    %v642 = vld [vmem:[%s1 + $0x1308] sm:$0xff]
    %v643 = vld [vmem:[%s1 + $0x1310] sm:$0xff]
    %v644 = vld [vmem:[%s1 + $0x1318] sm:$0xff]
    %v645 = vld [vmem:[%s1 + $0x1320] sm:$0xff]
    %v646 = vld [vmem:[%s1 + $0x1328] sm:$0xff]
    %v647 = vld [vmem:[%s1 + $0x1330] sm:$0xff]
    %v648 = vld [vmem:[%s1 + $0x1338] sm:$0xff]
    %v649 = vld [vmem:[%s1 + $0x1340] sm:$0xff]
    %v650 = vld [vmem:[%s1 + $0x1348] sm:$0xff]
    %v651 = vld [vmem:[%s1 + $0x1350] sm:$0xff]
    %v652 = vld [vmem:[%s1 + $0x1358] sm:$0xff]
    %v653 = vld [vmem:[%s1 + $0x1360] sm:$0xff]
    %v654 = vld [vmem:[%s1 + $0x1368] sm:$0xff]
    %v655 = vld [vmem:[%s1 + $0x1370] sm:$0xff]
    %v656 = vld [vmem:[%s1 + $0x1378] sm:$0xff]
    %v657 = vld [vmem:[%s1 + $0x1380] sm:$0xff]
    %v658 = vld [vmem:[%s1 + $0x1388] sm:$0xff]
    %v659 = vld [vmem:[%s1 + $0x1390] sm:$0xff]
    %v660 = vld [vmem:[%s1 + $0x1398] sm:$0xff]
    %v661 = vld [vmem:[%s1 + $0x13a0] sm:$0xff]
    %v662 = vld [vmem:[%s1 + $0x13a8] sm:$0xff]
    %v663 = vld [vmem:[%s1 + $0x13b0] sm:$0xff]
    %v664 = vld [vmem:[%s1 + $0x13b8] sm:$0xff]
    %v665 = vld [vmem:[%s1 + $0x13c0] sm:$0xff]
    %v666 = vld [vmem:[%s1 + $0x13c8] sm:$0xff]
    %v667 = vld [vmem:[%s1 + $0x13d0] sm:$0xff]
    %v668 = vld [vmem:[%s1 + $0x13d8] sm:$0xff]
    %v669 = vld [vmem:[%s1 + $0x13e0] sm:$0xff]
    %v670 = vld [vmem:[%s1 + $0x13e8] sm:$0xff]
    %v671 = vld [vmem:[%s1 + $0x13f0] sm:$0xff]
    %v672 = vld [vmem:[%s1 + $0x13f8] sm:$0xff]
    %v673 = vld [vmem:[%s1 + $0x1400] sm:$0xff]
    %v674 = vld [vmem:[%s1 + $0x1408] sm:$0xff]
    %v675 = vld [vmem:[%s1 + $0x1410] sm:$0xff]
    %v676 = vld [vmem:[%s1 + $0x1418] sm:$0xff]
    %v677 = vld [vmem:[%s1 + $0x1420] sm:$0xff]
    %v678 = vld [vmem:[%s1 + $0x1428] sm:$0xff]
    %v679 = vld [vmem:[%s1 + $0x1430] sm:$0xff]
    %v680 = vld [vmem:[%s1 + $0x1438] sm:$0xff]
    %v681 = vld [vmem:[%s1 + $0x1440] sm:$0xff]
    %v682 = vld [vmem:[%s1 + $0x1448] sm:$0xff]
    %v683 = vld [vmem:[%s1 + $0x1450] sm:$0xff]
    %v684 = vld [vmem:[%s1 + $0x1458] sm:$0xff]
    %v685 = vld [vmem:[%s1 + $0x1460] sm:$0xff]
    %v686 = vld [vmem:[%s1 + $0x1468] sm:$0xff]
    %v687 = vld [vmem:[%s1 + $0x1470] sm:$0xff]
    %v688 = vld [vmem:[%s1 + $0x1478] sm:$0xff]
    %v689 = vld [vmem:[%s1 + $0x1480] sm:$0xff]
    %v690 = vld [vmem:[%s1 + $0x1488] sm:$0xff]
    %v691 = vld [vmem:[%s1 + $0x1490] sm:$0xff]
    %v692 = vld [vmem:[%s1 + $0x1498] sm:$0xff]
    %v693 = vld [vmem:[%s1 + $0x14a0] sm:$0xff]
    %v694 = vld [vmem:[%s1 + $0x14a8] sm:$0xff]
    %v695 = vld [vmem:[%s1 + $0x14b0] sm:$0xff]
    %v696 = vld [vmem:[%s1 + $0x14b8] sm:$0xff]
    %v697 = vld [vmem:[%s1 + $0x14c0] sm:$0xff]
    %v698 = vld [vmem:[%s1 + $0x14c8] sm:$0xff]
    %v699 = vld [vmem:[%s1 + $0x14d0] sm:$0xff]
    %v700 = vld [vmem:[%s1 + $0x14d8] sm:$0xff]
    %v701 = vld [vmem:[%s1 + $0x14e0] sm:$0xff]
    %v702 = vld [vmem:[%s1 + $0x14e8] sm:$0xff]
    %v703 = vld [vmem:[%s1 + $0x14f0] sm:$0xff]
    %v704 = vld [vmem:[%s1 + $0x14f8] sm:$0xff]
    %v705 = vld [vmem:[%s1 + $0x1500] sm:$0xff]
    %v706 = vld [vmem:[%s1 + $0x1508] sm:$0xff]
    %v707 = vld [vmem:[%s1 + $0x1510] sm:$0xff]
    %v708 = vld [vmem:[%s1 + $0x1518] sm:$0xff]
    %v709 = vld [vmem:[%s1 + $0x1520] sm:$0xff]
    %v710 = vld [vmem:[%s1 + $0x1528] sm:$0xff]
    %v711 = vld [vmem:[%s1 + $0x1530] sm:$0xff]
    %v712 = vld [vmem:[%s1 + $0x1538] sm:$0xff]
    %v713 = vld [vmem:[%s1 + $0x1540] sm:$0xff]
    %v714 = vld [vmem:[%s1 + $0x1548] sm:$0xff]
    %v715 = vld [vmem:[%s1 + $0x1550] sm:$0xff]
    %v716 = vld [vmem:[%s1 + $0x1558] sm:$0xff]
    %v717 = vld [vmem:[%s1 + $0x1560] sm:$0xff]
    %v718 = vld [vmem:[%s1 + $0x1568] sm:$0xff]
    %v719 = vld [vmem:[%s1 + $0x1570] sm:$0xff]
    %v720 = vld [vmem:[%s1 + $0x1578] sm:$0xff]
    %v721 = vld [vmem:[%s1 + $0x1580] sm:$0xff]
    %v722 = vld [vmem:[%s1 + $0x1588] sm:$0xff]
    %v723 = vld [vmem:[%s1 + $0x1590] sm:$0xff]
    %v724 = vld [vmem:[%s1 + $0x1598] sm:$0xff]
    %v725 = vld [vmem:[%s1 + $0x15a0] sm:$0xff]
    %v726 = vld [vmem:[%s1 + $0x15a8] sm:$0xff]
    %v727 = vld [vmem:[%s1 + $0x15b0] sm:$0xff]
    %v728 = vld [vmem:[%s1 + $0x15b8] sm:$0xff]
    %v729 = vld [vmem:[%s1 + $0x15c0] sm:$0xff]
    %v730 = vld [vmem:[%s1 + $0x15c8] sm:$0xff]
    %v731 = vld [vmem:[%s1 + $0x15d0] sm:$0xff]
    %v732 = vld [vmem:[%s1 + $0x15d8] sm:$0xff]
    %v733 = vld [vmem:[%s1 + $0x15e0] sm:$0xff]
    %v734 = vld [vmem:[%s1 + $0x15e8] sm:$0xff]
    %v735 = vld [vmem:[%s1 + $0x15f0] sm:$0xff]
    %v736 = vld [vmem:[%s1 + $0x15f8] sm:$0xff]
    %v737 = vld [vmem:[%s1 + $0x1600] sm:$0xff]
    %v738 = vld [vmem:[%s1 + $0x1608] sm:$0xff]
    %v739 = vld [vmem:[%s1 + $0x1610] sm:$0xff]
    %v740 = vld [vmem:[%s1 + $0x1618] sm:$0xff]
    %v741 = vld [vmem:[%s1 + $0x1620] sm:$0xff]
    %v742 = vld [vmem:[%s1 + $0x1628] sm:$0xff]
    %v743 = vld [vmem:[%s1 + $0x1630] sm:$0xff]
    %v744 = vld [vmem:[%s1 + $0x1638] sm:$0xff]
    %v745 = vld [vmem:[%s1 + $0x1640] sm:$0xff]
    %v746 = vld [vmem:[%s1 + $0x1648] sm:$0xff]
    %v747 = vld [vmem:[%s1 + $0x1650] sm:$0xff]
    %v748 = vld [vmem:[%s1 + $0x1658] sm:$0xff]
    %v749 = vld [vmem:[%s1 + $0x1660] sm:$0xff]
    %v750 = vld [vmem:[%s1 + $0x1668] sm:$0xff]
    %v751 = vld [vmem:[%s1 + $0x1670] sm:$0xff]
    %v752 = vld [vmem:[%s1 + $0x1678] sm:$0xff]
    %v753 = vld [vmem:[%s1 + $0x1680] sm:$0xff]
    %v754 = vld [vmem:[%s1 + $0x1688] sm:$0xff]
    %v755 = vld [vmem:[%s1 + $0x1690] sm:$0xff]
    %v756 = vld [vmem:[%s1 + $0x1698] sm:$0xff]
    %v757 = vld [vmem:[%s1 + $0x16a0] sm:$0xff]
    %v758 = vld [vmem:[%s1 + $0x16a8] sm:$0xff]
    %v759 = vld [vmem:[%s1 + $0x16b0] sm:$0xff]
    %v760 = vld [vmem:[%s1 + $0x16b8] sm:$0xff]
    %v761 = vld [vmem:[%s1 + $0x16c0] sm:$0xff]
    %v762 = vld [vmem:[%s1 + $0x16c8] sm:$0xff]
    %v763 = vld [vmem:[%s1 + $0x16d0] sm:$0xff]
    %v764 = vld [vmem:[%s1 + $0x16d8] sm:$0xff]
    %v765 = vld [vmem:[%s1 + $0x16e0] sm:$0xff]
    %v766 = vld [vmem:[%s1 + $0x16e8] sm:$0xff]
    %v767 = vld [vmem:[%s1 + $0x16f0] sm:$0xff]
    %v768 = vld [vmem:[%s1 + $0x16f8] sm:$0xff]
    %v769 = vld [vmem:[%s1 + $0x1700] sm:$0xff]
    %v770 = vld [vmem:[%s1 + $0x1708] sm:$0xff]
    %v771 = vld [vmem:[%s1 + $0x1710] sm:$0xff]
    %v772 = vld [vmem:[%s1 + $0x1718] sm:$0xff]
    %v773 = vld [vmem:[%s1 + $0x1720] sm:$0xff]
    %v774 = vld [vmem:[%s1 + $0x1728] sm:$0xff]
    %v775 = vld [vmem:[%s1 + $0x1730] sm:$0xff]
    %v776 = vld [vmem:[%s1 + $0x1738] sm:$0xff]
    %v777 = vld [vmem:[%s1 + $0x1740] sm:$0xff]
    %v778 = vld [vmem:[%s1 + $0x1748] sm:$0xff]
    %v779 = vld [vmem:[%s1 + $0x1750] sm:$0xff]
    %v780 = vld [vmem:[%s1 + $0x1758] sm:$0xff]
    %v781 = vld [vmem:[%s1 + $0x1760] sm:$0xff]
    %v782 = vld [vmem:[%s1 + $0x1768] sm:$0xff]
    %v783 = vld [vmem:[%s1 + $0x1770] sm:$0xff]
    %v784 = vld [vmem:[%s1 + $0x1778] sm:$0xff]
    %v785 = vld [vmem:[%s1 + $0x1780] sm:$0xff]
    %v786 = vld [vmem:[%s1 + $0x1788] sm:$0xff]
    %v787 = vld [vmem:[%s1 + $0x1790] sm:$0xff]
    %v788 = vld [vmem:[%s1 + $0x1798] sm:$0xff]
    %v789 = vld [vmem:[%s1 + $0x17a0] sm:$0xff]
    %v790 = vld [vmem:[%s1 + $0x17a8] sm:$0xff]
    %v791 = vld [vmem:[%s1 + $0x17b0] sm:$0xff]
    %v792 = vld [vmem:[%s1 + $0x17b8] sm:$0xff]
    %v793 = vld [vmem:[%s1 + $0x17c0] sm:$0xff]
    %v794 = vld [vmem:[%s1 + $0x17c8] sm:$0xff]
    %v795 = vld [vmem:[%s1 + $0x17d0] sm:$0xff]
    %v796 = vld [vmem:[%s1 + $0x17d8] sm:$0xff]
    %v797 = vld [vmem:[%s1 + $0x17e0] sm:$0xff]
    %v798 = vld [vmem:[%s1 + $0x17e8] sm:$0xff]
    %v799 = vld [vmem:[%s1 + $0x17f0] sm:$0xff]
    %v800 = vld [vmem:[%s1 + $0x17f8] sm:$0xff]
    %v801 = vld [vmem:[%s2] sm:$0xff]
    %v803 = vlaneseq
    %v804 = vshrl.u32 %v803, 7
    %v805 = vsub.s32 0, %v804
    %v806 = vrot.slane %v801, %v805
    %v807 = vlaneseq
    %v808 = vshrl.u32 %v807, 7
    %v809 = vsub.s32 1, %v808
    %v810 = vrot.slane %v801, %v809
    %v811 = vlaneseq
    %v812 = vshrl.u32 %v811, 7
    %v813 = vsub.s32 2, %v812
    %v814 = vrot.slane %v801, %v813
    %v815 = vlaneseq
    %v816 = vshrl.u32 %v815, 7
    %v817 = vsub.s32 3, %v816
    %v818 = vrot.slane %v801, %v817
    %v819 = vlaneseq
    %v820 = vshrl.u32 %v819, 7
    %v821 = vsub.s32 4, %v820
    %v822 = vrot.slane %v801, %v821
    %v823 = vlaneseq
    %v824 = vshrl.u32 %v823, 7
    %v825 = vsub.s32 5, %v824
    %v826 = vrot.slane %v801, %v825
    %v827 = vlaneseq
    %v828 = vshrl.u32 %v827, 7
    %v829 = vsub.s32 6, %v828
    %v830 = vrot.slane %v801, %v829
    %v831 = vlaneseq
    %v832 = vshrl.u32 %v831, 7
    %v833 = vsub.s32 7, %v832
    %v834 = vrot.slane %v801, %v833
    %v845 = vcombine.high %v31, %v31
    %v847 = vunpack.c.l.s4 1966171168
    %v848 = vunpack.c.0.s8 %v847
    %v849 = vlaneseq
    %v850 = vshrl.u32 %v849, 7
    %v851 = vsub.s32 %v848, %v850
    %v852 = vrot.slane %v31, %v851
    %v854 = vunpack.c.l.s4 1966171168
    %v855 = vunpack.c.0.s8 %v854
    %v856 = vlaneseq
    %v857 = vshrl.u32 %v856, 7
    %v858 = vsub.s32 %v855, %v857
    %v859 = vrot.slane %v845, %v858
    %v860 = vcombine.high %v852, %v852
    %v861 = vcombine.high %v859, %v859
    %v863 = vunpack.c.l.s4 1966171168
    %v864 = vunpack.c.0.s8 %v863
    %v865 = vlaneseq
    %v866 = vshrl.u32 %v865, 7
    %v867 = vsub.s32 %v864, %v866
    %v868 = vrot.slane %v852, %v867
    %v870 = vunpack.c.l.s4 1966171168
    %v871 = vunpack.c.0.s8 %v870
    %v872 = vlaneseq
    %v873 = vshrl.u32 %v872, 7
    %v874 = vsub.s32 %v871, %v873
    %v875 = vrot.slane %v859, %v874
    %v877 = vunpack.c.l.s4 1966171168
    %v878 = vunpack.c.0.s8 %v877
    %v879 = vlaneseq
    %v880 = vshrl.u32 %v879, 7
    %v881 = vsub.s32 %v878, %v880
    %v882 = vrot.slane %v860, %v881
    %v884 = vunpack.c.l.s4 1966171168
    %v885 = vunpack.c.0.s8 %v884
    %v886 = vlaneseq
    %v887 = vshrl.u32 %v886, 7
    %v888 = vsub.s32 %v885, %v887
    %v889 = vrot.slane %v861, %v888
    %v890 = vcombine.high %v868, %v868
    %v891 = vcombine.high %v875, %v875
    %v892 = vcombine.high %v882, %v882
    %v893 = vcombine.high %v889, %v889
    %v895 = vunpack.c.l.s4 1966171168
    %v896 = vunpack.c.0.s8 %v895
    %v897 = vlaneseq
    %v898 = vshrl.u32 %v897, 7
    %v899 = vsub.s32 %v896, %v898
    %v900 = vrot.slane %v32, %v899
    %v901 = vcombine.high %v900, %v900
    %v903 = vunpack.c.l.s4 1966171168
    %v904 = vunpack.c.0.s8 %v903
    %v905 = vlaneseq
    %v906 = vshrl.u32 %v905, 7
    %v907 = vsub.s32 %v904, %v906
    %v908 = vrot.slane %v900, %v907
    %v910 = vunpack.c.l.s4 1966171168
    %v911 = vunpack.c.0.s8 %v910
    %v912 = vlaneseq
    %v913 = vshrl.u32 %v912, 7
    %v914 = vsub.s32 %v911, %v913
    %v915 = vrot.slane %v901, %v914
    %v916 = vcombine.high %v908, %v908
    %v917 = vcombine.high %v915, %v915
    %v1698 = vunpack.c.l.b16 %v33
    %v1699 = vunpack.c.h.b16 %v33
    %v1700 = vunpack.c.l.b16 %v34
    %v1701 = vunpack.c.h.b16 %v34
    %v1702 = vunpack.c.l.b16 %v35
    %v1703 = vunpack.c.h.b16 %v35
    %v1704 = vunpack.c.l.b16 %v36
    %v1705 = vunpack.c.h.b16 %v36
    %v1706 = vunpack.c.l.b16 %v37
    %v1707 = vunpack.c.h.b16 %v37
    %v1708 = vunpack.c.l.b16 %v38
    %v1709 = vunpack.c.h.b16 %v38
    %v1710 = vunpack.c.l.b16 %v39
    %v1711 = vunpack.c.h.b16 %v39
    %v1712 = vunpack.c.l.b16 %v40
    %v1713 = vunpack.c.h.b16 %v40
    %v1714 = vunpack.c.l.b16 %v41
    %v1715 = vunpack.c.h.b16 %v41
    %v1716 = vunpack.c.l.b16 %v42
    %v1717 = vunpack.c.h.b16 %v42
    %v1718 = vunpack.c.l.b16 %v43
    %v1719 = vunpack.c.h.b16 %v43
    %v1720 = vunpack.c.l.b16 %v44
    %v1721 = vunpack.c.h.b16 %v44
    %v1722 = vunpack.c.l.b16 %v45
    %v1723 = vunpack.c.h.b16 %v45
    %v1724 = vunpack.c.l.b16 %v46
    %v1725 = vunpack.c.h.b16 %v46
    %v1726 = vunpack.c.l.b16 %v47
    %v1727 = vunpack.c.h.b16 %v47
    %v1728 = vunpack.c.l.b16 %v48
    %v1729 = vunpack.c.h.b16 %v48
    %v1730 = vunpack.c.l.b16 %v49
    %v1731 = vunpack.c.h.b16 %v49
    %v1732 = vunpack.c.l.b16 %v50
    %v1733 = vunpack.c.h.b16 %v50
    %v1734 = vunpack.c.l.b16 %v51
    %v1735 = vunpack.c.h.b16 %v51
    %v1736 = vunpack.c.l.b16 %v52
    %v1737 = vunpack.c.h.b16 %v52
    %v1738 = vunpack.c.l.b16 %v53
    %v1739 = vunpack.c.h.b16 %v53
    %v1740 = vunpack.c.l.b16 %v54
    %v1741 = vunpack.c.h.b16 %v54
    %v1742 = vunpack.c.l.b16 %v55
    %v1743 = vunpack.c.h.b16 %v55
    %v1744 = vunpack.c.l.b16 %v56
    %v1745 = vunpack.c.h.b16 %v56
    %v1746 = vunpack.c.l.b16 %v57
    %v1747 = vunpack.c.h.b16 %v57
    %v1748 = vunpack.c.l.b16 %v58
    %v1749 = vunpack.c.h.b16 %v58
    %v1750 = vunpack.c.l.b16 %v59
    %v1751 = vunpack.c.h.b16 %v59
    %v1752 = vunpack.c.l.b16 %v60
    %v1753 = vunpack.c.h.b16 %v60
    %v1754 = vunpack.c.l.b16 %v61
    %v1755 = vunpack.c.h.b16 %v61
    %v1756 = vunpack.c.l.b16 %v62
    %v1757 = vunpack.c.h.b16 %v62
    %v1758 = vunpack.c.l.b16 %v63
    %v1759 = vunpack.c.h.b16 %v63
    %v1760 = vunpack.c.l.b16 %v64
    %v1761 = vunpack.c.h.b16 %v64
    %v1762 = vunpack.c.l.b16 %v65
    %v1763 = vunpack.c.h.b16 %v65
    %v1764 = vunpack.c.l.b16 %v66
    %v1765 = vunpack.c.h.b16 %v66
    %v1766 = vunpack.c.l.b16 %v67
    %v1767 = vunpack.c.h.b16 %v67
    %v1768 = vunpack.c.l.b16 %v68
    %v1769 = vunpack.c.h.b16 %v68
    %v1770 = vunpack.c.l.b16 %v69
    %v1771 = vunpack.c.h.b16 %v69
    %v1772 = vunpack.c.l.b16 %v70
    %v1773 = vunpack.c.h.b16 %v70
    %v1774 = vunpack.c.l.b16 %v71
    %v1775 = vunpack.c.h.b16 %v71
    %v1776 = vunpack.c.l.b16 %v72
    %v1777 = vunpack.c.h.b16 %v72
    %v1778 = vunpack.c.l.b16 %v73
    %v1779 = vunpack.c.h.b16 %v73
    %v1780 = vunpack.c.l.b16 %v74
    %v1781 = vunpack.c.h.b16 %v74
    %v1782 = vunpack.c.l.b16 %v75
    %v1783 = vunpack.c.h.b16 %v75
    %v1784 = vunpack.c.l.b16 %v76
    %v1785 = vunpack.c.h.b16 %v76
    %v1786 = vunpack.c.l.b16 %v77
    %v1787 = vunpack.c.h.b16 %v77
    %v1788 = vunpack.c.l.b16 %v78
    %v1789 = vunpack.c.h.b16 %v78
    %v1790 = vunpack.c.l.b16 %v79
    %v1791 = vunpack.c.h.b16 %v79
    %v1792 = vunpack.c.l.b16 %v80
    %v1793 = vunpack.c.h.b16 %v80
    %v1794 = vunpack.c.l.b16 %v81
    %v1795 = vunpack.c.h.b16 %v81
    %v1796 = vunpack.c.l.b16 %v82
    %v1797 = vunpack.c.h.b16 %v82
    %v1798 = vunpack.c.l.b16 %v83
    %v1799 = vunpack.c.h.b16 %v83
    %v1800 = vunpack.c.l.b16 %v84
    %v1801 = vunpack.c.h.b16 %v84
    %v1802 = vunpack.c.l.b16 %v85
    %v1803 = vunpack.c.h.b16 %v85
    %v1804 = vunpack.c.l.b16 %v86
    %v1805 = vunpack.c.h.b16 %v86
    %v1806 = vunpack.c.l.b16 %v87
    %v1807 = vunpack.c.h.b16 %v87
    %v1808 = vunpack.c.l.b16 %v88
    %v1809 = vunpack.c.h.b16 %v88
    %v1810 = vunpack.c.l.b16 %v89
    %v1811 = vunpack.c.h.b16 %v89
    %v1812 = vunpack.c.l.b16 %v90
    %v1813 = vunpack.c.h.b16 %v90
    %v1814 = vunpack.c.l.b16 %v91
    %v1815 = vunpack.c.h.b16 %v91
    %v1816 = vunpack.c.l.b16 %v92
    %v1817 = vunpack.c.h.b16 %v92
    %v1818 = vunpack.c.l.b16 %v93
    %v1819 = vunpack.c.h.b16 %v93
    %v1820 = vunpack.c.l.b16 %v94
    %v1821 = vunpack.c.h.b16 %v94
    %v1822 = vunpack.c.l.b16 %v95
    %v1823 = vunpack.c.h.b16 %v95
    %v1824 = vunpack.c.l.b16 %v96
    %v1825 = vunpack.c.h.b16 %v96
    %v1826 = vunpack.c.l.b16 %v97
    %v1827 = vunpack.c.h.b16 %v97
    %v1828 = vunpack.c.l.b16 %v98
    %v1829 = vunpack.c.h.b16 %v98
    %v1830 = vunpack.c.l.b16 %v99
    %v1831 = vunpack.c.h.b16 %v99
    %v1832 = vunpack.c.l.b16 %v100
    %v1833 = vunpack.c.h.b16 %v100
    %v1834 = vunpack.c.l.b16 %v101
    %v1835 = vunpack.c.h.b16 %v101
    %v1836 = vunpack.c.l.b16 %v102
    %v1837 = vunpack.c.h.b16 %v102
    %v1838 = vunpack.c.l.b16 %v103
    %v1839 = vunpack.c.h.b16 %v103
    %v1840 = vunpack.c.l.b16 %v104
    %v1841 = vunpack.c.h.b16 %v104
    %v1842 = vunpack.c.l.b16 %v105
    %v1843 = vunpack.c.h.b16 %v105
    %v1844 = vunpack.c.l.b16 %v106
    %v1845 = vunpack.c.h.b16 %v106
    %v1846 = vunpack.c.l.b16 %v107
    %v1847 = vunpack.c.h.b16 %v107
    %v1848 = vunpack.c.l.b16 %v108
    %v1849 = vunpack.c.h.b16 %v108
    %v1850 = vunpack.c.l.b16 %v109
    %v1851 = vunpack.c.h.b16 %v109
    %v1852 = vunpack.c.l.b16 %v110
    %v1853 = vunpack.c.h.b16 %v110
    %v1854 = vunpack.c.l.b16 %v111
    %v1855 = vunpack.c.h.b16 %v111
    %v1856 = vunpack.c.l.b16 %v112
    %v1857 = vunpack.c.h.b16 %v112
    %v1858 = vunpack.c.l.b16 %v113
    %v1859 = vunpack.c.h.b16 %v113
    %v1860 = vunpack.c.l.b16 %v114
    %v1861 = vunpack.c.h.b16 %v114
    %v1862 = vunpack.c.l.b16 %v115
    %v1863 = vunpack.c.h.b16 %v115
    %v1864 = vunpack.c.l.b16 %v116
    %v1865 = vunpack.c.h.b16 %v116
    %v1866 = vunpack.c.l.b16 %v117
    %v1867 = vunpack.c.h.b16 %v117
    %v1868 = vunpack.c.l.b16 %v118
    %v1869 = vunpack.c.h.b16 %v118
    %v1870 = vunpack.c.l.b16 %v119
    %v1871 = vunpack.c.h.b16 %v119
    %v1872 = vunpack.c.l.b16 %v120
    %v1873 = vunpack.c.h.b16 %v120
    %v1874 = vunpack.c.l.b16 %v121
    %v1875 = vunpack.c.h.b16 %v121
    %v1876 = vunpack.c.l.b16 %v122
    %v1877 = vunpack.c.h.b16 %v122
    %v1878 = vunpack.c.l.b16 %v123
    %v1879 = vunpack.c.h.b16 %v123
    %v1880 = vunpack.c.l.b16 %v124
    %v1881 = vunpack.c.h.b16 %v124
    %v1882 = vunpack.c.l.b16 %v125
    %v1883 = vunpack.c.h.b16 %v125
    %v1884 = vunpack.c.l.b16 %v126
    %v1885 = vunpack.c.h.b16 %v126
    %v1886 = vunpack.c.l.b16 %v127
    %v1887 = vunpack.c.h.b16 %v127
    %v1888 = vunpack.c.l.b16 %v128
    %v1889 = vunpack.c.h.b16 %v128
    %v1890 = vunpack.c.l.b16 %v129
    %v1891 = vunpack.c.h.b16 %v129
    %v1892 = vunpack.c.l.b16 %v130
    %v1893 = vunpack.c.h.b16 %v130
    %v1894 = vunpack.c.l.b16 %v131
    %v1895 = vunpack.c.h.b16 %v131
    %v1896 = vunpack.c.l.b16 %v132
    %v1897 = vunpack.c.h.b16 %v132
    %v1898 = vunpack.c.l.b16 %v133
    %v1899 = vunpack.c.h.b16 %v133
    %v1900 = vunpack.c.l.b16 %v134
    %v1901 = vunpack.c.h.b16 %v134
    %v1902 = vunpack.c.l.b16 %v135
    %v1903 = vunpack.c.h.b16 %v135
    %v1904 = vunpack.c.l.b16 %v136
    %v1905 = vunpack.c.h.b16 %v136
    %v1906 = vunpack.c.l.b16 %v137
    %v1907 = vunpack.c.h.b16 %v137
    %v1908 = vunpack.c.l.b16 %v138
    %v1909 = vunpack.c.h.b16 %v138
    %v1910 = vunpack.c.l.b16 %v139
    %v1911 = vunpack.c.h.b16 %v139
    %v1912 = vunpack.c.l.b16 %v140
    %v1913 = vunpack.c.h.b16 %v140
    %v1914 = vunpack.c.l.b16 %v141
    %v1915 = vunpack.c.h.b16 %v141
    %v1916 = vunpack.c.l.b16 %v142
    %v1917 = vunpack.c.h.b16 %v142
    %v1918 = vunpack.c.l.b16 %v143
    %v1919 = vunpack.c.h.b16 %v143
    %v1920 = vunpack.c.l.b16 %v144
    %v1921 = vunpack.c.h.b16 %v144
    %v1922 = vunpack.c.l.b16 %v145
    %v1923 = vunpack.c.h.b16 %v145
    %v1924 = vunpack.c.l.b16 %v146
    %v1925 = vunpack.c.h.b16 %v146
    %v1926 = vunpack.c.l.b16 %v147
    %v1927 = vunpack.c.h.b16 %v147
    %v1928 = vunpack.c.l.b16 %v148
    %v1929 = vunpack.c.h.b16 %v148
    %v1930 = vunpack.c.l.b16 %v149
    %v1931 = vunpack.c.h.b16 %v149
    %v1932 = vunpack.c.l.b16 %v150
    %v1933 = vunpack.c.h.b16 %v150
    %v1934 = vunpack.c.l.b16 %v151
    %v1935 = vunpack.c.h.b16 %v151
    %v1936 = vunpack.c.l.b16 %v152
    %v1937 = vunpack.c.h.b16 %v152
    %v1938 = vunpack.c.l.b16 %v153
    %v1939 = vunpack.c.h.b16 %v153
    %v1940 = vunpack.c.l.b16 %v154
    %v1941 = vunpack.c.h.b16 %v154
    %v1942 = vunpack.c.l.b16 %v155
    %v1943 = vunpack.c.h.b16 %v155
    %v1944 = vunpack.c.l.b16 %v156
    %v1945 = vunpack.c.h.b16 %v156
    %v1946 = vunpack.c.l.b16 %v157
    %v1947 = vunpack.c.h.b16 %v157
    %v1948 = vunpack.c.l.b16 %v158
    %v1949 = vunpack.c.h.b16 %v158
    %v1950 = vunpack.c.l.b16 %v159
    %v1951 = vunpack.c.h.b16 %v159
    %v1952 = vunpack.c.l.b16 %v160
    %v1953 = vunpack.c.h.b16 %v160
    %v1954 = vunpack.c.l.b16 %v161
    %v1955 = vunpack.c.h.b16 %v161
    %v1956 = vunpack.c.l.b16 %v162
    %v1957 = vunpack.c.h.b16 %v162
    %v1958 = vunpack.c.l.b16 %v163
    %v1959 = vunpack.c.h.b16 %v163
    %v1960 = vunpack.c.l.b16 %v164
    %v1961 = vunpack.c.h.b16 %v164
    %v1962 = vunpack.c.l.b16 %v165
    %v1963 = vunpack.c.h.b16 %v165
    %v1964 = vunpack.c.l.b16 %v166
    %v1965 = vunpack.c.h.b16 %v166
    %v1966 = vunpack.c.l.b16 %v167
    %v1967 = vunpack.c.h.b16 %v167
    %v1968 = vunpack.c.l.b16 %v168
    %v1969 = vunpack.c.h.b16 %v168
    %v1970 = vunpack.c.l.b16 %v169
    %v1971 = vunpack.c.h.b16 %v169
    %v1972 = vunpack.c.l.b16 %v170
    %v1973 = vunpack.c.h.b16 %v170
    %v1974 = vunpack.c.l.b16 %v171
    %v1975 = vunpack.c.h.b16 %v171
    %v1976 = vunpack.c.l.b16 %v172
    %v1977 = vunpack.c.h.b16 %v172
    %v1978 = vunpack.c.l.b16 %v173
    %v1979 = vunpack.c.h.b16 %v173
    %v1980 = vunpack.c.l.b16 %v174
    %v1981 = vunpack.c.h.b16 %v174
    %v1982 = vunpack.c.l.b16 %v175
    %v1983 = vunpack.c.h.b16 %v175
    %v1984 = vunpack.c.l.b16 %v176
    %v1985 = vunpack.c.h.b16 %v176
    %v1986 = vunpack.c.l.b16 %v177
    %v1987 = vunpack.c.h.b16 %v177
    %v1988 = vunpack.c.l.b16 %v178
    %v1989 = vunpack.c.h.b16 %v178
    %v1990 = vunpack.c.l.b16 %v179
    %v1991 = vunpack.c.h.b16 %v179
    %v1992 = vunpack.c.l.b16 %v180
    %v1993 = vunpack.c.h.b16 %v180
    %v1994 = vunpack.c.l.b16 %v181
    %v1995 = vunpack.c.h.b16 %v181
    %v1996 = vunpack.c.l.b16 %v182
    %v1997 = vunpack.c.h.b16 %v182
    %v1998 = vunpack.c.l.b16 %v183
    %v1999 = vunpack.c.h.b16 %v183
    %v2000 = vunpack.c.l.b16 %v184
    %v2001 = vunpack.c.h.b16 %v184
    %v2002 = vunpack.c.l.b16 %v185
    %v2003 = vunpack.c.h.b16 %v185
    %v2004 = vunpack.c.l.b16 %v186
    %v2005 = vunpack.c.h.b16 %v186
    %v2006 = vunpack.c.l.b16 %v187
    %v2007 = vunpack.c.h.b16 %v187
    %v2008 = vunpack.c.l.b16 %v188
    %v2009 = vunpack.c.h.b16 %v188
    %v2010 = vunpack.c.l.b16 %v189
    %v2011 = vunpack.c.h.b16 %v189
    %v2012 = vunpack.c.l.b16 %v190
    %v2013 = vunpack.c.h.b16 %v190
    %v2014 = vunpack.c.l.b16 %v191
    %v2015 = vunpack.c.h.b16 %v191
    %v2016 = vunpack.c.l.b16 %v192
    %v2017 = vunpack.c.h.b16 %v192
    %v2018 = vunpack.c.l.b16 %v193
    %v2019 = vunpack.c.h.b16 %v193
    %v2020 = vunpack.c.l.b16 %v194
    %v2021 = vunpack.c.h.b16 %v194
    %v2022 = vunpack.c.l.b16 %v195
    %v2023 = vunpack.c.h.b16 %v195
    %v2024 = vunpack.c.l.b16 %v196
    %v2025 = vunpack.c.h.b16 %v196
    %v2026 = vunpack.c.l.b16 %v197
    %v2027 = vunpack.c.h.b16 %v197
    %v2028 = vunpack.c.l.b16 %v198
    %v2029 = vunpack.c.h.b16 %v198
    %v2030 = vunpack.c.l.b16 %v199
    %v2031 = vunpack.c.h.b16 %v199
    %v2032 = vunpack.c.l.b16 %v200
    %v2033 = vunpack.c.h.b16 %v200
    %v2034 = vunpack.c.l.b16 %v201
    %v2035 = vunpack.c.h.b16 %v201
    %v2036 = vunpack.c.l.b16 %v202
    %v2037 = vunpack.c.h.b16 %v202
    %v2038 = vunpack.c.l.b16 %v203
    %v2039 = vunpack.c.h.b16 %v203
    %v2040 = vunpack.c.l.b16 %v204
    %v2041 = vunpack.c.h.b16 %v204
    %v2042 = vunpack.c.l.b16 %v205
    %v2043 = vunpack.c.h.b16 %v205
    %v2044 = vunpack.c.l.b16 %v206
    %v2045 = vunpack.c.h.b16 %v206
    %v2046 = vunpack.c.l.b16 %v207
    %v2047 = vunpack.c.h.b16 %v207
    %v2048 = vunpack.c.l.b16 %v208
    %v2049 = vunpack.c.h.b16 %v208
    %v2050 = vunpack.c.l.b16 %v209
    %v2051 = vunpack.c.h.b16 %v209
    %v2052 = vunpack.c.l.b16 %v210
    %v2053 = vunpack.c.h.b16 %v210
    %v2054 = vunpack.c.l.b16 %v211
    %v2055 = vunpack.c.h.b16 %v211
    %v2056 = vunpack.c.l.b16 %v212
    %v2057 = vunpack.c.h.b16 %v212
    %v2058 = vunpack.c.l.b16 %v213
    %v2059 = vunpack.c.h.b16 %v213
    %v2060 = vunpack.c.l.b16 %v214
    %v2061 = vunpack.c.h.b16 %v214
    %v2062 = vunpack.c.l.b16 %v215
    %v2063 = vunpack.c.h.b16 %v215
    %v2064 = vunpack.c.l.b16 %v216
    %v2065 = vunpack.c.h.b16 %v216
    %v2066 = vunpack.c.l.b16 %v217
    %v2067 = vunpack.c.h.b16 %v217
    %v2068 = vunpack.c.l.b16 %v218
    %v2069 = vunpack.c.h.b16 %v218
    %v2070 = vunpack.c.l.b16 %v219
    %v2071 = vunpack.c.h.b16 %v219
    %v2072 = vunpack.c.l.b16 %v220
    %v2073 = vunpack.c.h.b16 %v220
    %v2074 = vunpack.c.l.b16 %v221
    %v2075 = vunpack.c.h.b16 %v221
    %v2076 = vunpack.c.l.b16 %v222
    %v2077 = vunpack.c.h.b16 %v222
    %v2078 = vunpack.c.l.b16 %v223
    %v2079 = vunpack.c.h.b16 %v223
    %v2080 = vunpack.c.l.b16 %v224
    %v2081 = vunpack.c.h.b16 %v224
    %v2082 = vunpack.c.l.b16 %v225
    %v2083 = vunpack.c.h.b16 %v225
    %v2084 = vunpack.c.l.b16 %v226
    %v2085 = vunpack.c.h.b16 %v226
    %v2086 = vunpack.c.l.b16 %v227
    %v2087 = vunpack.c.h.b16 %v227
    %v2088 = vunpack.c.l.b16 %v228
    %v2089 = vunpack.c.h.b16 %v228
    %v2090 = vunpack.c.l.b16 %v229
    %v2091 = vunpack.c.h.b16 %v229
    %v2092 = vunpack.c.l.b16 %v230
    %v2093 = vunpack.c.h.b16 %v230
    %v2094 = vunpack.c.l.b16 %v231
    %v2095 = vunpack.c.h.b16 %v231
    %v2096 = vunpack.c.l.b16 %v232
    %v2097 = vunpack.c.h.b16 %v232
    %v2098 = vunpack.c.l.b16 %v233
    %v2099 = vunpack.c.h.b16 %v233
    %v2100 = vunpack.c.l.b16 %v234
    %v2101 = vunpack.c.h.b16 %v234
    %v2102 = vunpack.c.l.b16 %v235
    %v2103 = vunpack.c.h.b16 %v235
    %v2104 = vunpack.c.l.b16 %v236
    %v2105 = vunpack.c.h.b16 %v236
    %v2106 = vunpack.c.l.b16 %v237
    %v2107 = vunpack.c.h.b16 %v237
    %v2108 = vunpack.c.l.b16 %v238
    %v2109 = vunpack.c.h.b16 %v238
    %v2110 = vunpack.c.l.b16 %v239
    %v2111 = vunpack.c.h.b16 %v239
    %v2112 = vunpack.c.l.b16 %v240
    %v2113 = vunpack.c.h.b16 %v240
    %v2114 = vunpack.c.l.b16 %v241
    %v2115 = vunpack.c.h.b16 %v241
    %v2116 = vunpack.c.l.b16 %v242
    %v2117 = vunpack.c.h.b16 %v242
    %v2118 = vunpack.c.l.b16 %v243
    %v2119 = vunpack.c.h.b16 %v243
    %v2120 = vunpack.c.l.b16 %v244
    %v2121 = vunpack.c.h.b16 %v244
    %v2122 = vunpack.c.l.b16 %v245
    %v2123 = vunpack.c.h.b16 %v245
    %v2124 = vunpack.c.l.b16 %v246
    %v2125 = vunpack.c.h.b16 %v246
    %v2126 = vunpack.c.l.b16 %v247
    %v2127 = vunpack.c.h.b16 %v247
    %v2128 = vunpack.c.l.b16 %v248
    %v2129 = vunpack.c.h.b16 %v248
    %v2130 = vunpack.c.l.b16 %v249
    %v2131 = vunpack.c.h.b16 %v249
    %v2132 = vunpack.c.l.b16 %v250
    %v2133 = vunpack.c.h.b16 %v250
    %v2134 = vunpack.c.l.b16 %v251
    %v2135 = vunpack.c.h.b16 %v251
    %v2136 = vunpack.c.l.b16 %v252
    %v2137 = vunpack.c.h.b16 %v252
    %v2138 = vunpack.c.l.b16 %v253
    %v2139 = vunpack.c.h.b16 %v253
    %v2140 = vunpack.c.l.b16 %v254
    %v2141 = vunpack.c.h.b16 %v254
    %v2142 = vunpack.c.l.b16 %v255
    %v2143 = vunpack.c.h.b16 %v255
    %v2144 = vunpack.c.l.b16 %v256
    %v2145 = vunpack.c.h.b16 %v256
    %v2146 = vunpack.c.l.b16 %v257
    %v2147 = vunpack.c.h.b16 %v257
    %v2148 = vunpack.c.l.b16 %v258
    %v2149 = vunpack.c.h.b16 %v258
    %v2150 = vunpack.c.l.b16 %v259
    %v2151 = vunpack.c.h.b16 %v259
    %v2152 = vunpack.c.l.b16 %v260
    %v2153 = vunpack.c.h.b16 %v260
    %v2154 = vunpack.c.l.b16 %v261
    %v2155 = vunpack.c.h.b16 %v261
    %v2156 = vunpack.c.l.b16 %v262
    %v2157 = vunpack.c.h.b16 %v262
    %v2158 = vunpack.c.l.b16 %v263
    %v2159 = vunpack.c.h.b16 %v263
    %v2160 = vunpack.c.l.b16 %v264
    %v2161 = vunpack.c.h.b16 %v264
    %v2162 = vunpack.c.l.b16 %v265
    %v2163 = vunpack.c.h.b16 %v265
    %v2164 = vunpack.c.l.b16 %v266
    %v2165 = vunpack.c.h.b16 %v266
    %v2166 = vunpack.c.l.b16 %v267
    %v2167 = vunpack.c.h.b16 %v267
    %v2168 = vunpack.c.l.b16 %v268
    %v2169 = vunpack.c.h.b16 %v268
    %v2170 = vunpack.c.l.b16 %v269
    %v2171 = vunpack.c.h.b16 %v269
    %v2172 = vunpack.c.l.b16 %v270
    %v2173 = vunpack.c.h.b16 %v270
    %v2174 = vunpack.c.l.b16 %v271
    %v2175 = vunpack.c.h.b16 %v271
    %v2176 = vunpack.c.l.b16 %v272
    %v2177 = vunpack.c.h.b16 %v272
    %v2178 = vunpack.c.l.b16 %v273
    %v2179 = vunpack.c.h.b16 %v273
    %v2180 = vunpack.c.l.b16 %v274
    %v2181 = vunpack.c.h.b16 %v274
    %v2182 = vunpack.c.l.b16 %v275
    %v2183 = vunpack.c.h.b16 %v275
    %v2184 = vunpack.c.l.b16 %v276
    %v2185 = vunpack.c.h.b16 %v276
    %v2186 = vunpack.c.l.b16 %v277
    %v2187 = vunpack.c.h.b16 %v277
    %v2188 = vunpack.c.l.b16 %v278
    %v2189 = vunpack.c.h.b16 %v278
    %v2190 = vunpack.c.l.b16 %v279
    %v2191 = vunpack.c.h.b16 %v279
    %v2192 = vunpack.c.l.b16 %v280
    %v2193 = vunpack.c.h.b16 %v280
    %v2194 = vunpack.c.l.b16 %v281
    %v2195 = vunpack.c.h.b16 %v281
    %v2196 = vunpack.c.l.b16 %v282
    %v2197 = vunpack.c.h.b16 %v282
    %v2198 = vunpack.c.l.b16 %v283
    %v2199 = vunpack.c.h.b16 %v283
    %v2200 = vunpack.c.l.b16 %v284
    %v2201 = vunpack.c.h.b16 %v284
    %v2202 = vunpack.c.l.b16 %v285
    %v2203 = vunpack.c.h.b16 %v285
    %v2204 = vunpack.c.l.b16 %v286
    %v2205 = vunpack.c.h.b16 %v286
    %v2206 = vunpack.c.l.b16 %v287
    %v2207 = vunpack.c.h.b16 %v287
    %v2208 = vunpack.c.l.b16 %v288
    %v2209 = vunpack.c.h.b16 %v288
    %v2210 = vunpack.c.l.b16 %v289
    %v2211 = vunpack.c.h.b16 %v289
    %v2212 = vunpack.c.l.b16 %v290
    %v2213 = vunpack.c.h.b16 %v290
    %v2214 = vunpack.c.l.b16 %v291
    %v2215 = vunpack.c.h.b16 %v291
    %v2216 = vunpack.c.l.b16 %v292
    %v2217 = vunpack.c.h.b16 %v292
    %v2218 = vunpack.c.l.b16 %v293
    %v2219 = vunpack.c.h.b16 %v293
    %v2220 = vunpack.c.l.b16 %v294
    %v2221 = vunpack.c.h.b16 %v294
    %v2222 = vunpack.c.l.b16 %v295
    %v2223 = vunpack.c.h.b16 %v295
    %v2224 = vunpack.c.l.b16 %v296
    %v2225 = vunpack.c.h.b16 %v296
    %v2226 = vunpack.c.l.b16 %v297
    %v2227 = vunpack.c.h.b16 %v297
    %v2228 = vunpack.c.l.b16 %v298
    %v2229 = vunpack.c.h.b16 %v298
    %v2230 = vunpack.c.l.b16 %v299
    %v2231 = vunpack.c.h.b16 %v299
    %v2232 = vunpack.c.l.b16 %v300
    %v2233 = vunpack.c.h.b16 %v300
    %v2234 = vunpack.c.l.b16 %v301
    %v2235 = vunpack.c.h.b16 %v301
    %v2236 = vunpack.c.l.b16 %v302
    %v2237 = vunpack.c.h.b16 %v302
    %v2238 = vunpack.c.l.b16 %v303
    %v2239 = vunpack.c.h.b16 %v303
    %v2240 = vunpack.c.l.b16 %v304
    %v2241 = vunpack.c.h.b16 %v304
    %v2242 = vunpack.c.l.b16 %v305
    %v2243 = vunpack.c.h.b16 %v305
    %v2244 = vunpack.c.l.b16 %v306
    %v2245 = vunpack.c.h.b16 %v306
    %v2246 = vunpack.c.l.b16 %v307
    %v2247 = vunpack.c.h.b16 %v307
    %v2248 = vunpack.c.l.b16 %v308
    %v2249 = vunpack.c.h.b16 %v308
    %v2250 = vunpack.c.l.b16 %v309
    %v2251 = vunpack.c.h.b16 %v309
    %v2252 = vunpack.c.l.b16 %v310
    %v2253 = vunpack.c.h.b16 %v310
    %v2254 = vunpack.c.l.b16 %v311
    %v2255 = vunpack.c.h.b16 %v311
    %v2256 = vunpack.c.l.b16 %v312
    %v2257 = vunpack.c.h.b16 %v312
    %v2258 = vunpack.c.l.b16 %v313
    %v2259 = vunpack.c.h.b16 %v313
    %v2260 = vunpack.c.l.b16 %v314
    %v2261 = vunpack.c.h.b16 %v314
    %v2262 = vunpack.c.l.b16 %v315
    %v2263 = vunpack.c.h.b16 %v315
    %v2264 = vunpack.c.l.b16 %v316
    %v2265 = vunpack.c.h.b16 %v316
    %v2266 = vunpack.c.l.b16 %v317
    %v2267 = vunpack.c.h.b16 %v317
    %v2268 = vunpack.c.l.b16 %v318
    %v2269 = vunpack.c.h.b16 %v318
    %v2270 = vunpack.c.l.b16 %v319
    %v2271 = vunpack.c.h.b16 %v319
    %v2272 = vunpack.c.l.b16 %v320
    %v2273 = vunpack.c.h.b16 %v320
    %v2274 = vunpack.c.l.b16 %v321
    %v2275 = vunpack.c.h.b16 %v321
    %v2276 = vunpack.c.l.b16 %v322
    %v2277 = vunpack.c.h.b16 %v322
    %v2278 = vunpack.c.l.b16 %v323
    %v2279 = vunpack.c.h.b16 %v323
    %v2280 = vunpack.c.l.b16 %v324
    %v2281 = vunpack.c.h.b16 %v324
    %v2282 = vunpack.c.l.b16 %v325
    %v2283 = vunpack.c.h.b16 %v325
    %v2284 = vunpack.c.l.b16 %v326
    %v2285 = vunpack.c.h.b16 %v326
    %v2286 = vunpack.c.l.b16 %v327
    %v2287 = vunpack.c.h.b16 %v327
    %v2288 = vunpack.c.l.b16 %v328
    %v2289 = vunpack.c.h.b16 %v328
    %v2290 = vunpack.c.l.b16 %v329
    %v2291 = vunpack.c.h.b16 %v329
    %v2292 = vunpack.c.l.b16 %v330
    %v2293 = vunpack.c.h.b16 %v330
    %v2294 = vunpack.c.l.b16 %v331
    %v2295 = vunpack.c.h.b16 %v331
    %v2296 = vunpack.c.l.b16 %v332
    %v2297 = vunpack.c.h.b16 %v332
    %v2298 = vunpack.c.l.b16 %v333
    %v2299 = vunpack.c.h.b16 %v333
    %v2300 = vunpack.c.l.b16 %v334
    %v2301 = vunpack.c.h.b16 %v334
    %v2302 = vunpack.c.l.b16 %v335
    %v2303 = vunpack.c.h.b16 %v335
    %v2304 = vunpack.c.l.b16 %v336
    %v2305 = vunpack.c.h.b16 %v336
    %v2306 = vunpack.c.l.b16 %v337
    %v2307 = vunpack.c.h.b16 %v337
    %v2308 = vunpack.c.l.b16 %v338
    %v2309 = vunpack.c.h.b16 %v338
    %v2310 = vunpack.c.l.b16 %v339
    %v2311 = vunpack.c.h.b16 %v339
    %v2312 = vunpack.c.l.b16 %v340
    %v2313 = vunpack.c.h.b16 %v340
    %v2314 = vunpack.c.l.b16 %v341
    %v2315 = vunpack.c.h.b16 %v341
    %v2316 = vunpack.c.l.b16 %v342
    %v2317 = vunpack.c.h.b16 %v342
    %v2318 = vunpack.c.l.b16 %v343
    %v2319 = vunpack.c.h.b16 %v343
    %v2320 = vunpack.c.l.b16 %v344
    %v2321 = vunpack.c.h.b16 %v344
    %v2322 = vunpack.c.l.b16 %v345
    %v2323 = vunpack.c.h.b16 %v345
    %v2324 = vunpack.c.l.b16 %v346
    %v2325 = vunpack.c.h.b16 %v346
    %v2326 = vunpack.c.l.b16 %v347
    %v2327 = vunpack.c.h.b16 %v347
    %v2328 = vunpack.c.l.b16 %v348
    %v2329 = vunpack.c.h.b16 %v348
    %v2330 = vunpack.c.l.b16 %v349
    %v2331 = vunpack.c.h.b16 %v349
    %v2332 = vunpack.c.l.b16 %v350
    %v2333 = vunpack.c.h.b16 %v350
    %v2334 = vunpack.c.l.b16 %v351
    %v2335 = vunpack.c.h.b16 %v351
    %v2336 = vunpack.c.l.b16 %v352
    %v2337 = vunpack.c.h.b16 %v352
    %v2338 = vunpack.c.l.b16 %v353
    %v2339 = vunpack.c.h.b16 %v353
    %v2340 = vunpack.c.l.b16 %v354
    %v2341 = vunpack.c.h.b16 %v354
    %v2342 = vunpack.c.l.b16 %v355
    %v2343 = vunpack.c.h.b16 %v355
    %v2344 = vunpack.c.l.b16 %v356
    %v2345 = vunpack.c.h.b16 %v356
    %v2346 = vunpack.c.l.b16 %v357
    %v2347 = vunpack.c.h.b16 %v357
    %v2348 = vunpack.c.l.b16 %v358
    %v2349 = vunpack.c.h.b16 %v358
    %v2350 = vunpack.c.l.b16 %v359
    %v2351 = vunpack.c.h.b16 %v359
    %v2352 = vunpack.c.l.b16 %v360
    %v2353 = vunpack.c.h.b16 %v360
    %v2354 = vunpack.c.l.b16 %v361
    %v2355 = vunpack.c.h.b16 %v361
    %v2356 = vunpack.c.l.b16 %v362
    %v2357 = vunpack.c.h.b16 %v362
    %v2358 = vunpack.c.l.b16 %v363
    %v2359 = vunpack.c.h.b16 %v363
    %v2360 = vunpack.c.l.b16 %v364
    %v2361 = vunpack.c.h.b16 %v364
    %v2362 = vunpack.c.l.b16 %v365
    %v2363 = vunpack.c.h.b16 %v365
    %v2364 = vunpack.c.l.b16 %v366
    %v2365 = vunpack.c.h.b16 %v366
    %v2366 = vunpack.c.l.b16 %v367
    %v2367 = vunpack.c.h.b16 %v367
    %v2368 = vunpack.c.l.b16 %v368
    %v2369 = vunpack.c.h.b16 %v368
    %v2370 = vunpack.c.l.b16 %v369
    %v2371 = vunpack.c.h.b16 %v369
    %v2372 = vunpack.c.l.b16 %v370
    %v2373 = vunpack.c.h.b16 %v370
    %v2374 = vunpack.c.l.b16 %v371
    %v2375 = vunpack.c.h.b16 %v371
    %v2376 = vunpack.c.l.b16 %v372
    %v2377 = vunpack.c.h.b16 %v372
    %v2378 = vunpack.c.l.b16 %v373
    %v2379 = vunpack.c.h.b16 %v373
    %v2380 = vunpack.c.l.b16 %v374
    %v2381 = vunpack.c.h.b16 %v374
    %v2382 = vunpack.c.l.b16 %v375
    %v2383 = vunpack.c.h.b16 %v375
    %v2384 = vunpack.c.l.b16 %v376
    %v2385 = vunpack.c.h.b16 %v376
    %v2386 = vunpack.c.l.b16 %v377
    %v2387 = vunpack.c.h.b16 %v377
    %v2388 = vunpack.c.l.b16 %v378
    %v2389 = vunpack.c.h.b16 %v378
    %v2390 = vunpack.c.l.b16 %v379
    %v2391 = vunpack.c.h.b16 %v379
    %v2392 = vunpack.c.l.b16 %v380
    %v2393 = vunpack.c.h.b16 %v380
    %v2394 = vunpack.c.l.b16 %v381
    %v2395 = vunpack.c.h.b16 %v381
    %v2396 = vunpack.c.l.b16 %v382
    %v2397 = vunpack.c.h.b16 %v382
    %v2398 = vunpack.c.l.b16 %v383
    %v2399 = vunpack.c.h.b16 %v383
    %v2400 = vunpack.c.l.b16 %v384
    %v2401 = vunpack.c.h.b16 %v384
    %v2402 = vunpack.c.l.b16 %v385
    %v2403 = vunpack.c.h.b16 %v385
    %v2404 = vunpack.c.l.b16 %v386
    %v2405 = vunpack.c.h.b16 %v386
    %v2406 = vunpack.c.l.b16 %v387
    %v2407 = vunpack.c.h.b16 %v387
    %v2408 = vunpack.c.l.b16 %v388
    %v2409 = vunpack.c.h.b16 %v388
    %v2410 = vunpack.c.l.b16 %v389
    %v2411 = vunpack.c.h.b16 %v389
    %v2412 = vunpack.c.l.b16 %v390
    %v2413 = vunpack.c.h.b16 %v390
    %v2414 = vunpack.c.l.b16 %v391
    %v2415 = vunpack.c.h.b16 %v391
    %v2416 = vunpack.c.l.b16 %v392
    %v2417 = vunpack.c.h.b16 %v392
    %v2418 = vunpack.c.l.b16 %v393
    %v2419 = vunpack.c.h.b16 %v393
    %v2420 = vunpack.c.l.b16 %v394
    %v2421 = vunpack.c.h.b16 %v394
    %v2422 = vunpack.c.l.b16 %v395
    %v2423 = vunpack.c.h.b16 %v395
    %v2424 = vunpack.c.l.b16 %v396
    %v2425 = vunpack.c.h.b16 %v396
    %v2426 = vunpack.c.l.b16 %v397
    %v2427 = vunpack.c.h.b16 %v397
    %v2428 = vunpack.c.l.b16 %v398
    %v2429 = vunpack.c.h.b16 %v398
    %v2430 = vunpack.c.l.b16 %v399
    %v2431 = vunpack.c.h.b16 %v399
    %v2432 = vunpack.c.l.b16 %v400
    %v2433 = vunpack.c.h.b16 %v400
    %v2434 = vunpack.c.l.b16 %v401
    %v2435 = vunpack.c.h.b16 %v401
    %v2436 = vunpack.c.l.b16 %v402
    %v2437 = vunpack.c.h.b16 %v402
    %v2438 = vunpack.c.l.b16 %v403
    %v2439 = vunpack.c.h.b16 %v403
    %v2440 = vunpack.c.l.b16 %v404
    %v2441 = vunpack.c.h.b16 %v404
    %v2442 = vunpack.c.l.b16 %v405
    %v2443 = vunpack.c.h.b16 %v405
    %v2444 = vunpack.c.l.b16 %v406
    %v2445 = vunpack.c.h.b16 %v406
    %v2446 = vunpack.c.l.b16 %v407
    %v2447 = vunpack.c.h.b16 %v407
    %v2448 = vunpack.c.l.b16 %v408
    %v2449 = vunpack.c.h.b16 %v408
    %v2450 = vunpack.c.l.b16 %v409
    %v2451 = vunpack.c.h.b16 %v409
    %v2452 = vunpack.c.l.b16 %v410
    %v2453 = vunpack.c.h.b16 %v410
    %v2454 = vunpack.c.l.b16 %v411
    %v2455 = vunpack.c.h.b16 %v411
    %v2456 = vunpack.c.l.b16 %v412
    %v2457 = vunpack.c.h.b16 %v412
    %v2458 = vunpack.c.l.b16 %v413
    %v2459 = vunpack.c.h.b16 %v413
    %v2460 = vunpack.c.l.b16 %v414
    %v2461 = vunpack.c.h.b16 %v414
    %v2462 = vunpack.c.l.b16 %v415
    %v2463 = vunpack.c.h.b16 %v415
    %v2464 = vunpack.c.l.b16 %v416
    %v2465 = vunpack.c.h.b16 %v416
    %v2466 = vunpack.c.l.b16 %v417
    %v2467 = vunpack.c.h.b16 %v417
    %v2468 = vunpack.c.l.b16 %v418
    %v2469 = vunpack.c.h.b16 %v418
    %v2470 = vunpack.c.l.b16 %v419
    %v2471 = vunpack.c.h.b16 %v419
    %v2472 = vunpack.c.l.b16 %v420
    %v2473 = vunpack.c.h.b16 %v420
    %v2474 = vunpack.c.l.b16 %v421
    %v2475 = vunpack.c.h.b16 %v421
    %v2476 = vunpack.c.l.b16 %v422
    %v2477 = vunpack.c.h.b16 %v422
    %v2478 = vunpack.c.l.b16 %v423
    %v2479 = vunpack.c.h.b16 %v423
    %v2480 = vunpack.c.l.b16 %v424
    %v2481 = vunpack.c.h.b16 %v424
    %v2482 = vunpack.c.l.b16 %v425
    %v2483 = vunpack.c.h.b16 %v425
    %v2484 = vunpack.c.l.b16 %v426
    %v2485 = vunpack.c.h.b16 %v426
    %v2486 = vunpack.c.l.b16 %v427
    %v2487 = vunpack.c.h.b16 %v427
    %v2488 = vunpack.c.l.b16 %v428
    %v2489 = vunpack.c.h.b16 %v428
    %v2490 = vunpack.c.l.b16 %v429
    %v2491 = vunpack.c.h.b16 %v429
    %v2492 = vunpack.c.l.b16 %v430
    %v2493 = vunpack.c.h.b16 %v430
    %v2494 = vunpack.c.l.b16 %v431
    %v2495 = vunpack.c.h.b16 %v431
    %v2496 = vunpack.c.l.b16 %v432
    %v2497 = vunpack.c.h.b16 %v432
    %v2498 = vunpack.c.l.b16 %v433
    %v2499 = vunpack.c.h.b16 %v433
    %v2500 = vunpack.c.l.b16 %v434
    %v2501 = vunpack.c.h.b16 %v434
    %v2502 = vunpack.c.l.b16 %v435
    %v2503 = vunpack.c.h.b16 %v435
    %v2504 = vunpack.c.l.b16 %v436
    %v2505 = vunpack.c.h.b16 %v436
    %v2506 = vunpack.c.l.b16 %v437
    %v2507 = vunpack.c.h.b16 %v437
    %v2508 = vunpack.c.l.b16 %v438
    %v2509 = vunpack.c.h.b16 %v438
    %v2510 = vunpack.c.l.b16 %v439
    %v2511 = vunpack.c.h.b16 %v439
    %v2512 = vunpack.c.l.b16 %v440
    %v2513 = vunpack.c.h.b16 %v440
    %v2514 = vunpack.c.l.b16 %v441
    %v2515 = vunpack.c.h.b16 %v441
    %v2516 = vunpack.c.l.b16 %v442
    %v2517 = vunpack.c.h.b16 %v442
    %v2518 = vunpack.c.l.b16 %v443
    %v2519 = vunpack.c.h.b16 %v443
    %v2520 = vunpack.c.l.b16 %v444
    %v2521 = vunpack.c.h.b16 %v444
    %v2522 = vunpack.c.l.b16 %v445
    %v2523 = vunpack.c.h.b16 %v445
    %v2524 = vunpack.c.l.b16 %v446
    %v2525 = vunpack.c.h.b16 %v446
    %v2526 = vunpack.c.l.b16 %v447
    %v2527 = vunpack.c.h.b16 %v447
    %v2528 = vunpack.c.l.b16 %v448
    %v2529 = vunpack.c.h.b16 %v448
    %v2530 = vunpack.c.l.b16 %v449
    %v2531 = vunpack.c.h.b16 %v449
    %v2532 = vunpack.c.l.b16 %v450
    %v2533 = vunpack.c.h.b16 %v450
    %v2534 = vunpack.c.l.b16 %v451
    %v2535 = vunpack.c.h.b16 %v451
    %v2536 = vunpack.c.l.b16 %v452
    %v2537 = vunpack.c.h.b16 %v452
    %v2538 = vunpack.c.l.b16 %v453
    %v2539 = vunpack.c.h.b16 %v453
    %v2540 = vunpack.c.l.b16 %v454
    %v2541 = vunpack.c.h.b16 %v454
    %v2542 = vunpack.c.l.b16 %v455
    %v2543 = vunpack.c.h.b16 %v455
    %v2544 = vunpack.c.l.b16 %v456
    %v2545 = vunpack.c.h.b16 %v456
    %v2546 = vunpack.c.l.b16 %v457
    %v2547 = vunpack.c.h.b16 %v457
    %v2548 = vunpack.c.l.b16 %v458
    %v2549 = vunpack.c.h.b16 %v458
    %v2550 = vunpack.c.l.b16 %v459
    %v2551 = vunpack.c.h.b16 %v459
    %v2552 = vunpack.c.l.b16 %v460
    %v2553 = vunpack.c.h.b16 %v460
    %v2554 = vunpack.c.l.b16 %v461
    %v2555 = vunpack.c.h.b16 %v461
    %v2556 = vunpack.c.l.b16 %v462
    %v2557 = vunpack.c.h.b16 %v462
    %v2558 = vunpack.c.l.b16 %v463
    %v2559 = vunpack.c.h.b16 %v463
    %v2560 = vunpack.c.l.b16 %v464
    %v2561 = vunpack.c.h.b16 %v464
    %v2562 = vunpack.c.l.b16 %v465
    %v2563 = vunpack.c.h.b16 %v465
    %v2564 = vunpack.c.l.b16 %v466
    %v2565 = vunpack.c.h.b16 %v466
    %v2566 = vunpack.c.l.b16 %v467
    %v2567 = vunpack.c.h.b16 %v467
    %v2568 = vunpack.c.l.b16 %v468
    %v2569 = vunpack.c.h.b16 %v468
    %v2570 = vunpack.c.l.b16 %v469
    %v2571 = vunpack.c.h.b16 %v469
    %v2572 = vunpack.c.l.b16 %v470
    %v2573 = vunpack.c.h.b16 %v470
    %v2574 = vunpack.c.l.b16 %v471
    %v2575 = vunpack.c.h.b16 %v471
    %v2576 = vunpack.c.l.b16 %v472
    %v2577 = vunpack.c.h.b16 %v472
    %v2578 = vunpack.c.l.b16 %v473
    %v2579 = vunpack.c.h.b16 %v473
    %v2580 = vunpack.c.l.b16 %v474
    %v2581 = vunpack.c.h.b16 %v474
    %v2582 = vunpack.c.l.b16 %v475
    %v2583 = vunpack.c.h.b16 %v475
    %v2584 = vunpack.c.l.b16 %v476
    %v2585 = vunpack.c.h.b16 %v476
    %v2586 = vunpack.c.l.b16 %v477
    %v2587 = vunpack.c.h.b16 %v477
    %v2588 = vunpack.c.l.b16 %v478
    %v2589 = vunpack.c.h.b16 %v478
    %v2590 = vunpack.c.l.b16 %v479
    %v2591 = vunpack.c.h.b16 %v479
    %v2592 = vunpack.c.l.b16 %v480
    %v2593 = vunpack.c.h.b16 %v480
    %v2594 = vunpack.c.l.b16 %v481
    %v2595 = vunpack.c.h.b16 %v481
    %v2596 = vunpack.c.l.b16 %v482
    %v2597 = vunpack.c.h.b16 %v482
    %v2598 = vunpack.c.l.b16 %v483
    %v2599 = vunpack.c.h.b16 %v483
    %v2600 = vunpack.c.l.b16 %v484
    %v2601 = vunpack.c.h.b16 %v484
    %v2602 = vunpack.c.l.b16 %v485
    %v2603 = vunpack.c.h.b16 %v485
    %v2604 = vunpack.c.l.b16 %v486
    %v2605 = vunpack.c.h.b16 %v486
    %v2606 = vunpack.c.l.b16 %v487
    %v2607 = vunpack.c.h.b16 %v487
    %v2608 = vunpack.c.l.b16 %v488
    %v2609 = vunpack.c.h.b16 %v488
    %v2610 = vunpack.c.l.b16 %v489
    %v2611 = vunpack.c.h.b16 %v489
    %v2612 = vunpack.c.l.b16 %v490
    %v2613 = vunpack.c.h.b16 %v490
    %v2614 = vunpack.c.l.b16 %v491
    %v2615 = vunpack.c.h.b16 %v491
    %v2616 = vunpack.c.l.b16 %v492
    %v2617 = vunpack.c.h.b16 %v492
    %v2618 = vunpack.c.l.b16 %v493
    %v2619 = vunpack.c.h.b16 %v493
    %v2620 = vunpack.c.l.b16 %v494
    %v2621 = vunpack.c.h.b16 %v494
    %v2622 = vunpack.c.l.b16 %v495
    %v2623 = vunpack.c.h.b16 %v495
    %v2624 = vunpack.c.l.b16 %v496
    %v2625 = vunpack.c.h.b16 %v496
    %v2626 = vunpack.c.l.b16 %v497
    %v2627 = vunpack.c.h.b16 %v497
    %v2628 = vunpack.c.l.b16 %v498
    %v2629 = vunpack.c.h.b16 %v498
    %v2630 = vunpack.c.l.b16 %v499
    %v2631 = vunpack.c.h.b16 %v499
    %v2632 = vunpack.c.l.b16 %v500
    %v2633 = vunpack.c.h.b16 %v500
    %v2634 = vunpack.c.l.b16 %v501
    %v2635 = vunpack.c.h.b16 %v501
    %v2636 = vunpack.c.l.b16 %v502
    %v2637 = vunpack.c.h.b16 %v502
    %v2638 = vunpack.c.l.b16 %v503
    %v2639 = vunpack.c.h.b16 %v503
    %v2640 = vunpack.c.l.b16 %v504
    %v2641 = vunpack.c.h.b16 %v504
    %v2642 = vunpack.c.l.b16 %v505
    %v2643 = vunpack.c.h.b16 %v505
    %v2644 = vunpack.c.l.b16 %v506
    %v2645 = vunpack.c.h.b16 %v506
    %v2646 = vunpack.c.l.b16 %v507
    %v2647 = vunpack.c.h.b16 %v507
    %v2648 = vunpack.c.l.b16 %v508
    %v2649 = vunpack.c.h.b16 %v508
    %v2650 = vunpack.c.l.b16 %v509
    %v2651 = vunpack.c.h.b16 %v509
    %v2652 = vunpack.c.l.b16 %v510
    %v2653 = vunpack.c.h.b16 %v510
    %v2654 = vunpack.c.l.b16 %v511
    %v2655 = vunpack.c.h.b16 %v511
    %v2656 = vunpack.c.l.b16 %v512
    %v2657 = vunpack.c.h.b16 %v512
    %v2658 = vunpack.c.l.b16 %v513
    %v2659 = vunpack.c.h.b16 %v513
    %v2660 = vunpack.c.l.b16 %v514
    %v2661 = vunpack.c.h.b16 %v514
    %v2662 = vunpack.c.l.b16 %v515
    %v2663 = vunpack.c.h.b16 %v515
    %v2664 = vunpack.c.l.b16 %v516
    %v2665 = vunpack.c.h.b16 %v516
    %v2666 = vunpack.c.l.b16 %v517
    %v2667 = vunpack.c.h.b16 %v517
    %v2668 = vunpack.c.l.b16 %v518
    %v2669 = vunpack.c.h.b16 %v518
    %v2670 = vunpack.c.l.b16 %v519
    %v2671 = vunpack.c.h.b16 %v519
    %v2672 = vunpack.c.l.b16 %v520
    %v2673 = vunpack.c.h.b16 %v520
    %v2674 = vunpack.c.l.b16 %v521
    %v2675 = vunpack.c.h.b16 %v521
    %v2676 = vunpack.c.l.b16 %v522
    %v2677 = vunpack.c.h.b16 %v522
    %v2678 = vunpack.c.l.b16 %v523
    %v2679 = vunpack.c.h.b16 %v523
    %v2680 = vunpack.c.l.b16 %v524
    %v2681 = vunpack.c.h.b16 %v524
    %v2682 = vunpack.c.l.b16 %v525
    %v2683 = vunpack.c.h.b16 %v525
    %v2684 = vunpack.c.l.b16 %v526
    %v2685 = vunpack.c.h.b16 %v526
    %v2686 = vunpack.c.l.b16 %v527
    %v2687 = vunpack.c.h.b16 %v527
    %v2688 = vunpack.c.l.b16 %v528
    %v2689 = vunpack.c.h.b16 %v528
    %v2690 = vunpack.c.l.b16 %v529
    %v2691 = vunpack.c.h.b16 %v529
    %v2692 = vunpack.c.l.b16 %v530
    %v2693 = vunpack.c.h.b16 %v530
    %v2694 = vunpack.c.l.b16 %v531
    %v2695 = vunpack.c.h.b16 %v531
    %v2696 = vunpack.c.l.b16 %v532
    %v2697 = vunpack.c.h.b16 %v532
    %v2698 = vunpack.c.l.b16 %v533
    %v2699 = vunpack.c.h.b16 %v533
    %v2700 = vunpack.c.l.b16 %v534
    %v2701 = vunpack.c.h.b16 %v534
    %v2702 = vunpack.c.l.b16 %v535
    %v2703 = vunpack.c.h.b16 %v535
    %v2704 = vunpack.c.l.b16 %v536
    %v2705 = vunpack.c.h.b16 %v536
    %v2706 = vunpack.c.l.b16 %v537
    %v2707 = vunpack.c.h.b16 %v537
    %v2708 = vunpack.c.l.b16 %v538
    %v2709 = vunpack.c.h.b16 %v538
    %v2710 = vunpack.c.l.b16 %v539
    %v2711 = vunpack.c.h.b16 %v539
    %v2712 = vunpack.c.l.b16 %v540
    %v2713 = vunpack.c.h.b16 %v540
    %v2714 = vunpack.c.l.b16 %v541
    %v2715 = vunpack.c.h.b16 %v541
    %v2716 = vunpack.c.l.b16 %v542
    %v2717 = vunpack.c.h.b16 %v542
    %v2718 = vunpack.c.l.b16 %v543
    %v2719 = vunpack.c.h.b16 %v543
    %v2720 = vunpack.c.l.b16 %v544
    %v2721 = vunpack.c.h.b16 %v544
    %v2722 = vunpack.c.l.b16 %v545
    %v2723 = vunpack.c.h.b16 %v545
    %v2724 = vunpack.c.l.b16 %v546
    %v2725 = vunpack.c.h.b16 %v546
    %v2726 = vunpack.c.l.b16 %v547
    %v2727 = vunpack.c.h.b16 %v547
    %v2728 = vunpack.c.l.b16 %v548
    %v2729 = vunpack.c.h.b16 %v548
    %v2730 = vunpack.c.l.b16 %v549
    %v2731 = vunpack.c.h.b16 %v549
    %v2732 = vunpack.c.l.b16 %v550
    %v2733 = vunpack.c.h.b16 %v550
    %v2734 = vunpack.c.l.b16 %v551
    %v2735 = vunpack.c.h.b16 %v551
    %v2736 = vunpack.c.l.b16 %v552
    %v2737 = vunpack.c.h.b16 %v552
    %v2738 = vunpack.c.l.b16 %v553
    %v2739 = vunpack.c.h.b16 %v553
    %v2740 = vunpack.c.l.b16 %v554
    %v2741 = vunpack.c.h.b16 %v554
    %v2742 = vunpack.c.l.b16 %v555
    %v2743 = vunpack.c.h.b16 %v555
    %v2744 = vunpack.c.l.b16 %v556
    %v2745 = vunpack.c.h.b16 %v556
    %v2746 = vunpack.c.l.b16 %v557
    %v2747 = vunpack.c.h.b16 %v557
    %v2748 = vunpack.c.l.b16 %v558
    %v2749 = vunpack.c.h.b16 %v558
    %v2750 = vunpack.c.l.b16 %v559
    %v2751 = vunpack.c.h.b16 %v559
    %v2752 = vunpack.c.l.b16 %v560
    %v2753 = vunpack.c.h.b16 %v560
    %v2754 = vunpack.c.l.b16 %v561
    %v2755 = vunpack.c.h.b16 %v561
    %v2756 = vunpack.c.l.b16 %v562
    %v2757 = vunpack.c.h.b16 %v562
    %v2758 = vunpack.c.l.b16 %v563
    %v2759 = vunpack.c.h.b16 %v563
    %v2760 = vunpack.c.l.b16 %v564
    %v2761 = vunpack.c.h.b16 %v564
    %v2762 = vunpack.c.l.b16 %v565
    %v2763 = vunpack.c.h.b16 %v565
    %v2764 = vunpack.c.l.b16 %v566
    %v2765 = vunpack.c.h.b16 %v566
    %v2766 = vunpack.c.l.b16 %v567
    %v2767 = vunpack.c.h.b16 %v567
    %v2768 = vunpack.c.l.b16 %v568
    %v2769 = vunpack.c.h.b16 %v568
    %v2770 = vunpack.c.l.b16 %v569
    %v2771 = vunpack.c.h.b16 %v569
    %v2772 = vunpack.c.l.b16 %v570
    %v2773 = vunpack.c.h.b16 %v570
    %v2774 = vunpack.c.l.b16 %v571
    %v2775 = vunpack.c.h.b16 %v571
    %v2776 = vunpack.c.l.b16 %v572
    %v2777 = vunpack.c.h.b16 %v572
    %v2778 = vunpack.c.l.b16 %v573
    %v2779 = vunpack.c.h.b16 %v573
    %v2780 = vunpack.c.l.b16 %v574
    %v2781 = vunpack.c.h.b16 %v574
    %v2782 = vunpack.c.l.b16 %v575
    %v2783 = vunpack.c.h.b16 %v575
    %v2784 = vunpack.c.l.b16 %v576
    %v2785 = vunpack.c.h.b16 %v576
    %v2786 = vunpack.c.l.b16 %v577
    %v2787 = vunpack.c.h.b16 %v577
    %v2788 = vunpack.c.l.b16 %v578
    %v2789 = vunpack.c.h.b16 %v578
    %v2790 = vunpack.c.l.b16 %v579
    %v2791 = vunpack.c.h.b16 %v579
    %v2792 = vunpack.c.l.b16 %v580
    %v2793 = vunpack.c.h.b16 %v580
    %v2794 = vunpack.c.l.b16 %v581
    %v2795 = vunpack.c.h.b16 %v581
    %v2796 = vunpack.c.l.b16 %v582
    %v2797 = vunpack.c.h.b16 %v582
    %v2798 = vunpack.c.l.b16 %v583
    %v2799 = vunpack.c.h.b16 %v583
    %v2800 = vunpack.c.l.b16 %v584
    %v2801 = vunpack.c.h.b16 %v584
    %v2802 = vunpack.c.l.b16 %v585
    %v2803 = vunpack.c.h.b16 %v585
    %v2804 = vunpack.c.l.b16 %v586
    %v2805 = vunpack.c.h.b16 %v586
    %v2806 = vunpack.c.l.b16 %v587
    %v2807 = vunpack.c.h.b16 %v587
    %v2808 = vunpack.c.l.b16 %v588
    %v2809 = vunpack.c.h.b16 %v588
    %v2810 = vunpack.c.l.b16 %v589
    %v2811 = vunpack.c.h.b16 %v589
    %v2812 = vunpack.c.l.b16 %v590
    %v2813 = vunpack.c.h.b16 %v590
    %v2814 = vunpack.c.l.b16 %v591
    %v2815 = vunpack.c.h.b16 %v591
    %v2816 = vunpack.c.l.b16 %v592
    %v2817 = vunpack.c.h.b16 %v592
    %v2818 = vunpack.c.l.b16 %v593
    %v2819 = vunpack.c.h.b16 %v593
    %v2820 = vunpack.c.l.b16 %v594
    %v2821 = vunpack.c.h.b16 %v594
    %v2822 = vunpack.c.l.b16 %v595
    %v2823 = vunpack.c.h.b16 %v595
    %v2824 = vunpack.c.l.b16 %v596
    %v2825 = vunpack.c.h.b16 %v596
    %v2826 = vunpack.c.l.b16 %v597
    %v2827 = vunpack.c.h.b16 %v597
    %v2828 = vunpack.c.l.b16 %v598
    %v2829 = vunpack.c.h.b16 %v598
    %v2830 = vunpack.c.l.b16 %v599
    %v2831 = vunpack.c.h.b16 %v599
    %v2832 = vunpack.c.l.b16 %v600
    %v2833 = vunpack.c.h.b16 %v600
    %v2834 = vunpack.c.l.b16 %v601
    %v2835 = vunpack.c.h.b16 %v601
    %v2836 = vunpack.c.l.b16 %v602
    %v2837 = vunpack.c.h.b16 %v602
    %v2838 = vunpack.c.l.b16 %v603
    %v2839 = vunpack.c.h.b16 %v603
    %v2840 = vunpack.c.l.b16 %v604
    %v2841 = vunpack.c.h.b16 %v604
    %v2842 = vunpack.c.l.b16 %v605
    %v2843 = vunpack.c.h.b16 %v605
    %v2844 = vunpack.c.l.b16 %v606
    %v2845 = vunpack.c.h.b16 %v606
    %v2846 = vunpack.c.l.b16 %v607
    %v2847 = vunpack.c.h.b16 %v607
    %v2848 = vunpack.c.l.b16 %v608
    %v2849 = vunpack.c.h.b16 %v608
    %v2850 = vunpack.c.l.b16 %v609
    %v2851 = vunpack.c.h.b16 %v609
    %v2852 = vunpack.c.l.b16 %v610
    %v2853 = vunpack.c.h.b16 %v610
    %v2854 = vunpack.c.l.b16 %v611
    %v2855 = vunpack.c.h.b16 %v611
    %v2856 = vunpack.c.l.b16 %v612
    %v2857 = vunpack.c.h.b16 %v612
    %v2858 = vunpack.c.l.b16 %v613
    %v2859 = vunpack.c.h.b16 %v613
    %v2860 = vunpack.c.l.b16 %v614
    %v2861 = vunpack.c.h.b16 %v614
    %v2862 = vunpack.c.l.b16 %v615
    %v2863 = vunpack.c.h.b16 %v615
    %v2864 = vunpack.c.l.b16 %v616
    %v2865 = vunpack.c.h.b16 %v616
    %v2866 = vunpack.c.l.b16 %v617
    %v2867 = vunpack.c.h.b16 %v617
    %v2868 = vunpack.c.l.b16 %v618
    %v2869 = vunpack.c.h.b16 %v618
    %v2870 = vunpack.c.l.b16 %v619
    %v2871 = vunpack.c.h.b16 %v619
    %v2872 = vunpack.c.l.b16 %v620
    %v2873 = vunpack.c.h.b16 %v620
    %v2874 = vunpack.c.l.b16 %v621
    %v2875 = vunpack.c.h.b16 %v621
    %v2876 = vunpack.c.l.b16 %v622
    %v2877 = vunpack.c.h.b16 %v622
    %v2878 = vunpack.c.l.b16 %v623
    %v2879 = vunpack.c.h.b16 %v623
    %v2880 = vunpack.c.l.b16 %v624
    %v2881 = vunpack.c.h.b16 %v624
    %v2882 = vunpack.c.l.b16 %v625
    %v2883 = vunpack.c.h.b16 %v625
    %v2884 = vunpack.c.l.b16 %v626
    %v2885 = vunpack.c.h.b16 %v626
    %v2886 = vunpack.c.l.b16 %v627
    %v2887 = vunpack.c.h.b16 %v627
    %v2888 = vunpack.c.l.b16 %v628
    %v2889 = vunpack.c.h.b16 %v628
    %v2890 = vunpack.c.l.b16 %v629
    %v2891 = vunpack.c.h.b16 %v629
    %v2892 = vunpack.c.l.b16 %v630
    %v2893 = vunpack.c.h.b16 %v630
    %v2894 = vunpack.c.l.b16 %v631
    %v2895 = vunpack.c.h.b16 %v631
    %v2896 = vunpack.c.l.b16 %v632
    %v2897 = vunpack.c.h.b16 %v632
    %v2898 = vunpack.c.l.b16 %v633
    %v2899 = vunpack.c.h.b16 %v633
    %v2900 = vunpack.c.l.b16 %v634
    %v2901 = vunpack.c.h.b16 %v634
    %v2902 = vunpack.c.l.b16 %v635
    %v2903 = vunpack.c.h.b16 %v635
    %v2904 = vunpack.c.l.b16 %v636
    %v2905 = vunpack.c.h.b16 %v636
    %v2906 = vunpack.c.l.b16 %v637
    %v2907 = vunpack.c.h.b16 %v637
    %v2908 = vunpack.c.l.b16 %v638
    %v2909 = vunpack.c.h.b16 %v638
    %v2910 = vunpack.c.l.b16 %v639
    %v2911 = vunpack.c.h.b16 %v639
    %v2912 = vunpack.c.l.b16 %v640
    %v2913 = vunpack.c.h.b16 %v640
    %v2914 = vunpack.c.l.b16 %v641
    %v2915 = vunpack.c.h.b16 %v641
    %v2916 = vunpack.c.l.b16 %v642
    %v2917 = vunpack.c.h.b16 %v642
    %v2918 = vunpack.c.l.b16 %v643
    %v2919 = vunpack.c.h.b16 %v643
    %v2920 = vunpack.c.l.b16 %v644
    %v2921 = vunpack.c.h.b16 %v644
    %v2922 = vunpack.c.l.b16 %v645
    %v2923 = vunpack.c.h.b16 %v645
    %v2924 = vunpack.c.l.b16 %v646
    %v2925 = vunpack.c.h.b16 %v646
    %v2926 = vunpack.c.l.b16 %v647
    %v2927 = vunpack.c.h.b16 %v647
    %v2928 = vunpack.c.l.b16 %v648
    %v2929 = vunpack.c.h.b16 %v648
    %v2930 = vunpack.c.l.b16 %v649
    %v2931 = vunpack.c.h.b16 %v649
    %v2932 = vunpack.c.l.b16 %v650
    %v2933 = vunpack.c.h.b16 %v650
    %v2934 = vunpack.c.l.b16 %v651
    %v2935 = vunpack.c.h.b16 %v651
    %v2936 = vunpack.c.l.b16 %v652
    %v2937 = vunpack.c.h.b16 %v652
    %v2938 = vunpack.c.l.b16 %v653
    %v2939 = vunpack.c.h.b16 %v653
    %v2940 = vunpack.c.l.b16 %v654
    %v2941 = vunpack.c.h.b16 %v654
    %v2942 = vunpack.c.l.b16 %v655
    %v2943 = vunpack.c.h.b16 %v655
    %v2944 = vunpack.c.l.b16 %v656
    %v2945 = vunpack.c.h.b16 %v656
    %v2946 = vunpack.c.l.b16 %v657
    %v2947 = vunpack.c.h.b16 %v657
    %v2948 = vunpack.c.l.b16 %v658
    %v2949 = vunpack.c.h.b16 %v658
    %v2950 = vunpack.c.l.b16 %v659
    %v2951 = vunpack.c.h.b16 %v659
    %v2952 = vunpack.c.l.b16 %v660
    %v2953 = vunpack.c.h.b16 %v660
    %v2954 = vunpack.c.l.b16 %v661
    %v2955 = vunpack.c.h.b16 %v661
    %v2956 = vunpack.c.l.b16 %v662
    %v2957 = vunpack.c.h.b16 %v662
    %v2958 = vunpack.c.l.b16 %v663
    %v2959 = vunpack.c.h.b16 %v663
    %v2960 = vunpack.c.l.b16 %v664
    %v2961 = vunpack.c.h.b16 %v664
    %v2962 = vunpack.c.l.b16 %v665
    %v2963 = vunpack.c.h.b16 %v665
    %v2964 = vunpack.c.l.b16 %v666
    %v2965 = vunpack.c.h.b16 %v666
    %v2966 = vunpack.c.l.b16 %v667
    %v2967 = vunpack.c.h.b16 %v667
    %v2968 = vunpack.c.l.b16 %v668
    %v2969 = vunpack.c.h.b16 %v668
    %v2970 = vunpack.c.l.b16 %v669
    %v2971 = vunpack.c.h.b16 %v669
    %v2972 = vunpack.c.l.b16 %v670
    %v2973 = vunpack.c.h.b16 %v670
    %v2974 = vunpack.c.l.b16 %v671
    %v2975 = vunpack.c.h.b16 %v671
    %v2976 = vunpack.c.l.b16 %v672
    %v2977 = vunpack.c.h.b16 %v672
    %v2978 = vunpack.c.l.b16 %v673
    %v2979 = vunpack.c.h.b16 %v673
    %v2980 = vunpack.c.l.b16 %v674
    %v2981 = vunpack.c.h.b16 %v674
    %v2982 = vunpack.c.l.b16 %v675
    %v2983 = vunpack.c.h.b16 %v675
    %v2984 = vunpack.c.l.b16 %v676
    %v2985 = vunpack.c.h.b16 %v676
    %v2986 = vunpack.c.l.b16 %v677
    %v2987 = vunpack.c.h.b16 %v677
    %v2988 = vunpack.c.l.b16 %v678
    %v2989 = vunpack.c.h.b16 %v678
    %v2990 = vunpack.c.l.b16 %v679
    %v2991 = vunpack.c.h.b16 %v679
    %v2992 = vunpack.c.l.b16 %v680
    %v2993 = vunpack.c.h.b16 %v680
    %v2994 = vunpack.c.l.b16 %v681
    %v2995 = vunpack.c.h.b16 %v681
    %v2996 = vunpack.c.l.b16 %v682
    %v2997 = vunpack.c.h.b16 %v682
    %v2998 = vunpack.c.l.b16 %v683
    %v2999 = vunpack.c.h.b16 %v683
    %v3000 = vunpack.c.l.b16 %v684
    %v3001 = vunpack.c.h.b16 %v684
    %v3002 = vunpack.c.l.b16 %v685
    %v3003 = vunpack.c.h.b16 %v685
    %v3004 = vunpack.c.l.b16 %v686
    %v3005 = vunpack.c.h.b16 %v686
    %v3006 = vunpack.c.l.b16 %v687
    %v3007 = vunpack.c.h.b16 %v687
    %v3008 = vunpack.c.l.b16 %v688
    %v3009 = vunpack.c.h.b16 %v688
    %v3010 = vunpack.c.l.b16 %v689
    %v3011 = vunpack.c.h.b16 %v689
    %v3012 = vunpack.c.l.b16 %v690
    %v3013 = vunpack.c.h.b16 %v690
    %v3014 = vunpack.c.l.b16 %v691
    %v3015 = vunpack.c.h.b16 %v691
    %v3016 = vunpack.c.l.b16 %v692
    %v3017 = vunpack.c.h.b16 %v692
    %v3018 = vunpack.c.l.b16 %v693
    %v3019 = vunpack.c.h.b16 %v693
    %v3020 = vunpack.c.l.b16 %v694
    %v3021 = vunpack.c.h.b16 %v694
    %v3022 = vunpack.c.l.b16 %v695
    %v3023 = vunpack.c.h.b16 %v695
    %v3024 = vunpack.c.l.b16 %v696
    %v3025 = vunpack.c.h.b16 %v696
    %v3026 = vunpack.c.l.b16 %v697
    %v3027 = vunpack.c.h.b16 %v697
    %v3028 = vunpack.c.l.b16 %v698
    %v3029 = vunpack.c.h.b16 %v698
    %v3030 = vunpack.c.l.b16 %v699
    %v3031 = vunpack.c.h.b16 %v699
    %v3032 = vunpack.c.l.b16 %v700
    %v3033 = vunpack.c.h.b16 %v700
    %v3034 = vunpack.c.l.b16 %v701
    %v3035 = vunpack.c.h.b16 %v701
    %v3036 = vunpack.c.l.b16 %v702
    %v3037 = vunpack.c.h.b16 %v702
    %v3038 = vunpack.c.l.b16 %v703
    %v3039 = vunpack.c.h.b16 %v703
    %v3040 = vunpack.c.l.b16 %v704
    %v3041 = vunpack.c.h.b16 %v704
    %v3042 = vunpack.c.l.b16 %v705
    %v3043 = vunpack.c.h.b16 %v705
    %v3044 = vunpack.c.l.b16 %v706
    %v3045 = vunpack.c.h.b16 %v706
    %v3046 = vunpack.c.l.b16 %v707
    %v3047 = vunpack.c.h.b16 %v707
    %v3048 = vunpack.c.l.b16 %v708
    %v3049 = vunpack.c.h.b16 %v708
    %v3050 = vunpack.c.l.b16 %v709
    %v3051 = vunpack.c.h.b16 %v709
    %v3052 = vunpack.c.l.b16 %v710
    %v3053 = vunpack.c.h.b16 %v710
    %v3054 = vunpack.c.l.b16 %v711
    %v3055 = vunpack.c.h.b16 %v711
    %v3056 = vunpack.c.l.b16 %v712
    %v3057 = vunpack.c.h.b16 %v712
    %v3058 = vunpack.c.l.b16 %v713
    %v3059 = vunpack.c.h.b16 %v713
    %v3060 = vunpack.c.l.b16 %v714
    %v3061 = vunpack.c.h.b16 %v714
    %v3062 = vunpack.c.l.b16 %v715
    %v3063 = vunpack.c.h.b16 %v715
    %v3064 = vunpack.c.l.b16 %v716
    %v3065 = vunpack.c.h.b16 %v716
    %v3066 = vunpack.c.l.b16 %v717
    %v3067 = vunpack.c.h.b16 %v717
    %v3068 = vunpack.c.l.b16 %v718
    %v3069 = vunpack.c.h.b16 %v718
    %v3070 = vunpack.c.l.b16 %v719
    %v3071 = vunpack.c.h.b16 %v719
    %v3072 = vunpack.c.l.b16 %v720
    %v3073 = vunpack.c.h.b16 %v720
    %v3074 = vunpack.c.l.b16 %v721
    %v3075 = vunpack.c.h.b16 %v721
    %v3076 = vunpack.c.l.b16 %v722
    %v3077 = vunpack.c.h.b16 %v722
    %v3078 = vunpack.c.l.b16 %v723
    %v3079 = vunpack.c.h.b16 %v723
    %v3080 = vunpack.c.l.b16 %v724
    %v3081 = vunpack.c.h.b16 %v724
    %v3082 = vunpack.c.l.b16 %v725
    %v3083 = vunpack.c.h.b16 %v725
    %v3084 = vunpack.c.l.b16 %v726
    %v3085 = vunpack.c.h.b16 %v726
    %v3086 = vunpack.c.l.b16 %v727
    %v3087 = vunpack.c.h.b16 %v727
    %v3088 = vunpack.c.l.b16 %v728
    %v3089 = vunpack.c.h.b16 %v728
    %v3090 = vunpack.c.l.b16 %v729
    %v3091 = vunpack.c.h.b16 %v729
    %v3092 = vunpack.c.l.b16 %v730
    %v3093 = vunpack.c.h.b16 %v730
    %v3094 = vunpack.c.l.b16 %v731
    %v3095 = vunpack.c.h.b16 %v731
    %v3096 = vunpack.c.l.b16 %v732
    %v3097 = vunpack.c.h.b16 %v732
    %v3098 = vunpack.c.l.b16 %v733
    %v3099 = vunpack.c.h.b16 %v733
    %v3100 = vunpack.c.l.b16 %v734
    %v3101 = vunpack.c.h.b16 %v734
    %v3102 = vunpack.c.l.b16 %v735
    %v3103 = vunpack.c.h.b16 %v735
    %v3104 = vunpack.c.l.b16 %v736
    %v3105 = vunpack.c.h.b16 %v736
    %v3106 = vunpack.c.l.b16 %v737
    %v3107 = vunpack.c.h.b16 %v737
    %v3108 = vunpack.c.l.b16 %v738
    %v3109 = vunpack.c.h.b16 %v738
    %v3110 = vunpack.c.l.b16 %v739
    %v3111 = vunpack.c.h.b16 %v739
    %v3112 = vunpack.c.l.b16 %v740
    %v3113 = vunpack.c.h.b16 %v740
    %v3114 = vunpack.c.l.b16 %v741
    %v3115 = vunpack.c.h.b16 %v741
    %v3116 = vunpack.c.l.b16 %v742
    %v3117 = vunpack.c.h.b16 %v742
    %v3118 = vunpack.c.l.b16 %v743
    %v3119 = vunpack.c.h.b16 %v743
    %v3120 = vunpack.c.l.b16 %v744
    %v3121 = vunpack.c.h.b16 %v744
    %v3122 = vunpack.c.l.b16 %v745
    %v3123 = vunpack.c.h.b16 %v745
    %v3124 = vunpack.c.l.b16 %v746
    %v3125 = vunpack.c.h.b16 %v746
    %v3126 = vunpack.c.l.b16 %v747
    %v3127 = vunpack.c.h.b16 %v747
    %v3128 = vunpack.c.l.b16 %v748
    %v3129 = vunpack.c.h.b16 %v748
    %v3130 = vunpack.c.l.b16 %v749
    %v3131 = vunpack.c.h.b16 %v749
    %v3132 = vunpack.c.l.b16 %v750
    %v3133 = vunpack.c.h.b16 %v750
    %v3134 = vunpack.c.l.b16 %v751
    %v3135 = vunpack.c.h.b16 %v751
    %v3136 = vunpack.c.l.b16 %v752
    %v3137 = vunpack.c.h.b16 %v752
    %v3138 = vunpack.c.l.b16 %v753
    %v3139 = vunpack.c.h.b16 %v753
    %v3140 = vunpack.c.l.b16 %v754
    %v3141 = vunpack.c.h.b16 %v754
    %v3142 = vunpack.c.l.b16 %v755
    %v3143 = vunpack.c.h.b16 %v755
    %v3144 = vunpack.c.l.b16 %v756
    %v3145 = vunpack.c.h.b16 %v756
    %v3146 = vunpack.c.l.b16 %v757
    %v3147 = vunpack.c.h.b16 %v757
    %v3148 = vunpack.c.l.b16 %v758
    %v3149 = vunpack.c.h.b16 %v758
    %v3150 = vunpack.c.l.b16 %v759
    %v3151 = vunpack.c.h.b16 %v759
    %v3152 = vunpack.c.l.b16 %v760
    %v3153 = vunpack.c.h.b16 %v760
    %v3154 = vunpack.c.l.b16 %v761
    %v3155 = vunpack.c.h.b16 %v761
    %v3156 = vunpack.c.l.b16 %v762
    %v3157 = vunpack.c.h.b16 %v762
    %v3158 = vunpack.c.l.b16 %v763
    %v3159 = vunpack.c.h.b16 %v763
    %v3160 = vunpack.c.l.b16 %v764
    %v3161 = vunpack.c.h.b16 %v764
    %v3162 = vunpack.c.l.b16 %v765
    %v3163 = vunpack.c.h.b16 %v765
    %v3164 = vunpack.c.l.b16 %v766
    %v3165 = vunpack.c.h.b16 %v766
    %v3166 = vunpack.c.l.b16 %v767
    %v3167 = vunpack.c.h.b16 %v767
    %v3168 = vunpack.c.l.b16 %v768
    %v3169 = vunpack.c.h.b16 %v768
    %v3170 = vunpack.c.l.b16 %v769
    %v3171 = vunpack.c.h.b16 %v769
    %v3172 = vunpack.c.l.b16 %v770
    %v3173 = vunpack.c.h.b16 %v770
    %v3174 = vunpack.c.l.b16 %v771
    %v3175 = vunpack.c.h.b16 %v771
    %v3176 = vunpack.c.l.b16 %v772
    %v3177 = vunpack.c.h.b16 %v772
    %v3178 = vunpack.c.l.b16 %v773
    %v3179 = vunpack.c.h.b16 %v773
    %v3180 = vunpack.c.l.b16 %v774
    %v3181 = vunpack.c.h.b16 %v774
    %v3182 = vunpack.c.l.b16 %v775
    %v3183 = vunpack.c.h.b16 %v775
    %v3184 = vunpack.c.l.b16 %v776
    %v3185 = vunpack.c.h.b16 %v776
    %v3186 = vunpack.c.l.b16 %v777
    %v3187 = vunpack.c.h.b16 %v777
    %v3188 = vunpack.c.l.b16 %v778
    %v3189 = vunpack.c.h.b16 %v778
    %v3190 = vunpack.c.l.b16 %v779
    %v3191 = vunpack.c.h.b16 %v779
    %v3192 = vunpack.c.l.b16 %v780
    %v3193 = vunpack.c.h.b16 %v780
    %v3194 = vunpack.c.l.b16 %v781
    %v3195 = vunpack.c.h.b16 %v781
    %v3196 = vunpack.c.l.b16 %v782
    %v3197 = vunpack.c.h.b16 %v782
    %v3198 = vunpack.c.l.b16 %v783
    %v3199 = vunpack.c.h.b16 %v783
    %v3200 = vunpack.c.l.b16 %v784
    %v3201 = vunpack.c.h.b16 %v784
    %v3202 = vunpack.c.l.b16 %v785
    %v3203 = vunpack.c.h.b16 %v785
    %v3204 = vunpack.c.l.b16 %v786
    %v3205 = vunpack.c.h.b16 %v786
    %v3206 = vunpack.c.l.b16 %v787
    %v3207 = vunpack.c.h.b16 %v787
    %v3208 = vunpack.c.l.b16 %v788
    %v3209 = vunpack.c.h.b16 %v788
    %v3210 = vunpack.c.l.b16 %v789
    %v3211 = vunpack.c.h.b16 %v789
    %v3212 = vunpack.c.l.b16 %v790
    %v3213 = vunpack.c.h.b16 %v790
    %v3214 = vunpack.c.l.b16 %v791
    %v3215 = vunpack.c.h.b16 %v791
    %v3216 = vunpack.c.l.b16 %v792
    %v3217 = vunpack.c.h.b16 %v792
    %v3218 = vunpack.c.l.b16 %v793
    %v3219 = vunpack.c.h.b16 %v793
    %v3220 = vunpack.c.l.b16 %v794
    %v3221 = vunpack.c.h.b16 %v794
    %v3222 = vunpack.c.l.b16 %v795
    %v3223 = vunpack.c.h.b16 %v795
    %v3224 = vunpack.c.l.b16 %v796
    %v3225 = vunpack.c.h.b16 %v796
    %v3226 = vunpack.c.l.b16 %v797
    %v3227 = vunpack.c.h.b16 %v797
    %v3228 = vunpack.c.l.b16 %v798
    %v3229 = vunpack.c.h.b16 %v798
    %v3230 = vunpack.c.l.b16 %v799
    %v3231 = vunpack.c.h.b16 %v799
    %v3232 = vunpack.c.l.b16 %v800
    %v3233 = vunpack.c.h.b16 %v800
    %v3234 = vpack.c.b16 %v1706, %v1698
    %v3235 = vpack.c.b16 %v1707, %v1699
    %v3236 = vpack.c.b16 %v1708, %v1700
    %v3237 = vpack.c.b16 %v1709, %v1701
    %v3238 = vpack.c.b16 %v1710, %v1702
    %v3239 = vpack.c.b16 %v1711, %v1703
    %v3240 = vpack.c.b16 %v1712, %v1704
    %v3241 = vpack.c.b16 %v1713, %v1705
    %v3242 = vpack.c.b16 %v1722, %v1714
    %v3243 = vpack.c.b16 %v1723, %v1715
    %v3244 = vpack.c.b16 %v1724, %v1716
    %v3245 = vpack.c.b16 %v1725, %v1717
    %v3246 = vpack.c.b16 %v1726, %v1718
    %v3247 = vpack.c.b16 %v1727, %v1719
    %v3248 = vpack.c.b16 %v1728, %v1720
    %v3249 = vpack.c.b16 %v1729, %v1721
    %v3250 = vpack.c.b16 %v1738, %v1730
    %v3251 = vpack.c.b16 %v1739, %v1731
    %v3252 = vpack.c.b16 %v1740, %v1732
    %v3253 = vpack.c.b16 %v1741, %v1733
    %v3254 = vpack.c.b16 %v1742, %v1734
    %v3255 = vpack.c.b16 %v1743, %v1735
    %v3256 = vpack.c.b16 %v1744, %v1736
    %v3257 = vpack.c.b16 %v1745, %v1737
    %v3258 = vpack.c.b16 %v1754, %v1746
    %v3259 = vpack.c.b16 %v1755, %v1747
    %v3260 = vpack.c.b16 %v1756, %v1748
    %v3261 = vpack.c.b16 %v1757, %v1749
    %v3262 = vpack.c.b16 %v1758, %v1750
    %v3263 = vpack.c.b16 %v1759, %v1751
    %v3264 = vpack.c.b16 %v1760, %v1752
    %v3265 = vpack.c.b16 %v1761, %v1753
    %v3266 = vpack.c.b16 %v1770, %v1762
    %v3267 = vpack.c.b16 %v1771, %v1763
    %v3268 = vpack.c.b16 %v1772, %v1764
    %v3269 = vpack.c.b16 %v1773, %v1765
    %v3270 = vpack.c.b16 %v1774, %v1766
    %v3271 = vpack.c.b16 %v1775, %v1767
    %v3272 = vpack.c.b16 %v1776, %v1768
    %v3273 = vpack.c.b16 %v1777, %v1769
    %v3274 = vpack.c.b16 %v1786, %v1778
    %v3275 = vpack.c.b16 %v1787, %v1779
    %v3276 = vpack.c.b16 %v1788, %v1780
    %v3277 = vpack.c.b16 %v1789, %v1781
    %v3278 = vpack.c.b16 %v1790, %v1782
    %v3279 = vpack.c.b16 %v1791, %v1783
    %v3280 = vpack.c.b16 %v1792, %v1784
    %v3281 = vpack.c.b16 %v1793, %v1785
    %v3282 = vpack.c.b16 %v1802, %v1794
    %v3283 = vpack.c.b16 %v1803, %v1795
    %v3284 = vpack.c.b16 %v1804, %v1796
    %v3285 = vpack.c.b16 %v1805, %v1797
    %v3286 = vpack.c.b16 %v1806, %v1798
    %v3287 = vpack.c.b16 %v1807, %v1799
    %v3288 = vpack.c.b16 %v1808, %v1800
    %v3289 = vpack.c.b16 %v1809, %v1801
    %v3290 = vpack.c.b16 %v1818, %v1810
    %v3291 = vpack.c.b16 %v1819, %v1811
    %v3292 = vpack.c.b16 %v1820, %v1812
    %v3293 = vpack.c.b16 %v1821, %v1813
    %v3294 = vpack.c.b16 %v1822, %v1814
    %v3295 = vpack.c.b16 %v1823, %v1815
    %v3296 = vpack.c.b16 %v1824, %v1816
    %v3297 = vpack.c.b16 %v1825, %v1817
    %v3298 = vpack.c.b16 %v1834, %v1826
    %v3299 = vpack.c.b16 %v1835, %v1827
    %v3300 = vpack.c.b16 %v1836, %v1828
    %v3301 = vpack.c.b16 %v1837, %v1829
    %v3302 = vpack.c.b16 %v1838, %v1830
    %v3303 = vpack.c.b16 %v1839, %v1831
    %v3304 = vpack.c.b16 %v1840, %v1832
    %v3305 = vpack.c.b16 %v1841, %v1833
    %v3306 = vpack.c.b16 %v1850, %v1842
    %v3307 = vpack.c.b16 %v1851, %v1843
    %v3308 = vpack.c.b16 %v1852, %v1844
    %v3309 = vpack.c.b16 %v1853, %v1845
    %v3310 = vpack.c.b16 %v1854, %v1846
    %v3311 = vpack.c.b16 %v1855, %v1847
    %v3312 = vpack.c.b16 %v1856, %v1848
    %v3313 = vpack.c.b16 %v1857, %v1849
    %v3314 = vpack.c.b16 %v1866, %v1858
    %v3315 = vpack.c.b16 %v1867, %v1859
    %v3316 = vpack.c.b16 %v1868, %v1860
    %v3317 = vpack.c.b16 %v1869, %v1861
    %v3318 = vpack.c.b16 %v1870, %v1862
    %v3319 = vpack.c.b16 %v1871, %v1863
    %v3320 = vpack.c.b16 %v1872, %v1864
    %v3321 = vpack.c.b16 %v1873, %v1865
    %v3322 = vpack.c.b16 %v1882, %v1874
    %v3323 = vpack.c.b16 %v1883, %v1875
    %v3324 = vpack.c.b16 %v1884, %v1876
    %v3325 = vpack.c.b16 %v1885, %v1877
    %v3326 = vpack.c.b16 %v1886, %v1878
    %v3327 = vpack.c.b16 %v1887, %v1879
    %v3328 = vpack.c.b16 %v1888, %v1880
    %v3329 = vpack.c.b16 %v1889, %v1881
    %v3330 = vpack.c.b16 %v1898, %v1890
    %v3331 = vpack.c.b16 %v1899, %v1891
    %v3332 = vpack.c.b16 %v1900, %v1892
    %v3333 = vpack.c.b16 %v1901, %v1893
    %v3334 = vpack.c.b16 %v1902, %v1894
    %v3335 = vpack.c.b16 %v1903, %v1895
    %v3336 = vpack.c.b16 %v1904, %v1896
    %v3337 = vpack.c.b16 %v1905, %v1897
    %v3338 = vpack.c.b16 %v1914, %v1906
    %v3339 = vpack.c.b16 %v1915, %v1907
    %v3340 = vpack.c.b16 %v1916, %v1908
    %v3341 = vpack.c.b16 %v1917, %v1909
    %v3342 = vpack.c.b16 %v1918, %v1910
    %v3343 = vpack.c.b16 %v1919, %v1911
    %v3344 = vpack.c.b16 %v1920, %v1912
    %v3345 = vpack.c.b16 %v1921, %v1913
    %v3346 = vpack.c.b16 %v1930, %v1922
    %v3347 = vpack.c.b16 %v1931, %v1923
    %v3348 = vpack.c.b16 %v1932, %v1924
    %v3349 = vpack.c.b16 %v1933, %v1925
    %v3350 = vpack.c.b16 %v1934, %v1926
    %v3351 = vpack.c.b16 %v1935, %v1927
    %v3352 = vpack.c.b16 %v1936, %v1928
    %v3353 = vpack.c.b16 %v1937, %v1929
    %v3354 = vpack.c.b16 %v1946, %v1938
    %v3355 = vpack.c.b16 %v1947, %v1939
    %v3356 = vpack.c.b16 %v1948, %v1940
    %v3357 = vpack.c.b16 %v1949, %v1941
    %v3358 = vpack.c.b16 %v1950, %v1942
    %v3359 = vpack.c.b16 %v1951, %v1943
    %v3360 = vpack.c.b16 %v1952, %v1944
    %v3361 = vpack.c.b16 %v1953, %v1945
    %v3362 = vpack.c.b16 %v1962, %v1954
    %v3363 = vpack.c.b16 %v1963, %v1955
    %v3364 = vpack.c.b16 %v1964, %v1956
    %v3365 = vpack.c.b16 %v1965, %v1957
    %v3366 = vpack.c.b16 %v1966, %v1958
    %v3367 = vpack.c.b16 %v1967, %v1959
    %v3368 = vpack.c.b16 %v1968, %v1960
    %v3369 = vpack.c.b16 %v1969, %v1961
    %v3370 = vpack.c.b16 %v1978, %v1970
    %v3371 = vpack.c.b16 %v1979, %v1971
    %v3372 = vpack.c.b16 %v1980, %v1972
    %v3373 = vpack.c.b16 %v1981, %v1973
    %v3374 = vpack.c.b16 %v1982, %v1974
    %v3375 = vpack.c.b16 %v1983, %v1975
    %v3376 = vpack.c.b16 %v1984, %v1976
    %v3377 = vpack.c.b16 %v1985, %v1977
    %v3378 = vpack.c.b16 %v1994, %v1986
    %v3379 = vpack.c.b16 %v1995, %v1987
    %v3380 = vpack.c.b16 %v1996, %v1988
    %v3381 = vpack.c.b16 %v1997, %v1989
    %v3382 = vpack.c.b16 %v1998, %v1990
    %v3383 = vpack.c.b16 %v1999, %v1991
    %v3384 = vpack.c.b16 %v2000, %v1992
    %v3385 = vpack.c.b16 %v2001, %v1993
    %v3386 = vpack.c.b16 %v2010, %v2002
    %v3387 = vpack.c.b16 %v2011, %v2003
    %v3388 = vpack.c.b16 %v2012, %v2004
    %v3389 = vpack.c.b16 %v2013, %v2005
    %v3390 = vpack.c.b16 %v2014, %v2006
    %v3391 = vpack.c.b16 %v2015, %v2007
    %v3392 = vpack.c.b16 %v2016, %v2008
    %v3393 = vpack.c.b16 %v2017, %v2009
    %v3394 = vpack.c.b16 %v2026, %v2018
    %v3395 = vpack.c.b16 %v2027, %v2019
    %v3396 = vpack.c.b16 %v2028, %v2020
    %v3397 = vpack.c.b16 %v2029, %v2021
    %v3398 = vpack.c.b16 %v2030, %v2022
    %v3399 = vpack.c.b16 %v2031, %v2023
    %v3400 = vpack.c.b16 %v2032, %v2024
    %v3401 = vpack.c.b16 %v2033, %v2025
    %v3402 = vpack.c.b16 %v2042, %v2034
    %v3403 = vpack.c.b16 %v2043, %v2035
    %v3404 = vpack.c.b16 %v2044, %v2036
    %v3405 = vpack.c.b16 %v2045, %v2037
    %v3406 = vpack.c.b16 %v2046, %v2038
    %v3407 = vpack.c.b16 %v2047, %v2039
    %v3408 = vpack.c.b16 %v2048, %v2040
    %v3409 = vpack.c.b16 %v2049, %v2041
    %v3410 = vpack.c.b16 %v2058, %v2050
    %v3411 = vpack.c.b16 %v2059, %v2051
    %v3412 = vpack.c.b16 %v2060, %v2052
    %v3413 = vpack.c.b16 %v2061, %v2053
    %v3414 = vpack.c.b16 %v2062, %v2054
    %v3415 = vpack.c.b16 %v2063, %v2055
    %v3416 = vpack.c.b16 %v2064, %v2056
    %v3417 = vpack.c.b16 %v2065, %v2057
    %v3418 = vpack.c.b16 %v2074, %v2066
    %v3419 = vpack.c.b16 %v2075, %v2067
    %v3420 = vpack.c.b16 %v2076, %v2068
    %v3421 = vpack.c.b16 %v2077, %v2069
    %v3422 = vpack.c.b16 %v2078, %v2070
    %v3423 = vpack.c.b16 %v2079, %v2071
    %v3424 = vpack.c.b16 %v2080, %v2072
    %v3425 = vpack.c.b16 %v2081, %v2073
    %v3426 = vpack.c.b16 %v2090, %v2082
    %v3427 = vpack.c.b16 %v2091, %v2083
    %v3428 = vpack.c.b16 %v2092, %v2084
    %v3429 = vpack.c.b16 %v2093, %v2085
    %v3430 = vpack.c.b16 %v2094, %v2086
    %v3431 = vpack.c.b16 %v2095, %v2087
    %v3432 = vpack.c.b16 %v2096, %v2088
    %v3433 = vpack.c.b16 %v2097, %v2089
    %v3434 = vpack.c.b16 %v2106, %v2098
    %v3435 = vpack.c.b16 %v2107, %v2099
    %v3436 = vpack.c.b16 %v2108, %v2100
    %v3437 = vpack.c.b16 %v2109, %v2101
    %v3438 = vpack.c.b16 %v2110, %v2102
    %v3439 = vpack.c.b16 %v2111, %v2103
    %v3440 = vpack.c.b16 %v2112, %v2104
    %v3441 = vpack.c.b16 %v2113, %v2105
    %v3442 = vpack.c.b16 %v2122, %v2114
    %v3443 = vpack.c.b16 %v2123, %v2115
    %v3444 = vpack.c.b16 %v2124, %v2116
    %v3445 = vpack.c.b16 %v2125, %v2117
    %v3446 = vpack.c.b16 %v2126, %v2118
    %v3447 = vpack.c.b16 %v2127, %v2119
    %v3448 = vpack.c.b16 %v2128, %v2120
    %v3449 = vpack.c.b16 %v2129, %v2121
    %v3450 = vpack.c.b16 %v2138, %v2130
    %v3451 = vpack.c.b16 %v2139, %v2131
    %v3452 = vpack.c.b16 %v2140, %v2132
    %v3453 = vpack.c.b16 %v2141, %v2133
    %v3454 = vpack.c.b16 %v2142, %v2134
    %v3455 = vpack.c.b16 %v2143, %v2135
    %v3456 = vpack.c.b16 %v2144, %v2136
    %v3457 = vpack.c.b16 %v2145, %v2137
    %v3458 = vpack.c.b16 %v2154, %v2146
    %v3459 = vpack.c.b16 %v2155, %v2147
    %v3460 = vpack.c.b16 %v2156, %v2148
    %v3461 = vpack.c.b16 %v2157, %v2149
    %v3462 = vpack.c.b16 %v2158, %v2150
    %v3463 = vpack.c.b16 %v2159, %v2151
    %v3464 = vpack.c.b16 %v2160, %v2152
    %v3465 = vpack.c.b16 %v2161, %v2153
    %v3466 = vpack.c.b16 %v2170, %v2162
    %v3467 = vpack.c.b16 %v2171, %v2163
    %v3468 = vpack.c.b16 %v2172, %v2164
    %v3469 = vpack.c.b16 %v2173, %v2165
    %v3470 = vpack.c.b16 %v2174, %v2166
    %v3471 = vpack.c.b16 %v2175, %v2167
    %v3472 = vpack.c.b16 %v2176, %v2168
    %v3473 = vpack.c.b16 %v2177, %v2169
    %v3474 = vpack.c.b16 %v2186, %v2178
    %v3475 = vpack.c.b16 %v2187, %v2179
    %v3476 = vpack.c.b16 %v2188, %v2180
    %v3477 = vpack.c.b16 %v2189, %v2181
    %v3478 = vpack.c.b16 %v2190, %v2182
    %v3479 = vpack.c.b16 %v2191, %v2183
    %v3480 = vpack.c.b16 %v2192, %v2184
    %v3481 = vpack.c.b16 %v2193, %v2185
    %v3482 = vpack.c.b16 %v2202, %v2194
    %v3483 = vpack.c.b16 %v2203, %v2195
    %v3484 = vpack.c.b16 %v2204, %v2196
    %v3485 = vpack.c.b16 %v2205, %v2197
    %v3486 = vpack.c.b16 %v2206, %v2198
    %v3487 = vpack.c.b16 %v2207, %v2199
    %v3488 = vpack.c.b16 %v2208, %v2200
    %v3489 = vpack.c.b16 %v2209, %v2201
    %v3490 = vpack.c.b16 %v2218, %v2210
    %v3491 = vpack.c.b16 %v2219, %v2211
    %v3492 = vpack.c.b16 %v2220, %v2212
    %v3493 = vpack.c.b16 %v2221, %v2213
    %v3494 = vpack.c.b16 %v2222, %v2214
    %v3495 = vpack.c.b16 %v2223, %v2215
    %v3496 = vpack.c.b16 %v2224, %v2216
    %v3497 = vpack.c.b16 %v2225, %v2217
    %v3498 = vpack.c.b16 %v2234, %v2226
    %v3499 = vpack.c.b16 %v2235, %v2227
    %v3500 = vpack.c.b16 %v2236, %v2228
    %v3501 = vpack.c.b16 %v2237, %v2229
    %v3502 = vpack.c.b16 %v2238, %v2230
    %v3503 = vpack.c.b16 %v2239, %v2231
    %v3504 = vpack.c.b16 %v2240, %v2232
    %v3505 = vpack.c.b16 %v2241, %v2233
    %v3506 = vpack.c.b16 %v2250, %v2242
    %v3507 = vpack.c.b16 %v2251, %v2243
    %v3508 = vpack.c.b16 %v2252, %v2244
    %v3509 = vpack.c.b16 %v2253, %v2245
    %v3510 = vpack.c.b16 %v2254, %v2246
    %v3511 = vpack.c.b16 %v2255, %v2247
    %v3512 = vpack.c.b16 %v2256, %v2248
    %v3513 = vpack.c.b16 %v2257, %v2249
    %v3514 = vpack.c.b16 %v2266, %v2258
    %v3515 = vpack.c.b16 %v2267, %v2259
    %v3516 = vpack.c.b16 %v2268, %v2260
    %v3517 = vpack.c.b16 %v2269, %v2261
    %v3518 = vpack.c.b16 %v2270, %v2262
    %v3519 = vpack.c.b16 %v2271, %v2263
    %v3520 = vpack.c.b16 %v2272, %v2264
    %v3521 = vpack.c.b16 %v2273, %v2265
    %v3522 = vpack.c.b16 %v2282, %v2274
    %v3523 = vpack.c.b16 %v2283, %v2275
    %v3524 = vpack.c.b16 %v2284, %v2276
    %v3525 = vpack.c.b16 %v2285, %v2277
    %v3526 = vpack.c.b16 %v2286, %v2278
    %v3527 = vpack.c.b16 %v2287, %v2279
    %v3528 = vpack.c.b16 %v2288, %v2280
    %v3529 = vpack.c.b16 %v2289, %v2281
    %v3530 = vpack.c.b16 %v2298, %v2290
    %v3531 = vpack.c.b16 %v2299, %v2291
    %v3532 = vpack.c.b16 %v2300, %v2292
    %v3533 = vpack.c.b16 %v2301, %v2293
    %v3534 = vpack.c.b16 %v2302, %v2294
    %v3535 = vpack.c.b16 %v2303, %v2295
    %v3536 = vpack.c.b16 %v2304, %v2296
    %v3537 = vpack.c.b16 %v2305, %v2297
    %v3538 = vpack.c.b16 %v2314, %v2306
    %v3539 = vpack.c.b16 %v2315, %v2307
    %v3540 = vpack.c.b16 %v2316, %v2308
    %v3541 = vpack.c.b16 %v2317, %v2309
    %v3542 = vpack.c.b16 %v2318, %v2310
    %v3543 = vpack.c.b16 %v2319, %v2311
    %v3544 = vpack.c.b16 %v2320, %v2312
    %v3545 = vpack.c.b16 %v2321, %v2313
    %v3546 = vpack.c.b16 %v2330, %v2322
    %v3547 = vpack.c.b16 %v2331, %v2323
    %v3548 = vpack.c.b16 %v2332, %v2324
    %v3549 = vpack.c.b16 %v2333, %v2325
    %v3550 = vpack.c.b16 %v2334, %v2326
    %v3551 = vpack.c.b16 %v2335, %v2327
    %v3552 = vpack.c.b16 %v2336, %v2328
    %v3553 = vpack.c.b16 %v2337, %v2329
    %v3554 = vpack.c.b16 %v2346, %v2338
    %v3555 = vpack.c.b16 %v2347, %v2339
    %v3556 = vpack.c.b16 %v2348, %v2340
    %v3557 = vpack.c.b16 %v2349, %v2341
    %v3558 = vpack.c.b16 %v2350, %v2342
    %v3559 = vpack.c.b16 %v2351, %v2343
    %v3560 = vpack.c.b16 %v2352, %v2344
    %v3561 = vpack.c.b16 %v2353, %v2345
    %v3562 = vpack.c.b16 %v2362, %v2354
    %v3563 = vpack.c.b16 %v2363, %v2355
    %v3564 = vpack.c.b16 %v2364, %v2356
    %v3565 = vpack.c.b16 %v2365, %v2357
    %v3566 = vpack.c.b16 %v2366, %v2358
    %v3567 = vpack.c.b16 %v2367, %v2359
    %v3568 = vpack.c.b16 %v2368, %v2360
    %v3569 = vpack.c.b16 %v2369, %v2361
    %v3570 = vpack.c.b16 %v2378, %v2370
    %v3571 = vpack.c.b16 %v2379, %v2371
    %v3572 = vpack.c.b16 %v2380, %v2372
    %v3573 = vpack.c.b16 %v2381, %v2373
    %v3574 = vpack.c.b16 %v2382, %v2374
    %v3575 = vpack.c.b16 %v2383, %v2375
    %v3576 = vpack.c.b16 %v2384, %v2376
    %v3577 = vpack.c.b16 %v2385, %v2377
    %v3578 = vpack.c.b16 %v2394, %v2386
    %v3579 = vpack.c.b16 %v2395, %v2387
    %v3580 = vpack.c.b16 %v2396, %v2388
    %v3581 = vpack.c.b16 %v2397, %v2389
    %v3582 = vpack.c.b16 %v2398, %v2390
    %v3583 = vpack.c.b16 %v2399, %v2391
    %v3584 = vpack.c.b16 %v2400, %v2392
    %v3585 = vpack.c.b16 %v2401, %v2393
    %v3586 = vpack.c.b16 %v2410, %v2402
    %v3587 = vpack.c.b16 %v2411, %v2403
    %v3588 = vpack.c.b16 %v2412, %v2404
    %v3589 = vpack.c.b16 %v2413, %v2405
    %v3590 = vpack.c.b16 %v2414, %v2406
    %v3591 = vpack.c.b16 %v2415, %v2407
    %v3592 = vpack.c.b16 %v2416, %v2408
    %v3593 = vpack.c.b16 %v2417, %v2409
    %v3594 = vpack.c.b16 %v2426, %v2418
    %v3595 = vpack.c.b16 %v2427, %v2419
    %v3596 = vpack.c.b16 %v2428, %v2420
    %v3597 = vpack.c.b16 %v2429, %v2421
    %v3598 = vpack.c.b16 %v2430, %v2422
    %v3599 = vpack.c.b16 %v2431, %v2423
    %v3600 = vpack.c.b16 %v2432, %v2424
    %v3601 = vpack.c.b16 %v2433, %v2425
    %v3602 = vpack.c.b16 %v2442, %v2434
    %v3603 = vpack.c.b16 %v2443, %v2435
    %v3604 = vpack.c.b16 %v2444, %v2436
    %v3605 = vpack.c.b16 %v2445, %v2437
    %v3606 = vpack.c.b16 %v2446, %v2438
    %v3607 = vpack.c.b16 %v2447, %v2439
    %v3608 = vpack.c.b16 %v2448, %v2440
    %v3609 = vpack.c.b16 %v2449, %v2441
    %v3610 = vpack.c.b16 %v2458, %v2450
    %v3611 = vpack.c.b16 %v2459, %v2451
    %v3612 = vpack.c.b16 %v2460, %v2452
    %v3613 = vpack.c.b16 %v2461, %v2453
    %v3614 = vpack.c.b16 %v2462, %v2454
    %v3615 = vpack.c.b16 %v2463, %v2455
    %v3616 = vpack.c.b16 %v2464, %v2456
    %v3617 = vpack.c.b16 %v2465, %v2457
    %v3618 = vpack.c.b16 %v2474, %v2466
    %v3619 = vpack.c.b16 %v2475, %v2467
    %v3620 = vpack.c.b16 %v2476, %v2468
    %v3621 = vpack.c.b16 %v2477, %v2469
    %v3622 = vpack.c.b16 %v2478, %v2470
    %v3623 = vpack.c.b16 %v2479, %v2471
    %v3624 = vpack.c.b16 %v2480, %v2472
    %v3625 = vpack.c.b16 %v2481, %v2473
    %v3626 = vpack.c.b16 %v2490, %v2482
    %v3627 = vpack.c.b16 %v2491, %v2483
    %v3628 = vpack.c.b16 %v2492, %v2484
    %v3629 = vpack.c.b16 %v2493, %v2485
    %v3630 = vpack.c.b16 %v2494, %v2486
    %v3631 = vpack.c.b16 %v2495, %v2487
    %v3632 = vpack.c.b16 %v2496, %v2488
    %v3633 = vpack.c.b16 %v2497, %v2489
    %v3634 = vpack.c.b16 %v2506, %v2498
    %v3635 = vpack.c.b16 %v2507, %v2499
    %v3636 = vpack.c.b16 %v2508, %v2500
    %v3637 = vpack.c.b16 %v2509, %v2501
    %v3638 = vpack.c.b16 %v2510, %v2502
    %v3639 = vpack.c.b16 %v2511, %v2503
    %v3640 = vpack.c.b16 %v2512, %v2504
    %v3641 = vpack.c.b16 %v2513, %v2505
    %v3642 = vpack.c.b16 %v2522, %v2514
    %v3643 = vpack.c.b16 %v2523, %v2515
    %v3644 = vpack.c.b16 %v2524, %v2516
    %v3645 = vpack.c.b16 %v2525, %v2517
    %v3646 = vpack.c.b16 %v2526, %v2518
    %v3647 = vpack.c.b16 %v2527, %v2519
    %v3648 = vpack.c.b16 %v2528, %v2520
    %v3649 = vpack.c.b16 %v2529, %v2521
    %v3650 = vpack.c.b16 %v2538, %v2530
    %v3651 = vpack.c.b16 %v2539, %v2531
    %v3652 = vpack.c.b16 %v2540, %v2532
    %v3653 = vpack.c.b16 %v2541, %v2533
    %v3654 = vpack.c.b16 %v2542, %v2534
    %v3655 = vpack.c.b16 %v2543, %v2535
    %v3656 = vpack.c.b16 %v2544, %v2536
    %v3657 = vpack.c.b16 %v2545, %v2537
    %v3658 = vpack.c.b16 %v2554, %v2546
    %v3659 = vpack.c.b16 %v2555, %v2547
    %v3660 = vpack.c.b16 %v2556, %v2548
    %v3661 = vpack.c.b16 %v2557, %v2549
    %v3662 = vpack.c.b16 %v2558, %v2550
    %v3663 = vpack.c.b16 %v2559, %v2551
    %v3664 = vpack.c.b16 %v2560, %v2552
    %v3665 = vpack.c.b16 %v2561, %v2553
    %v3666 = vpack.c.b16 %v2570, %v2562
    %v3667 = vpack.c.b16 %v2571, %v2563
    %v3668 = vpack.c.b16 %v2572, %v2564
    %v3669 = vpack.c.b16 %v2573, %v2565
    %v3670 = vpack.c.b16 %v2574, %v2566
    %v3671 = vpack.c.b16 %v2575, %v2567
    %v3672 = vpack.c.b16 %v2576, %v2568
    %v3673 = vpack.c.b16 %v2577, %v2569
    %v3674 = vpack.c.b16 %v2586, %v2578
    %v3675 = vpack.c.b16 %v2587, %v2579
    %v3676 = vpack.c.b16 %v2588, %v2580
    %v3677 = vpack.c.b16 %v2589, %v2581
    %v3678 = vpack.c.b16 %v2590, %v2582
    %v3679 = vpack.c.b16 %v2591, %v2583
    %v3680 = vpack.c.b16 %v2592, %v2584
    %v3681 = vpack.c.b16 %v2593, %v2585
    %v3682 = vpack.c.b16 %v2602, %v2594
    %v3683 = vpack.c.b16 %v2603, %v2595
    %v3684 = vpack.c.b16 %v2604, %v2596
    %v3685 = vpack.c.b16 %v2605, %v2597
    %v3686 = vpack.c.b16 %v2606, %v2598
    %v3687 = vpack.c.b16 %v2607, %v2599
    %v3688 = vpack.c.b16 %v2608, %v2600
    %v3689 = vpack.c.b16 %v2609, %v2601
    %v3690 = vpack.c.b16 %v2618, %v2610
    %v3691 = vpack.c.b16 %v2619, %v2611
    %v3692 = vpack.c.b16 %v2620, %v2612
    %v3693 = vpack.c.b16 %v2621, %v2613
    %v3694 = vpack.c.b16 %v2622, %v2614
    %v3695 = vpack.c.b16 %v2623, %v2615
    %v3696 = vpack.c.b16 %v2624, %v2616
    %v3697 = vpack.c.b16 %v2625, %v2617
    %v3698 = vpack.c.b16 %v2634, %v2626
    %v3699 = vpack.c.b16 %v2635, %v2627
    %v3700 = vpack.c.b16 %v2636, %v2628
    %v3701 = vpack.c.b16 %v2637, %v2629
    %v3702 = vpack.c.b16 %v2638, %v2630
    %v3703 = vpack.c.b16 %v2639, %v2631
    %v3704 = vpack.c.b16 %v2640, %v2632
    %v3705 = vpack.c.b16 %v2641, %v2633
    %v3706 = vpack.c.b16 %v2650, %v2642
    %v3707 = vpack.c.b16 %v2651, %v2643
    %v3708 = vpack.c.b16 %v2652, %v2644
    %v3709 = vpack.c.b16 %v2653, %v2645
    %v3710 = vpack.c.b16 %v2654, %v2646
    %v3711 = vpack.c.b16 %v2655, %v2647
    %v3712 = vpack.c.b16 %v2656, %v2648
    %v3713 = vpack.c.b16 %v2657, %v2649
    %v3714 = vpack.c.b16 %v2666, %v2658
    %v3715 = vpack.c.b16 %v2667, %v2659
    %v3716 = vpack.c.b16 %v2668, %v2660
    %v3717 = vpack.c.b16 %v2669, %v2661
    %v3718 = vpack.c.b16 %v2670, %v2662
    %v3719 = vpack.c.b16 %v2671, %v2663
    %v3720 = vpack.c.b16 %v2672, %v2664
    %v3721 = vpack.c.b16 %v2673, %v2665
    %v3722 = vpack.c.b16 %v2682, %v2674
    %v3723 = vpack.c.b16 %v2683, %v2675
    %v3724 = vpack.c.b16 %v2684, %v2676
    %v3725 = vpack.c.b16 %v2685, %v2677
    %v3726 = vpack.c.b16 %v2686, %v2678
    %v3727 = vpack.c.b16 %v2687, %v2679
    %v3728 = vpack.c.b16 %v2688, %v2680
    %v3729 = vpack.c.b16 %v2689, %v2681
    %v3730 = vpack.c.b16 %v2698, %v2690
    %v3731 = vpack.c.b16 %v2699, %v2691
    %v3732 = vpack.c.b16 %v2700, %v2692
    %v3733 = vpack.c.b16 %v2701, %v2693
    %v3734 = vpack.c.b16 %v2702, %v2694
    %v3735 = vpack.c.b16 %v2703, %v2695
    %v3736 = vpack.c.b16 %v2704, %v2696
    %v3737 = vpack.c.b16 %v2705, %v2697
    %v3738 = vpack.c.b16 %v2714, %v2706
    %v3739 = vpack.c.b16 %v2715, %v2707
    %v3740 = vpack.c.b16 %v2716, %v2708
    %v3741 = vpack.c.b16 %v2717, %v2709
    %v3742 = vpack.c.b16 %v2718, %v2710
    %v3743 = vpack.c.b16 %v2719, %v2711
    %v3744 = vpack.c.b16 %v2720, %v2712
    %v3745 = vpack.c.b16 %v2721, %v2713
    %v3746 = vpack.c.b16 %v2730, %v2722
    %v3747 = vpack.c.b16 %v2731, %v2723
    %v3748 = vpack.c.b16 %v2732, %v2724
    %v3749 = vpack.c.b16 %v2733, %v2725
    %v3750 = vpack.c.b16 %v2734, %v2726
    %v3751 = vpack.c.b16 %v2735, %v2727
    %v3752 = vpack.c.b16 %v2736, %v2728
    %v3753 = vpack.c.b16 %v2737, %v2729
    %v3754 = vpack.c.b16 %v2746, %v2738
    %v3755 = vpack.c.b16 %v2747, %v2739
    %v3756 = vpack.c.b16 %v2748, %v2740
    %v3757 = vpack.c.b16 %v2749, %v2741
    %v3758 = vpack.c.b16 %v2750, %v2742
    %v3759 = vpack.c.b16 %v2751, %v2743
    %v3760 = vpack.c.b16 %v2752, %v2744
    %v3761 = vpack.c.b16 %v2753, %v2745
    %v3762 = vpack.c.b16 %v2762, %v2754
    %v3763 = vpack.c.b16 %v2763, %v2755
    %v3764 = vpack.c.b16 %v2764, %v2756
    %v3765 = vpack.c.b16 %v2765, %v2757
    %v3766 = vpack.c.b16 %v2766, %v2758
    %v3767 = vpack.c.b16 %v2767, %v2759
    %v3768 = vpack.c.b16 %v2768, %v2760
    %v3769 = vpack.c.b16 %v2769, %v2761
    %v3770 = vpack.c.b16 %v2778, %v2770
    %v3771 = vpack.c.b16 %v2779, %v2771
    %v3772 = vpack.c.b16 %v2780, %v2772
    %v3773 = vpack.c.b16 %v2781, %v2773
    %v3774 = vpack.c.b16 %v2782, %v2774
    %v3775 = vpack.c.b16 %v2783, %v2775
    %v3776 = vpack.c.b16 %v2784, %v2776
    %v3777 = vpack.c.b16 %v2785, %v2777
    %v3778 = vpack.c.b16 %v2794, %v2786
    %v3779 = vpack.c.b16 %v2795, %v2787
    %v3780 = vpack.c.b16 %v2796, %v2788
    %v3781 = vpack.c.b16 %v2797, %v2789
    %v3782 = vpack.c.b16 %v2798, %v2790
    %v3783 = vpack.c.b16 %v2799, %v2791
    %v3784 = vpack.c.b16 %v2800, %v2792
    %v3785 = vpack.c.b16 %v2801, %v2793
    %v3786 = vpack.c.b16 %v2810, %v2802
    %v3787 = vpack.c.b16 %v2811, %v2803
    %v3788 = vpack.c.b16 %v2812, %v2804
    %v3789 = vpack.c.b16 %v2813, %v2805
    %v3790 = vpack.c.b16 %v2814, %v2806
    %v3791 = vpack.c.b16 %v2815, %v2807
    %v3792 = vpack.c.b16 %v2816, %v2808
    %v3793 = vpack.c.b16 %v2817, %v2809
    %v3794 = vpack.c.b16 %v2826, %v2818
    %v3795 = vpack.c.b16 %v2827, %v2819
    %v3796 = vpack.c.b16 %v2828, %v2820
    %v3797 = vpack.c.b16 %v2829, %v2821
    %v3798 = vpack.c.b16 %v2830, %v2822
    %v3799 = vpack.c.b16 %v2831, %v2823
    %v3800 = vpack.c.b16 %v2832, %v2824
    %v3801 = vpack.c.b16 %v2833, %v2825
    %v3802 = vpack.c.b16 %v2842, %v2834
    %v3803 = vpack.c.b16 %v2843, %v2835
    %v3804 = vpack.c.b16 %v2844, %v2836
    %v3805 = vpack.c.b16 %v2845, %v2837
    %v3806 = vpack.c.b16 %v2846, %v2838
    %v3807 = vpack.c.b16 %v2847, %v2839
    %v3808 = vpack.c.b16 %v2848, %v2840
    %v3809 = vpack.c.b16 %v2849, %v2841
    %v3810 = vpack.c.b16 %v2858, %v2850
    %v3811 = vpack.c.b16 %v2859, %v2851
    %v3812 = vpack.c.b16 %v2860, %v2852
    %v3813 = vpack.c.b16 %v2861, %v2853
    %v3814 = vpack.c.b16 %v2862, %v2854
    %v3815 = vpack.c.b16 %v2863, %v2855
    %v3816 = vpack.c.b16 %v2864, %v2856
    %v3817 = vpack.c.b16 %v2865, %v2857
    %v3818 = vpack.c.b16 %v2874, %v2866
    %v3819 = vpack.c.b16 %v2875, %v2867
    %v3820 = vpack.c.b16 %v2876, %v2868
    %v3821 = vpack.c.b16 %v2877, %v2869
    %v3822 = vpack.c.b16 %v2878, %v2870
    %v3823 = vpack.c.b16 %v2879, %v2871
    %v3824 = vpack.c.b16 %v2880, %v2872
    %v3825 = vpack.c.b16 %v2881, %v2873
    %v3826 = vpack.c.b16 %v2890, %v2882
    %v3827 = vpack.c.b16 %v2891, %v2883
    %v3828 = vpack.c.b16 %v2892, %v2884
    %v3829 = vpack.c.b16 %v2893, %v2885
    %v3830 = vpack.c.b16 %v2894, %v2886
    %v3831 = vpack.c.b16 %v2895, %v2887
    %v3832 = vpack.c.b16 %v2896, %v2888
    %v3833 = vpack.c.b16 %v2897, %v2889
    %v3834 = vpack.c.b16 %v2906, %v2898
    %v3835 = vpack.c.b16 %v2907, %v2899
    %v3836 = vpack.c.b16 %v2908, %v2900
    %v3837 = vpack.c.b16 %v2909, %v2901
    %v3838 = vpack.c.b16 %v2910, %v2902
    %v3839 = vpack.c.b16 %v2911, %v2903
    %v3840 = vpack.c.b16 %v2912, %v2904
    %v3841 = vpack.c.b16 %v2913, %v2905
    %v3842 = vpack.c.b16 %v2922, %v2914
    %v3843 = vpack.c.b16 %v2923, %v2915
    %v3844 = vpack.c.b16 %v2924, %v2916
    %v3845 = vpack.c.b16 %v2925, %v2917
    %v3846 = vpack.c.b16 %v2926, %v2918
    %v3847 = vpack.c.b16 %v2927, %v2919
    %v3848 = vpack.c.b16 %v2928, %v2920
    %v3849 = vpack.c.b16 %v2929, %v2921
    %v3850 = vpack.c.b16 %v2938, %v2930
    %v3851 = vpack.c.b16 %v2939, %v2931
    %v3852 = vpack.c.b16 %v2940, %v2932
    %v3853 = vpack.c.b16 %v2941, %v2933
    %v3854 = vpack.c.b16 %v2942, %v2934
    %v3855 = vpack.c.b16 %v2943, %v2935
    %v3856 = vpack.c.b16 %v2944, %v2936
    %v3857 = vpack.c.b16 %v2945, %v2937
    %v3858 = vpack.c.b16 %v2954, %v2946
    %v3859 = vpack.c.b16 %v2955, %v2947
    %v3860 = vpack.c.b16 %v2956, %v2948
    %v3861 = vpack.c.b16 %v2957, %v2949
    %v3862 = vpack.c.b16 %v2958, %v2950
    %v3863 = vpack.c.b16 %v2959, %v2951
    %v3864 = vpack.c.b16 %v2960, %v2952
    %v3865 = vpack.c.b16 %v2961, %v2953
    %v3866 = vpack.c.b16 %v2970, %v2962
    %v3867 = vpack.c.b16 %v2971, %v2963
    %v3868 = vpack.c.b16 %v2972, %v2964
    %v3869 = vpack.c.b16 %v2973, %v2965
    %v3870 = vpack.c.b16 %v2974, %v2966
    %v3871 = vpack.c.b16 %v2975, %v2967
    %v3872 = vpack.c.b16 %v2976, %v2968
    %v3873 = vpack.c.b16 %v2977, %v2969
    %v3874 = vpack.c.b16 %v2986, %v2978
    %v3875 = vpack.c.b16 %v2987, %v2979
    %v3876 = vpack.c.b16 %v2988, %v2980
    %v3877 = vpack.c.b16 %v2989, %v2981
    %v3878 = vpack.c.b16 %v2990, %v2982
    %v3879 = vpack.c.b16 %v2991, %v2983
    %v3880 = vpack.c.b16 %v2992, %v2984
    %v3881 = vpack.c.b16 %v2993, %v2985
    %v3882 = vpack.c.b16 %v3002, %v2994
    %v3883 = vpack.c.b16 %v3003, %v2995
    %v3884 = vpack.c.b16 %v3004, %v2996
    %v3885 = vpack.c.b16 %v3005, %v2997
    %v3886 = vpack.c.b16 %v3006, %v2998
    %v3887 = vpack.c.b16 %v3007, %v2999
    %v3888 = vpack.c.b16 %v3008, %v3000
    %v3889 = vpack.c.b16 %v3009, %v3001
    %v3890 = vpack.c.b16 %v3018, %v3010
    %v3891 = vpack.c.b16 %v3019, %v3011
    %v3892 = vpack.c.b16 %v3020, %v3012
    %v3893 = vpack.c.b16 %v3021, %v3013
    %v3894 = vpack.c.b16 %v3022, %v3014
    %v3895 = vpack.c.b16 %v3023, %v3015
    %v3896 = vpack.c.b16 %v3024, %v3016
    %v3897 = vpack.c.b16 %v3025, %v3017
    %v3898 = vpack.c.b16 %v3034, %v3026
    %v3899 = vpack.c.b16 %v3035, %v3027
    %v3900 = vpack.c.b16 %v3036, %v3028
    %v3901 = vpack.c.b16 %v3037, %v3029
    %v3902 = vpack.c.b16 %v3038, %v3030
    %v3903 = vpack.c.b16 %v3039, %v3031
    %v3904 = vpack.c.b16 %v3040, %v3032
    %v3905 = vpack.c.b16 %v3041, %v3033
    %v3906 = vpack.c.b16 %v3050, %v3042
    %v3907 = vpack.c.b16 %v3051, %v3043
    %v3908 = vpack.c.b16 %v3052, %v3044
    %v3909 = vpack.c.b16 %v3053, %v3045
    %v3910 = vpack.c.b16 %v3054, %v3046
    %v3911 = vpack.c.b16 %v3055, %v3047
    %v3912 = vpack.c.b16 %v3056, %v3048
    %v3913 = vpack.c.b16 %v3057, %v3049
    %v3914 = vpack.c.b16 %v3066, %v3058
    %v3915 = vpack.c.b16 %v3067, %v3059
    %v3916 = vpack.c.b16 %v3068, %v3060
    %v3917 = vpack.c.b16 %v3069, %v3061
    %v3918 = vpack.c.b16 %v3070, %v3062
    %v3919 = vpack.c.b16 %v3071, %v3063
    %v3920 = vpack.c.b16 %v3072, %v3064
    %v3921 = vpack.c.b16 %v3073, %v3065
    %v3922 = vpack.c.b16 %v3082, %v3074
    %v3923 = vpack.c.b16 %v3083, %v3075
    %v3924 = vpack.c.b16 %v3084, %v3076
    %v3925 = vpack.c.b16 %v3085, %v3077
    %v3926 = vpack.c.b16 %v3086, %v3078
    %v3927 = vpack.c.b16 %v3087, %v3079
    %v3928 = vpack.c.b16 %v3088, %v3080
    %v3929 = vpack.c.b16 %v3089, %v3081
    %v3930 = vpack.c.b16 %v3098, %v3090
    %v3931 = vpack.c.b16 %v3099, %v3091
    %v3932 = vpack.c.b16 %v3100, %v3092
    %v3933 = vpack.c.b16 %v3101, %v3093
    %v3934 = vpack.c.b16 %v3102, %v3094
    %v3935 = vpack.c.b16 %v3103, %v3095
    %v3936 = vpack.c.b16 %v3104, %v3096
    %v3937 = vpack.c.b16 %v3105, %v3097
    %v3938 = vpack.c.b16 %v3114, %v3106
    %v3939 = vpack.c.b16 %v3115, %v3107
    %v3940 = vpack.c.b16 %v3116, %v3108
    %v3941 = vpack.c.b16 %v3117, %v3109
    %v3942 = vpack.c.b16 %v3118, %v3110
    %v3943 = vpack.c.b16 %v3119, %v3111
    %v3944 = vpack.c.b16 %v3120, %v3112
    %v3945 = vpack.c.b16 %v3121, %v3113
    %v3946 = vpack.c.b16 %v3130, %v3122
    %v3947 = vpack.c.b16 %v3131, %v3123
    %v3948 = vpack.c.b16 %v3132, %v3124
    %v3949 = vpack.c.b16 %v3133, %v3125
    %v3950 = vpack.c.b16 %v3134, %v3126
    %v3951 = vpack.c.b16 %v3135, %v3127
    %v3952 = vpack.c.b16 %v3136, %v3128
    %v3953 = vpack.c.b16 %v3137, %v3129
    %v3954 = vpack.c.b16 %v3146, %v3138
    %v3955 = vpack.c.b16 %v3147, %v3139
    %v3956 = vpack.c.b16 %v3148, %v3140
    %v3957 = vpack.c.b16 %v3149, %v3141
    %v3958 = vpack.c.b16 %v3150, %v3142
    %v3959 = vpack.c.b16 %v3151, %v3143
    %v3960 = vpack.c.b16 %v3152, %v3144
    %v3961 = vpack.c.b16 %v3153, %v3145
    %v3962 = vpack.c.b16 %v3162, %v3154
    %v3963 = vpack.c.b16 %v3163, %v3155
    %v3964 = vpack.c.b16 %v3164, %v3156
    %v3965 = vpack.c.b16 %v3165, %v3157
    %v3966 = vpack.c.b16 %v3166, %v3158
    %v3967 = vpack.c.b16 %v3167, %v3159
    %v3968 = vpack.c.b16 %v3168, %v3160
    %v3969 = vpack.c.b16 %v3169, %v3161
    %v3970 = vpack.c.b16 %v3178, %v3170
    %v3971 = vpack.c.b16 %v3179, %v3171
    %v3972 = vpack.c.b16 %v3180, %v3172
    %v3973 = vpack.c.b16 %v3181, %v3173
    %v3974 = vpack.c.b16 %v3182, %v3174
    %v3975 = vpack.c.b16 %v3183, %v3175
    %v3976 = vpack.c.b16 %v3184, %v3176
    %v3977 = vpack.c.b16 %v3185, %v3177
    %v3978 = vpack.c.b16 %v3194, %v3186
    %v3979 = vpack.c.b16 %v3195, %v3187
    %v3980 = vpack.c.b16 %v3196, %v3188
    %v3981 = vpack.c.b16 %v3197, %v3189
    %v3982 = vpack.c.b16 %v3198, %v3190
    %v3983 = vpack.c.b16 %v3199, %v3191
    %v3984 = vpack.c.b16 %v3200, %v3192
    %v3985 = vpack.c.b16 %v3201, %v3193
    %v3986 = vpack.c.b16 %v3210, %v3202
    %v3987 = vpack.c.b16 %v3211, %v3203
    %v3988 = vpack.c.b16 %v3212, %v3204
    %v3989 = vpack.c.b16 %v3213, %v3205
    %v3990 = vpack.c.b16 %v3214, %v3206
    %v3991 = vpack.c.b16 %v3215, %v3207
    %v3992 = vpack.c.b16 %v3216, %v3208
    %v3993 = vpack.c.b16 %v3217, %v3209
    %v3994 = vpack.c.b16 %v3226, %v3218
    %v3995 = vpack.c.b16 %v3227, %v3219
    %v3996 = vpack.c.b16 %v3228, %v3220
    %v3997 = vpack.c.b16 %v3229, %v3221
    %v3998 = vpack.c.b16 %v3230, %v3222
    %v3999 = vpack.c.b16 %v3231, %v3223
    %v4000 = vpack.c.b16 %v3232, %v3224
    %v4001 = vpack.c.b16 %v3233, %v3225
    %4770 = vmatprep.subr.bf16.mxu0 %v3235
    %4771 = vmatpush1.bf16.msra.mxu0 %v3234
    %4772 = vmatprep.subr.bf16.mxu0 %v3243
    %4773 = vmatpush1.bf16.msra.mxu0 %v3242
    %4774 = vmatprep.subr.bf16.mxu0 %v3251
    %4775 = vmatpush1.bf16.msra.mxu0 %v3250
    %4776 = vmatprep.subr.bf16.mxu0 %v3259
    %4777 = vmatpush1.bf16.msra.mxu0 %v3258
    %4778 = vmatprep.subr.bf16.mxu0 %v3267
    %4779 = vmatpush1.bf16.msra.mxu0 %v3266
    %4780 = vmatprep.subr.bf16.mxu0 %v3275
    %4781 = vmatpush1.bf16.msra.mxu0 %v3274
    %4782 = vmatprep.subr.bf16.mxu0 %v3283
    %4783 = vmatpush1.bf16.msra.mxu0 %v3282
    %4784 = vmatprep.subr.bf16.mxu0 %v3291
    %4785 = vmatpush1.bf16.msra.mxu0 %v3290
    %4786 = vmatprep.subr.bf16.mxu0 %v3299
    %4787 = vmatpush1.bf16.msra.mxu0 %v3298
    %4788 = vmatprep.subr.bf16.mxu0 %v3307
    %4789 = vmatpush1.bf16.msra.mxu0 %v3306
    %4790 = vmatprep.subr.bf16.mxu0 %v3315
    %4791 = vmatpush1.bf16.msra.mxu0 %v3314
    %4792 = vmatprep.subr.bf16.mxu0 %v3323
    %4793 = vmatpush1.bf16.msra.mxu0 %v3322
    %4794 = vmatprep.subr.bf16.mxu0 %v3331
    %4795 = vmatpush1.bf16.msra.mxu0 %v3330
    %4796 = vmatprep.subr.bf16.mxu0 %v3339
    %4797 = vmatpush1.bf16.msra.mxu0 %v3338
    %4798 = vmatprep.subr.bf16.mxu0 %v3347
    %4799 = vmatpush1.bf16.msra.mxu0 %v3346
    %4800 = vmatprep.subr.bf16.mxu0 %v3355
    %4801 = vmatpush1.bf16.msra.mxu0 %v3354
    %4802 = vmatprep.mubr.bf16.mxu0 %v882
    %4803 = vmatmul.mubr.bf16.gmra.mrb[0].mxu0 %v868
    %v4804 = vpop.f32.mrb[0].mxu0
    %v4805 = vadd.f32 %v806, %v4804
    %v4806 = vpop.f32.mrb[0].mxu0
    %v4807 = vadd.f32 %v810, %v4806
    %v4808 = vpop.f32.mrb[0].mxu0
    %v4809 = vpop.f32.mrb[0].mxu0
    %4810 = vdwg.mxu0
    %4811 = vmatprep.subr.bf16.mxu0 %v3363
    %4812 = vmatpush1.bf16.msra.mxu0 %v3362
    %4813 = vmatprep.subr.bf16.mxu0 %v3371
    %4814 = vmatpush1.bf16.msra.mxu0 %v3370
    %4815 = vmatprep.subr.bf16.mxu0 %v3379
    %4816 = vmatpush1.bf16.msra.mxu0 %v3378
    %4817 = vmatprep.subr.bf16.mxu0 %v3387
    %4818 = vmatpush1.bf16.msra.mxu0 %v3386
    %4819 = vmatprep.subr.bf16.mxu0 %v3395
    %4820 = vmatpush1.bf16.msra.mxu0 %v3394
    %4821 = vmatprep.subr.bf16.mxu0 %v3403
    %4822 = vmatpush1.bf16.msra.mxu0 %v3402
    %4823 = vmatprep.subr.bf16.mxu0 %v3411
    %4824 = vmatpush1.bf16.msra.mxu0 %v3410
    %4825 = vmatprep.subr.bf16.mxu0 %v3419
    %4826 = vmatpush1.bf16.msra.mxu0 %v3418
    %4827 = vmatprep.subr.bf16.mxu0 %v3427
    %4828 = vmatpush1.bf16.msra.mxu0 %v3426
    %4829 = vmatprep.subr.bf16.mxu0 %v3435
    %4830 = vmatpush1.bf16.msra.mxu0 %v3434
    %4831 = vmatprep.subr.bf16.mxu0 %v3443
    %4832 = vmatpush1.bf16.msra.mxu0 %v3442
    %4833 = vmatprep.subr.bf16.mxu0 %v3451
    %4834 = vmatpush1.bf16.msra.mxu0 %v3450
    %4835 = vmatprep.subr.bf16.mxu0 %v3459
    %4836 = vmatpush1.bf16.msra.mxu0 %v3458
    %4837 = vmatprep.subr.bf16.mxu0 %v3467
    %4838 = vmatpush1.bf16.msra.mxu0 %v3466
    %4839 = vmatprep.subr.bf16.mxu0 %v3475
    %4840 = vmatpush1.bf16.msra.mxu0 %v3474
    %4841 = vmatprep.subr.bf16.mxu0 %v3483
    %4842 = vmatpush1.bf16.msra.mxu0 %v3482
    %4843 = vmatprep.mubr.bf16.mxu0 %v892
    %4844 = vmatmul.mubr.bf16.gmra.mrb[0].mxu0 %v890
    %v4845 = vpop.f32.mrb[0].mxu0
    %v4846 = vadd.f32 %v4805, %v4845
    %v4847 = vpop.f32.mrb[0].mxu0
    %v4848 = vadd.f32 %v4807, %v4847
    %v4849 = vpop.f32.mrb[0].mxu0
    %v4850 = vpop.f32.mrb[0].mxu0
    %4851 = vdwg.mxu0
    %4852 = vmatprep.subr.bf16.mxu0 %v3491
    %4853 = vmatpush1.bf16.msra.mxu0 %v3490
    %4854 = vmatprep.subr.bf16.mxu0 %v3499
    %4855 = vmatpush1.bf16.msra.mxu0 %v3498
    %4856 = vmatprep.subr.bf16.mxu0 %v3507
    %4857 = vmatpush1.bf16.msra.mxu0 %v3506
    %4858 = vmatprep.subr.bf16.mxu0 %v3515
    %4859 = vmatpush1.bf16.msra.mxu0 %v3514
    %4860 = vmatprep.subr.bf16.mxu0 %v3523
    %4861 = vmatpush1.bf16.msra.mxu0 %v3522
    %4862 = vmatprep.subr.bf16.mxu0 %v3531
    %4863 = vmatpush1.bf16.msra.mxu0 %v3530
    %4864 = vmatprep.subr.bf16.mxu0 %v3539
    %4865 = vmatpush1.bf16.msra.mxu0 %v3538
    %4866 = vmatprep.subr.bf16.mxu0 %v3547
    %4867 = vmatpush1.bf16.msra.mxu0 %v3546
    %4868 = vmatprep.subr.bf16.mxu0 %v3555
    %4869 = vmatpush1.bf16.msra.mxu0 %v3554
    %4870 = vmatprep.subr.bf16.mxu0 %v3563
    %4871 = vmatpush1.bf16.msra.mxu0 %v3562
    %4872 = vmatprep.subr.bf16.mxu0 %v3571
    %4873 = vmatpush1.bf16.msra.mxu0 %v3570
    %4874 = vmatprep.subr.bf16.mxu0 %v3579
    %4875 = vmatpush1.bf16.msra.mxu0 %v3578
    %4876 = vmatprep.subr.bf16.mxu0 %v3587
    %4877 = vmatpush1.bf16.msra.mxu0 %v3586
    %4878 = vmatprep.subr.bf16.mxu0 %v3595
    %4879 = vmatpush1.bf16.msra.mxu0 %v3594
    %4880 = vmatprep.subr.bf16.mxu0 %v3603
    %4881 = vmatpush1.bf16.msra.mxu0 %v3602
    %4882 = vmatprep.subr.bf16.mxu0 %v3611
    %4883 = vmatpush1.bf16.msra.mxu0 %v3610
    %4884 = vmatprep.mubr.bf16.mxu0 %v889
    %4885 = vmatmul.mubr.bf16.gmra.mrb[0].mxu0 %v875
    %v4886 = vpop.f32.mrb[0].mxu0
    %v4887 = vadd.f32 %v4846, %v4886
    %v4888 = vpop.f32.mrb[0].mxu0
    %v4889 = vadd.f32 %v4848, %v4888
    %v4890 = vpop.f32.mrb[0].mxu0
    %v4891 = vpop.f32.mrb[0].mxu0
    %4892 = vdwg.mxu0
    %4893 = vmatprep.subr.bf16.mxu0 %v3619
    %4894 = vmatpush1.bf16.msra.mxu0 %v3618
    %4895 = vmatprep.subr.bf16.mxu0 %v3627
    %4896 = vmatpush1.bf16.msra.mxu0 %v3626
    %4897 = vmatprep.subr.bf16.mxu0 %v3635
    %4898 = vmatpush1.bf16.msra.mxu0 %v3634
    %4899 = vmatprep.subr.bf16.mxu0 %v3643
    %4900 = vmatpush1.bf16.msra.mxu0 %v3642
    %4901 = vmatprep.subr.bf16.mxu0 %v3651
    %4902 = vmatpush1.bf16.msra.mxu0 %v3650
    %4903 = vmatprep.subr.bf16.mxu0 %v3659
    %4904 = vmatpush1.bf16.msra.mxu0 %v3658
    %4905 = vmatprep.subr.bf16.mxu0 %v3667
    %4906 = vmatpush1.bf16.msra.mxu0 %v3666
    %4907 = vmatprep.subr.bf16.mxu0 %v3675
    %4908 = vmatpush1.bf16.msra.mxu0 %v3674
    %4909 = vmatprep.subr.bf16.mxu0 %v3683
    %4910 = vmatpush1.bf16.msra.mxu0 %v3682
    %4911 = vmatprep.subr.bf16.mxu0 %v3691
    %4912 = vmatpush1.bf16.msra.mxu0 %v3690
    %4913 = vmatprep.subr.bf16.mxu0 %v3699
    %4914 = vmatpush1.bf16.msra.mxu0 %v3698
    %4915 = vmatprep.subr.bf16.mxu0 %v3707
    %4916 = vmatpush1.bf16.msra.mxu0 %v3706
    %4917 = vmatprep.subr.bf16.mxu0 %v3715
    %4918 = vmatpush1.bf16.msra.mxu0 %v3714
    %4919 = vmatprep.subr.bf16.mxu0 %v3723
    %4920 = vmatpush1.bf16.msra.mxu0 %v3722
    %4921 = vmatprep.subr.bf16.mxu0 %v3731
    %4922 = vmatpush1.bf16.msra.mxu0 %v3730
    %4923 = vmatprep.subr.bf16.mxu0 %v3739
    %4924 = vmatpush1.bf16.msra.mxu0 %v3738
    %4925 = vmatprep.mubr.bf16.mxu0 %v893
    %4926 = vmatmul.mubr.bf16.gmra.mrb[0].mxu0 %v891
    %v4927 = vpop.f32.mrb[0].mxu0
    %v4928 = vadd.f32 %v4887, %v4927
    %v4929 = vpop.f32.mrb[0].mxu0
    %v4930 = vadd.f32 %v4889, %v4929
    %v4931 = vpop.f32.mrb[0].mxu0
    %v4932 = vpop.f32.mrb[0].mxu0
    %4933 = vdwg.mxu0
    %4934 = vmatprep.subr.bf16.mxu0 %v3747
    %4935 = vmatpush1.bf16.msra.mxu0 %v3746
    %4936 = vmatprep.subr.bf16.mxu0 %v3755
    %4937 = vmatpush1.bf16.msra.mxu0 %v3754
    %4938 = vmatprep.subr.bf16.mxu0 %v3763
    %4939 = vmatpush1.bf16.msra.mxu0 %v3762
    %4940 = vmatprep.subr.bf16.mxu0 %v3771
    %4941 = vmatpush1.bf16.msra.mxu0 %v3770
    %4942 = vmatprep.subr.bf16.mxu0 %v3779
    %4943 = vmatpush1.bf16.msra.mxu0 %v3778
    %4944 = vmatprep.subr.bf16.mxu0 %v3787
    %4945 = vmatpush1.bf16.msra.mxu0 %v3786
    %4946 = vmatprep.subr.bf16.mxu0 %v3795
    %4947 = vmatpush1.bf16.msra.mxu0 %v3794
    %4948 = vmatprep.subr.bf16.mxu0 %v3803
    %4949 = vmatpush1.bf16.msra.mxu0 %v3802
    %4950 = vmatprep.subr.bf16.mxu0 %v3811
    %4951 = vmatpush1.bf16.msra.mxu0 %v3810
    %4952 = vmatprep.subr.bf16.mxu0 %v3819
    %4953 = vmatpush1.bf16.msra.mxu0 %v3818
    %4954 = vmatprep.subr.bf16.mxu0 %v3827
    %4955 = vmatpush1.bf16.msra.mxu0 %v3826
    %4956 = vmatprep.subr.bf16.mxu0 %v3835
    %4957 = vmatpush1.bf16.msra.mxu0 %v3834
    %4958 = vmatprep.subr.bf16.mxu0 %v3843
    %4959 = vmatpush1.bf16.msra.mxu0 %v3842
    %4960 = vmatprep.subr.bf16.mxu0 %v3851
    %4961 = vmatpush1.bf16.msra.mxu0 %v3850
    %4962 = vmatprep.subr.bf16.mxu0 %v3859
    %4963 = vmatpush1.bf16.msra.mxu0 %v3858
    %4964 = vmatprep.subr.bf16.mxu0 %v3867
    %4965 = vmatpush1.bf16.msra.mxu0 %v3866
    %4966 = vmatprep.mubr.bf16.mxu0 %v915
    %4967 = vmatmul.mubr.bf16.gmra.mrb[0].mxu0 %v908
    %v4968 = vpop.f32.mrb[0].mxu0
    %v4969 = vadd.f32 %v4928, %v4968
    %v4970 = vpop.f32.mrb[0].mxu0
    %v4971 = vadd.f32 %v4930, %v4970
    %v4972 = vpop.f32.mrb[0].mxu0
    %v4973 = vpop.f32.mrb[0].mxu0
    %4974 = vdwg.mxu0
    %4975 = vmatprep.subr.bf16.mxu0 %v3875
    %4976 = vmatpush1.bf16.msra.mxu0 %v3874
    %4977 = vmatprep.subr.bf16.mxu0 %v3883
    %4978 = vmatpush1.bf16.msra.mxu0 %v3882
    %4979 = vmatprep.subr.bf16.mxu0 %v3891
    %4980 = vmatpush1.bf16.msra.mxu0 %v3890
    %4981 = vmatprep.subr.bf16.mxu0 %v3899
    %4982 = vmatpush1.bf16.msra.mxu0 %v3898
    %4983 = vmatprep.subr.bf16.mxu0 %v3907
    %4984 = vmatpush1.bf16.msra.mxu0 %v3906
    %4985 = vmatprep.subr.bf16.mxu0 %v3915
    %4986 = vmatpush1.bf16.msra.mxu0 %v3914
    %4987 = vmatprep.subr.bf16.mxu0 %v3923
    %4988 = vmatpush1.bf16.msra.mxu0 %v3922
    %4989 = vmatprep.subr.bf16.mxu0 %v3931
    %4990 = vmatpush1.bf16.msra.mxu0 %v3930
    %4991 = vmatprep.subr.bf16.mxu0 %v3939
    %4992 = vmatpush1.bf16.msra.mxu0 %v3938
    %4993 = vmatprep.subr.bf16.mxu0 %v3947
    %4994 = vmatpush1.bf16.msra.mxu0 %v3946
    %4995 = vmatprep.subr.bf16.mxu0 %v3955
    %4996 = vmatpush1.bf16.msra.mxu0 %v3954
    %4997 = vmatprep.subr.bf16.mxu0 %v3963
    %4998 = vmatpush1.bf16.msra.mxu0 %v3962
    %4999 = vmatprep.subr.bf16.mxu0 %v3971
    %5000 = vmatpush1.bf16.msra.mxu0 %v3970
    %5001 = vmatprep.subr.bf16.mxu0 %v3979
    %5002 = vmatpush1.bf16.msra.mxu0 %v3978
    %5003 = vmatprep.subr.bf16.mxu0 %v3987
    %5004 = vmatpush1.bf16.msra.mxu0 %v3986
    %5005 = vmatprep.subr.bf16.mxu0 %v3995
    %5006 = vmatpush1.bf16.msra.mxu0 %v3994
    %5007 = vmatprep.mubr.bf16.mxu0 %v917
    %5008 = vmatmul.mubr.bf16.gmra.mrb[0].mxu0 %v916
    %v5009 = vpop.f32.mrb[0].mxu0
    %v5010 = vadd.f32 %v4969, %v5009
    %v5011 = vpop.f32.mrb[0].mxu0
    %v5012 = vadd.f32 %v4971, %v5011
    %v5013 = vpop.f32.mrb[0].mxu0
    %v5014 = vpop.f32.mrb[0].mxu0
    %5015 = vdwg.mxu0
    %5016 = vmatprep.subr.bf16.mxu0 %v3237
    %5017 = vmatpush1.bf16.msra.mxu0 %v3236
    %5018 = vmatprep.subr.bf16.mxu0 %v3245
    %5019 = vmatpush1.bf16.msra.mxu0 %v3244
    %5020 = vmatprep.subr.bf16.mxu0 %v3253
    %5021 = vmatpush1.bf16.msra.mxu0 %v3252
    %5022 = vmatprep.subr.bf16.mxu0 %v3261
    %5023 = vmatpush1.bf16.msra.mxu0 %v3260
    %5024 = vmatprep.subr.bf16.mxu0 %v3269
    %5025 = vmatpush1.bf16.msra.mxu0 %v3268
    %5026 = vmatprep.subr.bf16.mxu0 %v3277
    %5027 = vmatpush1.bf16.msra.mxu0 %v3276
    %5028 = vmatprep.subr.bf16.mxu0 %v3285
    %5029 = vmatpush1.bf16.msra.mxu0 %v3284
    %5030 = vmatprep.subr.bf16.mxu0 %v3293
    %5031 = vmatpush1.bf16.msra.mxu0 %v3292
    %5032 = vmatprep.subr.bf16.mxu0 %v3301
    %5033 = vmatpush1.bf16.msra.mxu0 %v3300
    %5034 = vmatprep.subr.bf16.mxu0 %v3309
    %5035 = vmatpush1.bf16.msra.mxu0 %v3308
    %5036 = vmatprep.subr.bf16.mxu0 %v3317
    %5037 = vmatpush1.bf16.msra.mxu0 %v3316
    %5038 = vmatprep.subr.bf16.mxu0 %v3325
    %5039 = vmatpush1.bf16.msra.mxu0 %v3324
    %5040 = vmatprep.subr.bf16.mxu0 %v3333
    %5041 = vmatpush1.bf16.msra.mxu0 %v3332
    %5042 = vmatprep.subr.bf16.mxu0 %v3341
    %5043 = vmatpush1.bf16.msra.mxu0 %v3340
    %5044 = vmatprep.subr.bf16.mxu0 %v3349
    %5045 = vmatpush1.bf16.msra.mxu0 %v3348
    %5046 = vmatprep.subr.bf16.mxu0 %v3357
    %5047 = vmatpush1.bf16.msra.mxu0 %v3356
    %5048 = vmatprep.mubr.bf16.mxu0 %v882
    %5049 = vmatmul.mubr.bf16.gmra.mrb[0].mxu0 %v868
    %v5050 = vpop.f32.mrb[0].mxu0
    %v5051 = vadd.f32 %v814, %v5050
    %v5052 = vpop.f32.mrb[0].mxu0
    %v5053 = vadd.f32 %v818, %v5052
    %v5054 = vpop.f32.mrb[0].mxu0
    %v5055 = vpop.f32.mrb[0].mxu0
    %5056 = vdwg.mxu0
    %5057 = vmatprep.subr.bf16.mxu0 %v3365
    %5058 = vmatpush1.bf16.msra.mxu0 %v3364
    %5059 = vmatprep.subr.bf16.mxu0 %v3373
    %5060 = vmatpush1.bf16.msra.mxu0 %v3372
    %5061 = vmatprep.subr.bf16.mxu0 %v3381
    %5062 = vmatpush1.bf16.msra.mxu0 %v3380
    %5063 = vmatprep.subr.bf16.mxu0 %v3389
    %5064 = vmatpush1.bf16.msra.mxu0 %v3388
    %5065 = vmatprep.subr.bf16.mxu0 %v3397
    %5066 = vmatpush1.bf16.msra.mxu0 %v3396
    %5067 = vmatprep.subr.bf16.mxu0 %v3405
    %5068 = vmatpush1.bf16.msra.mxu0 %v3404
    %5069 = vmatprep.subr.bf16.mxu0 %v3413
    %5070 = vmatpush1.bf16.msra.mxu0 %v3412
    %5071 = vmatprep.subr.bf16.mxu0 %v3421
    %5072 = vmatpush1.bf16.msra.mxu0 %v3420
    %5073 = vmatprep.subr.bf16.mxu0 %v3429
    %5074 = vmatpush1.bf16.msra.mxu0 %v3428
    %5075 = vmatprep.subr.bf16.mxu0 %v3437
    %5076 = vmatpush1.bf16.msra.mxu0 %v3436
    %5077 = vmatprep.subr.bf16.mxu0 %v3445
    %5078 = vmatpush1.bf16.msra.mxu0 %v3444
    %5079 = vmatprep.subr.bf16.mxu0 %v3453
    %5080 = vmatpush1.bf16.msra.mxu0 %v3452
    %5081 = vmatprep.subr.bf16.mxu0 %v3461
    %5082 = vmatpush1.bf16.msra.mxu0 %v3460
    %5083 = vmatprep.subr.bf16.mxu0 %v3469
    %5084 = vmatpush1.bf16.msra.mxu0 %v3468
    %5085 = vmatprep.subr.bf16.mxu0 %v3477
    %5086 = vmatpush1.bf16.msra.mxu0 %v3476
    %5087 = vmatprep.subr.bf16.mxu0 %v3485
    %5088 = vmatpush1.bf16.msra.mxu0 %v3484
    %5089 = vmatprep.mubr.bf16.mxu0 %v892
    %5090 = vmatmul.mubr.bf16.gmra.mrb[0].mxu0 %v890
    %v5091 = vpop.f32.mrb[0].mxu0
    %v5092 = vadd.f32 %v5051, %v5091
    %v5093 = vpop.f32.mrb[0].mxu0
    %v5094 = vadd.f32 %v5053, %v5093
    %v5095 = vpop.f32.mrb[0].mxu0
    %v5096 = vpop.f32.mrb[0].mxu0
    %5097 = vdwg.mxu0
    %5098 = vmatprep.subr.bf16.mxu0 %v3493
    %5099 = vmatpush1.bf16.msra.mxu0 %v3492
    %5100 = vmatprep.subr.bf16.mxu0 %v3501
    %5101 = vmatpush1.bf16.msra.mxu0 %v3500
    %5102 = vmatprep.subr.bf16.mxu0 %v3509
    %5103 = vmatpush1.bf16.msra.mxu0 %v3508
    %5104 = vmatprep.subr.bf16.mxu0 %v3517
    %5105 = vmatpush1.bf16.msra.mxu0 %v3516
    %5106 = vmatprep.subr.bf16.mxu0 %v3525
    %5107 = vmatpush1.bf16.msra.mxu0 %v3524
    %5108 = vmatprep.subr.bf16.mxu0 %v3533
    %5109 = vmatpush1.bf16.msra.mxu0 %v3532
    %5110 = vmatprep.subr.bf16.mxu0 %v3541
    %5111 = vmatpush1.bf16.msra.mxu0 %v3540
    %5112 = vmatprep.subr.bf16.mxu0 %v3549
    %5113 = vmatpush1.bf16.msra.mxu0 %v3548
    %5114 = vmatprep.subr.bf16.mxu0 %v3557
    %5115 = vmatpush1.bf16.msra.mxu0 %v3556
    %5116 = vmatprep.subr.bf16.mxu0 %v3565
    %5117 = vmatpush1.bf16.msra.mxu0 %v3564
    %5118 = vmatprep.subr.bf16.mxu0 %v3573
    %5119 = vmatpush1.bf16.msra.mxu0 %v3572
    %5120 = vmatprep.subr.bf16.mxu0 %v3581
    %5121 = vmatpush1.bf16.msra.mxu0 %v3580
    %5122 = vmatprep.subr.bf16.mxu0 %v3589
    %5123 = vmatpush1.bf16.msra.mxu0 %v3588
    %5124 = vmatprep.subr.bf16.mxu0 %v3597
    %5125 = vmatpush1.bf16.msra.mxu0 %v3596
    %5126 = vmatprep.subr.bf16.mxu0 %v3605
    %5127 = vmatpush1.bf16.msra.mxu0 %v3604
    %5128 = vmatprep.subr.bf16.mxu0 %v3613
    %5129 = vmatpush1.bf16.msra.mxu0 %v3612
    %5130 = vmatprep.mubr.bf16.mxu0 %v889
    %5131 = vmatmul.mubr.bf16.gmra.mrb[0].mxu0 %v875
    %v5132 = vpop.f32.mrb[0].mxu0
    %v5133 = vadd.f32 %v5092, %v5132
    %v5134 = vpop.f32.mrb[0].mxu0
    %v5135 = vadd.f32 %v5094, %v5134
    %v5136 = vpop.f32.mrb[0].mxu0
    %v5137 = vpop.f32.mrb[0].mxu0
    %5138 = vdwg.mxu0
    %5139 = vmatprep.subr.bf16.mxu0 %v3621
    %5140 = vmatpush1.bf16.msra.mxu0 %v3620
    %5141 = vmatprep.subr.bf16.mxu0 %v3629
    %5142 = vmatpush1.bf16.msra.mxu0 %v3628
    %5143 = vmatprep.subr.bf16.mxu0 %v3637
    %5144 = vmatpush1.bf16.msra.mxu0 %v3636
    %5145 = vmatprep.subr.bf16.mxu0 %v3645
    %5146 = vmatpush1.bf16.msra.mxu0 %v3644
    %5147 = vmatprep.subr.bf16.mxu0 %v3653
    %5148 = vmatpush1.bf16.msra.mxu0 %v3652
    %5149 = vmatprep.subr.bf16.mxu0 %v3661
    %5150 = vmatpush1.bf16.msra.mxu0 %v3660
    %5151 = vmatprep.subr.bf16.mxu0 %v3669
    %5152 = vmatpush1.bf16.msra.mxu0 %v3668
    %5153 = vmatprep.subr.bf16.mxu0 %v3677
    %5154 = vmatpush1.bf16.msra.mxu0 %v3676
    %5155 = vmatprep.subr.bf16.mxu0 %v3685
    %5156 = vmatpush1.bf16.msra.mxu0 %v3684
    %5157 = vmatprep.subr.bf16.mxu0 %v3693
    %5158 = vmatpush1.bf16.msra.mxu0 %v3692
    %5159 = vmatprep.subr.bf16.mxu0 %v3701
    %5160 = vmatpush1.bf16.msra.mxu0 %v3700
    %5161 = vmatprep.subr.bf16.mxu0 %v3709
    %5162 = vmatpush1.bf16.msra.mxu0 %v3708
    %5163 = vmatprep.subr.bf16.mxu0 %v3717
    %5164 = vmatpush1.bf16.msra.mxu0 %v3716
    %5165 = vmatprep.subr.bf16.mxu0 %v3725
    %5166 = vmatpush1.bf16.msra.mxu0 %v3724
    %5167 = vmatprep.subr.bf16.mxu0 %v3733
    %5168 = vmatpush1.bf16.msra.mxu0 %v3732
    %5169 = vmatprep.subr.bf16.mxu0 %v3741
    %5170 = vmatpush1.bf16.msra.mxu0 %v3740
    %5171 = vmatprep.mubr.bf16.mxu0 %v893
    %5172 = vmatmul.mubr.bf16.gmra.mrb[0].mxu0 %v891
    %v5173 = vpop.f32.mrb[0].mxu0
    %v5174 = vadd.f32 %v5133, %v5173
    %v5175 = vpop.f32.mrb[0].mxu0
    %v5176 = vadd.f32 %v5135, %v5175
    %v5177 = vpop.f32.mrb[0].mxu0
    %v5178 = vpop.f32.mrb[0].mxu0
    %5179 = vdwg.mxu0
    %5180 = vmatprep.subr.bf16.mxu0 %v3749
    %5181 = vmatpush1.bf16.msra.mxu0 %v3748
    %5182 = vmatprep.subr.bf16.mxu0 %v3757
    %5183 = vmatpush1.bf16.msra.mxu0 %v3756
    %5184 = vmatprep.subr.bf16.mxu0 %v3765
    %5185 = vmatpush1.bf16.msra.mxu0 %v3764
    %5186 = vmatprep.subr.bf16.mxu0 %v3773
    %5187 = vmatpush1.bf16.msra.mxu0 %v3772
    %5188 = vmatprep.subr.bf16.mxu0 %v3781
    %5189 = vmatpush1.bf16.msra.mxu0 %v3780
    %5190 = vmatprep.subr.bf16.mxu0 %v3789
    %5191 = vmatpush1.bf16.msra.mxu0 %v3788
    %5192 = vmatprep.subr.bf16.mxu0 %v3797
    %5193 = vmatpush1.bf16.msra.mxu0 %v3796
    %5194 = vmatprep.subr.bf16.mxu0 %v3805
    %5195 = vmatpush1.bf16.msra.mxu0 %v3804
    %5196 = vmatprep.subr.bf16.mxu0 %v3813
    %5197 = vmatpush1.bf16.msra.mxu0 %v3812
    %5198 = vmatprep.subr.bf16.mxu0 %v3821
    %5199 = vmatpush1.bf16.msra.mxu0 %v3820
    %5200 = vmatprep.subr.bf16.mxu0 %v3829
    %5201 = vmatpush1.bf16.msra.mxu0 %v3828
    %5202 = vmatprep.subr.bf16.mxu0 %v3837
    %5203 = vmatpush1.bf16.msra.mxu0 %v3836
    %5204 = vmatprep.subr.bf16.mxu0 %v3845
    %5205 = vmatpush1.bf16.msra.mxu0 %v3844
    %5206 = vmatprep.subr.bf16.mxu0 %v3853
    %5207 = vmatpush1.bf16.msra.mxu0 %v3852
    %5208 = vmatprep.subr.bf16.mxu0 %v3861
    %5209 = vmatpush1.bf16.msra.mxu0 %v3860
    %5210 = vmatprep.subr.bf16.mxu0 %v3869
    %5211 = vmatpush1.bf16.msra.mxu0 %v3868
    %5212 = vmatprep.mubr.bf16.mxu0 %v915
    %5213 = vmatmul.mubr.bf16.gmra.mrb[0].mxu0 %v908
    %v5214 = vpop.f32.mrb[0].mxu0
    %v5215 = vadd.f32 %v5174, %v5214
    %v5216 = vpop.f32.mrb[0].mxu0
    %v5217 = vadd.f32 %v5176, %v5216
    %v5218 = vpop.f32.mrb[0].mxu0
    %v5219 = vpop.f32.mrb[0].mxu0
    %5220 = vdwg.mxu0
    %5221 = vmatprep.subr.bf16.mxu0 %v3877
    %5222 = vmatpush1.bf16.msra.mxu0 %v3876
    %5223 = vmatprep.subr.bf16.mxu0 %v3885
    %5224 = vmatpush1.bf16.msra.mxu0 %v3884
    %5225 = vmatprep.subr.bf16.mxu0 %v3893
    %5226 = vmatpush1.bf16.msra.mxu0 %v3892
    %5227 = vmatprep.subr.bf16.mxu0 %v3901
    %5228 = vmatpush1.bf16.msra.mxu0 %v3900
    %5229 = vmatprep.subr.bf16.mxu0 %v3909
    %5230 = vmatpush1.bf16.msra.mxu0 %v3908
    %5231 = vmatprep.subr.bf16.mxu0 %v3917
    %5232 = vmatpush1.bf16.msra.mxu0 %v3916
    %5233 = vmatprep.subr.bf16.mxu0 %v3925
    %5234 = vmatpush1.bf16.msra.mxu0 %v3924
    %5235 = vmatprep.subr.bf16.mxu0 %v3933
    %5236 = vmatpush1.bf16.msra.mxu0 %v3932
    %5237 = vmatprep.subr.bf16.mxu0 %v3941
    %5238 = vmatpush1.bf16.msra.mxu0 %v3940
    %5239 = vmatprep.subr.bf16.mxu0 %v3949
    %5240 = vmatpush1.bf16.msra.mxu0 %v3948
    %5241 = vmatprep.subr.bf16.mxu0 %v3957
    %5242 = vmatpush1.bf16.msra.mxu0 %v3956
    %5243 = vmatprep.subr.bf16.mxu0 %v3965
    %5244 = vmatpush1.bf16.msra.mxu0 %v3964
    %5245 = vmatprep.subr.bf16.mxu0 %v3973
    %5246 = vmatpush1.bf16.msra.mxu0 %v3972
    %5247 = vmatprep.subr.bf16.mxu0 %v3981
    %5248 = vmatpush1.bf16.msra.mxu0 %v3980
    %5249 = vmatprep.subr.bf16.mxu0 %v3989
    %5250 = vmatpush1.bf16.msra.mxu0 %v3988
    %5251 = vmatprep.subr.bf16.mxu0 %v3997
    %5252 = vmatpush1.bf16.msra.mxu0 %v3996
    %5253 = vmatprep.mubr.bf16.mxu0 %v917
    %5254 = vmatmul.mubr.bf16.gmra.mrb[0].mxu0 %v916
    %v5255 = vpop.f32.mrb[0].mxu0
    %v5256 = vadd.f32 %v5215, %v5255
    %v5257 = vpop.f32.mrb[0].mxu0
    %v5258 = vadd.f32 %v5217, %v5257
    %v5259 = vpop.f32.mrb[0].mxu0
    %v5260 = vpop.f32.mrb[0].mxu0
    %5261 = vdwg.mxu0
    %5262 = vmatprep.subr.bf16.mxu0 %v3239
    %5263 = vmatpush1.bf16.msra.mxu0 %v3238
    %5264 = vmatprep.subr.bf16.mxu0 %v3247
    %5265 = vmatpush1.bf16.msra.mxu0 %v3246
    %5266 = vmatprep.subr.bf16.mxu0 %v3255
    %5267 = vmatpush1.bf16.msra.mxu0 %v3254
    %5268 = vmatprep.subr.bf16.mxu0 %v3263
    %5269 = vmatpush1.bf16.msra.mxu0 %v3262
    %5270 = vmatprep.subr.bf16.mxu0 %v3271
    %5271 = vmatpush1.bf16.msra.mxu0 %v3270
    %5272 = vmatprep.subr.bf16.mxu0 %v3279
    %5273 = vmatpush1.bf16.msra.mxu0 %v3278
    %5274 = vmatprep.subr.bf16.mxu0 %v3287
    %5275 = vmatpush1.bf16.msra.mxu0 %v3286
    %5276 = vmatprep.subr.bf16.mxu0 %v3295
    %5277 = vmatpush1.bf16.msra.mxu0 %v3294
    %5278 = vmatprep.subr.bf16.mxu0 %v3303
    %5279 = vmatpush1.bf16.msra.mxu0 %v3302
    %5280 = vmatprep.subr.bf16.mxu0 %v3311
    %5281 = vmatpush1.bf16.msra.mxu0 %v3310
    %5282 = vmatprep.subr.bf16.mxu0 %v3319
    %5283 = vmatpush1.bf16.msra.mxu0 %v3318
    %5284 = vmatprep.subr.bf16.mxu0 %v3327
    %5285 = vmatpush1.bf16.msra.mxu0 %v3326
    %5286 = vmatprep.subr.bf16.mxu0 %v3335
    %5287 = vmatpush1.bf16.msra.mxu0 %v3334
    %5288 = vmatprep.subr.bf16.mxu0 %v3343
    %5289 = vmatpush1.bf16.msra.mxu0 %v3342
    %5290 = vmatprep.subr.bf16.mxu0 %v3351
    %5291 = vmatpush1.bf16.msra.mxu0 %v3350
    %5292 = vmatprep.subr.bf16.mxu0 %v3359
    %5293 = vmatpush1.bf16.msra.mxu0 %v3358
    %5294 = vmatprep.mubr.bf16.mxu0 %v882
    %5295 = vmatmul.mubr.bf16.gmra.mrb[0].mxu0 %v868
    %v5296 = vpop.f32.mrb[0].mxu0
    %v5297 = vadd.f32 %v822, %v5296
    %v5298 = vpop.f32.mrb[0].mxu0
    %v5299 = vadd.f32 %v826, %v5298
    %v5300 = vpop.f32.mrb[0].mxu0
    %v5301 = vpop.f32.mrb[0].mxu0
    %5302 = vdwg.mxu0
    %5303 = vmatprep.subr.bf16.mxu0 %v3367
    %5304 = vmatpush1.bf16.msra.mxu0 %v3366
    %5305 = vmatprep.subr.bf16.mxu0 %v3375
    %5306 = vmatpush1.bf16.msra.mxu0 %v3374
    %5307 = vmatprep.subr.bf16.mxu0 %v3383
    %5308 = vmatpush1.bf16.msra.mxu0 %v3382
    %5309 = vmatprep.subr.bf16.mxu0 %v3391
    %5310 = vmatpush1.bf16.msra.mxu0 %v3390
    %5311 = vmatprep.subr.bf16.mxu0 %v3399
    %5312 = vmatpush1.bf16.msra.mxu0 %v3398
    %5313 = vmatprep.subr.bf16.mxu0 %v3407
    %5314 = vmatpush1.bf16.msra.mxu0 %v3406
    %5315 = vmatprep.subr.bf16.mxu0 %v3415
    %5316 = vmatpush1.bf16.msra.mxu0 %v3414
    %5317 = vmatprep.subr.bf16.mxu0 %v3423
    %5318 = vmatpush1.bf16.msra.mxu0 %v3422
    %5319 = vmatprep.subr.bf16.mxu0 %v3431
    %5320 = vmatpush1.bf16.msra.mxu0 %v3430
    %5321 = vmatprep.subr.bf16.mxu0 %v3439
    %5322 = vmatpush1.bf16.msra.mxu0 %v3438
    %5323 = vmatprep.subr.bf16.mxu0 %v3447
    %5324 = vmatpush1.bf16.msra.mxu0 %v3446
    %5325 = vmatprep.subr.bf16.mxu0 %v3455
    %5326 = vmatpush1.bf16.msra.mxu0 %v3454
    %5327 = vmatprep.subr.bf16.mxu0 %v3463
    %5328 = vmatpush1.bf16.msra.mxu0 %v3462
    %5329 = vmatprep.subr.bf16.mxu0 %v3471
    %5330 = vmatpush1.bf16.msra.mxu0 %v3470
    %5331 = vmatprep.subr.bf16.mxu0 %v3479
    %5332 = vmatpush1.bf16.msra.mxu0 %v3478
    %5333 = vmatprep.subr.bf16.mxu0 %v3487
    %5334 = vmatpush1.bf16.msra.mxu0 %v3486
    %5335 = vmatprep.mubr.bf16.mxu0 %v892
    %5336 = vmatmul.mubr.bf16.gmra.mrb[0].mxu0 %v890
    %v5337 = vpop.f32.mrb[0].mxu0
    %v5338 = vadd.f32 %v5297, %v5337
    %v5339 = vpop.f32.mrb[0].mxu0
    %v5340 = vadd.f32 %v5299, %v5339
    %v5341 = vpop.f32.mrb[0].mxu0
    %v5342 = vpop.f32.mrb[0].mxu0
    %5343 = vdwg.mxu0
    %5344 = vmatprep.subr.bf16.mxu0 %v3495
    %5345 = vmatpush1.bf16.msra.mxu0 %v3494
    %5346 = vmatprep.subr.bf16.mxu0 %v3503
    %5347 = vmatpush1.bf16.msra.mxu0 %v3502
    %5348 = vmatprep.subr.bf16.mxu0 %v3511
    %5349 = vmatpush1.bf16.msra.mxu0 %v3510
    %5350 = vmatprep.subr.bf16.mxu0 %v3519
    %5351 = vmatpush1.bf16.msra.mxu0 %v3518
    %5352 = vmatprep.subr.bf16.mxu0 %v3527
    %5353 = vmatpush1.bf16.msra.mxu0 %v3526
    %5354 = vmatprep.subr.bf16.mxu0 %v3535
    %5355 = vmatpush1.bf16.msra.mxu0 %v3534
    %5356 = vmatprep.subr.bf16.mxu0 %v3543
    %5357 = vmatpush1.bf16.msra.mxu0 %v3542
    %5358 = vmatprep.subr.bf16.mxu0 %v3551
    %5359 = vmatpush1.bf16.msra.mxu0 %v3550
    %5360 = vmatprep.subr.bf16.mxu0 %v3559
    %5361 = vmatpush1.bf16.msra.mxu0 %v3558
    %5362 = vmatprep.subr.bf16.mxu0 %v3567
    %5363 = vmatpush1.bf16.msra.mxu0 %v3566
    %5364 = vmatprep.subr.bf16.mxu0 %v3575
    %5365 = vmatpush1.bf16.msra.mxu0 %v3574
    %5366 = vmatprep.subr.bf16.mxu0 %v3583
    %5367 = vmatpush1.bf16.msra.mxu0 %v3582
    %5368 = vmatprep.subr.bf16.mxu0 %v3591
    %5369 = vmatpush1.bf16.msra.mxu0 %v3590
    %5370 = vmatprep.subr.bf16.mxu0 %v3599
    %5371 = vmatpush1.bf16.msra.mxu0 %v3598
    %5372 = vmatprep.subr.bf16.mxu0 %v3607
    %5373 = vmatpush1.bf16.msra.mxu0 %v3606
    %5374 = vmatprep.subr.bf16.mxu0 %v3615
    %5375 = vmatpush1.bf16.msra.mxu0 %v3614
    %5376 = vmatprep.mubr.bf16.mxu0 %v889
    %5377 = vmatmul.mubr.bf16.gmra.mrb[0].mxu0 %v875
    %v5378 = vpop.f32.mrb[0].mxu0
    %v5379 = vadd.f32 %v5338, %v5378
    %v5380 = vpop.f32.mrb[0].mxu0
    %v5381 = vadd.f32 %v5340, %v5380
    %v5382 = vpop.f32.mrb[0].mxu0
    %v5383 = vpop.f32.mrb[0].mxu0
    %5384 = vdwg.mxu0
    %5385 = vmatprep.subr.bf16.mxu0 %v3623
    %5386 = vmatpush1.bf16.msra.mxu0 %v3622
    %5387 = vmatprep.subr.bf16.mxu0 %v3631
    %5388 = vmatpush1.bf16.msra.mxu0 %v3630
    %5389 = vmatprep.subr.bf16.mxu0 %v3639
    %5390 = vmatpush1.bf16.msra.mxu0 %v3638
    %5391 = vmatprep.subr.bf16.mxu0 %v3647
    %5392 = vmatpush1.bf16.msra.mxu0 %v3646
    %5393 = vmatprep.subr.bf16.mxu0 %v3655
    %5394 = vmatpush1.bf16.msra.mxu0 %v3654
    %5395 = vmatprep.subr.bf16.mxu0 %v3663
    %5396 = vmatpush1.bf16.msra.mxu0 %v3662
    %5397 = vmatprep.subr.bf16.mxu0 %v3671
    %5398 = vmatpush1.bf16.msra.mxu0 %v3670
    %5399 = vmatprep.subr.bf16.mxu0 %v3679
    %5400 = vmatpush1.bf16.msra.mxu0 %v3678
    %5401 = vmatprep.subr.bf16.mxu0 %v3687
    %5402 = vmatpush1.bf16.msra.mxu0 %v3686
    %5403 = vmatprep.subr.bf16.mxu0 %v3695
    %5404 = vmatpush1.bf16.msra.mxu0 %v3694
    %5405 = vmatprep.subr.bf16.mxu0 %v3703
    %5406 = vmatpush1.bf16.msra.mxu0 %v3702
    %5407 = vmatprep.subr.bf16.mxu0 %v3711
    %5408 = vmatpush1.bf16.msra.mxu0 %v3710
    %5409 = vmatprep.subr.bf16.mxu0 %v3719
    %5410 = vmatpush1.bf16.msra.mxu0 %v3718
    %5411 = vmatprep.subr.bf16.mxu0 %v3727
    %5412 = vmatpush1.bf16.msra.mxu0 %v3726
    %5413 = vmatprep.subr.bf16.mxu0 %v3735
    %5414 = vmatpush1.bf16.msra.mxu0 %v3734
    %5415 = vmatprep.subr.bf16.mxu0 %v3743
    %5416 = vmatpush1.bf16.msra.mxu0 %v3742
    %5417 = vmatprep.mubr.bf16.mxu0 %v893
    %5418 = vmatmul.mubr.bf16.gmra.mrb[0].mxu0 %v891
    %v5419 = vpop.f32.mrb[0].mxu0
    %v5420 = vadd.f32 %v5379, %v5419
    %v5421 = vpop.f32.mrb[0].mxu0
    %v5422 = vadd.f32 %v5381, %v5421
    %v5423 = vpop.f32.mrb[0].mxu0
    %v5424 = vpop.f32.mrb[0].mxu0
    %5425 = vdwg.mxu0
    %5426 = vmatprep.subr.bf16.mxu0 %v3751
    %5427 = vmatpush1.bf16.msra.mxu0 %v3750
    %5428 = vmatprep.subr.bf16.mxu0 %v3759
    %5429 = vmatpush1.bf16.msra.mxu0 %v3758
    %5430 = vmatprep.subr.bf16.mxu0 %v3767
    %5431 = vmatpush1.bf16.msra.mxu0 %v3766
    %5432 = vmatprep.subr.bf16.mxu0 %v3775
    %5433 = vmatpush1.bf16.msra.mxu0 %v3774
    %5434 = vmatprep.subr.bf16.mxu0 %v3783
    %5435 = vmatpush1.bf16.msra.mxu0 %v3782
    %5436 = vmatprep.subr.bf16.mxu0 %v3791
    %5437 = vmatpush1.bf16.msra.mxu0 %v3790
    %5438 = vmatprep.subr.bf16.mxu0 %v3799
    %5439 = vmatpush1.bf16.msra.mxu0 %v3798
    %5440 = vmatprep.subr.bf16.mxu0 %v3807
    %5441 = vmatpush1.bf16.msra.mxu0 %v3806
    %5442 = vmatprep.subr.bf16.mxu0 %v3815
    %5443 = vmatpush1.bf16.msra.mxu0 %v3814
    %5444 = vmatprep.subr.bf16.mxu0 %v3823
    %5445 = vmatpush1.bf16.msra.mxu0 %v3822
    %5446 = vmatprep.subr.bf16.mxu0 %v3831
    %5447 = vmatpush1.bf16.msra.mxu0 %v3830
    %5448 = vmatprep.subr.bf16.mxu0 %v3839
    %5449 = vmatpush1.bf16.msra.mxu0 %v3838
    %5450 = vmatprep.subr.bf16.mxu0 %v3847
    %5451 = vmatpush1.bf16.msra.mxu0 %v3846
    %5452 = vmatprep.subr.bf16.mxu0 %v3855
    %5453 = vmatpush1.bf16.msra.mxu0 %v3854
    %5454 = vmatprep.subr.bf16.mxu0 %v3863
    %5455 = vmatpush1.bf16.msra.mxu0 %v3862
    %5456 = vmatprep.subr.bf16.mxu0 %v3871
    %5457 = vmatpush1.bf16.msra.mxu0 %v3870
    %5458 = vmatprep.mubr.bf16.mxu0 %v915
    %5459 = vmatmul.mubr.bf16.gmra.mrb[0].mxu0 %v908
    %v5460 = vpop.f32.mrb[0].mxu0
    %v5461 = vadd.f32 %v5420, %v5460
    %v5462 = vpop.f32.mrb[0].mxu0
    %v5463 = vadd.f32 %v5422, %v5462
    %v5464 = vpop.f32.mrb[0].mxu0
    %v5465 = vpop.f32.mrb[0].mxu0
    %5466 = vdwg.mxu0
    %5467 = vmatprep.subr.bf16.mxu0 %v3879
    %5468 = vmatpush1.bf16.msra.mxu0 %v3878
    %5469 = vmatprep.subr.bf16.mxu0 %v3887
    %5470 = vmatpush1.bf16.msra.mxu0 %v3886
    %5471 = vmatprep.subr.bf16.mxu0 %v3895
    %5472 = vmatpush1.bf16.msra.mxu0 %v3894
    %5473 = vmatprep.subr.bf16.mxu0 %v3903
    %5474 = vmatpush1.bf16.msra.mxu0 %v3902
    %5475 = vmatprep.subr.bf16.mxu0 %v3911
    %5476 = vmatpush1.bf16.msra.mxu0 %v3910
    %5477 = vmatprep.subr.bf16.mxu0 %v3919
    %5478 = vmatpush1.bf16.msra.mxu0 %v3918
    %5479 = vmatprep.subr.bf16.mxu0 %v3927
    %5480 = vmatpush1.bf16.msra.mxu0 %v3926
    %5481 = vmatprep.subr.bf16.mxu0 %v3935
    %5482 = vmatpush1.bf16.msra.mxu0 %v3934
    %5483 = vmatprep.subr.bf16.mxu0 %v3943
    %5484 = vmatpush1.bf16.msra.mxu0 %v3942
    %5485 = vmatprep.subr.bf16.mxu0 %v3951
    %5486 = vmatpush1.bf16.msra.mxu0 %v3950
    %5487 = vmatprep.subr.bf16.mxu0 %v3959
    %5488 = vmatpush1.bf16.msra.mxu0 %v3958
    %5489 = vmatprep.subr.bf16.mxu0 %v3967
    %5490 = vmatpush1.bf16.msra.mxu0 %v3966
    %5491 = vmatprep.subr.bf16.mxu0 %v3975
    %5492 = vmatpush1.bf16.msra.mxu0 %v3974
    %5493 = vmatprep.subr.bf16.mxu0 %v3983
    %5494 = vmatpush1.bf16.msra.mxu0 %v3982
    %5495 = vmatprep.subr.bf16.mxu0 %v3991
    %5496 = vmatpush1.bf16.msra.mxu0 %v3990
    %5497 = vmatprep.subr.bf16.mxu0 %v3999
    %5498 = vmatpush1.bf16.msra.mxu0 %v3998
    %5499 = vmatprep.mubr.bf16.mxu0 %v917
    %5500 = vmatmul.mubr.bf16.gmra.mrb[0].mxu0 %v916
    %v5501 = vpop.f32.mrb[0].mxu0
    %v5502 = vadd.f32 %v5461, %v5501
    %v5503 = vpop.f32.mrb[0].mxu0
    %v5504 = vadd.f32 %v5463, %v5503
    %v5505 = vpop.f32.mrb[0].mxu0
    %v5506 = vpop.f32.mrb[0].mxu0
    %5507 = vdwg.mxu0
    %5508 = vmatprep.subr.bf16.mxu0 %v3241
    %5509 = vmatpush1.bf16.msra.mxu0 %v3240
    %5510 = vmatprep.subr.bf16.mxu0 %v3249
    %5511 = vmatpush1.bf16.msra.mxu0 %v3248
    %5512 = vmatprep.subr.bf16.mxu0 %v3257
    %5513 = vmatpush1.bf16.msra.mxu0 %v3256
    %5514 = vmatprep.subr.bf16.mxu0 %v3265
    %5515 = vmatpush1.bf16.msra.mxu0 %v3264
    %5516 = vmatprep.subr.bf16.mxu0 %v3273
    %5517 = vmatpush1.bf16.msra.mxu0 %v3272
    %5518 = vmatprep.subr.bf16.mxu0 %v3281
    %5519 = vmatpush1.bf16.msra.mxu0 %v3280
    %5520 = vmatprep.subr.bf16.mxu0 %v3289
    %5521 = vmatpush1.bf16.msra.mxu0 %v3288
    %5522 = vmatprep.subr.bf16.mxu0 %v3297
    %5523 = vmatpush1.bf16.msra.mxu0 %v3296
    %5524 = vmatprep.subr.bf16.mxu0 %v3305
    %5525 = vmatpush1.bf16.msra.mxu0 %v3304
    %5526 = vmatprep.subr.bf16.mxu0 %v3313
    %5527 = vmatpush1.bf16.msra.mxu0 %v3312
    %5528 = vmatprep.subr.bf16.mxu0 %v3321
    %5529 = vmatpush1.bf16.msra.mxu0 %v3320
    %5530 = vmatprep.subr.bf16.mxu0 %v3329
    %5531 = vmatpush1.bf16.msra.mxu0 %v3328
    %5532 = vmatprep.subr.bf16.mxu0 %v3337
    %5533 = vmatpush1.bf16.msra.mxu0 %v3336
    %5534 = vmatprep.subr.bf16.mxu0 %v3345
    %5535 = vmatpush1.bf16.msra.mxu0 %v3344
    %5536 = vmatprep.subr.bf16.mxu0 %v3353
    %5537 = vmatpush1.bf16.msra.mxu0 %v3352
    %5538 = vmatprep.subr.bf16.mxu0 %v3361
    %5539 = vmatpush1.bf16.msra.mxu0 %v3360
    %5540 = vmatprep.mubr.bf16.mxu0 %v882
    %5541 = vmatmul.mubr.bf16.gmra.mrb[0].mxu0 %v868
    %v5542 = vpop.f32.mrb[0].mxu0
    %v5543 = vadd.f32 %v830, %v5542
    %v5544 = vpop.f32.mrb[0].mxu0
    %v5545 = vadd.f32 %v834, %v5544
    %v5546 = vpop.f32.mrb[0].mxu0
    %v5547 = vpop.f32.mrb[0].mxu0
    %5548 = vdwg.mxu0
    %5549 = vmatprep.subr.bf16.mxu0 %v3369
    %5550 = vmatpush1.bf16.msra.mxu0 %v3368
    %5551 = vmatprep.subr.bf16.mxu0 %v3377
    %5552 = vmatpush1.bf16.msra.mxu0 %v3376
    %5553 = vmatprep.subr.bf16.mxu0 %v3385
    %5554 = vmatpush1.bf16.msra.mxu0 %v3384
    %5555 = vmatprep.subr.bf16.mxu0 %v3393
    %5556 = vmatpush1.bf16.msra.mxu0 %v3392
    %5557 = vmatprep.subr.bf16.mxu0 %v3401
    %5558 = vmatpush1.bf16.msra.mxu0 %v3400
    %5559 = vmatprep.subr.bf16.mxu0 %v3409
    %5560 = vmatpush1.bf16.msra.mxu0 %v3408
    %5561 = vmatprep.subr.bf16.mxu0 %v3417
    %5562 = vmatpush1.bf16.msra.mxu0 %v3416
    %5563 = vmatprep.subr.bf16.mxu0 %v3425
    %5564 = vmatpush1.bf16.msra.mxu0 %v3424
    %5565 = vmatprep.subr.bf16.mxu0 %v3433
    %5566 = vmatpush1.bf16.msra.mxu0 %v3432
    %5567 = vmatprep.subr.bf16.mxu0 %v3441
    %5568 = vmatpush1.bf16.msra.mxu0 %v3440
    %5569 = vmatprep.subr.bf16.mxu0 %v3449
    %5570 = vmatpush1.bf16.msra.mxu0 %v3448
    %5571 = vmatprep.subr.bf16.mxu0 %v3457
    %5572 = vmatpush1.bf16.msra.mxu0 %v3456
    %5573 = vmatprep.subr.bf16.mxu0 %v3465
    %5574 = vmatpush1.bf16.msra.mxu0 %v3464
    %5575 = vmatprep.subr.bf16.mxu0 %v3473
    %5576 = vmatpush1.bf16.msra.mxu0 %v3472
    %5577 = vmatprep.subr.bf16.mxu0 %v3481
    %5578 = vmatpush1.bf16.msra.mxu0 %v3480
    %5579 = vmatprep.subr.bf16.mxu0 %v3489
    %5580 = vmatpush1.bf16.msra.mxu0 %v3488
    %5581 = vmatprep.mubr.bf16.mxu0 %v892
    %5582 = vmatmul.mubr.bf16.gmra.mrb[0].mxu0 %v890
    %v5583 = vpop.f32.mrb[0].mxu0
    %v5584 = vadd.f32 %v5543, %v5583
    %v5585 = vpop.f32.mrb[0].mxu0
    %v5586 = vadd.f32 %v5545, %v5585
    %v5587 = vpop.f32.mrb[0].mxu0
    %v5588 = vpop.f32.mrb[0].mxu0
    %5589 = vdwg.mxu0
    %5590 = vmatprep.subr.bf16.mxu0 %v3497
    %5591 = vmatpush1.bf16.msra.mxu0 %v3496
    %5592 = vmatprep.subr.bf16.mxu0 %v3505
    %5593 = vmatpush1.bf16.msra.mxu0 %v3504
    %5594 = vmatprep.subr.bf16.mxu0 %v3513
    %5595 = vmatpush1.bf16.msra.mxu0 %v3512
    %5596 = vmatprep.subr.bf16.mxu0 %v3521
    %5597 = vmatpush1.bf16.msra.mxu0 %v3520
    %5598 = vmatprep.subr.bf16.mxu0 %v3529
    %5599 = vmatpush1.bf16.msra.mxu0 %v3528
    %5600 = vmatprep.subr.bf16.mxu0 %v3537
    %5601 = vmatpush1.bf16.msra.mxu0 %v3536
    %5602 = vmatprep.subr.bf16.mxu0 %v3545
    %5603 = vmatpush1.bf16.msra.mxu0 %v3544
    %5604 = vmatprep.subr.bf16.mxu0 %v3553
    %5605 = vmatpush1.bf16.msra.mxu0 %v3552
    %5606 = vmatprep.subr.bf16.mxu0 %v3561
    %5607 = vmatpush1.bf16.msra.mxu0 %v3560
    %5608 = vmatprep.subr.bf16.mxu0 %v3569
    %5609 = vmatpush1.bf16.msra.mxu0 %v3568
    %5610 = vmatprep.subr.bf16.mxu0 %v3577
    %5611 = vmatpush1.bf16.msra.mxu0 %v3576
    %5612 = vmatprep.subr.bf16.mxu0 %v3585
    %5613 = vmatpush1.bf16.msra.mxu0 %v3584
    %5614 = vmatprep.subr.bf16.mxu0 %v3593
    %5615 = vmatpush1.bf16.msra.mxu0 %v3592
    %5616 = vmatprep.subr.bf16.mxu0 %v3601
    %5617 = vmatpush1.bf16.msra.mxu0 %v3600
    %5618 = vmatprep.subr.bf16.mxu0 %v3609
    %5619 = vmatpush1.bf16.msra.mxu0 %v3608
    %5620 = vmatprep.subr.bf16.mxu0 %v3617
    %5621 = vmatpush1.bf16.msra.mxu0 %v3616
    %5622 = vmatprep.mubr.bf16.mxu0 %v889
    %5623 = vmatmul.mubr.bf16.gmra.mrb[0].mxu0 %v875
    %v5624 = vpop.f32.mrb[0].mxu0
    %v5625 = vadd.f32 %v5584, %v5624
    %v5626 = vpop.f32.mrb[0].mxu0
    %v5627 = vadd.f32 %v5586, %v5626
    %v5628 = vpop.f32.mrb[0].mxu0
    %v5629 = vpop.f32.mrb[0].mxu0
    %5630 = vdwg.mxu0
    %5631 = vmatprep.subr.bf16.mxu0 %v3625
    %5632 = vmatpush1.bf16.msra.mxu0 %v3624
    %5633 = vmatprep.subr.bf16.mxu0 %v3633
    %5634 = vmatpush1.bf16.msra.mxu0 %v3632
    %5635 = vmatprep.subr.bf16.mxu0 %v3641
    %5636 = vmatpush1.bf16.msra.mxu0 %v3640
    %5637 = vmatprep.subr.bf16.mxu0 %v3649
    %5638 = vmatpush1.bf16.msra.mxu0 %v3648
    %5639 = vmatprep.subr.bf16.mxu0 %v3657
    %5640 = vmatpush1.bf16.msra.mxu0 %v3656
    %5641 = vmatprep.subr.bf16.mxu0 %v3665
    %5642 = vmatpush1.bf16.msra.mxu0 %v3664
    %5643 = vmatprep.subr.bf16.mxu0 %v3673
    %5644 = vmatpush1.bf16.msra.mxu0 %v3672
    %5645 = vmatprep.subr.bf16.mxu0 %v3681
    %5646 = vmatpush1.bf16.msra.mxu0 %v3680
    %5647 = vmatprep.subr.bf16.mxu0 %v3689
    %5648 = vmatpush1.bf16.msra.mxu0 %v3688
    %5649 = vmatprep.subr.bf16.mxu0 %v3697
    %5650 = vmatpush1.bf16.msra.mxu0 %v3696
    %5651 = vmatprep.subr.bf16.mxu0 %v3705
    %5652 = vmatpush1.bf16.msra.mxu0 %v3704
    %5653 = vmatprep.subr.bf16.mxu0 %v3713
    %5654 = vmatpush1.bf16.msra.mxu0 %v3712
    %5655 = vmatprep.subr.bf16.mxu0 %v3721
    %5656 = vmatpush1.bf16.msra.mxu0 %v3720
    %5657 = vmatprep.subr.bf16.mxu0 %v3729
    %5658 = vmatpush1.bf16.msra.mxu0 %v3728
    %5659 = vmatprep.subr.bf16.mxu0 %v3737
    %5660 = vmatpush1.bf16.msra.mxu0 %v3736
    %5661 = vmatprep.subr.bf16.mxu0 %v3745
    %5662 = vmatpush1.bf16.msra.mxu0 %v3744
    %5663 = vmatprep.mubr.bf16.mxu0 %v893
    %5664 = vmatmul.mubr.bf16.gmra.mrb[0].mxu0 %v891
    %v5665 = vpop.f32.mrb[0].mxu0
    %v5666 = vadd.f32 %v5625, %v5665
    %v5667 = vpop.f32.mrb[0].mxu0
    %v5668 = vadd.f32 %v5627, %v5667
    %v5669 = vpop.f32.mrb[0].mxu0
    %v5670 = vpop.f32.mrb[0].mxu0
    %5671 = vdwg.mxu0
    %5672 = vmatprep.subr.bf16.mxu0 %v3753
    %5673 = vmatpush1.bf16.msra.mxu0 %v3752
    %5674 = vmatprep.subr.bf16.mxu0 %v3761
    %5675 = vmatpush1.bf16.msra.mxu0 %v3760
    %5676 = vmatprep.subr.bf16.mxu0 %v3769
    %5677 = vmatpush1.bf16.msra.mxu0 %v3768
    %5678 = vmatprep.subr.bf16.mxu0 %v3777
    %5679 = vmatpush1.bf16.msra.mxu0 %v3776
    %5680 = vmatprep.subr.bf16.mxu0 %v3785
    %5681 = vmatpush1.bf16.msra.mxu0 %v3784
    %5682 = vmatprep.subr.bf16.mxu0 %v3793
    %5683 = vmatpush1.bf16.msra.mxu0 %v3792
    %5684 = vmatprep.subr.bf16.mxu0 %v3801
    %5685 = vmatpush1.bf16.msra.mxu0 %v3800
    %5686 = vmatprep.subr.bf16.mxu0 %v3809
    %5687 = vmatpush1.bf16.msra.mxu0 %v3808
    %5688 = vmatprep.subr.bf16.mxu0 %v3817
    %5689 = vmatpush1.bf16.msra.mxu0 %v3816
    %5690 = vmatprep.subr.bf16.mxu0 %v3825
    %5691 = vmatpush1.bf16.msra.mxu0 %v3824
    %5692 = vmatprep.subr.bf16.mxu0 %v3833
    %5693 = vmatpush1.bf16.msra.mxu0 %v3832
    %5694 = vmatprep.subr.bf16.mxu0 %v3841
    %5695 = vmatpush1.bf16.msra.mxu0 %v3840
    %5696 = vmatprep.subr.bf16.mxu0 %v3849
    %5697 = vmatpush1.bf16.msra.mxu0 %v3848
    %5698 = vmatprep.subr.bf16.mxu0 %v3857
    %5699 = vmatpush1.bf16.msra.mxu0 %v3856
    %5700 = vmatprep.subr.bf16.mxu0 %v3865
    %5701 = vmatpush1.bf16.msra.mxu0 %v3864
    %5702 = vmatprep.subr.bf16.mxu0 %v3873
    %5703 = vmatpush1.bf16.msra.mxu0 %v3872
    %5704 = vmatprep.mubr.bf16.mxu0 %v915
    %5705 = vmatmul.mubr.bf16.gmra.mrb[0].mxu0 %v908
    %v5706 = vpop.f32.mrb[0].mxu0
    %v5707 = vadd.f32 %v5666, %v5706
    %v5708 = vpop.f32.mrb[0].mxu0
    %v5709 = vadd.f32 %v5668, %v5708
    %v5710 = vpop.f32.mrb[0].mxu0
    %v5711 = vpop.f32.mrb[0].mxu0
    %5712 = vdwg.mxu0
    %5713 = vmatprep.subr.bf16.mxu0 %v3881
    %5714 = vmatpush1.bf16.msra.mxu0 %v3880
    %5715 = vmatprep.subr.bf16.mxu0 %v3889
    %5716 = vmatpush1.bf16.msra.mxu0 %v3888
    %5717 = vmatprep.subr.bf16.mxu0 %v3897
    %5718 = vmatpush1.bf16.msra.mxu0 %v3896
    %5719 = vmatprep.subr.bf16.mxu0 %v3905
    %5720 = vmatpush1.bf16.msra.mxu0 %v3904
    %5721 = vmatprep.subr.bf16.mxu0 %v3913
    %5722 = vmatpush1.bf16.msra.mxu0 %v3912
    %5723 = vmatprep.subr.bf16.mxu0 %v3921
    %5724 = vmatpush1.bf16.msra.mxu0 %v3920
    %5725 = vmatprep.subr.bf16.mxu0 %v3929
    %5726 = vmatpush1.bf16.msra.mxu0 %v3928
    %5727 = vmatprep.subr.bf16.mxu0 %v3937
    %5728 = vmatpush1.bf16.msra.mxu0 %v3936
    %5729 = vmatprep.subr.bf16.mxu0 %v3945
    %5730 = vmatpush1.bf16.msra.mxu0 %v3944
    %5731 = vmatprep.subr.bf16.mxu0 %v3953
    %5732 = vmatpush1.bf16.msra.mxu0 %v3952
    %5733 = vmatprep.subr.bf16.mxu0 %v3961
    %5734 = vmatpush1.bf16.msra.mxu0 %v3960
    %5735 = vmatprep.subr.bf16.mxu0 %v3969
    %5736 = vmatpush1.bf16.msra.mxu0 %v3968
    %5737 = vmatprep.subr.bf16.mxu0 %v3977
    %5738 = vmatpush1.bf16.msra.mxu0 %v3976
    %5739 = vmatprep.subr.bf16.mxu0 %v3985
    %5740 = vmatpush1.bf16.msra.mxu0 %v3984
    %5741 = vmatprep.subr.bf16.mxu0 %v3993
    %5742 = vmatpush1.bf16.msra.mxu0 %v3992
    %5743 = vmatprep.subr.bf16.mxu0 %v4001
    %5744 = vmatpush1.bf16.msra.mxu0 %v4000
    %5745 = vmatprep.mubr.bf16.mxu0 %v917
    %5746 = vmatmul.mubr.bf16.gmra.mrb[0].mxu0 %v916
    %v5747 = vpop.f32.mrb[0].mxu0
    %v5748 = vadd.f32 %v5707, %v5747
    %v5749 = vpop.f32.mrb[0].mxu0
    %v5750 = vadd.f32 %v5709, %v5749
    %v5751 = vpop.f32.mrb[0].mxu0
    %v5752 = vpop.f32.mrb[0].mxu0
    %5753 = vdwg.mxu0
    %v5754 = vmax.f32 %v5010, 0.0
    %v5755 = vmax.f32 %v5012, 0.0
    %v5756 = vmax.f32 %v5256, 0.0
    %v5757 = vmax.f32 %v5258, 0.0
    %v5758 = vmax.f32 %v5502, 0.0
    %v5759 = vmax.f32 %v5504, 0.0
    %v5760 = vmax.f32 %v5748, 0.0
    %v5761 = vmax.f32 %v5750, 0.0
    %v5762 = vpack.c.bf16 %v5754, %v5754
    %v5763 = vpack.c.bf16 %v5755, %v5755
    %v5764 = vpack.c.bf16 %v5756, %v5756
    %v5765 = vpack.c.bf16 %v5757, %v5757
    %v5766 = vpack.c.bf16 %v5758, %v5758
    %v5767 = vpack.c.bf16 %v5759, %v5759
    %v5768 = vpack.c.bf16 %v5760, %v5760
    %v5769 = vpack.c.bf16 %v5761, %v5761
    %v5770 = vld [vmem:[%s3] sm:$0xff]
    %v5771 = vld [vmem:[%s3 + $0x8] sm:$0xff]
    %v5772 = vld [vmem:[%s3 + $0x10] sm:$0xff]
    %v5773 = vld [vmem:[%s3 + $0x18] sm:$0xff]
    %v5774 = vld [vmem:[%s3 + $0x20] sm:$0xff]
    %v5775 = vld [vmem:[%s3 + $0x28] sm:$0xff]
    %v5776 = vld [vmem:[%s3 + $0x30] sm:$0xff]
    %v5777 = vld [vmem:[%s3 + $0x38] sm:$0xff]
    %v5778 = vld [vmem:[%s3 + $0x40] sm:$0xff]
    %v5779 = vld [vmem:[%s3 + $0x48] sm:$0xff]
    %v5780 = vld [vmem:[%s3 + $0x50] sm:$0xff]
    %v5781 = vld [vmem:[%s3 + $0x58] sm:$0xff]
    %v5782 = vld [vmem:[%s3 + $0x60] sm:$0xff]
    %v5783 = vld [vmem:[%s3 + $0x68] sm:$0xff]
    %v5784 = vld [vmem:[%s3 + $0x70] sm:$0xff]
    %v5785 = vld [vmem:[%s3 + $0x78] sm:$0xff]
    %v5786 = vld [vmem:[%s3 + $0x80] sm:$0xff]
    %v5787 = vld [vmem:[%s3 + $0x88] sm:$0xff]
    %v5788 = vld [vmem:[%s3 + $0x90] sm:$0xff]
    %v5789 = vld [vmem:[%s3 + $0x98] sm:$0xff]
    %v5790 = vld [vmem:[%s3 + $0xa0] sm:$0xff]
    %v5791 = vld [vmem:[%s3 + $0xa8] sm:$0xff]
    %v5792 = vld [vmem:[%s3 + $0xb0] sm:$0xff]
    %v5793 = vld [vmem:[%s3 + $0xb8] sm:$0xff]
    %v5794 = vld [vmem:[%s3 + $0xc0] sm:$0xff]
    %v5795 = vld [vmem:[%s3 + $0xc8] sm:$0xff]
    %v5796 = vld [vmem:[%s3 + $0xd0] sm:$0xff]
    %v5797 = vld [vmem:[%s3 + $0xd8] sm:$0xff]
    %v5798 = vld [vmem:[%s3 + $0xe0] sm:$0xff]
    %v5799 = vld [vmem:[%s3 + $0xe8] sm:$0xff]
    %v5800 = vld [vmem:[%s3 + $0xf0] sm:$0xff]
    %v5801 = vld [vmem:[%s3 + $0xf8] sm:$0xff]
    %v5802 = vld [vmem:[%s3 + $0x100] sm:$0xff]
    %v5803 = vld [vmem:[%s3 + $0x108] sm:$0xff]
    %v5804 = vld [vmem:[%s3 + $0x110] sm:$0xff]
    %v5805 = vld [vmem:[%s3 + $0x118] sm:$0xff]
    %v5806 = vld [vmem:[%s3 + $0x120] sm:$0xff]
    %v5807 = vld [vmem:[%s3 + $0x128] sm:$0xff]
    %v5808 = vld [vmem:[%s3 + $0x130] sm:$0xff]
    %v5809 = vld [vmem:[%s3 + $0x138] sm:$0xff]
    %v5810 = vld [vmem:[%s3 + $0x140] sm:$0xff]
    %v5811 = vld [vmem:[%s3 + $0x148] sm:$0xff]
    %v5812 = vld [vmem:[%s3 + $0x150] sm:$0xff]
    %v5813 = vld [vmem:[%s3 + $0x158] sm:$0xff]
    %v5814 = vld [vmem:[%s3 + $0x160] sm:$0xff]
    %v5815 = vld [vmem:[%s3 + $0x168] sm:$0xff]
    %v5816 = vld [vmem:[%s3 + $0x170] sm:$0xff]
    %v5817 = vld [vmem:[%s3 + $0x178] sm:$0xff]
    %v5818 = vld [vmem:[%s3 + $0x180] sm:$0xff]
    %v5819 = vld [vmem:[%s3 + $0x188] sm:$0xff]
    %v5820 = vld [vmem:[%s3 + $0x190] sm:$0xff]
    %v5821 = vld [vmem:[%s3 + $0x198] sm:$0xff]
    %v5822 = vld [vmem:[%s3 + $0x1a0] sm:$0xff]
    %v5823 = vld [vmem:[%s3 + $0x1a8] sm:$0xff]
    %v5824 = vld [vmem:[%s3 + $0x1b0] sm:$0xff]
    %v5825 = vld [vmem:[%s3 + $0x1b8] sm:$0xff]
    %v5826 = vld [vmem:[%s3 + $0x1c0] sm:$0xff]
    %v5827 = vld [vmem:[%s3 + $0x1c8] sm:$0xff]
    %v5828 = vld [vmem:[%s3 + $0x1d0] sm:$0xff]
    %v5829 = vld [vmem:[%s3 + $0x1d8] sm:$0xff]
    %v5830 = vld [vmem:[%s3 + $0x1e0] sm:$0xff]
    %v5831 = vld [vmem:[%s3 + $0x1e8] sm:$0xff]
    %v5832 = vld [vmem:[%s3 + $0x1f0] sm:$0xff]
    %v5833 = vld [vmem:[%s3 + $0x1f8] sm:$0xff]
    %v5834 = vld [vmem:[%s3 + $0x200] sm:$0xff]
    %v5835 = vld [vmem:[%s3 + $0x208] sm:$0xff]
    %v5836 = vld [vmem:[%s3 + $0x210] sm:$0xff]
    %v5837 = vld [vmem:[%s3 + $0x218] sm:$0xff]
    %v5838 = vld [vmem:[%s3 + $0x220] sm:$0xff]
    %v5839 = vld [vmem:[%s3 + $0x228] sm:$0xff]
    %v5840 = vld [vmem:[%s3 + $0x230] sm:$0xff]
    %v5841 = vld [vmem:[%s3 + $0x238] sm:$0xff]
    %v5842 = vld [vmem:[%s3 + $0x240] sm:$0xff]
    %v5843 = vld [vmem:[%s3 + $0x248] sm:$0xff]
    %v5844 = vld [vmem:[%s3 + $0x250] sm:$0xff]
    %v5845 = vld [vmem:[%s3 + $0x258] sm:$0xff]
    %v5846 = vld [vmem:[%s3 + $0x260] sm:$0xff]
    %v5847 = vld [vmem:[%s3 + $0x268] sm:$0xff]
    %v5848 = vld [vmem:[%s3 + $0x270] sm:$0xff]
    %v5849 = vld [vmem:[%s3 + $0x278] sm:$0xff]
    %v5850 = vld [vmem:[%s3 + $0x280] sm:$0xff]
    %v5851 = vld [vmem:[%s3 + $0x288] sm:$0xff]
    %v5852 = vld [vmem:[%s3 + $0x290] sm:$0xff]
    %v5853 = vld [vmem:[%s3 + $0x298] sm:$0xff]
    %v5854 = vld [vmem:[%s3 + $0x2a0] sm:$0xff]
    %v5855 = vld [vmem:[%s3 + $0x2a8] sm:$0xff]
    %v5856 = vld [vmem:[%s3 + $0x2b0] sm:$0xff]
    %v5857 = vld [vmem:[%s3 + $0x2b8] sm:$0xff]
    %v5858 = vld [vmem:[%s3 + $0x2c0] sm:$0xff]
    %v5859 = vld [vmem:[%s3 + $0x2c8] sm:$0xff]
    %v5860 = vld [vmem:[%s3 + $0x2d0] sm:$0xff]
    %v5861 = vld [vmem:[%s3 + $0x2d8] sm:$0xff]
    %v5862 = vld [vmem:[%s3 + $0x2e0] sm:$0xff]
    %v5863 = vld [vmem:[%s3 + $0x2e8] sm:$0xff]
    %v5864 = vld [vmem:[%s3 + $0x2f0] sm:$0xff]
    %v5865 = vld [vmem:[%s3 + $0x2f8] sm:$0xff]
    %v5866 = vld [vmem:[%s3 + $0x300] sm:$0xff]
    %v5867 = vld [vmem:[%s3 + $0x308] sm:$0xff]
    %v5868 = vld [vmem:[%s3 + $0x310] sm:$0xff]
    %v5869 = vld [vmem:[%s3 + $0x318] sm:$0xff]
    %v5870 = vld [vmem:[%s3 + $0x320] sm:$0xff]
    %v5871 = vld [vmem:[%s3 + $0x328] sm:$0xff]
    %v5872 = vld [vmem:[%s3 + $0x330] sm:$0xff]
    %v5873 = vld [vmem:[%s3 + $0x338] sm:$0xff]
    %v5874 = vld [vmem:[%s3 + $0x340] sm:$0xff]
    %v5875 = vld [vmem:[%s3 + $0x348] sm:$0xff]
    %v5876 = vld [vmem:[%s3 + $0x350] sm:$0xff]
    %v5877 = vld [vmem:[%s3 + $0x358] sm:$0xff]
    %v5878 = vld [vmem:[%s3 + $0x360] sm:$0xff]
    %v5879 = vld [vmem:[%s3 + $0x368] sm:$0xff]
    %v5880 = vld [vmem:[%s3 + $0x370] sm:$0xff]
    %v5881 = vld [vmem:[%s3 + $0x378] sm:$0xff]
    %v5882 = vld [vmem:[%s3 + $0x380] sm:$0xff]
    %v5883 = vld [vmem:[%s3 + $0x388] sm:$0xff]
    %v5884 = vld [vmem:[%s3 + $0x390] sm:$0xff]
    %v5885 = vld [vmem:[%s3 + $0x398] sm:$0xff]
    %v5886 = vld [vmem:[%s3 + $0x3a0] sm:$0xff]
    %v5887 = vld [vmem:[%s3 + $0x3a8] sm:$0xff]
    %v5888 = vld [vmem:[%s3 + $0x3b0] sm:$0xff]
    %v5889 = vld [vmem:[%s3 + $0x3b8] sm:$0xff]
    %v5890 = vld [vmem:[%s3 + $0x3c0] sm:$0xff]
    %v5891 = vld [vmem:[%s3 + $0x3c8] sm:$0xff]
    %v5892 = vld [vmem:[%s3 + $0x3d0] sm:$0xff]
    %v5893 = vld [vmem:[%s3 + $0x3d8] sm:$0xff]
    %v5894 = vld [vmem:[%s3 + $0x3e0] sm:$0xff]
    %v5895 = vld [vmem:[%s3 + $0x3e8] sm:$0xff]
    %v5896 = vld [vmem:[%s3 + $0x3f0] sm:$0xff]
    %v5897 = vld [vmem:[%s3 + $0x3f8] sm:$0xff]
    %v5898 = vld [vmem:[%s3 + $0x400] sm:$0xff]
    %v5899 = vld [vmem:[%s3 + $0x408] sm:$0xff]
    %v5900 = vld [vmem:[%s3 + $0x410] sm:$0xff]
    %v5901 = vld [vmem:[%s3 + $0x418] sm:$0xff]
    %v5902 = vld [vmem:[%s3 + $0x420] sm:$0xff]
    %v5903 = vld [vmem:[%s3 + $0x428] sm:$0xff]
    %v5904 = vld [vmem:[%s3 + $0x430] sm:$0xff]
    %v5905 = vld [vmem:[%s3 + $0x438] sm:$0xff]
    %v5906 = vld [vmem:[%s3 + $0x440] sm:$0xff]
    %v5907 = vld [vmem:[%s3 + $0x448] sm:$0xff]
    %v5908 = vld [vmem:[%s3 + $0x450] sm:$0xff]
    %v5909 = vld [vmem:[%s3 + $0x458] sm:$0xff]
    %v5910 = vld [vmem:[%s3 + $0x460] sm:$0xff]
    %v5911 = vld [vmem:[%s3 + $0x468] sm:$0xff]
    %v5912 = vld [vmem:[%s3 + $0x470] sm:$0xff]
    %v5913 = vld [vmem:[%s3 + $0x478] sm:$0xff]
    %v5914 = vld [vmem:[%s3 + $0x480] sm:$0xff]
    %v5915 = vld [vmem:[%s3 + $0x488] sm:$0xff]
    %v5916 = vld [vmem:[%s3 + $0x490] sm:$0xff]
    %v5917 = vld [vmem:[%s3 + $0x498] sm:$0xff]
    %v5918 = vld [vmem:[%s3 + $0x4a0] sm:$0xff]
    %v5919 = vld [vmem:[%s3 + $0x4a8] sm:$0xff]
    %v5920 = vld [vmem:[%s3 + $0x4b0] sm:$0xff]
    %v5921 = vld [vmem:[%s3 + $0x4b8] sm:$0xff]
    %v5922 = vld [vmem:[%s3 + $0x4c0] sm:$0xff]
    %v5923 = vld [vmem:[%s3 + $0x4c8] sm:$0xff]
    %v5924 = vld [vmem:[%s3 + $0x4d0] sm:$0xff]
    %v5925 = vld [vmem:[%s3 + $0x4d8] sm:$0xff]
    %v5926 = vld [vmem:[%s3 + $0x4e0] sm:$0xff]
    %v5927 = vld [vmem:[%s3 + $0x4e8] sm:$0xff]
    %v5928 = vld [vmem:[%s3 + $0x4f0] sm:$0xff]
    %v5929 = vld [vmem:[%s3 + $0x4f8] sm:$0xff]
    %v5930 = vld [vmem:[%s3 + $0x500] sm:$0xff]
    %v5931 = vld [vmem:[%s3 + $0x508] sm:$0xff]
    %v5932 = vld [vmem:[%s3 + $0x510] sm:$0xff]
    %v5933 = vld [vmem:[%s3 + $0x518] sm:$0xff]
    %v5934 = vld [vmem:[%s3 + $0x520] sm:$0xff]
    %v5935 = vld [vmem:[%s3 + $0x528] sm:$0xff]
    %v5936 = vld [vmem:[%s3 + $0x530] sm:$0xff]
    %v5937 = vld [vmem:[%s3 + $0x538] sm:$0xff]
    %v5938 = vld [vmem:[%s3 + $0x540] sm:$0xff]
    %v5939 = vld [vmem:[%s3 + $0x548] sm:$0xff]
    %v5940 = vld [vmem:[%s3 + $0x550] sm:$0xff]
    %v5941 = vld [vmem:[%s3 + $0x558] sm:$0xff]
    %v5942 = vld [vmem:[%s3 + $0x560] sm:$0xff]
    %v5943 = vld [vmem:[%s3 + $0x568] sm:$0xff]
    %v5944 = vld [vmem:[%s3 + $0x570] sm:$0xff]
    %v5945 = vld [vmem:[%s3 + $0x578] sm:$0xff]
    %v5946 = vld [vmem:[%s3 + $0x580] sm:$0xff]
    %v5947 = vld [vmem:[%s3 + $0x588] sm:$0xff]
    %v5948 = vld [vmem:[%s3 + $0x590] sm:$0xff]
    %v5949 = vld [vmem:[%s3 + $0x598] sm:$0xff]
    %v5950 = vld [vmem:[%s3 + $0x5a0] sm:$0xff]
    %v5951 = vld [vmem:[%s3 + $0x5a8] sm:$0xff]
    %v5952 = vld [vmem:[%s3 + $0x5b0] sm:$0xff]
    %v5953 = vld [vmem:[%s3 + $0x5b8] sm:$0xff]
    %v5954 = vld [vmem:[%s3 + $0x5c0] sm:$0xff]
    %v5955 = vld [vmem:[%s3 + $0x5c8] sm:$0xff]
    %v5956 = vld [vmem:[%s3 + $0x5d0] sm:$0xff]
    %v5957 = vld [vmem:[%s3 + $0x5d8] sm:$0xff]
    %v5958 = vld [vmem:[%s3 + $0x5e0] sm:$0xff]
    %v5959 = vld [vmem:[%s3 + $0x5e8] sm:$0xff]
    %v5960 = vld [vmem:[%s3 + $0x5f0] sm:$0xff]
    %v5961 = vld [vmem:[%s3 + $0x5f8] sm:$0xff]
    %v5962 = vld [vmem:[%s3 + $0x600] sm:$0xff]
    %v5963 = vld [vmem:[%s3 + $0x608] sm:$0xff]
    %v5964 = vld [vmem:[%s3 + $0x610] sm:$0xff]
    %v5965 = vld [vmem:[%s3 + $0x618] sm:$0xff]
    %v5966 = vld [vmem:[%s3 + $0x620] sm:$0xff]
    %v5967 = vld [vmem:[%s3 + $0x628] sm:$0xff]
    %v5968 = vld [vmem:[%s3 + $0x630] sm:$0xff]
    %v5969 = vld [vmem:[%s3 + $0x638] sm:$0xff]
    %v5970 = vld [vmem:[%s3 + $0x640] sm:$0xff]
    %v5971 = vld [vmem:[%s3 + $0x648] sm:$0xff]
    %v5972 = vld [vmem:[%s3 + $0x650] sm:$0xff]
    %v5973 = vld [vmem:[%s3 + $0x658] sm:$0xff]
    %v5974 = vld [vmem:[%s3 + $0x660] sm:$0xff]
    %v5975 = vld [vmem:[%s3 + $0x668] sm:$0xff]
    %v5976 = vld [vmem:[%s3 + $0x670] sm:$0xff]
    %v5977 = vld [vmem:[%s3 + $0x678] sm:$0xff]
    %v5978 = vld [vmem:[%s3 + $0x680] sm:$0xff]
    %v5979 = vld [vmem:[%s3 + $0x688] sm:$0xff]
    %v5980 = vld [vmem:[%s3 + $0x690] sm:$0xff]
    %v5981 = vld [vmem:[%s3 + $0x698] sm:$0xff]
    %v5982 = vld [vmem:[%s3 + $0x6a0] sm:$0xff]
    %v5983 = vld [vmem:[%s3 + $0x6a8] sm:$0xff]
    %v5984 = vld [vmem:[%s3 + $0x6b0] sm:$0xff]
    %v5985 = vld [vmem:[%s3 + $0x6b8] sm:$0xff]
    %v5986 = vld [vmem:[%s3 + $0x6c0] sm:$0xff]
    %v5987 = vld [vmem:[%s3 + $0x6c8] sm:$0xff]
    %v5988 = vld [vmem:[%s3 + $0x6d0] sm:$0xff]
    %v5989 = vld [vmem:[%s3 + $0x6d8] sm:$0xff]
    %v5990 = vld [vmem:[%s3 + $0x6e0] sm:$0xff]
    %v5991 = vld [vmem:[%s3 + $0x6e8] sm:$0xff]
    %v5992 = vld [vmem:[%s3 + $0x6f0] sm:$0xff]
    %v5993 = vld [vmem:[%s3 + $0x6f8] sm:$0xff]
    %v5994 = vld [vmem:[%s3 + $0x700] sm:$0xff]
    %v5995 = vld [vmem:[%s3 + $0x708] sm:$0xff]
    %v5996 = vld [vmem:[%s3 + $0x710] sm:$0xff]
    %v5997 = vld [vmem:[%s3 + $0x718] sm:$0xff]
    %v5998 = vld [vmem:[%s3 + $0x720] sm:$0xff]
    %v5999 = vld [vmem:[%s3 + $0x728] sm:$0xff]
    %v6000 = vld [vmem:[%s3 + $0x730] sm:$0xff]
    %v6001 = vld [vmem:[%s3 + $0x738] sm:$0xff]
    %v6002 = vld [vmem:[%s3 + $0x740] sm:$0xff]
    %v6003 = vld [vmem:[%s3 + $0x748] sm:$0xff]
    %v6004 = vld [vmem:[%s3 + $0x750] sm:$0xff]
    %v6005 = vld [vmem:[%s3 + $0x758] sm:$0xff]
    %v6006 = vld [vmem:[%s3 + $0x760] sm:$0xff]
    %v6007 = vld [vmem:[%s3 + $0x768] sm:$0xff]
    %v6008 = vld [vmem:[%s3 + $0x770] sm:$0xff]
    %v6009 = vld [vmem:[%s3 + $0x778] sm:$0xff]
    %v6010 = vld [vmem:[%s3 + $0x780] sm:$0xff]
    %v6011 = vld [vmem:[%s3 + $0x788] sm:$0xff]
    %v6012 = vld [vmem:[%s3 + $0x790] sm:$0xff]
    %v6013 = vld [vmem:[%s3 + $0x798] sm:$0xff]
    %v6014 = vld [vmem:[%s3 + $0x7a0] sm:$0xff]
    %v6015 = vld [vmem:[%s3 + $0x7a8] sm:$0xff]
    %v6016 = vld [vmem:[%s3 + $0x7b0] sm:$0xff]
    %v6017 = vld [vmem:[%s3 + $0x7b8] sm:$0xff]
    %v6018 = vld [vmem:[%s3 + $0x7c0] sm:$0xff]
    %v6019 = vld [vmem:[%s3 + $0x7c8] sm:$0xff]
    %v6020 = vld [vmem:[%s3 + $0x7d0] sm:$0xff]
    %v6021 = vld [vmem:[%s3 + $0x7d8] sm:$0xff]
    %v6022 = vld [vmem:[%s3 + $0x7e0] sm:$0xff]
    %v6023 = vld [vmem:[%s3 + $0x7e8] sm:$0xff]
    %v6024 = vld [vmem:[%s3 + $0x7f0] sm:$0xff]
    %v6025 = vld [vmem:[%s3 + $0x7f8] sm:$0xff]
    %v6026 = vld [vmem:[%s4] sm:$0xf]
    %v6028 = vlaneseq
    %v6029 = vshrl.u32 %v6028, 7
    %v6030 = vsub.s32 0, %v6029
    %v6031 = vrot.slane %v6026, %v6030
    %v6032 = vlaneseq
    %v6033 = vshrl.u32 %v6032, 7
    %v6034 = vsub.s32 1, %v6033
    %v6035 = vrot.slane %v6026, %v6034
    %v6036 = vlaneseq
    %v6037 = vshrl.u32 %v6036, 7
    %v6038 = vsub.s32 2, %v6037
    %v6039 = vrot.slane %v6026, %v6038
    %v6040 = vlaneseq
    %v6041 = vshrl.u32 %v6040, 7
    %v6042 = vsub.s32 3, %v6041
    %v6043 = vrot.slane %v6026, %v6042
    %v6304 = vunpack.c.l.b16 %v5770
    %v6305 = vunpack.c.h.b16 %v5770
    %v6306 = vunpack.c.l.b16 %v5771
    %v6307 = vunpack.c.h.b16 %v5771
    %v6308 = vunpack.c.l.b16 %v5772
    %v6309 = vunpack.c.h.b16 %v5772
    %v6310 = vunpack.c.l.b16 %v5773
    %v6311 = vunpack.c.h.b16 %v5773
    %v6312 = vunpack.c.l.b16 %v5774
    %v6313 = vunpack.c.h.b16 %v5774
    %v6314 = vunpack.c.l.b16 %v5775
    %v6315 = vunpack.c.h.b16 %v5775
    %v6316 = vunpack.c.l.b16 %v5776
    %v6317 = vunpack.c.h.b16 %v5776
    %v6318 = vunpack.c.l.b16 %v5777
    %v6319 = vunpack.c.h.b16 %v5777
    %v6320 = vunpack.c.l.b16 %v5778
    %v6321 = vunpack.c.h.b16 %v5778
    %v6322 = vunpack.c.l.b16 %v5779
    %v6323 = vunpack.c.h.b16 %v5779
    %v6324 = vunpack.c.l.b16 %v5780
    %v6325 = vunpack.c.h.b16 %v5780
    %v6326 = vunpack.c.l.b16 %v5781
    %v6327 = vunpack.c.h.b16 %v5781
    %v6328 = vunpack.c.l.b16 %v5782
    %v6329 = vunpack.c.h.b16 %v5782
    %v6330 = vunpack.c.l.b16 %v5783
    %v6331 = vunpack.c.h.b16 %v5783
    %v6332 = vunpack.c.l.b16 %v5784
    %v6333 = vunpack.c.h.b16 %v5784
    %v6334 = vunpack.c.l.b16 %v5785
    %v6335 = vunpack.c.h.b16 %v5785
    %v6336 = vunpack.c.l.b16 %v5786
    %v6337 = vunpack.c.h.b16 %v5786
    %v6338 = vunpack.c.l.b16 %v5787
    %v6339 = vunpack.c.h.b16 %v5787
    %v6340 = vunpack.c.l.b16 %v5788
    %v6341 = vunpack.c.h.b16 %v5788
    %v6342 = vunpack.c.l.b16 %v5789
    %v6343 = vunpack.c.h.b16 %v5789
    %v6344 = vunpack.c.l.b16 %v5790
    %v6345 = vunpack.c.h.b16 %v5790
    %v6346 = vunpack.c.l.b16 %v5791
    %v6347 = vunpack.c.h.b16 %v5791
    %v6348 = vunpack.c.l.b16 %v5792
    %v6349 = vunpack.c.h.b16 %v5792
    %v6350 = vunpack.c.l.b16 %v5793
    %v6351 = vunpack.c.h.b16 %v5793
    %v6352 = vunpack.c.l.b16 %v5794
    %v6353 = vunpack.c.h.b16 %v5794
    %v6354 = vunpack.c.l.b16 %v5795
    %v6355 = vunpack.c.h.b16 %v5795
    %v6356 = vunpack.c.l.b16 %v5796
    %v6357 = vunpack.c.h.b16 %v5796
    %v6358 = vunpack.c.l.b16 %v5797
    %v6359 = vunpack.c.h.b16 %v5797
    %v6360 = vunpack.c.l.b16 %v5798
    %v6361 = vunpack.c.h.b16 %v5798
    %v6362 = vunpack.c.l.b16 %v5799
    %v6363 = vunpack.c.h.b16 %v5799
    %v6364 = vunpack.c.l.b16 %v5800
    %v6365 = vunpack.c.h.b16 %v5800
    %v6366 = vunpack.c.l.b16 %v5801
    %v6367 = vunpack.c.h.b16 %v5801
    %v6368 = vunpack.c.l.b16 %v5802
    %v6369 = vunpack.c.h.b16 %v5802
    %v6370 = vunpack.c.l.b16 %v5803
    %v6371 = vunpack.c.h.b16 %v5803
    %v6372 = vunpack.c.l.b16 %v5804
    %v6373 = vunpack.c.h.b16 %v5804
    %v6374 = vunpack.c.l.b16 %v5805
    %v6375 = vunpack.c.h.b16 %v5805
    %v6376 = vunpack.c.l.b16 %v5806
    %v6377 = vunpack.c.h.b16 %v5806
    %v6378 = vunpack.c.l.b16 %v5807
    %v6379 = vunpack.c.h.b16 %v5807
    %v6380 = vunpack.c.l.b16 %v5808
    %v6381 = vunpack.c.h.b16 %v5808
    %v6382 = vunpack.c.l.b16 %v5809
    %v6383 = vunpack.c.h.b16 %v5809
    %v6384 = vunpack.c.l.b16 %v5810
    %v6385 = vunpack.c.h.b16 %v5810
    %v6386 = vunpack.c.l.b16 %v5811
    %v6387 = vunpack.c.h.b16 %v5811
    %v6388 = vunpack.c.l.b16 %v5812
    %v6389 = vunpack.c.h.b16 %v5812
    %v6390 = vunpack.c.l.b16 %v5813
    %v6391 = vunpack.c.h.b16 %v5813
    %v6392 = vunpack.c.l.b16 %v5814
    %v6393 = vunpack.c.h.b16 %v5814
    %v6394 = vunpack.c.l.b16 %v5815
    %v6395 = vunpack.c.h.b16 %v5815
    %v6396 = vunpack.c.l.b16 %v5816
    %v6397 = vunpack.c.h.b16 %v5816
    %v6398 = vunpack.c.l.b16 %v5817
    %v6399 = vunpack.c.h.b16 %v5817
    %v6400 = vunpack.c.l.b16 %v5818
    %v6401 = vunpack.c.h.b16 %v5818
    %v6402 = vunpack.c.l.b16 %v5819
    %v6403 = vunpack.c.h.b16 %v5819
    %v6404 = vunpack.c.l.b16 %v5820
    %v6405 = vunpack.c.h.b16 %v5820
    %v6406 = vunpack.c.l.b16 %v5821
    %v6407 = vunpack.c.h.b16 %v5821
    %v6408 = vunpack.c.l.b16 %v5822
    %v6409 = vunpack.c.h.b16 %v5822
    %v6410 = vunpack.c.l.b16 %v5823
    %v6411 = vunpack.c.h.b16 %v5823
    %v6412 = vunpack.c.l.b16 %v5824
    %v6413 = vunpack.c.h.b16 %v5824
    %v6414 = vunpack.c.l.b16 %v5825
    %v6415 = vunpack.c.h.b16 %v5825
    %v6416 = vunpack.c.l.b16 %v5826
    %v6417 = vunpack.c.h.b16 %v5826
    %v6418 = vunpack.c.l.b16 %v5827
    %v6419 = vunpack.c.h.b16 %v5827
    %v6420 = vunpack.c.l.b16 %v5828
    %v6421 = vunpack.c.h.b16 %v5828
    %v6422 = vunpack.c.l.b16 %v5829
    %v6423 = vunpack.c.h.b16 %v5829
    %v6424 = vunpack.c.l.b16 %v5830
    %v6425 = vunpack.c.h.b16 %v5830
    %v6426 = vunpack.c.l.b16 %v5831
    %v6427 = vunpack.c.h.b16 %v5831
    %v6428 = vunpack.c.l.b16 %v5832
    %v6429 = vunpack.c.h.b16 %v5832
    %v6430 = vunpack.c.l.b16 %v5833
    %v6431 = vunpack.c.h.b16 %v5833
    %v6432 = vunpack.c.l.b16 %v5834
    %v6433 = vunpack.c.h.b16 %v5834
    %v6434 = vunpack.c.l.b16 %v5835
    %v6435 = vunpack.c.h.b16 %v5835
    %v6436 = vunpack.c.l.b16 %v5836
    %v6437 = vunpack.c.h.b16 %v5836
    %v6438 = vunpack.c.l.b16 %v5837
    %v6439 = vunpack.c.h.b16 %v5837
    %v6440 = vunpack.c.l.b16 %v5838
    %v6441 = vunpack.c.h.b16 %v5838
    %v6442 = vunpack.c.l.b16 %v5839
    %v6443 = vunpack.c.h.b16 %v5839
    %v6444 = vunpack.c.l.b16 %v5840
    %v6445 = vunpack.c.h.b16 %v5840
    %v6446 = vunpack.c.l.b16 %v5841
    %v6447 = vunpack.c.h.b16 %v5841
    %v6448 = vunpack.c.l.b16 %v5842
    %v6449 = vunpack.c.h.b16 %v5842
    %v6450 = vunpack.c.l.b16 %v5843
    %v6451 = vunpack.c.h.b16 %v5843
    %v6452 = vunpack.c.l.b16 %v5844
    %v6453 = vunpack.c.h.b16 %v5844
    %v6454 = vunpack.c.l.b16 %v5845
    %v6455 = vunpack.c.h.b16 %v5845
    %v6456 = vunpack.c.l.b16 %v5846
    %v6457 = vunpack.c.h.b16 %v5846
    %v6458 = vunpack.c.l.b16 %v5847
    %v6459 = vunpack.c.h.b16 %v5847
    %v6460 = vunpack.c.l.b16 %v5848
    %v6461 = vunpack.c.h.b16 %v5848
    %v6462 = vunpack.c.l.b16 %v5849
    %v6463 = vunpack.c.h.b16 %v5849
    %v6464 = vunpack.c.l.b16 %v5850
    %v6465 = vunpack.c.h.b16 %v5850
    %v6466 = vunpack.c.l.b16 %v5851
    %v6467 = vunpack.c.h.b16 %v5851
    %v6468 = vunpack.c.l.b16 %v5852
    %v6469 = vunpack.c.h.b16 %v5852
    %v6470 = vunpack.c.l.b16 %v5853
    %v6471 = vunpack.c.h.b16 %v5853
    %v6472 = vunpack.c.l.b16 %v5854
    %v6473 = vunpack.c.h.b16 %v5854
    %v6474 = vunpack.c.l.b16 %v5855
    %v6475 = vunpack.c.h.b16 %v5855
    %v6476 = vunpack.c.l.b16 %v5856
    %v6477 = vunpack.c.h.b16 %v5856
    %v6478 = vunpack.c.l.b16 %v5857
    %v6479 = vunpack.c.h.b16 %v5857
    %v6480 = vunpack.c.l.b16 %v5858
    %v6481 = vunpack.c.h.b16 %v5858
    %v6482 = vunpack.c.l.b16 %v5859
    %v6483 = vunpack.c.h.b16 %v5859
    %v6484 = vunpack.c.l.b16 %v5860
    %v6485 = vunpack.c.h.b16 %v5860
    %v6486 = vunpack.c.l.b16 %v5861
    %v6487 = vunpack.c.h.b16 %v5861
    %v6488 = vunpack.c.l.b16 %v5862
    %v6489 = vunpack.c.h.b16 %v5862
    %v6490 = vunpack.c.l.b16 %v5863
    %v6491 = vunpack.c.h.b16 %v5863
    %v6492 = vunpack.c.l.b16 %v5864
    %v6493 = vunpack.c.h.b16 %v5864
    %v6494 = vunpack.c.l.b16 %v5865
    %v6495 = vunpack.c.h.b16 %v5865
    %v6496 = vunpack.c.l.b16 %v5866
    %v6497 = vunpack.c.h.b16 %v5866
    %v6498 = vunpack.c.l.b16 %v5867
    %v6499 = vunpack.c.h.b16 %v5867
    %v6500 = vunpack.c.l.b16 %v5868
    %v6501 = vunpack.c.h.b16 %v5868
    %v6502 = vunpack.c.l.b16 %v5869
    %v6503 = vunpack.c.h.b16 %v5869
    %v6504 = vunpack.c.l.b16 %v5870
    %v6505 = vunpack.c.h.b16 %v5870
    %v6506 = vunpack.c.l.b16 %v5871
    %v6507 = vunpack.c.h.b16 %v5871
    %v6508 = vunpack.c.l.b16 %v5872
    %v6509 = vunpack.c.h.b16 %v5872
    %v6510 = vunpack.c.l.b16 %v5873
    %v6511 = vunpack.c.h.b16 %v5873
    %v6512 = vunpack.c.l.b16 %v5874
    %v6513 = vunpack.c.h.b16 %v5874
    %v6514 = vunpack.c.l.b16 %v5875
    %v6515 = vunpack.c.h.b16 %v5875
    %v6516 = vunpack.c.l.b16 %v5876
    %v6517 = vunpack.c.h.b16 %v5876
    %v6518 = vunpack.c.l.b16 %v5877
    %v6519 = vunpack.c.h.b16 %v5877
    %v6520 = vunpack.c.l.b16 %v5878
    %v6521 = vunpack.c.h.b16 %v5878
    %v6522 = vunpack.c.l.b16 %v5879
    %v6523 = vunpack.c.h.b16 %v5879
    %v6524 = vunpack.c.l.b16 %v5880
    %v6525 = vunpack.c.h.b16 %v5880
    %v6526 = vunpack.c.l.b16 %v5881
    %v6527 = vunpack.c.h.b16 %v5881
    %v6528 = vunpack.c.l.b16 %v5882
    %v6529 = vunpack.c.h.b16 %v5882
    %v6530 = vunpack.c.l.b16 %v5883
    %v6531 = vunpack.c.h.b16 %v5883
    %v6532 = vunpack.c.l.b16 %v5884
    %v6533 = vunpack.c.h.b16 %v5884
    %v6534 = vunpack.c.l.b16 %v5885
    %v6535 = vunpack.c.h.b16 %v5885
    %v6536 = vunpack.c.l.b16 %v5886
    %v6537 = vunpack.c.h.b16 %v5886
    %v6538 = vunpack.c.l.b16 %v5887
    %v6539 = vunpack.c.h.b16 %v5887
    %v6540 = vunpack.c.l.b16 %v5888
    %v6541 = vunpack.c.h.b16 %v5888
    %v6542 = vunpack.c.l.b16 %v5889
    %v6543 = vunpack.c.h.b16 %v5889
    %v6544 = vunpack.c.l.b16 %v5890
    %v6545 = vunpack.c.h.b16 %v5890
    %v6546 = vunpack.c.l.b16 %v5891
    %v6547 = vunpack.c.h.b16 %v5891
    %v6548 = vunpack.c.l.b16 %v5892
    %v6549 = vunpack.c.h.b16 %v5892
    %v6550 = vunpack.c.l.b16 %v5893
    %v6551 = vunpack.c.h.b16 %v5893
    %v6552 = vunpack.c.l.b16 %v5894
    %v6553 = vunpack.c.h.b16 %v5894
    %v6554 = vunpack.c.l.b16 %v5895
    %v6555 = vunpack.c.h.b16 %v5895
    %v6556 = vunpack.c.l.b16 %v5896
    %v6557 = vunpack.c.h.b16 %v5896
    %v6558 = vunpack.c.l.b16 %v5897
    %v6559 = vunpack.c.h.b16 %v5897
    %v6560 = vunpack.c.l.b16 %v5898
    %v6561 = vunpack.c.h.b16 %v5898
    %v6562 = vunpack.c.l.b16 %v5899
    %v6563 = vunpack.c.h.b16 %v5899
    %v6564 = vunpack.c.l.b16 %v5900
    %v6565 = vunpack.c.h.b16 %v5900
    %v6566 = vunpack.c.l.b16 %v5901
    %v6567 = vunpack.c.h.b16 %v5901
    %v6568 = vunpack.c.l.b16 %v5902
    %v6569 = vunpack.c.h.b16 %v5902
    %v6570 = vunpack.c.l.b16 %v5903
    %v6571 = vunpack.c.h.b16 %v5903
    %v6572 = vunpack.c.l.b16 %v5904
    %v6573 = vunpack.c.h.b16 %v5904
    %v6574 = vunpack.c.l.b16 %v5905
    %v6575 = vunpack.c.h.b16 %v5905
    %v6576 = vunpack.c.l.b16 %v5906
    %v6577 = vunpack.c.h.b16 %v5906
    %v6578 = vunpack.c.l.b16 %v5907
    %v6579 = vunpack.c.h.b16 %v5907
    %v6580 = vunpack.c.l.b16 %v5908
    %v6581 = vunpack.c.h.b16 %v5908
    %v6582 = vunpack.c.l.b16 %v5909
    %v6583 = vunpack.c.h.b16 %v5909
    %v6584 = vunpack.c.l.b16 %v5910
    %v6585 = vunpack.c.h.b16 %v5910
    %v6586 = vunpack.c.l.b16 %v5911
    %v6587 = vunpack.c.h.b16 %v5911
    %v6588 = vunpack.c.l.b16 %v5912
    %v6589 = vunpack.c.h.b16 %v5912
    %v6590 = vunpack.c.l.b16 %v5913
    %v6591 = vunpack.c.h.b16 %v5913
    %v6592 = vunpack.c.l.b16 %v5914
    %v6593 = vunpack.c.h.b16 %v5914
    %v6594 = vunpack.c.l.b16 %v5915
    %v6595 = vunpack.c.h.b16 %v5915
    %v6596 = vunpack.c.l.b16 %v5916
    %v6597 = vunpack.c.h.b16 %v5916
    %v6598 = vunpack.c.l.b16 %v5917
    %v6599 = vunpack.c.h.b16 %v5917
    %v6600 = vunpack.c.l.b16 %v5918
    %v6601 = vunpack.c.h.b16 %v5918
    %v6602 = vunpack.c.l.b16 %v5919
    %v6603 = vunpack.c.h.b16 %v5919
    %v6604 = vunpack.c.l.b16 %v5920
    %v6605 = vunpack.c.h.b16 %v5920
    %v6606 = vunpack.c.l.b16 %v5921
    %v6607 = vunpack.c.h.b16 %v5921
    %v6608 = vunpack.c.l.b16 %v5922
    %v6609 = vunpack.c.h.b16 %v5922
    %v6610 = vunpack.c.l.b16 %v5923
    %v6611 = vunpack.c.h.b16 %v5923
    %v6612 = vunpack.c.l.b16 %v5924
    %v6613 = vunpack.c.h.b16 %v5924
    %v6614 = vunpack.c.l.b16 %v5925
    %v6615 = vunpack.c.h.b16 %v5925
    %v6616 = vunpack.c.l.b16 %v5926
    %v6617 = vunpack.c.h.b16 %v5926
    %v6618 = vunpack.c.l.b16 %v5927
    %v6619 = vunpack.c.h.b16 %v5927
    %v6620 = vunpack.c.l.b16 %v5928
    %v6621 = vunpack.c.h.b16 %v5928
    %v6622 = vunpack.c.l.b16 %v5929
    %v6623 = vunpack.c.h.b16 %v5929
    %v6624 = vunpack.c.l.b16 %v5930
    %v6625 = vunpack.c.h.b16 %v5930
    %v6626 = vunpack.c.l.b16 %v5931
    %v6627 = vunpack.c.h.b16 %v5931
    %v6628 = vunpack.c.l.b16 %v5932
    %v6629 = vunpack.c.h.b16 %v5932
    %v6630 = vunpack.c.l.b16 %v5933
    %v6631 = vunpack.c.h.b16 %v5933
    %v6632 = vunpack.c.l.b16 %v5934
    %v6633 = vunpack.c.h.b16 %v5934
    %v6634 = vunpack.c.l.b16 %v5935
    %v6635 = vunpack.c.h.b16 %v5935
    %v6636 = vunpack.c.l.b16 %v5936
    %v6637 = vunpack.c.h.b16 %v5936
    %v6638 = vunpack.c.l.b16 %v5937
    %v6639 = vunpack.c.h.b16 %v5937
    %v6640 = vunpack.c.l.b16 %v5938
    %v6641 = vunpack.c.h.b16 %v5938
    %v6642 = vunpack.c.l.b16 %v5939
    %v6643 = vunpack.c.h.b16 %v5939
    %v6644 = vunpack.c.l.b16 %v5940
    %v6645 = vunpack.c.h.b16 %v5940
    %v6646 = vunpack.c.l.b16 %v5941
    %v6647 = vunpack.c.h.b16 %v5941
    %v6648 = vunpack.c.l.b16 %v5942
    %v6649 = vunpack.c.h.b16 %v5942
    %v6650 = vunpack.c.l.b16 %v5943
    %v6651 = vunpack.c.h.b16 %v5943
    %v6652 = vunpack.c.l.b16 %v5944
    %v6653 = vunpack.c.h.b16 %v5944
    %v6654 = vunpack.c.l.b16 %v5945
    %v6655 = vunpack.c.h.b16 %v5945
    %v6656 = vunpack.c.l.b16 %v5946
    %v6657 = vunpack.c.h.b16 %v5946
    %v6658 = vunpack.c.l.b16 %v5947
    %v6659 = vunpack.c.h.b16 %v5947
    %v6660 = vunpack.c.l.b16 %v5948
    %v6661 = vunpack.c.h.b16 %v5948
    %v6662 = vunpack.c.l.b16 %v5949
    %v6663 = vunpack.c.h.b16 %v5949
    %v6664 = vunpack.c.l.b16 %v5950
    %v6665 = vunpack.c.h.b16 %v5950
    %v6666 = vunpack.c.l.b16 %v5951
    %v6667 = vunpack.c.h.b16 %v5951
    %v6668 = vunpack.c.l.b16 %v5952
    %v6669 = vunpack.c.h.b16 %v5952
    %v6670 = vunpack.c.l.b16 %v5953
    %v6671 = vunpack.c.h.b16 %v5953
    %v6672 = vunpack.c.l.b16 %v5954
    %v6673 = vunpack.c.h.b16 %v5954
    %v6674 = vunpack.c.l.b16 %v5955
    %v6675 = vunpack.c.h.b16 %v5955
    %v6676 = vunpack.c.l.b16 %v5956
    %v6677 = vunpack.c.h.b16 %v5956
    %v6678 = vunpack.c.l.b16 %v5957
    %v6679 = vunpack.c.h.b16 %v5957
    %v6680 = vunpack.c.l.b16 %v5958
    %v6681 = vunpack.c.h.b16 %v5958
    %v6682 = vunpack.c.l.b16 %v5959
    %v6683 = vunpack.c.h.b16 %v5959
    %v6684 = vunpack.c.l.b16 %v5960
    %v6685 = vunpack.c.h.b16 %v5960
    %v6686 = vunpack.c.l.b16 %v5961
    %v6687 = vunpack.c.h.b16 %v5961
    %v6688 = vunpack.c.l.b16 %v5962
    %v6689 = vunpack.c.h.b16 %v5962
    %v6690 = vunpack.c.l.b16 %v5963
    %v6691 = vunpack.c.h.b16 %v5963
    %v6692 = vunpack.c.l.b16 %v5964
    %v6693 = vunpack.c.h.b16 %v5964
    %v6694 = vunpack.c.l.b16 %v5965
    %v6695 = vunpack.c.h.b16 %v5965
    %v6696 = vunpack.c.l.b16 %v5966
    %v6697 = vunpack.c.h.b16 %v5966
    %v6698 = vunpack.c.l.b16 %v5967
    %v6699 = vunpack.c.h.b16 %v5967
    %v6700 = vunpack.c.l.b16 %v5968
    %v6701 = vunpack.c.h.b16 %v5968
    %v6702 = vunpack.c.l.b16 %v5969
    %v6703 = vunpack.c.h.b16 %v5969
    %v6704 = vunpack.c.l.b16 %v5970
    %v6705 = vunpack.c.h.b16 %v5970
    %v6706 = vunpack.c.l.b16 %v5971
    %v6707 = vunpack.c.h.b16 %v5971
    %v6708 = vunpack.c.l.b16 %v5972
    %v6709 = vunpack.c.h.b16 %v5972
    %v6710 = vunpack.c.l.b16 %v5973
    %v6711 = vunpack.c.h.b16 %v5973
    %v6712 = vunpack.c.l.b16 %v5974
    %v6713 = vunpack.c.h.b16 %v5974
    %v6714 = vunpack.c.l.b16 %v5975
    %v6715 = vunpack.c.h.b16 %v5975
    %v6716 = vunpack.c.l.b16 %v5976
    %v6717 = vunpack.c.h.b16 %v5976
    %v6718 = vunpack.c.l.b16 %v5977
    %v6719 = vunpack.c.h.b16 %v5977
    %v6720 = vunpack.c.l.b16 %v5978
    %v6721 = vunpack.c.h.b16 %v5978
    %v6722 = vunpack.c.l.b16 %v5979
    %v6723 = vunpack.c.h.b16 %v5979
    %v6724 = vunpack.c.l.b16 %v5980
    %v6725 = vunpack.c.h.b16 %v5980
    %v6726 = vunpack.c.l.b16 %v5981
    %v6727 = vunpack.c.h.b16 %v5981
    %v6728 = vunpack.c.l.b16 %v5982
    %v6729 = vunpack.c.h.b16 %v5982
    %v6730 = vunpack.c.l.b16 %v5983
    %v6731 = vunpack.c.h.b16 %v5983
    %v6732 = vunpack.c.l.b16 %v5984
    %v6733 = vunpack.c.h.b16 %v5984
    %v6734 = vunpack.c.l.b16 %v5985
    %v6735 = vunpack.c.h.b16 %v5985
    %v6736 = vunpack.c.l.b16 %v5986
    %v6737 = vunpack.c.h.b16 %v5986
    %v6738 = vunpack.c.l.b16 %v5987
    %v6739 = vunpack.c.h.b16 %v5987
    %v6740 = vunpack.c.l.b16 %v5988
    %v6741 = vunpack.c.h.b16 %v5988
    %v6742 = vunpack.c.l.b16 %v5989
    %v6743 = vunpack.c.h.b16 %v5989
    %v6744 = vunpack.c.l.b16 %v5990
    %v6745 = vunpack.c.h.b16 %v5990
    %v6746 = vunpack.c.l.b16 %v5991
    %v6747 = vunpack.c.h.b16 %v5991
    %v6748 = vunpack.c.l.b16 %v5992
    %v6749 = vunpack.c.h.b16 %v5992
    %v6750 = vunpack.c.l.b16 %v5993
    %v6751 = vunpack.c.h.b16 %v5993
    %v6752 = vunpack.c.l.b16 %v5994
    %v6753 = vunpack.c.h.b16 %v5994
    %v6754 = vunpack.c.l.b16 %v5995
    %v6755 = vunpack.c.h.b16 %v5995
    %v6756 = vunpack.c.l.b16 %v5996
    %v6757 = vunpack.c.h.b16 %v5996
    %v6758 = vunpack.c.l.b16 %v5997
    %v6759 = vunpack.c.h.b16 %v5997
    %v6760 = vunpack.c.l.b16 %v5998
    %v6761 = vunpack.c.h.b16 %v5998
    %v6762 = vunpack.c.l.b16 %v5999
    %v6763 = vunpack.c.h.b16 %v5999
    %v6764 = vunpack.c.l.b16 %v6000
    %v6765 = vunpack.c.h.b16 %v6000
    %v6766 = vunpack.c.l.b16 %v6001
    %v6767 = vunpack.c.h.b16 %v6001
    %v6768 = vunpack.c.l.b16 %v6002
    %v6769 = vunpack.c.h.b16 %v6002
    %v6770 = vunpack.c.l.b16 %v6003
    %v6771 = vunpack.c.h.b16 %v6003
    %v6772 = vunpack.c.l.b16 %v6004
    %v6773 = vunpack.c.h.b16 %v6004
    %v6774 = vunpack.c.l.b16 %v6005
    %v6775 = vunpack.c.h.b16 %v6005
    %v6776 = vunpack.c.l.b16 %v6006
    %v6777 = vunpack.c.h.b16 %v6006
    %v6778 = vunpack.c.l.b16 %v6007
    %v6779 = vunpack.c.h.b16 %v6007
    %v6780 = vunpack.c.l.b16 %v6008
    %v6781 = vunpack.c.h.b16 %v6008
    %v6782 = vunpack.c.l.b16 %v6009
    %v6783 = vunpack.c.h.b16 %v6009
    %v6784 = vunpack.c.l.b16 %v6010
    %v6785 = vunpack.c.h.b16 %v6010
    %v6786 = vunpack.c.l.b16 %v6011
    %v6787 = vunpack.c.h.b16 %v6011
    %v6788 = vunpack.c.l.b16 %v6012
    %v6789 = vunpack.c.h.b16 %v6012
    %v6790 = vunpack.c.l.b16 %v6013
    %v6791 = vunpack.c.h.b16 %v6013
    %v6792 = vunpack.c.l.b16 %v6014
    %v6793 = vunpack.c.h.b16 %v6014
    %v6794 = vunpack.c.l.b16 %v6015
    %v6795 = vunpack.c.h.b16 %v6015
    %v6796 = vunpack.c.l.b16 %v6016
    %v6797 = vunpack.c.h.b16 %v6016
    %v6798 = vunpack.c.l.b16 %v6017
    %v6799 = vunpack.c.h.b16 %v6017
    %v6800 = vunpack.c.l.b16 %v6018
    %v6801 = vunpack.c.h.b16 %v6018
    %v6802 = vunpack.c.l.b16 %v6019
    %v6803 = vunpack.c.h.b16 %v6019
    %v6804 = vunpack.c.l.b16 %v6020
    %v6805 = vunpack.c.h.b16 %v6020
    %v6806 = vunpack.c.l.b16 %v6021
    %v6807 = vunpack.c.h.b16 %v6021
    %v6808 = vunpack.c.l.b16 %v6022
    %v6809 = vunpack.c.h.b16 %v6022
    %v6810 = vunpack.c.l.b16 %v6023
    %v6811 = vunpack.c.h.b16 %v6023
    %v6812 = vunpack.c.l.b16 %v6024
    %v6813 = vunpack.c.h.b16 %v6024
    %v6814 = vunpack.c.l.b16 %v6025
    %v6815 = vunpack.c.h.b16 %v6025
    %v6816 = vpack.c.b16 %v6308, %v6304
    %v6817 = vpack.c.b16 %v6309, %v6305
    %v6818 = vpack.c.b16 %v6310, %v6306
    %v6819 = vpack.c.b16 %v6311, %v6307
    %v6820 = vpack.c.b16 %v6316, %v6312
    %v6821 = vpack.c.b16 %v6317, %v6313
    %v6822 = vpack.c.b16 %v6318, %v6314
    %v6823 = vpack.c.b16 %v6319, %v6315
    %v6824 = vpack.c.b16 %v6324, %v6320
    %v6825 = vpack.c.b16 %v6325, %v6321
    %v6826 = vpack.c.b16 %v6326, %v6322
    %v6827 = vpack.c.b16 %v6327, %v6323
    %v6828 = vpack.c.b16 %v6332, %v6328
    %v6829 = vpack.c.b16 %v6333, %v6329
    %v6830 = vpack.c.b16 %v6334, %v6330
    %v6831 = vpack.c.b16 %v6335, %v6331
    %v6832 = vpack.c.b16 %v6340, %v6336
    %v6833 = vpack.c.b16 %v6341, %v6337
    %v6834 = vpack.c.b16 %v6342, %v6338
    %v6835 = vpack.c.b16 %v6343, %v6339
    %v6836 = vpack.c.b16 %v6348, %v6344
    %v6837 = vpack.c.b16 %v6349, %v6345
    %v6838 = vpack.c.b16 %v6350, %v6346
    %v6839 = vpack.c.b16 %v6351, %v6347
    %v6840 = vpack.c.b16 %v6356, %v6352
    %v6841 = vpack.c.b16 %v6357, %v6353
    %v6842 = vpack.c.b16 %v6358, %v6354
    %v6843 = vpack.c.b16 %v6359, %v6355
    %v6844 = vpack.c.b16 %v6364, %v6360
    %v6845 = vpack.c.b16 %v6365, %v6361
    %v6846 = vpack.c.b16 %v6366, %v6362
    %v6847 = vpack.c.b16 %v6367, %v6363
    %v6848 = vpack.c.b16 %v6372, %v6368
    %v6849 = vpack.c.b16 %v6373, %v6369
    %v6850 = vpack.c.b16 %v6374, %v6370
    %v6851 = vpack.c.b16 %v6375, %v6371
    %v6852 = vpack.c.b16 %v6380, %v6376
    %v6853 = vpack.c.b16 %v6381, %v6377
    %v6854 = vpack.c.b16 %v6382, %v6378
    %v6855 = vpack.c.b16 %v6383, %v6379
    %v6856 = vpack.c.b16 %v6388, %v6384
    %v6857 = vpack.c.b16 %v6389, %v6385
    %v6858 = vpack.c.b16 %v6390, %v6386
    %v6859 = vpack.c.b16 %v6391, %v6387
    %v6860 = vpack.c.b16 %v6396, %v6392
    %v6861 = vpack.c.b16 %v6397, %v6393
    %v6862 = vpack.c.b16 %v6398, %v6394
    %v6863 = vpack.c.b16 %v6399, %v6395
    %v6864 = vpack.c.b16 %v6404, %v6400
    %v6865 = vpack.c.b16 %v6405, %v6401
    %v6866 = vpack.c.b16 %v6406, %v6402
    %v6867 = vpack.c.b16 %v6407, %v6403
    %v6868 = vpack.c.b16 %v6412, %v6408
    %v6869 = vpack.c.b16 %v6413, %v6409
    %v6870 = vpack.c.b16 %v6414, %v6410
    %v6871 = vpack.c.b16 %v6415, %v6411
    %v6872 = vpack.c.b16 %v6420, %v6416
    %v6873 = vpack.c.b16 %v6421, %v6417
    %v6874 = vpack.c.b16 %v6422, %v6418
    %v6875 = vpack.c.b16 %v6423, %v6419
    %v6876 = vpack.c.b16 %v6428, %v6424
    %v6877 = vpack.c.b16 %v6429, %v6425
    %v6878 = vpack.c.b16 %v6430, %v6426
    %v6879 = vpack.c.b16 %v6431, %v6427
    %v6880 = vpack.c.b16 %v6436, %v6432
    %v6881 = vpack.c.b16 %v6437, %v6433
    %v6882 = vpack.c.b16 %v6438, %v6434
    %v6883 = vpack.c.b16 %v6439, %v6435
    %v6884 = vpack.c.b16 %v6444, %v6440
    %v6885 = vpack.c.b16 %v6445, %v6441
    %v6886 = vpack.c.b16 %v6446, %v6442
    %v6887 = vpack.c.b16 %v6447, %v6443
    %v6888 = vpack.c.b16 %v6452, %v6448
    %v6889 = vpack.c.b16 %v6453, %v6449
    %v6890 = vpack.c.b16 %v6454, %v6450
    %v6891 = vpack.c.b16 %v6455, %v6451
    %v6892 = vpack.c.b16 %v6460, %v6456
    %v6893 = vpack.c.b16 %v6461, %v6457
    %v6894 = vpack.c.b16 %v6462, %v6458
    %v6895 = vpack.c.b16 %v6463, %v6459
    %v6896 = vpack.c.b16 %v6468, %v6464
    %v6897 = vpack.c.b16 %v6469, %v6465
    %v6898 = vpack.c.b16 %v6470, %v6466
    %v6899 = vpack.c.b16 %v6471, %v6467
    %v6900 = vpack.c.b16 %v6476, %v6472
    %v6901 = vpack.c.b16 %v6477, %v6473
    %v6902 = vpack.c.b16 %v6478, %v6474
    %v6903 = vpack.c.b16 %v6479, %v6475
    %v6904 = vpack.c.b16 %v6484, %v6480
    %v6905 = vpack.c.b16 %v6485, %v6481
    %v6906 = vpack.c.b16 %v6486, %v6482
    %v6907 = vpack.c.b16 %v6487, %v6483
    %v6908 = vpack.c.b16 %v6492, %v6488
    %v6909 = vpack.c.b16 %v6493, %v6489
    %v6910 = vpack.c.b16 %v6494, %v6490
    %v6911 = vpack.c.b16 %v6495, %v6491
    %v6912 = vpack.c.b16 %v6500, %v6496
    %v6913 = vpack.c.b16 %v6501, %v6497
    %v6914 = vpack.c.b16 %v6502, %v6498
    %v6915 = vpack.c.b16 %v6503, %v6499
    %v6916 = vpack.c.b16 %v6508, %v6504
    %v6917 = vpack.c.b16 %v6509, %v6505
    %v6918 = vpack.c.b16 %v6510, %v6506
    %v6919 = vpack.c.b16 %v6511, %v6507
    %v6920 = vpack.c.b16 %v6516, %v6512
    %v6921 = vpack.c.b16 %v6517, %v6513
    %v6922 = vpack.c.b16 %v6518, %v6514
    %v6923 = vpack.c.b16 %v6519, %v6515
    %v6924 = vpack.c.b16 %v6524, %v6520
    %v6925 = vpack.c.b16 %v6525, %v6521
    %v6926 = vpack.c.b16 %v6526, %v6522
    %v6927 = vpack.c.b16 %v6527, %v6523
    %v6928 = vpack.c.b16 %v6532, %v6528
    %v6929 = vpack.c.b16 %v6533, %v6529
    %v6930 = vpack.c.b16 %v6534, %v6530
    %v6931 = vpack.c.b16 %v6535, %v6531
    %v6932 = vpack.c.b16 %v6540, %v6536
    %v6933 = vpack.c.b16 %v6541, %v6537
    %v6934 = vpack.c.b16 %v6542, %v6538
    %v6935 = vpack.c.b16 %v6543, %v6539
    %v6936 = vpack.c.b16 %v6548, %v6544
    %v6937 = vpack.c.b16 %v6549, %v6545
    %v6938 = vpack.c.b16 %v6550, %v6546
    %v6939 = vpack.c.b16 %v6551, %v6547
    %v6940 = vpack.c.b16 %v6556, %v6552
    %v6941 = vpack.c.b16 %v6557, %v6553
    %v6942 = vpack.c.b16 %v6558, %v6554
    %v6943 = vpack.c.b16 %v6559, %v6555
    %v6944 = vpack.c.b16 %v6564, %v6560
    %v6945 = vpack.c.b16 %v6565, %v6561
    %v6946 = vpack.c.b16 %v6566, %v6562
    %v6947 = vpack.c.b16 %v6567, %v6563
    %v6948 = vpack.c.b16 %v6572, %v6568
    %v6949 = vpack.c.b16 %v6573, %v6569
    %v6950 = vpack.c.b16 %v6574, %v6570
    %v6951 = vpack.c.b16 %v6575, %v6571
    %v6952 = vpack.c.b16 %v6580, %v6576
    %v6953 = vpack.c.b16 %v6581, %v6577
    %v6954 = vpack.c.b16 %v6582, %v6578
    %v6955 = vpack.c.b16 %v6583, %v6579
    %v6956 = vpack.c.b16 %v6588, %v6584
    %v6957 = vpack.c.b16 %v6589, %v6585
    %v6958 = vpack.c.b16 %v6590, %v6586
    %v6959 = vpack.c.b16 %v6591, %v6587
    %v6960 = vpack.c.b16 %v6596, %v6592
    %v6961 = vpack.c.b16 %v6597, %v6593
    %v6962 = vpack.c.b16 %v6598, %v6594
    %v6963 = vpack.c.b16 %v6599, %v6595
    %v6964 = vpack.c.b16 %v6604, %v6600
    %v6965 = vpack.c.b16 %v6605, %v6601
    %v6966 = vpack.c.b16 %v6606, %v6602
    %v6967 = vpack.c.b16 %v6607, %v6603
    %v6968 = vpack.c.b16 %v6612, %v6608
    %v6969 = vpack.c.b16 %v6613, %v6609
    %v6970 = vpack.c.b16 %v6614, %v6610
    %v6971 = vpack.c.b16 %v6615, %v6611
    %v6972 = vpack.c.b16 %v6620, %v6616
    %v6973 = vpack.c.b16 %v6621, %v6617
    %v6974 = vpack.c.b16 %v6622, %v6618
    %v6975 = vpack.c.b16 %v6623, %v6619
    %v6976 = vpack.c.b16 %v6628, %v6624
    %v6977 = vpack.c.b16 %v6629, %v6625
    %v6978 = vpack.c.b16 %v6630, %v6626
    %v6979 = vpack.c.b16 %v6631, %v6627
    %v6980 = vpack.c.b16 %v6636, %v6632
    %v6981 = vpack.c.b16 %v6637, %v6633
    %v6982 = vpack.c.b16 %v6638, %v6634
    %v6983 = vpack.c.b16 %v6639, %v6635
    %v6984 = vpack.c.b16 %v6644, %v6640
    %v6985 = vpack.c.b16 %v6645, %v6641
    %v6986 = vpack.c.b16 %v6646, %v6642
    %v6987 = vpack.c.b16 %v6647, %v6643
    %v6988 = vpack.c.b16 %v6652, %v6648
    %v6989 = vpack.c.b16 %v6653, %v6649
    %v6990 = vpack.c.b16 %v6654, %v6650
    %v6991 = vpack.c.b16 %v6655, %v6651
    %v6992 = vpack.c.b16 %v6660, %v6656
    %v6993 = vpack.c.b16 %v6661, %v6657
    %v6994 = vpack.c.b16 %v6662, %v6658
    %v6995 = vpack.c.b16 %v6663, %v6659
    %v6996 = vpack.c.b16 %v6668, %v6664
    %v6997 = vpack.c.b16 %v6669, %v6665
    %v6998 = vpack.c.b16 %v6670, %v6666
    %v6999 = vpack.c.b16 %v6671, %v6667
    %v7000 = vpack.c.b16 %v6676, %v6672
    %v7001 = vpack.c.b16 %v6677, %v6673
    %v7002 = vpack.c.b16 %v6678, %v6674
    %v7003 = vpack.c.b16 %v6679, %v6675
    %v7004 = vpack.c.b16 %v6684, %v6680
    %v7005 = vpack.c.b16 %v6685, %v6681
    %v7006 = vpack.c.b16 %v6686, %v6682
    %v7007 = vpack.c.b16 %v6687, %v6683
    %v7008 = vpack.c.b16 %v6692, %v6688
    %v7009 = vpack.c.b16 %v6693, %v6689
    %v7010 = vpack.c.b16 %v6694, %v6690
    %v7011 = vpack.c.b16 %v6695, %v6691
    %v7012 = vpack.c.b16 %v6700, %v6696
    %v7013 = vpack.c.b16 %v6701, %v6697
    %v7014 = vpack.c.b16 %v6702, %v6698
    %v7015 = vpack.c.b16 %v6703, %v6699
    %v7016 = vpack.c.b16 %v6708, %v6704
    %v7017 = vpack.c.b16 %v6709, %v6705
    %v7018 = vpack.c.b16 %v6710, %v6706
    %v7019 = vpack.c.b16 %v6711, %v6707
    %v7020 = vpack.c.b16 %v6716, %v6712
    %v7021 = vpack.c.b16 %v6717, %v6713
    %v7022 = vpack.c.b16 %v6718, %v6714
    %v7023 = vpack.c.b16 %v6719, %v6715
    %v7024 = vpack.c.b16 %v6724, %v6720
    %v7025 = vpack.c.b16 %v6725, %v6721
    %v7026 = vpack.c.b16 %v6726, %v6722
    %v7027 = vpack.c.b16 %v6727, %v6723
    %v7028 = vpack.c.b16 %v6732, %v6728
    %v7029 = vpack.c.b16 %v6733, %v6729
    %v7030 = vpack.c.b16 %v6734, %v6730
    %v7031 = vpack.c.b16 %v6735, %v6731
    %v7032 = vpack.c.b16 %v6740, %v6736
    %v7033 = vpack.c.b16 %v6741, %v6737
    %v7034 = vpack.c.b16 %v6742, %v6738
    %v7035 = vpack.c.b16 %v6743, %v6739
    %v7036 = vpack.c.b16 %v6748, %v6744
    %v7037 = vpack.c.b16 %v6749, %v6745
    %v7038 = vpack.c.b16 %v6750, %v6746
    %v7039 = vpack.c.b16 %v6751, %v6747
    %v7040 = vpack.c.b16 %v6756, %v6752
    %v7041 = vpack.c.b16 %v6757, %v6753
    %v7042 = vpack.c.b16 %v6758, %v6754
    %v7043 = vpack.c.b16 %v6759, %v6755
    %v7044 = vpack.c.b16 %v6764, %v6760
    %v7045 = vpack.c.b16 %v6765, %v6761
    %v7046 = vpack.c.b16 %v6766, %v6762
    %v7047 = vpack.c.b16 %v6767, %v6763
    %v7048 = vpack.c.b16 %v6772, %v6768
    %v7049 = vpack.c.b16 %v6773, %v6769
    %v7050 = vpack.c.b16 %v6774, %v6770
    %v7051 = vpack.c.b16 %v6775, %v6771
    %v7052 = vpack.c.b16 %v6780, %v6776
    %v7053 = vpack.c.b16 %v6781, %v6777
    %v7054 = vpack.c.b16 %v6782, %v6778
    %v7055 = vpack.c.b16 %v6783, %v6779
    %v7056 = vpack.c.b16 %v6788, %v6784
    %v7057 = vpack.c.b16 %v6789, %v6785
    %v7058 = vpack.c.b16 %v6790, %v6786
    %v7059 = vpack.c.b16 %v6791, %v6787
    %v7060 = vpack.c.b16 %v6796, %v6792
    %v7061 = vpack.c.b16 %v6797, %v6793
    %v7062 = vpack.c.b16 %v6798, %v6794
    %v7063 = vpack.c.b16 %v6799, %v6795
    %v7064 = vpack.c.b16 %v6804, %v6800
    %v7065 = vpack.c.b16 %v6805, %v6801
    %v7066 = vpack.c.b16 %v6806, %v6802
    %v7067 = vpack.c.b16 %v6807, %v6803
    %v7068 = vpack.c.b16 %v6812, %v6808
    %v7069 = vpack.c.b16 %v6813, %v6809
    %v7070 = vpack.c.b16 %v6814, %v6810
    %v7071 = vpack.c.b16 %v6815, %v6811
    %7328 = vmatprep.subr.bf16.mxu0 %v6817
    %7329 = vmatpush1.bf16.msra.mxu0 %v6816
    %7330 = vmatprep.subr.bf16.mxu0 %v6821
    %7331 = vmatpush1.bf16.msra.mxu0 %v6820
    %7332 = vmatprep.subr.bf16.mxu0 %v6825
    %7333 = vmatpush1.bf16.msra.mxu0 %v6824
    %7334 = vmatprep.subr.bf16.mxu0 %v6829
    %7335 = vmatpush1.bf16.msra.mxu0 %v6828
    %7336 = vmatprep.subr.bf16.mxu0 %v6833
    %7337 = vmatpush1.bf16.msra.mxu0 %v6832
    %7338 = vmatprep.subr.bf16.mxu0 %v6837
    %7339 = vmatpush1.bf16.msra.mxu0 %v6836
    %7340 = vmatprep.subr.bf16.mxu0 %v6841
    %7341 = vmatpush1.bf16.msra.mxu0 %v6840
    %7342 = vmatprep.subr.bf16.mxu0 %v6845
    %7343 = vmatpush1.bf16.msra.mxu0 %v6844
    %7344 = vmatprep.subr.bf16.mxu0 %v6849
    %7345 = vmatpush1.bf16.msra.mxu0 %v6848
    %7346 = vmatprep.subr.bf16.mxu0 %v6853
    %7347 = vmatpush1.bf16.msra.mxu0 %v6852
    %7348 = vmatprep.subr.bf16.mxu0 %v6857
    %7349 = vmatpush1.bf16.msra.mxu0 %v6856
    %7350 = vmatprep.subr.bf16.mxu0 %v6861
    %7351 = vmatpush1.bf16.msra.mxu0 %v6860
    %7352 = vmatprep.subr.bf16.mxu0 %v6865
    %7353 = vmatpush1.bf16.msra.mxu0 %v6864
    %7354 = vmatprep.subr.bf16.mxu0 %v6869
    %7355 = vmatpush1.bf16.msra.mxu0 %v6868
    %7356 = vmatprep.subr.bf16.mxu0 %v6873
    %7357 = vmatpush1.bf16.msra.mxu0 %v6872
    %7358 = vmatprep.subr.bf16.mxu0 %v6877
    %7359 = vmatpush1.bf16.msra.mxu0 %v6876
    %7360 = vmatprep.mubr.bf16.mxu0 %v5763
    %7361 = vmatmul.mubr.bf16.gmra.mrb[0].mxu0 %v5762
    %v7362 = vpop.f32.mrb[0].mxu0
    %v7363 = vadd.f32 %v6031, %v7362
    %v7364 = vpop.f32.mrb[0].mxu0
    %v7365 = vadd.f32 %v6035, %v7364
    %v7366 = vpop.f32.mrb[0].mxu0
    %v7367 = vpop.f32.mrb[0].mxu0
    %7368 = vdwg.mxu0
    %7369 = vmatprep.subr.bf16.mxu0 %v6881
    %7370 = vmatpush1.bf16.msra.mxu0 %v6880
    %7371 = vmatprep.subr.bf16.mxu0 %v6885
    %7372 = vmatpush1.bf16.msra.mxu0 %v6884
    %7373 = vmatprep.subr.bf16.mxu0 %v6889
    %7374 = vmatpush1.bf16.msra.mxu0 %v6888
    %7375 = vmatprep.subr.bf16.mxu0 %v6893
    %7376 = vmatpush1.bf16.msra.mxu0 %v6892
    %7377 = vmatprep.subr.bf16.mxu0 %v6897
    %7378 = vmatpush1.bf16.msra.mxu0 %v6896
    %7379 = vmatprep.subr.bf16.mxu0 %v6901
    %7380 = vmatpush1.bf16.msra.mxu0 %v6900
    %7381 = vmatprep.subr.bf16.mxu0 %v6905
    %7382 = vmatpush1.bf16.msra.mxu0 %v6904
    %7383 = vmatprep.subr.bf16.mxu0 %v6909
    %7384 = vmatpush1.bf16.msra.mxu0 %v6908
    %7385 = vmatprep.subr.bf16.mxu0 %v6913
    %7386 = vmatpush1.bf16.msra.mxu0 %v6912
    %7387 = vmatprep.subr.bf16.mxu0 %v6917
    %7388 = vmatpush1.bf16.msra.mxu0 %v6916
    %7389 = vmatprep.subr.bf16.mxu0 %v6921
    %7390 = vmatpush1.bf16.msra.mxu0 %v6920
    %7391 = vmatprep.subr.bf16.mxu0 %v6925
    %7392 = vmatpush1.bf16.msra.mxu0 %v6924
    %7393 = vmatprep.subr.bf16.mxu0 %v6929
    %7394 = vmatpush1.bf16.msra.mxu0 %v6928
    %7395 = vmatprep.subr.bf16.mxu0 %v6933
    %7396 = vmatpush1.bf16.msra.mxu0 %v6932
    %7397 = vmatprep.subr.bf16.mxu0 %v6937
    %7398 = vmatpush1.bf16.msra.mxu0 %v6936
    %7399 = vmatprep.subr.bf16.mxu0 %v6941
    %7400 = vmatpush1.bf16.msra.mxu0 %v6940
    %7401 = vmatprep.mubr.bf16.mxu0 %v5765
    %7402 = vmatmul.mubr.bf16.gmra.mrb[0].mxu0 %v5764
    %v7403 = vpop.f32.mrb[0].mxu0
    %v7404 = vadd.f32 %v7363, %v7403
    %v7405 = vpop.f32.mrb[0].mxu0
    %v7406 = vadd.f32 %v7365, %v7405
    %v7407 = vpop.f32.mrb[0].mxu0
    %v7408 = vpop.f32.mrb[0].mxu0
    %7409 = vdwg.mxu0
    %7410 = vmatprep.subr.bf16.mxu0 %v6945
    %7411 = vmatpush1.bf16.msra.mxu0 %v6944
    %7412 = vmatprep.subr.bf16.mxu0 %v6949
    %7413 = vmatpush1.bf16.msra.mxu0 %v6948
    %7414 = vmatprep.subr.bf16.mxu0 %v6953
    %7415 = vmatpush1.bf16.msra.mxu0 %v6952
    %7416 = vmatprep.subr.bf16.mxu0 %v6957
    %7417 = vmatpush1.bf16.msra.mxu0 %v6956
    %7418 = vmatprep.subr.bf16.mxu0 %v6961
    %7419 = vmatpush1.bf16.msra.mxu0 %v6960
    %7420 = vmatprep.subr.bf16.mxu0 %v6965
    %7421 = vmatpush1.bf16.msra.mxu0 %v6964
    %7422 = vmatprep.subr.bf16.mxu0 %v6969
    %7423 = vmatpush1.bf16.msra.mxu0 %v6968
    %7424 = vmatprep.subr.bf16.mxu0 %v6973
    %7425 = vmatpush1.bf16.msra.mxu0 %v6972
    %7426 = vmatprep.subr.bf16.mxu0 %v6977
    %7427 = vmatpush1.bf16.msra.mxu0 %v6976
    %7428 = vmatprep.subr.bf16.mxu0 %v6981
    %7429 = vmatpush1.bf16.msra.mxu0 %v6980
    %7430 = vmatprep.subr.bf16.mxu0 %v6985
    %7431 = vmatpush1.bf16.msra.mxu0 %v6984
    %7432 = vmatprep.subr.bf16.mxu0 %v6989
    %7433 = vmatpush1.bf16.msra.mxu0 %v6988
    %7434 = vmatprep.subr.bf16.mxu0 %v6993
    %7435 = vmatpush1.bf16.msra.mxu0 %v6992
    %7436 = vmatprep.subr.bf16.mxu0 %v6997
    %7437 = vmatpush1.bf16.msra.mxu0 %v6996
    %7438 = vmatprep.subr.bf16.mxu0 %v7001
    %7439 = vmatpush1.bf16.msra.mxu0 %v7000
    %7440 = vmatprep.subr.bf16.mxu0 %v7005
    %7441 = vmatpush1.bf16.msra.mxu0 %v7004
    %7442 = vmatprep.mubr.bf16.mxu0 %v5767
    %7443 = vmatmul.mubr.bf16.gmra.mrb[0].mxu0 %v5766
    %v7444 = vpop.f32.mrb[0].mxu0
    %v7445 = vadd.f32 %v7404, %v7444
    %v7446 = vpop.f32.mrb[0].mxu0
    %v7447 = vadd.f32 %v7406, %v7446
    %v7448 = vpop.f32.mrb[0].mxu0
    %v7449 = vpop.f32.mrb[0].mxu0
    %7450 = vdwg.mxu0
    %7451 = vmatprep.subr.bf16.mxu0 %v7009
    %7452 = vmatpush1.bf16.msra.mxu0 %v7008
    %7453 = vmatprep.subr.bf16.mxu0 %v7013
    %7454 = vmatpush1.bf16.msra.mxu0 %v7012
    %7455 = vmatprep.subr.bf16.mxu0 %v7017
    %7456 = vmatpush1.bf16.msra.mxu0 %v7016
    %7457 = vmatprep.subr.bf16.mxu0 %v7021
    %7458 = vmatpush1.bf16.msra.mxu0 %v7020
    %7459 = vmatprep.subr.bf16.mxu0 %v7025
    %7460 = vmatpush1.bf16.msra.mxu0 %v7024
    %7461 = vmatprep.subr.bf16.mxu0 %v7029
    %7462 = vmatpush1.bf16.msra.mxu0 %v7028
    %7463 = vmatprep.subr.bf16.mxu0 %v7033
    %7464 = vmatpush1.bf16.msra.mxu0 %v7032
    %7465 = vmatprep.subr.bf16.mxu0 %v7037
    %7466 = vmatpush1.bf16.msra.mxu0 %v7036
    %7467 = vmatprep.subr.bf16.mxu0 %v7041
    %7468 = vmatpush1.bf16.msra.mxu0 %v7040
    %7469 = vmatprep.subr.bf16.mxu0 %v7045
    %7470 = vmatpush1.bf16.msra.mxu0 %v7044
    %7471 = vmatprep.subr.bf16.mxu0 %v7049
    %7472 = vmatpush1.bf16.msra.mxu0 %v7048
    %7473 = vmatprep.subr.bf16.mxu0 %v7053
    %7474 = vmatpush1.bf16.msra.mxu0 %v7052
    %7475 = vmatprep.subr.bf16.mxu0 %v7057
    %7476 = vmatpush1.bf16.msra.mxu0 %v7056
    %7477 = vmatprep.subr.bf16.mxu0 %v7061
    %7478 = vmatpush1.bf16.msra.mxu0 %v7060
    %7479 = vmatprep.subr.bf16.mxu0 %v7065
    %7480 = vmatpush1.bf16.msra.mxu0 %v7064
    %7481 = vmatprep.subr.bf16.mxu0 %v7069
    %7482 = vmatpush1.bf16.msra.mxu0 %v7068
    %7483 = vmatprep.mubr.bf16.mxu0 %v5769
    %7484 = vmatmul.mubr.bf16.gmra.mrb[0].mxu0 %v5768
    %v7485 = vpop.f32.mrb[0].mxu0
    %v7486 = vadd.f32 %v7445, %v7485
    %v7487 = vpop.f32.mrb[0].mxu0
    %v7488 = vadd.f32 %v7447, %v7487
    %v7489 = vpop.f32.mrb[0].mxu0
    %v7490 = vpop.f32.mrb[0].mxu0
    %7491 = vdwg.mxu0
    %7492 = vmatprep.subr.bf16.mxu0 %v6819
    %7493 = vmatpush1.bf16.msra.mxu0 %v6818
    %7494 = vmatprep.subr.bf16.mxu0 %v6823
    %7495 = vmatpush1.bf16.msra.mxu0 %v6822
    %7496 = vmatprep.subr.bf16.mxu0 %v6827
    %7497 = vmatpush1.bf16.msra.mxu0 %v6826
    %7498 = vmatprep.subr.bf16.mxu0 %v6831
    %7499 = vmatpush1.bf16.msra.mxu0 %v6830
    %7500 = vmatprep.subr.bf16.mxu0 %v6835
    %7501 = vmatpush1.bf16.msra.mxu0 %v6834
    %7502 = vmatprep.subr.bf16.mxu0 %v6839
    %7503 = vmatpush1.bf16.msra.mxu0 %v6838
    %7504 = vmatprep.subr.bf16.mxu0 %v6843
    %7505 = vmatpush1.bf16.msra.mxu0 %v6842
    %7506 = vmatprep.subr.bf16.mxu0 %v6847
    %7507 = vmatpush1.bf16.msra.mxu0 %v6846
    %7508 = vmatprep.subr.bf16.mxu0 %v6851
    %7509 = vmatpush1.bf16.msra.mxu0 %v6850
    %7510 = vmatprep.subr.bf16.mxu0 %v6855
    %7511 = vmatpush1.bf16.msra.mxu0 %v6854
    %7512 = vmatprep.subr.bf16.mxu0 %v6859
    %7513 = vmatpush1.bf16.msra.mxu0 %v6858
    %7514 = vmatprep.subr.bf16.mxu0 %v6863
    %7515 = vmatpush1.bf16.msra.mxu0 %v6862
    %7516 = vmatprep.subr.bf16.mxu0 %v6867
    %7517 = vmatpush1.bf16.msra.mxu0 %v6866
    %7518 = vmatprep.subr.bf16.mxu0 %v6871
    %7519 = vmatpush1.bf16.msra.mxu0 %v6870
    %7520 = vmatprep.subr.bf16.mxu0 %v6875
    %7521 = vmatpush1.bf16.msra.mxu0 %v6874
    %7522 = vmatprep.subr.bf16.mxu0 %v6879
    %7523 = vmatpush1.bf16.msra.mxu0 %v6878
    %7524 = vmatprep.mubr.bf16.mxu0 %v5763
    %7525 = vmatmul.mubr.bf16.gmra.mrb[0].mxu0 %v5762
    %v7526 = vpop.f32.mrb[0].mxu0
    %v7527 = vadd.f32 %v6039, %v7526
    %v7528 = vpop.f32.mrb[0].mxu0
    %v7529 = vadd.f32 %v6043, %v7528
    %v7530 = vpop.f32.mrb[0].mxu0
    %v7531 = vpop.f32.mrb[0].mxu0
    %7532 = vdwg.mxu0
    %7533 = vmatprep.subr.bf16.mxu0 %v6883
    %7534 = vmatpush1.bf16.msra.mxu0 %v6882
    %7535 = vmatprep.subr.bf16.mxu0 %v6887
    %7536 = vmatpush1.bf16.msra.mxu0 %v6886
    %7537 = vmatprep.subr.bf16.mxu0 %v6891
    %7538 = vmatpush1.bf16.msra.mxu0 %v6890
    %7539 = vmatprep.subr.bf16.mxu0 %v6895
    %7540 = vmatpush1.bf16.msra.mxu0 %v6894
    %7541 = vmatprep.subr.bf16.mxu0 %v6899
    %7542 = vmatpush1.bf16.msra.mxu0 %v6898
    %7543 = vmatprep.subr.bf16.mxu0 %v6903
    %7544 = vmatpush1.bf16.msra.mxu0 %v6902
    %7545 = vmatprep.subr.bf16.mxu0 %v6907
    %7546 = vmatpush1.bf16.msra.mxu0 %v6906
    %7547 = vmatprep.subr.bf16.mxu0 %v6911
    %7548 = vmatpush1.bf16.msra.mxu0 %v6910
    %7549 = vmatprep.subr.bf16.mxu0 %v6915
    %7550 = vmatpush1.bf16.msra.mxu0 %v6914
    %7551 = vmatprep.subr.bf16.mxu0 %v6919
    %7552 = vmatpush1.bf16.msra.mxu0 %v6918
    %7553 = vmatprep.subr.bf16.mxu0 %v6923
    %7554 = vmatpush1.bf16.msra.mxu0 %v6922
    %7555 = vmatprep.subr.bf16.mxu0 %v6927
    %7556 = vmatpush1.bf16.msra.mxu0 %v6926
    %7557 = vmatprep.subr.bf16.mxu0 %v6931
    %7558 = vmatpush1.bf16.msra.mxu0 %v6930
    %7559 = vmatprep.subr.bf16.mxu0 %v6935
    %7560 = vmatpush1.bf16.msra.mxu0 %v6934
    %7561 = vmatprep.subr.bf16.mxu0 %v6939
    %7562 = vmatpush1.bf16.msra.mxu0 %v6938
    %7563 = vmatprep.subr.bf16.mxu0 %v6943
    %7564 = vmatpush1.bf16.msra.mxu0 %v6942
    %7565 = vmatprep.mubr.bf16.mxu0 %v5765
    %7566 = vmatmul.mubr.bf16.gmra.mrb[0].mxu0 %v5764
    %v7567 = vpop.f32.mrb[0].mxu0
    %v7568 = vadd.f32 %v7527, %v7567
    %v7569 = vpop.f32.mrb[0].mxu0
    %v7570 = vadd.f32 %v7529, %v7569
    %v7571 = vpop.f32.mrb[0].mxu0
    %v7572 = vpop.f32.mrb[0].mxu0
    %7573 = vdwg.mxu0
    %7574 = vmatprep.subr.bf16.mxu0 %v6947
    %7575 = vmatpush1.bf16.msra.mxu0 %v6946
    %7576 = vmatprep.subr.bf16.mxu0 %v6951
    %7577 = vmatpush1.bf16.msra.mxu0 %v6950
    %7578 = vmatprep.subr.bf16.mxu0 %v6955
    %7579 = vmatpush1.bf16.msra.mxu0 %v6954
    %7580 = vmatprep.subr.bf16.mxu0 %v6959
    %7581 = vmatpush1.bf16.msra.mxu0 %v6958
    %7582 = vmatprep.subr.bf16.mxu0 %v6963
    %7583 = vmatpush1.bf16.msra.mxu0 %v6962
    %7584 = vmatprep.subr.bf16.mxu0 %v6967
    %7585 = vmatpush1.bf16.msra.mxu0 %v6966
    %7586 = vmatprep.subr.bf16.mxu0 %v6971
    %7587 = vmatpush1.bf16.msra.mxu0 %v6970
    %7588 = vmatprep.subr.bf16.mxu0 %v6975
    %7589 = vmatpush1.bf16.msra.mxu0 %v6974
    %7590 = vmatprep.subr.bf16.mxu0 %v6979
    %7591 = vmatpush1.bf16.msra.mxu0 %v6978
    %7592 = vmatprep.subr.bf16.mxu0 %v6983
    %7593 = vmatpush1.bf16.msra.mxu0 %v6982
    %7594 = vmatprep.subr.bf16.mxu0 %v6987
    %7595 = vmatpush1.bf16.msra.mxu0 %v6986
    %7596 = vmatprep.subr.bf16.mxu0 %v6991
    %7597 = vmatpush1.bf16.msra.mxu0 %v6990
    %7598 = vmatprep.subr.bf16.mxu0 %v6995
    %7599 = vmatpush1.bf16.msra.mxu0 %v6994
    %7600 = vmatprep.subr.bf16.mxu0 %v6999
    %7601 = vmatpush1.bf16.msra.mxu0 %v6998
    %7602 = vmatprep.subr.bf16.mxu0 %v7003
    %7603 = vmatpush1.bf16.msra.mxu0 %v7002
    %7604 = vmatprep.subr.bf16.mxu0 %v7007
    %7605 = vmatpush1.bf16.msra.mxu0 %v7006
    %7606 = vmatprep.mubr.bf16.mxu0 %v5767
    %7607 = vmatmul.mubr.bf16.gmra.mrb[0].mxu0 %v5766
    %v7608 = vpop.f32.mrb[0].mxu0
    %v7609 = vadd.f32 %v7568, %v7608
    %v7610 = vpop.f32.mrb[0].mxu0
    %v7611 = vadd.f32 %v7570, %v7610
    %v7612 = vpop.f32.mrb[0].mxu0
    %v7613 = vpop.f32.mrb[0].mxu0
    %7614 = vdwg.mxu0
    %7615 = vmatprep.subr.bf16.mxu0 %v7011
    %7616 = vmatpush1.bf16.msra.mxu0 %v7010
    %7617 = vmatprep.subr.bf16.mxu0 %v7015
    %7618 = vmatpush1.bf16.msra.mxu0 %v7014
    %7619 = vmatprep.subr.bf16.mxu0 %v7019
    %7620 = vmatpush1.bf16.msra.mxu0 %v7018
    %7621 = vmatprep.subr.bf16.mxu0 %v7023
    %7622 = vmatpush1.bf16.msra.mxu0 %v7022
    %7623 = vmatprep.subr.bf16.mxu0 %v7027
    %7624 = vmatpush1.bf16.msra.mxu0 %v7026
    %7625 = vmatprep.subr.bf16.mxu0 %v7031
    %7626 = vmatpush1.bf16.msra.mxu0 %v7030
    %7627 = vmatprep.subr.bf16.mxu0 %v7035
    %7628 = vmatpush1.bf16.msra.mxu0 %v7034
    %7629 = vmatprep.subr.bf16.mxu0 %v7039
    %7630 = vmatpush1.bf16.msra.mxu0 %v7038
    %7631 = vmatprep.subr.bf16.mxu0 %v7043
    %7632 = vmatpush1.bf16.msra.mxu0 %v7042
    %7633 = vmatprep.subr.bf16.mxu0 %v7047
    %7634 = vmatpush1.bf16.msra.mxu0 %v7046
    %7635 = vmatprep.subr.bf16.mxu0 %v7051
    %7636 = vmatpush1.bf16.msra.mxu0 %v7050
    %7637 = vmatprep.subr.bf16.mxu0 %v7055
    %7638 = vmatpush1.bf16.msra.mxu0 %v7054
    %7639 = vmatprep.subr.bf16.mxu0 %v7059
    %7640 = vmatpush1.bf16.msra.mxu0 %v7058
    %7641 = vmatprep.subr.bf16.mxu0 %v7063
    %7642 = vmatpush1.bf16.msra.mxu0 %v7062
    %7643 = vmatprep.subr.bf16.mxu0 %v7067
    %7644 = vmatpush1.bf16.msra.mxu0 %v7066
    %7645 = vmatprep.subr.bf16.mxu0 %v7071
    %7646 = vmatpush1.bf16.msra.mxu0 %v7070
    %7647 = vmatprep.mubr.bf16.mxu0 %v5769
    %7648 = vmatmul.mubr.bf16.gmra.mrb[0].mxu0 %v5768
    %v7649 = vpop.f32.mrb[0].mxu0
    %v7650 = vadd.f32 %v7609, %v7649
    %v7651 = vpop.f32.mrb[0].mxu0
    %v7652 = vadd.f32 %v7611, %v7651
    %v7653 = vpop.f32.mrb[0].mxu0
    %v7654 = vpop.f32.mrb[0].mxu0
    %7655 = vdwg.mxu0
    %v7656 = vmax.f32 %v7486, 0.0
    %v7657 = vmax.f32 %v7488, 0.0
    %v7658 = vmax.f32 %v7650, 0.0
    %v7659 = vmax.f32 %v7652, 0.0
    %v7660 = vld [vmem:[%s7] sm:$0xf]
    %v7661 = vunpack.c.l.bf16 %v7660
    %v7663 = vcombine.high %v7661, %v7661
    %v7665 = vunpack.c.l.s4 1983009808
    %v7666 = vunpack.c.0.s8 %v7665
    %v7667 = vlaneseq
    %v7668 = vshrl.u32 %v7667, 7
    %v7669 = vsub.s32 %v7666, %v7668
    %v7670 = vrot.slane %v7661, %v7669
    %v7672 = vunpack.c.l.s4 1983009808
    %v7673 = vunpack.c.0.s8 %v7672
    %v7674 = vlaneseq
    %v7675 = vshrl.u32 %v7674, 7
    %v7676 = vsub.s32 %v7673, %v7675
    %v7677 = vrot.slane %v7663, %v7676
    %v7678 = vcombine.high %v7670, %v7670
    %v7679 = vcombine.high %v7677, %v7677
    %v7684 = vmul.f32 %v7656, %v7670
    %v7685 = vmul.f32 %v7657, %v7678
    %v7686 = vmul.f32 %v7658, %v7677
    %v7687 = vmul.f32 %v7659, %v7679
    %v7688 = vpack.c.bf16 %v7684, %v7684
    %v7689 = vpack.c.bf16 %v7685, %v7685
    %v7690 = vpack.c.bf16 %v7686, %v7686
    %v7691 = vpack.c.bf16 %v7687, %v7687
    %v7692 = vld [vmem:[%s5] sm:$0xf]
    %v7693 = vld [vmem:[%s5 + $0x4] sm:$0xf]
    %v7694 = vld [vmem:[%s5 + $0x8] sm:$0xf]
    %v7695 = vld [vmem:[%s5 + $0xc] sm:$0xf]
    %v7696 = vld [vmem:[%s5 + $0x10] sm:$0xf]
    %v7697 = vld [vmem:[%s5 + $0x14] sm:$0xf]
    %v7698 = vld [vmem:[%s5 + $0x18] sm:$0xf]
    %v7699 = vld [vmem:[%s5 + $0x1c] sm:$0xf]
    %v7700 = vld [vmem:[%s5 + $0x20] sm:$0xf]
    %v7701 = vld [vmem:[%s5 + $0x24] sm:$0xf]
    %v7702 = vld [vmem:[%s5 + $0x28] sm:$0xf]
    %v7703 = vld [vmem:[%s5 + $0x2c] sm:$0xf]
    %v7704 = vld [vmem:[%s5 + $0x30] sm:$0xf]
    %v7705 = vld [vmem:[%s5 + $0x34] sm:$0xf]
    %v7706 = vld [vmem:[%s5 + $0x38] sm:$0xf]
    %v7707 = vld [vmem:[%s5 + $0x3c] sm:$0xf]
    %v7708 = vld [vmem:[%s5 + $0x40] sm:$0xf]
    %v7709 = vld [vmem:[%s5 + $0x44] sm:$0xf]
    %v7710 = vld [vmem:[%s5 + $0x48] sm:$0xf]
    %v7711 = vld [vmem:[%s5 + $0x4c] sm:$0xf]
    %v7712 = vld [vmem:[%s5 + $0x50] sm:$0xf]
    %v7713 = vld [vmem:[%s5 + $0x54] sm:$0xf]
    %v7714 = vld [vmem:[%s5 + $0x58] sm:$0xf]
    %v7715 = vld [vmem:[%s5 + $0x5c] sm:$0xf]
    %v7716 = vld [vmem:[%s5 + $0x60] sm:$0xf]
    %v7717 = vld [vmem:[%s5 + $0x64] sm:$0xf]
    %v7718 = vld [vmem:[%s5 + $0x68] sm:$0xf]
    %v7719 = vld [vmem:[%s5 + $0x6c] sm:$0xf]
    %v7720 = vld [vmem:[%s5 + $0x70] sm:$0xf]
    %v7721 = vld [vmem:[%s5 + $0x74] sm:$0xf]
    %v7722 = vld [vmem:[%s5 + $0x78] sm:$0xf]
    %v7723 = vld [vmem:[%s5 + $0x7c] sm:$0xf]
    %v7724 = vld [vmem:[%s5 + $0x80] sm:$0xf]
    %v7725 = vld [vmem:[%s5 + $0x84] sm:$0xf]
    %v7726 = vld [vmem:[%s5 + $0x88] sm:$0xf]
    %v7727 = vld [vmem:[%s5 + $0x8c] sm:$0xf]
    %v7728 = vld [vmem:[%s5 + $0x90] sm:$0xf]
    %v7729 = vld [vmem:[%s5 + $0x94] sm:$0xf]
    %v7730 = vld [vmem:[%s5 + $0x98] sm:$0xf]
    %v7731 = vld [vmem:[%s5 + $0x9c] sm:$0xf]
    %v7732 = vld [vmem:[%s5 + $0xa0] sm:$0xf]
    %v7733 = vld [vmem:[%s5 + $0xa4] sm:$0xf]
    %v7734 = vld [vmem:[%s5 + $0xa8] sm:$0xf]
    %v7735 = vld [vmem:[%s5 + $0xac] sm:$0xf]
    %v7736 = vld [vmem:[%s5 + $0xb0] sm:$0xf]
    %v7737 = vld [vmem:[%s5 + $0xb4] sm:$0xf]
    %v7738 = vld [vmem:[%s5 + $0xb8] sm:$0xf]
    %v7739 = vld [vmem:[%s5 + $0xbc] sm:$0xf]
    %v7740 = vld [vmem:[%s5 + $0xc0] sm:$0xf]
    %v7741 = vld [vmem:[%s5 + $0xc4] sm:$0xf]
    %v7742 = vld [vmem:[%s5 + $0xc8] sm:$0xf]
    %v7743 = vld [vmem:[%s5 + $0xcc] sm:$0xf]
    %v7744 = vld [vmem:[%s5 + $0xd0] sm:$0xf]
    %v7745 = vld [vmem:[%s5 + $0xd4] sm:$0xf]
    %v7746 = vld [vmem:[%s5 + $0xd8] sm:$0xf]
    %v7747 = vld [vmem:[%s5 + $0xdc] sm:$0xf]
    %v7748 = vld [vmem:[%s5 + $0xe0] sm:$0xf]
    %v7749 = vld [vmem:[%s5 + $0xe4] sm:$0xf]
    %v7750 = vld [vmem:[%s5 + $0xe8] sm:$0xf]
    %v7751 = vld [vmem:[%s5 + $0xec] sm:$0xf]
    %v7752 = vld [vmem:[%s5 + $0xf0] sm:$0xf]
    %v7753 = vld [vmem:[%s5 + $0xf4] sm:$0xf]
    %v7754 = vld [vmem:[%s5 + $0xf8] sm:$0xf]
    %v7755 = vld [vmem:[%s5 + $0xfc] sm:$0xf]
    %v7756 = vld [vmem:[%s6] sm:$0x1]
    %v7758 = vlaneseq
    %v7759 = vshrl.u32 %v7758, 7
    %v7760 = vsub.s32 0, %v7759
    %v7761 = vrot.slane %v7756, %v7760
    %v7827 = vunpack.c.l.b16 %v7692
    %v7828 = vunpack.c.l.b16 %v7693
    %v7829 = vunpack.c.l.b16 %v7694
    %v7830 = vunpack.c.l.b16 %v7695
    %v7831 = vunpack.c.l.b16 %v7696
    %v7832 = vunpack.c.l.b16 %v7697
    %v7833 = vunpack.c.l.b16 %v7698
    %v7834 = vunpack.c.l.b16 %v7699
    %v7835 = vunpack.c.l.b16 %v7700
    %v7836 = vunpack.c.l.b16 %v7701
    %v7837 = vunpack.c.l.b16 %v7702
    %v7838 = vunpack.c.l.b16 %v7703
    %v7839 = vunpack.c.l.b16 %v7704
    %v7840 = vunpack.c.l.b16 %v7705
    %v7841 = vunpack.c.l.b16 %v7706
    %v7842 = vunpack.c.l.b16 %v7707
    %v7843 = vunpack.c.l.b16 %v7708
    %v7844 = vunpack.c.l.b16 %v7709
    %v7845 = vunpack.c.l.b16 %v7710
    %v7846 = vunpack.c.l.b16 %v7711
    %v7847 = vunpack.c.l.b16 %v7712
    %v7848 = vunpack.c.l.b16 %v7713
    %v7849 = vunpack.c.l.b16 %v7714
    %v7850 = vunpack.c.l.b16 %v7715
    %v7851 = vunpack.c.l.b16 %v7716
    %v7852 = vunpack.c.l.b16 %v7717
    %v7853 = vunpack.c.l.b16 %v7718
    %v7854 = vunpack.c.l.b16 %v7719
    %v7855 = vunpack.c.l.b16 %v7720
    %v7856 = vunpack.c.l.b16 %v7721
    %v7857 = vunpack.c.l.b16 %v7722
    %v7858 = vunpack.c.l.b16 %v7723
    %v7859 = vunpack.c.l.b16 %v7724
    %v7860 = vunpack.c.l.b16 %v7725
    %v7861 = vunpack.c.l.b16 %v7726
    %v7862 = vunpack.c.l.b16 %v7727
    %v7863 = vunpack.c.l.b16 %v7728
    %v7864 = vunpack.c.l.b16 %v7729
    %v7865 = vunpack.c.l.b16 %v7730
    %v7866 = vunpack.c.l.b16 %v7731
    %v7867 = vunpack.c.l.b16 %v7732
    %v7868 = vunpack.c.l.b16 %v7733
    %v7869 = vunpack.c.l.b16 %v7734
    %v7870 = vunpack.c.l.b16 %v7735
    %v7871 = vunpack.c.l.b16 %v7736
    %v7872 = vunpack.c.l.b16 %v7737
    %v7873 = vunpack.c.l.b16 %v7738
    %v7874 = vunpack.c.l.b16 %v7739
    %v7875 = vunpack.c.l.b16 %v7740
    %v7876 = vunpack.c.l.b16 %v7741
    %v7877 = vunpack.c.l.b16 %v7742
    %v7878 = vunpack.c.l.b16 %v7743
    %v7879 = vunpack.c.l.b16 %v7744
    %v7880 = vunpack.c.l.b16 %v7745
    %v7881 = vunpack.c.l.b16 %v7746
    %v7882 = vunpack.c.l.b16 %v7747
    %v7883 = vunpack.c.l.b16 %v7748
    %v7884 = vunpack.c.l.b16 %v7749
    %v7885 = vunpack.c.l.b16 %v7750
    %v7886 = vunpack.c.l.b16 %v7751
    %v7887 = vunpack.c.l.b16 %v7752
    %v7888 = vunpack.c.l.b16 %v7753
    %v7889 = vunpack.c.l.b16 %v7754
    %v7890 = vunpack.c.l.b16 %v7755
    %v7891 = vpack.c.b16 %v7828, %v7827
    %v7892 = vpack.c.b16 %v7830, %v7829
    %v7893 = vpack.c.b16 %v7832, %v7831
    %v7894 = vpack.c.b16 %v7834, %v7833
    %v7895 = vpack.c.b16 %v7836, %v7835
    %v7896 = vpack.c.b16 %v7838, %v7837
    %v7897 = vpack.c.b16 %v7840, %v7839
    %v7898 = vpack.c.b16 %v7842, %v7841
    %v7899 = vpack.c.b16 %v7844, %v7843
    %v7900 = vpack.c.b16 %v7846, %v7845
    %v7901 = vpack.c.b16 %v7848, %v7847
    %v7902 = vpack.c.b16 %v7850, %v7849
    %v7903 = vpack.c.b16 %v7852, %v7851
    %v7904 = vpack.c.b16 %v7854, %v7853
    %v7905 = vpack.c.b16 %v7856, %v7855
    %v7906 = vpack.c.b16 %v7858, %v7857
    %v7907 = vpack.c.b16 %v7860, %v7859
    %v7908 = vpack.c.b16 %v7862, %v7861
    %v7909 = vpack.c.b16 %v7864, %v7863
    %v7910 = vpack.c.b16 %v7866, %v7865
    %v7911 = vpack.c.b16 %v7868, %v7867
    %v7912 = vpack.c.b16 %v7870, %v7869
    %v7913 = vpack.c.b16 %v7872, %v7871
    %v7914 = vpack.c.b16 %v7874, %v7873
    %v7915 = vpack.c.b16 %v7876, %v7875
    %v7916 = vpack.c.b16 %v7878, %v7877
    %v7917 = vpack.c.b16 %v7880, %v7879
    %v7918 = vpack.c.b16 %v7882, %v7881
    %v7919 = vpack.c.b16 %v7884, %v7883
    %v7920 = vpack.c.b16 %v7886, %v7885
    %v7921 = vpack.c.b16 %v7888, %v7887
    %v7922 = vpack.c.b16 %v7890, %v7889
    %7955 = vmatprep.subr.bf16.mxu0 0
    %7956 = vmatpush1.bf16.msra.mxu0 %v7891
    %7957 = vmatprep.subr.bf16.mxu0 0
    %7958 = vmatpush1.bf16.msra.mxu0 %v7892
    %7959 = vmatprep.subr.bf16.mxu0 0
    %7960 = vmatpush1.bf16.msra.mxu0 %v7893
    %7961 = vmatprep.subr.bf16.mxu0 0
    %7962 = vmatpush1.bf16.msra.mxu0 %v7894
    %7963 = vmatprep.subr.bf16.mxu0 0
    %7964 = vmatpush1.bf16.msra.mxu0 %v7895
    %7965 = vmatprep.subr.bf16.mxu0 0
    %7966 = vmatpush1.bf16.msra.mxu0 %v7896
    %7967 = vmatprep.subr.bf16.mxu0 0
    %7968 = vmatpush1.bf16.msra.mxu0 %v7897
    %7969 = vmatprep.subr.bf16.mxu0 0
    %7970 = vmatpush1.bf16.msra.mxu0 %v7898
    %7971 = vmatprep.subr.bf16.mxu0 0
    %7972 = vmatpush1.bf16.msra.mxu0 %v7899
    %7973 = vmatprep.subr.bf16.mxu0 0
    %7974 = vmatpush1.bf16.msra.mxu0 %v7900
    %7975 = vmatprep.subr.bf16.mxu0 0
    %7976 = vmatpush1.bf16.msra.mxu0 %v7901
    %7977 = vmatprep.subr.bf16.mxu0 0
    %7978 = vmatpush1.bf16.msra.mxu0 %v7902
    %7979 = vmatprep.subr.bf16.mxu0 0
    %7980 = vmatpush1.bf16.msra.mxu0 %v7903
    %7981 = vmatprep.subr.bf16.mxu0 0
    %7982 = vmatpush1.bf16.msra.mxu0 %v7904
    %7983 = vmatprep.subr.bf16.mxu0 0
    %7984 = vmatpush1.bf16.msra.mxu0 %v7905
    %7985 = vmatprep.subr.bf16.mxu0 0
    %7986 = vmatpush1.bf16.msra.mxu0 %v7906
    %7987 = vmatprep.mubr.bf16.mxu0 %v7689
    %7988 = vmatmul.mubr.bf16.gmra.mrb[0].mxu0 %v7688
    %v7989 = vpop.f32.mrb[0].mxu0
    %v7990 = vadd.f32 %v7761, %v7989
    %v7991 = vpop.f32.mrb[0].mxu0
    %v7992 = vpop.f32.mrb[0].mxu0
    %v7993 = vpop.f32.mrb[0].mxu0
    %7994 = vdwg.mxu0
    %7995 = vmatprep.subr.bf16.mxu0 0
    %7996 = vmatpush1.bf16.msra.mxu0 %v7907
    %7997 = vmatprep.subr.bf16.mxu0 0
    %7998 = vmatpush1.bf16.msra.mxu0 %v7908
    %7999 = vmatprep.subr.bf16.mxu0 0
    %8000 = vmatpush1.bf16.msra.mxu0 %v7909
    %8001 = vmatprep.subr.bf16.mxu0 0
    %8002 = vmatpush1.bf16.msra.mxu0 %v7910
    %8003 = vmatprep.subr.bf16.mxu0 0
    %8004 = vmatpush1.bf16.msra.mxu0 %v7911
    %8005 = vmatprep.subr.bf16.mxu0 0
    %8006 = vmatpush1.bf16.msra.mxu0 %v7912
    %8007 = vmatprep.subr.bf16.mxu0 0
    %8008 = vmatpush1.bf16.msra.mxu0 %v7913
    %8009 = vmatprep.subr.bf16.mxu0 0
    %8010 = vmatpush1.bf16.msra.mxu0 %v7914
    %8011 = vmatprep.subr.bf16.mxu0 0
    %8012 = vmatpush1.bf16.msra.mxu0 %v7915
    %8013 = vmatprep.subr.bf16.mxu0 0
    %8014 = vmatpush1.bf16.msra.mxu0 %v7916
    %8015 = vmatprep.subr.bf16.mxu0 0
    %8016 = vmatpush1.bf16.msra.mxu0 %v7917
    %8017 = vmatprep.subr.bf16.mxu0 0
    %8018 = vmatpush1.bf16.msra.mxu0 %v7918
    %8019 = vmatprep.subr.bf16.mxu0 0
    %8020 = vmatpush1.bf16.msra.mxu0 %v7919
    %8021 = vmatprep.subr.bf16.mxu0 0
    %8022 = vmatpush1.bf16.msra.mxu0 %v7920
    %8023 = vmatprep.subr.bf16.mxu0 0
    %8024 = vmatpush1.bf16.msra.mxu0 %v7921
    %8025 = vmatprep.subr.bf16.mxu0 0
    %8026 = vmatpush1.bf16.msra.mxu0 %v7922
    %8027 = vmatprep.mubr.bf16.mxu0 %v7691
    %8028 = vmatmul.mubr.bf16.gmra.mrb[0].mxu0 %v7690
    %v8029 = vpop.f32.mrb[0].mxu0
    %v8030 = vadd.f32 %v7990, %v8029
    %v8031 = vpop.f32.mrb[0].mxu0
    %v8032 = vpop.f32.mrb[0].mxu0
    %v8033 = vpop.f32.mrb[0].mxu0
    %8034 = vdwg.mxu0
    %v8035 = vsub.f32 0.0, %v8030
    %v8036 = vmul.f32 %v8035, 1.442695
    %v8037 = vpow.pop %v8036
    %v8038 = vadd.f32 %v8037, 1.0
    %v8039 = vrcp.pop %v8038
    %v8040 = vmul.f32 1.0, %v8039
    %8041 = vst [vmem:[#allocation2] sm:$0x3] %v8040
    // Predicated region
    $region34: #{notesnet_forward.5} parent=1 // pred_check
      _
    $region35: #{notesnet_forward.5} parent=1 // pred_check_branch
      %8043 = sbr.rel (0) target = $region37
    $region36: #{notesnet_forward.5} parent=1 // pred_region
      %s8045 = ssub.s32 32, 32
      %8046 = vsyncadd [#allocation3], %s8045
      %s8048 = sshll.u32 [#allocation2], 4
      %s8049 = int_to_ptr.vmem [resolvable:$true] %s8048
      %8051 = dma.vmem_to_hbm [thread:$0]  %s8049, 32, %s8, [#allocation3]
    $region37: #{notesnet_forward.5} parent=1 // pred_fallthru
      _
    // Predicated region
    $region38: #{notesnet_forward.5} parent=1 // pred_check
      _
    $region39: #{notesnet_forward.5} parent=1 // pred_check_branch
      %8053 = sbr.rel (0) target = $region41
    $region40: #{notesnet_forward.5} parent=1 // pred_region
      %8054 = dma.done [#allocation3], 32
    $region41: #{notesnet_forward.5} parent=1 // pred_fallthru
      _
    %8055 = vsyncpa [#allocation3], 1

</llo_original>
